<compile_context>
chip_gen: v6e
topology: v6e:2x2x1
jax: 0.10.0
libtpu: 0.0.40
codegen_flags: <defaults>
</compile_context>

<pallas_src>
import functools
import math

import jax
import jax.numpy as jnp
from jax.experimental import pallas as pl
from jax.experimental.pallas import tpu as pltpu

C_PAD = 128       # lane-dense channel padding for conv outputs / fc hiddens
CIN_PAD = 16      # conv1 input-channel padding (3 + 10 -> 16)


def _round_up(x, m):
    return ((x + m - 1) // m) * m


def _pick_tm(M, max_tm=1024):
    """Largest multiple-of-8 tile that divides M (prefer >=2 grid steps)."""
    divs = [d for d in range(8, min(M, max_tm) + 1, 8) if M % d == 0]
    if not divs:
        return min(_round_up(M, 8), max_tm)
    multi = [d for d in divs if M // d >= 2]
    if multi and multi[-1] >= 128:
        return multi[-1]          # >=2 steps -> megacore-parallel grid axis
    return divs[-1]


# ---------------------------------------------------------------------------
# Pallas kernel 1: bf16 matmul + bias + ReLU (both convs go through here)
# ---------------------------------------------------------------------------
def _matmul_bias_relu_kernel(x_ref, w_ref, b_ref, o_ref):
    acc = jnp.dot(x_ref[...], w_ref[...], preferred_element_type=jnp.float32)
    o_ref[...] = jnp.maximum(acc + b_ref[...], 0.0).astype(o_ref.dtype)


def matmul_bias_relu(x, w, b, max_tm=1024):
    """relu(x @ w + b). x:(M,K) bf16, w:(K,N) bf16, b:(1,N) f32 -> (M,N) bf16."""
    M, K = x.shape
    _, N = w.shape
    tm = _pick_tm(M, max_tm)
    Mp = _round_up(M, tm)
    if Mp != M:                      # not hit for this script's shapes
        x = jnp.pad(x, ((0, Mp - M), (0, 0)))
    y = pl.pallas_call(
        _matmul_bias_relu_kernel,
        out_shape=jax.ShapeDtypeStruct((Mp, N), jnp.bfloat16),
        grid=(Mp // tm,),
        in_specs=[
            pl.BlockSpec((tm, K), lambda i: (i, 0)),   # activation row tile
            pl.BlockSpec((K, N), lambda i: (0, 0)),    # full weight
            pl.BlockSpec((1, N), lambda i: (0, 0)),    # bias row
        ],
        out_specs=pl.BlockSpec((tm, N), lambda i: (i, 0)),
        compiler_params=pltpu.CompilerParams(
            dimension_semantics=("parallel",)),
    )(x.astype(jnp.bfloat16), w, b)
    return y if Mp == M else y[:M]


# ---------------------------------------------------------------------------
# Pallas kernel 2: fused "head + tail" (single launch)
#   relu(fc1) -> relu(fc2) -> fc3 -> batch-sum / l -> (e-mean)/std(unbiased)
#   -> relu(mlp1) -> relu(mlp2) -> relu(mlp3) -> relu(concat per-block fc)
# ---------------------------------------------------------------------------
def _head_tail_kernel(h_ref, fc1w, fc1b, fc2w, fc2b, fc3w, fc3b,
                      w1, b1, w2, b2, w3, b3, fhw, fhb, alpha_ref,
                      *, n_valid, inv_l, emb_dim):
    h = jnp.dot(h_ref[...], fc1w[...], preferred_element_type=jnp.float32)
    h = jnp.maximum(h + fc1b[...], 0.0)
    h = jnp.dot(h.astype(jnp.bfloat16), fc2w[...],
                preferred_element_type=jnp.float32)
    h = jnp.maximum(h + fc2b[...], 0.0)
    e = jnp.dot(h.astype(jnp.bfloat16), fc3w[...],
                preferred_element_type=jnp.float32) + fc3b[...]
    # embedding = sum over the real batch rows / l  (l mirrors torch `len(B)`)
    emb = jnp.sum(e[:n_valid], axis=0, keepdims=True) * inv_l       # (1, D)
    m = jnp.sum(emb) / emb_dim
    var = jnp.sum((emb - m) ** 2) / (emb_dim - 1)     # torch.std: unbiased
    emb = (emb - m) * jax.lax.rsqrt(var)  # TODO(synk): no eps, same as torch
    f = jnp.broadcast_to(emb, (8, emb_dim))           # 8 sublanes for the MXU
    f = jnp.maximum(jnp.dot(f, w1[...], preferred_element_type=jnp.float32)
                    + b1[...], 0.0)
    f = jnp.maximum(jnp.dot(f, w2[...], preferred_element_type=jnp.float32)
                    + b2[...], 0.0)
    f = jnp.maximum(jnp.dot(f, w3[...], preferred_element_type=jnp.float32)
                    + b3[...], 0.0)
    a = jnp.maximum(jnp.dot(f, fhw[...], preferred_element_type=jnp.float32)
                    + fhb[...], 0.0)
    alpha_ref[...] = a[0:1, :]


def fused_head_tail(h, p, *, inv_l):
    B = h.shape[0]
    rows = max(8, _round_up(B, 8))
    if rows != B:
        h = jnp.pad(h, ((0, rows - B), (0, 0)))   # tiny; padded rows sliced off
    emb_dim = p["fc3_w"].shape[1]
    n_out = p["fc_heads_w"].shape[1]
    return pl.pallas_call(
        functools.partial(_head_tail_kernel, n_valid=B, inv_l=inv_l,
                          emb_dim=emb_dim),
        out_shape=jax.ShapeDtypeStruct((1, n_out), jnp.float32),
    )(h, p["fc1_w"], p["fc1_b"], p["fc2_w"], p["fc2_b"],
      p["fc3_w"], p["fc3_b"],
      p["mlp_w1"], p["mlp_b1"], p["mlp_w2"], p["mlp_b2"],
      p["mlp_w3"], p["mlp_b3"], p["fc_heads_w"], p["fc_heads_b"])


# ---------------------------------------------------------------------------
# Glue (NHWC everywhere -- no layout transposes between layers)
# ---------------------------------------------------------------------------
def _im2col_nhwc(x, kh, kw):
    B, H, W, C = x.shape
    Ho, Wo = H - kh + 1, W - kw + 1
    cols = [x[:, di:di + Ho, dj:dj + Wo, :]
            for di in range(kh) for dj in range(kw)]
    p = jnp.stack(cols, axis=3)                     # (B, Ho, Wo, kh*kw, C)
    return p.reshape(B * Ho * Wo, kh * kw * C), Ho, Wo


def conv2d_relu(x, w_flat, b_row, kh=5, kw=5):
    B = x.shape[0]
    patches, Ho, Wo = _im2col_nhwc(x, kh, kw)
    y = matmul_bias_relu(patches, w_flat, b_row)    # (B*Ho*Wo, C_PAD) bf16
    return y.reshape(B, Ho, Wo, w_flat.shape[1])


def maxpool2x2(x):                                  # NHWC
    B, H, W, C = x.shape
    return x.reshape(B, H // 2, 2, W // 2, 2, C).max(axis=(2, 4))


def build_input_nhwc(x_nchw, y_onehot):
    B, C, H, W = x_nchw.shape
    x = jnp.transpose(x_nchw, (0, 2, 3, 1))
    c = jnp.broadcast_to(y_onehot[:, None, None, :],
                         (B, H, W, y_onehot.shape[1]))
    pad = jnp.zeros((B, H, W, CIN_PAD - C - y_onehot.shape[1]), x.dtype)
    return jnp.concatenate([x, c, pad], axis=-1).astype(jnp.bfloat16)


# ---------------------------------------------------------------------------
# HyperNetwork.forward (numeric part fully jitted, no host sync inside)
# ---------------------------------------------------------------------------
@functools.partial(jax.jit,
                   static_argnames=("client_num", "K", "n_blocks", "inv_l"))
def hypernet_forward_numeric(params, x, y_onehot, client_id, *,
                             client_num, K, n_blocks, inv_l):
    inp = build_input_nhwc(x, y_onehot)                        # (B,32,32,16)
    h = maxpool2x2(conv2d_relu(inp, params["conv1_w"], params["conv1_b"]))
    h = maxpool2x2(conv2d_relu(h, params["conv2_w"], params["conv2_b"]))
    h = h.reshape(h.shape[0], -1)                              # (B, 25*C_PAD)
    alpha_flat = fused_head_tail(h, params, inv_l=inv_l)       # (1, nb*cn)
    alpha_mat = alpha_flat.reshape(n_blocks, client_num)
    if K > 0:
        self_w = alpha_mat[:, client_id]                       # (n_blocks,)
        _, topk_idx = jax.lax.top_k(self_w, K)
        default_w = (jnp.arange(client_num) == client_id).astype(jnp.float32)
        in_topk = jnp.zeros((n_blocks,), jnp.bool_).at[topk_idx].set(True)
        alpha_mat = jnp.where(in_topk[:, None], default_w[None, :], alpha_mat)
    else:
        topk_idx = jnp.zeros((0,), jnp.int32)
    return alpha_mat, topk_idx


def hypernetwork_forward(params, x, y_onehot, client_id, client_num, K,
                         blocks_name):
    # l mirrors the torch quirk: single batch, l += len(B) where B is the
    # (x, y) tuple -> l == 2 regardless of batch size.
    alpha_mat, topk_idx = hypernet_forward_numeric(
        params, x, y_onehot, jnp.int32(client_id),
        client_num=client_num, K=K, n_blocks=len(blocks_name), inv_l=0.5)
    alpha = {name: alpha_mat[i] for i, name in enumerate(blocks_name)}
    # single host readback, only to produce the Python list of block names
    retain_blocks = ([blocks_name[int(i)] for i in jax.device_get(topk_idx)]
                     if K > 0 else [])
    return alpha, retain_blocks


# ---------------------------------------------------------------------------
# Parameter init (torch layouts) + one-time conversion to kernel layouts
# ---------------------------------------------------------------------------
def init_params(key, embed_y, dim_y, embedding_dim, hidden_dim, client_num,
                in_channels, n_kernels, blocks_name):
    cin1 = in_channels + (dim_y if embed_y else 0)
    w_shapes = {
        "conv1_w": (n_kernels, cin1, 5, 5),
        "conv2_w": (2 * n_kernels, n_kernels, 5, 5),
        "fc1_w": (120, 2 * n_kernels * 5 * 5),
        "fc2_w": (84, 120),
        "fc3_w": (embedding_dim, 84),
        "mlp_w1": (hidden_dim, embedding_dim),
        "mlp_w2": (hidden_dim, hidden_dim),
        "mlp_w3": (hidden_dim, hidden_dim),
    }
    b_shapes = {
        "conv1_b": n_kernels, "conv2_b": 2 * n_kernels,
        "fc1_b": 120, "fc2_b": 84, "fc3_b": embedding_dim,
        "mlp_b1": hidden_dim, "mlp_b2": hidden_dim, "mlp_b3": hidden_dim,
    }
    keys = jax.random.split(key, len(w_shapes) + len(blocks_name))
    params = {}
    for i, (name, shp) in enumerate(w_shapes.items()):
        fan_in = math.prod(shp[1:])
        params[name] = jax.random.normal(keys[i], shp, jnp.float32) / jnp.sqrt(fan_in)
    for name, n in b_shapes.items():
        params[name] = jnp.zeros((n,), jnp.float32)
    for j, block in enumerate(blocks_name):
        # custom Linear class: weight ~ U(0,1), bias = 0
        params[f"fc_{block}_w"] = jax.random.uniform(
            keys[len(w_shapes) + j], (client_num, hidden_dim), jnp.float32)
        params[f"fc_{block}_b"] = jnp.zeros((client_num,), jnp.float32)
    return params


def prepare_params(raw, n_kernels, blocks_name):
    """Torch-layout params -> kernel layouts (NHWC, zero-padded, bf16).

    All padding is with zeros and is exact: padded channels/features stay 0
    through ReLU and are multiplied by zero weight rows downstream.
    """
    p = {}

    def conv_prep(w, b, cin_pad):
        cout, cin, kh, kw = w.shape
        w = jnp.transpose(w, (2, 3, 1, 0))                  # (kh,kw,Cin,Cout)
        w = jnp.pad(w, ((0, 0), (0, 0), (0, cin_pad - cin), (0, C_PAD - cout)))
        return (w.reshape(kh * kw * cin_pad, C_PAD).astype(jnp.bfloat16),
                jnp.pad(b, (0, C_PAD - cout)).reshape(1, C_PAD))

    p["conv1_w"], p["conv1_b"] = conv_prep(raw["conv1_w"], raw["conv1_b"], CIN_PAD)
    p["conv2_w"], p["conv2_b"] = conv_prep(raw["conv2_w"], raw["conv2_b"], C_PAD)

    # fc1: torch flattens NCHW (c, i, j); our activation is NHWC-flattened
    # (i, j, c_padded).  Re-order + pad the weight once here (same math).
    c2 = 2 * n_kernels
    w = raw["fc1_w"].reshape(120, c2, 5, 5)                 # (out, c, i, j)
    w = jnp.transpose(w, (2, 3, 1, 0))                      # (i, j, c, out)
    w = jnp.pad(w, ((0, 0), (0, 0), (0, C_PAD - c2), (0, 128 - 120)))
    p["fc1_w"] = w.reshape(25 * C_PAD, 128).astype(jnp.bfloat16)
    p["fc1_b"] = jnp.pad(raw["fc1_b"], (0, 128 - 120)).reshape(1, 128)

    p["fc2_w"] = jnp.pad(raw["fc2_w"].T,
                         ((0, 128 - 120), (0, 128 - 84))).astype(jnp.bfloat16)
    p["fc2_b"] = jnp.pad(raw["fc2_b"], (0, 128 - 84)).reshape(1, 128)

    emb_dim = raw["fc3_w"].shape[0]
    p["fc3_w"] = jnp.pad(raw["fc3_w"].T,
                         ((0, 128 - 84), (0, 0))).astype(jnp.bfloat16)
    p["fc3_b"] = raw["fc3_b"].reshape(1, emb_dim)

    for k in (1, 2, 3):                                     # tiny, keep f32
        p[f"mlp_w{k}"] = raw[f"mlp_w{k}"].T
        p[f"mlp_b{k}"] = raw[f"mlp_b{k}"].reshape(1, -1)

    # all per-block fc heads concatenated into a single (hidden, nb*cn) matmul
    p["fc_heads_w"] = jnp.concatenate(
        [raw[f"fc_{n}_w"].T for n in blocks_name], axis=1)
    p["fc_heads_b"] = jnp.concatenate(
        [raw[f"fc_{n}_b"] for n in blocks_name]).reshape(1, -1)
    return p


if __name__ == "__main__":
    key = jax.random.PRNGKey(0)

    # Shapes dictated by the module: fc1 expects 2*n_kernels*5*5 inputs, which
    # with two 5x5 valid convs + two 2x2 pools implies 32x32 inputs (CIFAR-10).
    B, in_channels, H, W = 4, 3, 32, 32
    embed_y, dim_y = True, 10
    embedding_dim, hidden_dim = 32, 32
    client_num, K, n_kernels = 8, 2, 16
    client_id = 1
    blocks_name = ["conv1", "conv2", "fc1", "fc2", "fc3"]   # backbone blocks

    kx, ky, kp = jax.random.split(key, 3)
    x = jax.random.normal(kx, (B, in_channels, H, W), dtype=jnp.float32)
    labels = jax.random.randint(ky, (B,), 0, dim_y)
    y_onehot = jax.nn.one_hot(labels, dim_y, dtype=jnp.float32)

    raw = init_params(kp, embed_y, dim_y, embedding_dim, hidden_dim,
                      client_num, in_channels, n_kernels, blocks_name)
    params = prepare_params(raw, n_kernels, blocks_name)

    alpha, retain_blocks = hypernetwork_forward(
        params, x, y_onehot, client_id, client_num, K, blocks_name)

    for v in alpha.values():
        jax.block_until_ready(v)
    assert len(retain_blocks) == K
    assert all(a.shape == (client_num,) for a in alpha.values())
    assert all(bool(jnp.all(jnp.isfinite(a))) for a in alpha.values())
    print("KERNEL_OK")
</pallas_src>

<mosaic_0001>
module attributes {stable_mosaic.version = 11 : i64} {
  func.func @_matmul_bias_relu_kernel(%arg0: i32, %arg1: memref<784x400xbf16, #tpu.memory_space<vmem>>, %arg2: memref<400x128xbf16, #tpu.memory_space<vmem>>, %arg3: memref<1x128xf32, #tpu.memory_space<vmem>>, %arg4: memref<784x128xbf16, #tpu.memory_space<vmem>>) attributes {dimension_semantics = [#tpu.dimension_semantics<parallel>], iteration_bounds = array<i64: 4>, scalar_prefetch = 0 : i64, scratch_operands = 0 : i64, tpu.core_type = #tpu.core_type<tc>, window_params = [{transform_indices = @transform_0, window_bounds = array<i64: 784, 400>}, {pipeline_mode = #tpu.pipeline_mode<synchronous>, transform_indices = @transform_1, window_bounds = array<i64: 400, 128>}, {pipeline_mode = #tpu.pipeline_mode<synchronous>, transform_indices = @transform_2, window_bounds = array<i64: 1, 128>}, {transform_indices = @transform_3, window_bounds = array<i64: 784, 128>}]} {
    %c0 = arith.constant 0 : index
    %c0_0 = arith.constant 0 : index
    %0 = vector.load %arg1[%c0, %c0_0] : memref<784x400xbf16, #tpu.memory_space<vmem>>, vector<784x400xbf16>
    %c0_1 = arith.constant 0 : index
    %c0_2 = arith.constant 0 : index
    %1 = vector.load %arg2[%c0_1, %c0_2] : memref<400x128xbf16, #tpu.memory_space<vmem>>, vector<400x128xbf16>
    %cst = arith.constant dense<0.000000e+00> : vector<784x128xf32>
    %2 = tpu.matmul %0, %1, %cst {dimension_numbers = #tpu.dot_dimension_numbers<[1], [0], [0], [1], [0, 0, 1, 1], [], []>} : vector<784x400xbf16>, vector<400x128xbf16>, vector<784x128xf32> -> vector<784x128xf32>
    %c0_3 = arith.constant 0 : index
    %c0_4 = arith.constant 0 : index
    %3 = vector.load %arg3[%c0_3, %c0_4] : memref<1x128xf32, #tpu.memory_space<vmem>>, vector<1x128xf32>
    %4 = vector.broadcast %3 : vector<1x128xf32> to vector<784x128xf32>
    %5 = arith.addf %2, %4 : vector<784x128xf32>
    %cst_5 = arith.constant 0.000000e+00 : f32
    %6 = vector.broadcast %cst_5 : f32 to vector<784x128xf32>
    %7 = arith.maximumf %5, %6 : vector<784x128xf32>
    %8 = arith.truncf %7 : vector<784x128xf32> to vector<784x128xbf16>
    %c0_6 = arith.constant 0 : index
    %c0_7 = arith.constant 0 : index
    %9 = vector.load %arg4[%c0_6, %c0_7] : memref<784x128xbf16, #tpu.memory_space<vmem>>, vector<784x128xbf16>
    tpu.vector_store %arg4[%c0_6, %c0_7], %8 {strides = array<i32>} : memref<784x128xbf16, #tpu.memory_space<vmem>>, vector<784x128xbf16>,
    return
  }
  func.func @transform_0(%arg0: i32) -> (i32, i32) {
    %c0_i32 = arith.constant 0 : i32
    %c0_i32_0 = arith.constant 0 : i32
    return %arg0, %c0_i32 : i32, i32
  }
  func.func @transform_1(%arg0: i32) -> (i32, i32) {
    %c0_i32 = arith.constant 0 : i32
    %c0_i32_0 = arith.constant 0 : i32
    %c0_i32_1 = arith.constant 0 : i32
    return %c0_i32, %c0_i32_0 : i32, i32
  }
  func.func @transform_2(%arg0: i32) -> (i32, i32) {
    %c0_i32 = arith.constant 0 : i32
    %c0_i32_0 = arith.constant 0 : i32
    %c0_i32_1 = arith.constant 0 : i32
    return %c0_i32, %c0_i32_0 : i32, i32
  }
  func.func @transform_3(%arg0: i32) -> (i32, i32) {
    %c0_i32 = arith.constant 0 : i32
    %c0_i32_0 = arith.constant 0 : i32
    return %arg0, %c0_i32 : i32, i32
  }
}

module attributes {stable_mosaic.version = 11 : i64} {
  func.func @_matmul_bias_relu_kernel(%arg0: i32, %arg1: memref<200x3200xbf16, #tpu.memory_space<vmem>>, %arg2: memref<3200x128xbf16, #tpu.memory_space<vmem>>, %arg3: memref<1x128xf32, #tpu.memory_space<vmem>>, %arg4: memref<200x128xbf16, #tpu.memory_space<vmem>>) attributes {dimension_semantics = [#tpu.dimension_semantics<parallel>], iteration_bounds = array<i64: 2>, scalar_prefetch = 0 : i64, scratch_operands = 0 : i64, tpu.core_type = #tpu.core_type<tc>, window_params = [{transform_indices = @transform_0, window_bounds = array<i64: 200, 3200>}, {pipeline_mode = #tpu.pipeline_mode<synchronous>, transform_indices = @transform_1, window_bounds = array<i64: 3200, 128>}, {pipeline_mode = #tpu.pipeline_mode<synchronous>, transform_indices = @transform_2, window_bounds = array<i64: 1, 128>}, {transform_indices = @transform_3, window_bounds = array<i64: 200, 128>}]} {
    %c0 = arith.constant 0 : index
    %c0_0 = arith.constant 0 : index
    %0 = vector.load %arg1[%c0, %c0_0] : memref<200x3200xbf16, #tpu.memory_space<vmem>>, vector<200x3200xbf16>
    %c0_1 = arith.constant 0 : index
    %c0_2 = arith.constant 0 : index
    %1 = vector.load %arg2[%c0_1, %c0_2] : memref<3200x128xbf16, #tpu.memory_space<vmem>>, vector<3200x128xbf16>
    %cst = arith.constant dense<0.000000e+00> : vector<200x128xf32>
    %2 = tpu.matmul %0, %1, %cst {dimension_numbers = #tpu.dot_dimension_numbers<[1], [0], [0], [1], [0, 0, 1, 1], [], []>} : vector<200x3200xbf16>, vector<3200x128xbf16>, vector<200x128xf32> -> vector<200x128xf32>
    %c0_3 = arith.constant 0 : index
    %c0_4 = arith.constant 0 : index
    %3 = vector.load %arg3[%c0_3, %c0_4] : memref<1x128xf32, #tpu.memory_space<vmem>>, vector<1x128xf32>
    %4 = vector.broadcast %3 : vector<1x128xf32> to vector<200x128xf32>
    %5 = arith.addf %2, %4 : vector<200x128xf32>
    %cst_5 = arith.constant 0.000000e+00 : f32
    %6 = vector.broadcast %cst_5 : f32 to vector<200x128xf32>
    %7 = arith.maximumf %5, %6 : vector<200x128xf32>
    %8 = arith.truncf %7 : vector<200x128xf32> to vector<200x128xbf16>
    %c0_6 = arith.constant 0 : index
    %c0_7 = arith.constant 0 : index
    %9 = vector.load %arg4[%c0_6, %c0_7] : memref<200x128xbf16, #tpu.memory_space<vmem>>, vector<200x128xbf16>
    tpu.vector_store %arg4[%c0_6, %c0_7], %8 {strides = array<i32>} : memref<200x128xbf16, #tpu.memory_space<vmem>>, vector<200x128xbf16>,
    return
  }
  func.func @transform_0(%arg0: i32) -> (i32, i32) {
    %c0_i32 = arith.constant 0 : i32
    %c0_i32_0 = arith.constant 0 : i32
    return %arg0, %c0_i32 : i32, i32
  }
  func.func @transform_1(%arg0: i32) -> (i32, i32) {
    %c0_i32 = arith.constant 0 : i32
    %c0_i32_0 = arith.constant 0 : i32
    %c0_i32_1 = arith.constant 0 : i32
    return %c0_i32, %c0_i32_0 : i32, i32
  }
  func.func @transform_2(%arg0: i32) -> (i32, i32) {
    %c0_i32 = arith.constant 0 : i32
    %c0_i32_0 = arith.constant 0 : i32
    %c0_i32_1 = arith.constant 0 : i32
    return %c0_i32, %c0_i32_0 : i32, i32
  }
  func.func @transform_3(%arg0: i32) -> (i32, i32) {
    %c0_i32 = arith.constant 0 : i32
    %c0_i32_0 = arith.constant 0 : i32
    return %arg0, %c0_i32 : i32, i32
  }
}

module attributes {stable_mosaic.version = 11 : i64} {
  func.func @_head_tail_kernel(%arg0: memref<8x3200xbf16, #tpu.memory_space<vmem>>, %arg1: memref<3200x128xbf16, #tpu.memory_space<vmem>>, %arg2: memref<1x128xf32, #tpu.memory_space<vmem>>, %arg3: memref<128x128xbf16, #tpu.memory_space<vmem>>, %arg4: memref<1x128xf32, #tpu.memory_space<vmem>>, %arg5: memref<128x32xbf16, #tpu.memory_space<vmem>>, %arg6: memref<1x32xf32, #tpu.memory_space<vmem>>, %arg7: memref<32x32xf32, #tpu.memory_space<vmem>>, %arg8: memref<1x32xf32, #tpu.memory_space<vmem>>, %arg9: memref<32x32xf32, #tpu.memory_space<vmem>>, %arg10: memref<1x32xf32, #tpu.memory_space<vmem>>, %arg11: memref<32x32xf32, #tpu.memory_space<vmem>>, %arg12: memref<1x32xf32, #tpu.memory_space<vmem>>, %arg13: memref<32x40xf32, #tpu.memory_space<vmem>>, %arg14: memref<1x40xf32, #tpu.memory_space<vmem>>, %arg15: memref<1x40xf32, #tpu.memory_space<vmem>>) attributes {dimension_semantics = [], scalar_prefetch = 0 : i64, scratch_operands = 0 : i64, tpu.core_type = #tpu.core_type<tc>} {
    %c0 = arith.constant 0 : index
    %c0_0 = arith.constant 0 : index
    %0 = vector.load %arg0[%c0, %c0_0] : memref<8x3200xbf16, #tpu.memory_space<vmem>>, vector<8x3200xbf16>
    %c0_1 = arith.constant 0 : index
    %c0_2 = arith.constant 0 : index
    %1 = vector.load %arg1[%c0_1, %c0_2] : memref<3200x128xbf16, #tpu.memory_space<vmem>>, vector<3200x128xbf16>
    %cst = arith.constant dense<0.000000e+00> : vector<8x128xf32>
    %2 = tpu.matmul %0, %1, %cst {dimension_numbers = #tpu.dot_dimension_numbers<[1], [0], [0], [1], [0, 0, 1, 1], [], []>} : vector<8x3200xbf16>, vector<3200x128xbf16>, vector<8x128xf32> -> vector<8x128xf32>
    %c0_3 = arith.constant 0 : index
    %c0_4 = arith.constant 0 : index
    %3 = vector.load %arg2[%c0_3, %c0_4] : memref<1x128xf32, #tpu.memory_space<vmem>>, vector<1x128xf32>
    %4 = vector.broadcast %3 : vector<1x128xf32> to vector<8x128xf32>
    %5 = arith.addf %2, %4 : vector<8x128xf32>
    %cst_5 = arith.constant 0.000000e+00 : f32
    %6 = vector.broadcast %cst_5 : f32 to vector<8x128xf32>
    %7 = arith.maximumf %5, %6 : vector<8x128xf32>
    %8 = arith.truncf %7 : vector<8x128xf32> to vector<8x128xbf16>
    %c0_6 = arith.constant 0 : index
    %c0_7 = arith.constant 0 : index
    %9 = vector.load %arg3[%c0_6, %c0_7] : memref<128x128xbf16, #tpu.memory_space<vmem>>, vector<128x128xbf16>
    %cst_8 = arith.constant dense<0.000000e+00> : vector<8x128xf32>
    %10 = tpu.matmul %8, %9, %cst_8 {dimension_numbers = #tpu.dot_dimension_numbers<[1], [0], [0], [1], [0, 0, 1, 1], [], []>} : vector<8x128xbf16>, vector<128x128xbf16>, vector<8x128xf32> -> vector<8x128xf32>
    %c0_9 = arith.constant 0 : index
    %c0_10 = arith.constant 0 : index
    %11 = vector.load %arg4[%c0_9, %c0_10] : memref<1x128xf32, #tpu.memory_space<vmem>>, vector<1x128xf32>
    %12 = vector.broadcast %11 : vector<1x128xf32> to vector<8x128xf32>
    %13 = arith.addf %10, %12 : vector<8x128xf32>
    %cst_11 = arith.constant 0.000000e+00 : f32
    %14 = vector.broadcast %cst_11 : f32 to vector<8x128xf32>
    %15 = arith.maximumf %13, %14 : vector<8x128xf32>
    %16 = arith.truncf %15 : vector<8x128xf32> to vector<8x128xbf16>
    %c0_12 = arith.constant 0 : index
    %c0_13 = arith.constant 0 : index
    %17 = vector.load %arg5[%c0_12, %c0_13] : memref<128x32xbf16, #tpu.memory_space<vmem>>, vector<128x32xbf16>
    %cst_14 = arith.constant dense<0.000000e+00> : vector<8x32xf32>
    %18 = tpu.matmul %16, %17, %cst_14 {dimension_numbers = #tpu.dot_dimension_numbers<[1], [0], [0], [1], [0, 0, 1, 1], [], []>} : vector<8x128xbf16>, vector<128x32xbf16>, vector<8x32xf32> -> vector<8x32xf32>
    %c0_15 = arith.constant 0 : index
    %c0_16 = arith.constant 0 : index
    %19 = vector.load %arg6[%c0_15, %c0_16] : memref<1x32xf32, #tpu.memory_space<vmem>>, vector<1x32xf32>
    %20 = vector.broadcast %19 : vector<1x32xf32> to vector<8x32xf32>
    %21 = arith.addf %18, %20 : vector<8x32xf32>
    %22 = vector.extract_strided_slice %21 {offsets = [0, 0], sizes = [4, 32], strides = [1, 1]} : vector<8x32xf32> to vector<4x32xf32>
    %cst_17 = arith.constant dense<0.000000e+00> : vector<32xf32>
    %23 = vector.multi_reduction <add>, %22, %cst_17 [0] : vector<4x32xf32> to vector<32xf32>
    %24 = vector.shape_cast %23 : vector<32xf32> to vector<1x32xf32>
    %cst_18 = arith.constant 5.000000e-01 : f32
    %25 = vector.broadcast %cst_18 : f32 to vector<1x32xf32>
    %26 = arith.mulf %24, %25 : vector<1x32xf32>
    %27 = vector.shape_cast %26 : vector<1x32xf32> to vector<1x1x32xf32>
    %cst_19 = arith.constant dense<0.000000e+00> : vector<1xf32>
    %28 = vector.multi_reduction <add>, %27, %cst_19 [1, 2] : vector<1x1x32xf32> to vector<1xf32>
    %29 = vector.shape_cast %28 : vector<1xf32> to vector<1x1x1xf32>
    %30 = vector.extract %29[0, 0, 0] : f32 from vector<1x1x1xf32>
    %cst_20 = arith.constant 3.200000e+01 : f32
    %31 = arith.divf %30, %cst_20 : f32
    %32 = vector.broadcast %31 : f32 to vector<1x32xf32>
    %33 = arith.subf %26, %32 : vector<1x32xf32>
    %34 = arith.mulf %33, %33 : vector<1x32xf32>
    %35 = vector.shape_cast %34 : vector<1x32xf32> to vector<1x1x32xf32>
    %cst_21 = arith.constant dense<0.000000e+00> : vector<1xf32>
    %36 = vector.multi_reduction <add>, %35, %cst_21 [1, 2] : vector<1x1x32xf32> to vector<1xf32>
    %37 = vector.shape_cast %36 : vector<1xf32> to vector<1x1x1xf32>
    %38 = vector.extract %37[0, 0, 0] : f32 from vector<1x1x1xf32>
    %cst_22 = arith.constant 3.100000e+01 : f32
    %39 = arith.divf %38, %cst_22 : f32
    %40 = vector.broadcast %31 : f32 to vector<1x32xf32>
    %41 = arith.subf %26, %40 : vector<1x32xf32>
    %42 = math.rsqrt %39 : f32
    %43 = vector.broadcast %42 : f32 to vector<1x32xf32>
    %44 = arith.mulf %41, %43 : vector<1x32xf32>
    %45 = vector.shape_cast %44 : vector<1x32xf32> to vector<1x32xf32>
    %46 = vector.broadcast %45 : vector<1x32xf32> to vector<8x32xf32>
    %c0_23 = arith.constant 0 : index
    %c0_24 = arith.constant 0 : index
    %47 = vector.load %arg7[%c0_23, %c0_24] : memref<32x32xf32, #tpu.memory_space<vmem>>, vector<32x32xf32>
    %cst_25 = arith.constant dense<0.000000e+00> : vector<8x32xf32>
    %48 = tpu.matmul %46, %47, %cst_25 {dimension_numbers = #tpu.dot_dimension_numbers<[1], [0], [0], [1], [0, 0, 1, 1], [], []>} : vector<8x32xf32>, vector<32x32xf32>, vector<8x32xf32> -> vector<8x32xf32>
    %c0_26 = arith.constant 0 : index
    %c0_27 = arith.constant 0 : index
    %49 = vector.load %arg8[%c0_26, %c0_27] : memref<1x32xf32, #tpu.memory_space<vmem>>, vector<1x32xf32>
    %50 = vector.broadcast %49 : vector<1x32xf32> to vector<8x32xf32>
    %51 = arith.addf %48, %50 : vector<8x32xf32>
    %cst_28 = arith.constant 0.000000e+00 : f32
    %52 = vector.broadcast %cst_28 : f32 to vector<8x32xf32>
    %53 = arith.maximumf %51, %52 : vector<8x32xf32>
    %c0_29 = arith.constant 0 : index
    %c0_30 = arith.constant 0 : index
    %54 = vector.load %arg9[%c0_29, %c0_30] : memref<32x32xf32, #tpu.memory_space<vmem>>, vector<32x32xf32>
    %cst_31 = arith.constant dense<0.000000e+00> : vector<8x32xf32>
    %55 = tpu.matmul %53, %54, %cst_31 {dimension_numbers = #tpu.dot_dimension_numbers<[1], [0], [0], [1], [0, 0, 1, 1], [], []>} : vector<8x32xf32>, vector<32x32xf32>, vector<8x32xf32> -> vector<8x32xf32>
    %c0_32 = arith.constant 0 : index
    %c0_33 = arith.constant 0 : index
    %56 = vector.load %arg10[%c0_32, %c0_33] : memref<1x32xf32, #tpu.memory_space<vmem>>, vector<1x32xf32>
    %57 = vector.broadcast %56 : vector<1x32xf32> to vector<8x32xf32>
    %58 = arith.addf %55, %57 : vector<8x32xf32>
    %cst_34 = arith.constant 0.000000e+00 : f32
    %59 = vector.broadcast %cst_34 : f32 to vector<8x32xf32>
    %60 = arith.maximumf %58, %59 : vector<8x32xf32>
    %c0_35 = arith.constant 0 : index
    %c0_36 = arith.constant 0 : index
    %61 = vector.load %arg11[%c0_35, %c0_36] : memref<32x32xf32, #tpu.memory_space<vmem>>, vector<32x32xf32>
    %cst_37 = arith.constant dense<0.000000e+00> : vector<8x32xf32>
    %62 = tpu.matmul %60, %61, %cst_37 {dimension_numbers = #tpu.dot_dimension_numbers<[1], [0], [0], [1], [0, 0, 1, 1], [], []>} : vector<8x32xf32>, vector<32x32xf32>, vector<8x32xf32> -> vector<8x32xf32>
    %c0_38 = arith.constant 0 : index
    %c0_39 = arith.constant 0 : index
    %63 = vector.load %arg12[%c0_38, %c0_39] : memref<1x32xf32, #tpu.memory_space<vmem>>, vector<1x32xf32>
    %64 = vector.broadcast %63 : vector<1x32xf32> to vector<8x32xf32>
    %65 = arith.addf %62, %64 : vector<8x32xf32>
    %cst_40 = arith.constant 0.000000e+00 : f32
    %66 = vector.broadcast %cst_40 : f32 to vector<8x32xf32>
    %67 = arith.maximumf %65, %66 : vector<8x32xf32>
    %c0_41 = arith.constant 0 : index
    %c0_42 = arith.constant 0 : index
    %68 = vector.load %arg13[%c0_41, %c0_42] : memref<32x40xf32, #tpu.memory_space<vmem>>, vector<32x40xf32>
    %cst_43 = arith.constant dense<0.000000e+00> : vector<8x40xf32>
    %69 = tpu.matmul %67, %68, %cst_43 {dimension_numbers = #tpu.dot_dimension_numbers<[1], [0], [0], [1], [0, 0, 1, 1], [], []>} : vector<8x32xf32>, vector<32x40xf32>, vector<8x40xf32> -> vector<8x40xf32>
    %c0_44 = arith.constant 0 : index
    %c0_45 = arith.constant 0 : index
    %70 = vector.load %arg14[%c0_44, %c0_45] : memref<1x40xf32, #tpu.memory_space<vmem>>, vector<1x40xf32>
    %71 = vector.broadcast %70 : vector<1x40xf32> to vector<8x40xf32>
    %72 = arith.addf %69, %71 : vector<8x40xf32>
    %cst_46 = arith.constant 0.000000e+00 : f32
    %73 = vector.broadcast %cst_46 : f32 to vector<8x40xf32>
    %74 = arith.maximumf %72, %73 : vector<8x40xf32>
    %75 = vector.extract_strided_slice %74 {offsets = [0, 0], sizes = [1, 40], strides = [1, 1]} : vector<8x40xf32> to vector<1x40xf32>
    %c0_47 = arith.constant 0 : index
    %c0_48 = arith.constant 0 : index
    %76 = vector.load %arg15[%c0_47, %c0_48] : memref<1x40xf32, #tpu.memory_space<vmem>>, vector<1x40xf32>
    tpu.vector_store %arg15[%c0_47, %c0_48], %75 {strides = array<i32>} : memref<1x40xf32, #tpu.memory_space<vmem>>, vector<1x40xf32>,
    return
  }
}

</mosaic_0001>

<llo_original>
// kernel: hypernet_forward_numeric.3
$region0: #{hypernet_forward_numeric.3}
  #allocation0 [shape = 'u32[]', space=smem, size = 0x4, offset = 0x4, fixed_abs, tag = 'smem constant byte address 0x4 - core index']
  #allocation1 [shape = 'u32[144,128]{1,0:T(1,128)}', space=vmem, size = 0x12000, scoped, tag = 'internal scratch']
  %s0 = inlined_call_operand.vmem [shape: bf16[3136,400], index: 0, kind: input, shape index: {}]
  %s1 = inlined_call_operand.vmem [shape: bf16[400,128], index: 1, kind: input, shape index: {}]
  %s2 = inlined_call_operand.vmem [shape: f32[1,128], index: 2, kind: input, shape index: {}]
  %s3 = inlined_call_operand.vmem [shape: bf16[3136,128], index: 3, kind: output, shape index: {}]
  %s4 = sld [smem:[#allocation0]]
  $region45: #{hypernet_forward_numeric.3} parent=0
    _
  %s6 = ssub.s32 1, %s4
  %s7 = scalar_select 0, %s6, %s4
  loop: start=0, step=1, limit=6
  $region2: #{hypernet_forward_numeric.3} parent=0 // loop_pre_header
    _
  $region3: #{hypernet_forward_numeric.3} parent=0 // loop_header
    %s9 = sphi 0, %s13
    %p10 = scmp.ge.s32.totalorder %s9, 6
    %s19 = sphi 0, %s21
    %s22 = sphi 0, %s19
    %s23 = sphi 0, %s22
    %s39 = sphi 0, %s23
    %s43 = sphi 0, %s43
    %s45 = sphi 0, %s43
    %s46 = sphi 0, %s45
    %s60 = sphi 0, %s46
    %s64 = sphi 0, %s64
    %s66 = sphi 0, %s64
    %s67 = sphi 0, %s66
    %s81 = sphi 0, %s67
    %s87 = sphi 0, %s89
    %s90 = sphi 0, %s87
    %s91 = sphi 0, %s90
    %s107 = sphi 0, %s91
  $region4: #{hypernet_forward_numeric.3} parent=0 // loop_header_branch
    %12 = sbr.rel (%p10) target = $region8
  $region5: #{hypernet_forward_numeric.3} parent=0 // loop_body
    %s14 = ssub.s32 %s9, 1
    %s15 = ssub.s32 %s9, 2
    %s16 = sadd.s32 %s9, 1
    %s17 = ssub.s32 %s9, %s16
    %p18 = scmp.eq.s32.totalorder %s17, 0
    %s20 = sadd.s32 %s19, 1
    %s21 = scalar_select %p18, %s19, %s20
    %p24 = pneg %p18
    %p25 = scmp.eq.s32.totalorder %s9, 3
    %p26 = por %p24, %p25
    %p27 = scmp.ne.s32.totalorder %s19, %s22
    %p28 = scmp.eq.s32.totalorder %s9, 0
    %p29 = por %p27, %p28
    %p30 = scmp.ne.s32.totalorder %s19, %s22
    %p31 = scmp.eq.s32.totalorder %s14, 3
    %p32 = por %p30, %p31
    %p33 = scmp.ne.s32.totalorder %s22, %s23
    %p34 = scmp.eq.s32.totalorder %s14, 0
    %p35 = por %p33, %p34
    %p36 = scmp.ne.s32.totalorder %s22, %s23
    %p37 = scmp.eq.s32.totalorder %s15, 3
    %p38 = por %p36, %p37
    %p40 = scmp.ne.s32.totalorder %s23, %s39
    %p41 = scmp.eq.s32.totalorder %s15, 0
    %p42 = por %p40, %p41
    %s44 = sadd.s32 %s43, 1
    %p47 = scmp.eq.s32.totalorder %s9, 3
    %p48 = scmp.ne.s32.totalorder %s43, %s45
    %p49 = scmp.eq.s32.totalorder %s9, 0
    %p50 = por %p48, %p49
    %p51 = scmp.ne.s32.totalorder %s43, %s45
    %p52 = scmp.eq.s32.totalorder %s14, 3
    %p53 = por %p51, %p52
    %p54 = scmp.ne.s32.totalorder %s45, %s46
    %p55 = scmp.eq.s32.totalorder %s14, 0
    %p56 = por %p54, %p55
    %p57 = scmp.ne.s32.totalorder %s45, %s46
    %p58 = scmp.eq.s32.totalorder %s15, 3
    %p59 = por %p57, %p58
    %p61 = scmp.ne.s32.totalorder %s46, %s60
    %p62 = scmp.eq.s32.totalorder %s15, 0
    %p63 = por %p61, %p62
    %s65 = sadd.s32 %s64, 1
    %p68 = scmp.eq.s32.totalorder %s9, 3
    %p69 = scmp.ne.s32.totalorder %s64, %s66
    %p70 = scmp.eq.s32.totalorder %s9, 0
    %p71 = por %p69, %p70
    %p72 = scmp.ne.s32.totalorder %s64, %s66
    %p73 = scmp.eq.s32.totalorder %s14, 3
    %p74 = por %p72, %p73
    %p75 = scmp.ne.s32.totalorder %s66, %s67
    %p76 = scmp.eq.s32.totalorder %s14, 0
    %p77 = por %p75, %p76
    %p78 = scmp.ne.s32.totalorder %s66, %s67
    %p79 = scmp.eq.s32.totalorder %s15, 3
    %p80 = por %p78, %p79
    %p82 = scmp.ne.s32.totalorder %s67, %s81
    %p83 = scmp.eq.s32.totalorder %s15, 0
    %p84 = por %p82, %p83
    %s85 = ssub.s32 %s9, %s16
    %p86 = scmp.eq.s32.totalorder %s85, 0
    %s88 = sadd.s32 %s87, 1
    %s89 = scalar_select %p86, %s87, %s88
    %p92 = pneg %p86
    %p93 = scmp.eq.s32.totalorder %s9, 3
    %p94 = por %p92, %p93
    %p95 = scmp.ne.s32.totalorder %s87, %s90
    %p96 = scmp.eq.s32.totalorder %s9, 0
    %p97 = por %p95, %p96
    %p98 = scmp.ne.s32.totalorder %s87, %s90
    %p99 = scmp.eq.s32.totalorder %s14, 3
    %p100 = por %p98, %p99
    %p101 = scmp.ne.s32.totalorder %s90, %s91
    %p102 = scmp.eq.s32.totalorder %s14, 0
    %p103 = por %p101, %p102
    %p104 = scmp.ne.s32.totalorder %s90, %s91
    %p105 = scmp.eq.s32.totalorder %s15, 3
    %p106 = por %p104, %p105
    %p108 = scmp.ne.s32.totalorder %s91, %s107
    %p109 = scmp.eq.s32.totalorder %s15, 0
    %p110 = por %p108, %p109
    %p111 = scmp.le.s32.totalorder 1, %s9
    %p112 = scmp.lt.s32.totalorder %s9, 5
    %p113 = pnand %p111, %p112
    %p114 = pneg %p113
    // Predicated region
    $region9: #{hypernet_forward_numeric.3} parent=5 // pred_check
      _
    $region10: #{hypernet_forward_numeric.3} parent=5 // pred_check_branch
      %116 = sbr.rel (%p113) target = $region12
    $region11: #{hypernet_forward_numeric.3} parent=5 // pred_region
      %s117 = ssub.s32 %s9, 1
      // Predicated region
      $region13: #{hypernet_forward_numeric.3} parent=11 // pred_check
        %p118 = pneg %p56
      $region14: #{hypernet_forward_numeric.3} parent=11 // pred_check_branch
        %120 = sbr.rel (%p118) target = $region16
      $region15: #{hypernet_forward_numeric.3} parent=11 // pred_region
        _
      $region16: #{hypernet_forward_numeric.3} parent=11 // pred_fallthru
        _
      // Predicated region
      $region17: #{hypernet_forward_numeric.3} parent=11 // pred_check
        %p121 = pneg %p77
      $region18: #{hypernet_forward_numeric.3} parent=11 // pred_check_branch
        %123 = sbr.rel (%p121) target = $region20
      $region19: #{hypernet_forward_numeric.3} parent=11 // pred_region
        _
      $region20: #{hypernet_forward_numeric.3} parent=11 // pred_fallthru
        _
    $region12: #{hypernet_forward_numeric.3} parent=5 // pred_fallthru
      _
    %p124 = scmp.lt.s32.totalorder %s9, 4
    // Predicated region
    $region21: #{hypernet_forward_numeric.3} parent=5 // pred_check
      %p125 = pneg %p124
    $region22: #{hypernet_forward_numeric.3} parent=5 // pred_check_branch
      %127 = sbr.rel (%p125) target = $region24
    $region23: #{hypernet_forward_numeric.3} parent=5 // pred_region
      // Predicated region
      $region25: #{hypernet_forward_numeric.3} parent=23 // pred_check
        %p128 = pneg %p29
      $region26: #{hypernet_forward_numeric.3} parent=23 // pred_check_branch
        %130 = sbr.rel (%p128) target = $region28
      $region27: #{hypernet_forward_numeric.3} parent=23 // pred_region
        %s131 = smul.u32 98, %s9
        %p132 = scmp.lt.s32.totalorder %s131, 391
        %s133 = scalar_select %p132, %s131, 391
        %s134 = smul.addr %s133, 4
        %s135 = smul.addr %s134, 4
        %s136 = scalar_lea.vmem %s0, %s135
        %s137 = smul.u32 98, %s9
      $region28: #{hypernet_forward_numeric.3} parent=23 // pred_fallthru
        _
    $region24: #{hypernet_forward_numeric.3} parent=5 // pred_fallthru
      _
    %p138 = scmp.le.s32.totalorder 1, %s9
    %p139 = scmp.lt.s32.totalorder %s9, 5
    %p140 = pnand %p138, %p139
    %p141 = pneg %p140
    // Predicated region
    $region29: #{hypernet_forward_numeric.3} parent=5 // pred_check
      _
    $region30: #{hypernet_forward_numeric.3} parent=5 // pred_check_branch
      %143 = sbr.rel (%p140) target = $region32
    $region31: #{hypernet_forward_numeric.3} parent=5 // pred_region
      %s144 = ssub.s32 %s9, 1
      %s145 = smul.u32 98, %s14
      %p146 = scmp.lt.s32.totalorder %s145, 391
      %s147 = scalar_select %p146, %s145, 391
      %s148 = smul.addr %s147, 4
      %s149 = smul.addr %s148, 4
      %s150 = scalar_lea.vmem %s0, %s149
      %p151 = pneg %p35
      %p152 = pneg %p32
      %p153 = pneg %p56
      %p154 = pneg %p53
      %p155 = pneg %p77
      %p156 = pneg %p74
      %p157 = pneg %p103
      %p158 = pneg %p100
      %s159 = smul.u32 98, %s14
      %p160 = scmp.lt.s32.totalorder %s159, 391
      %s161 = scalar_select %p160, %s159, 391
      %s162 = smul.addr %s161, 4
      %s163 = scalar_lea.vmem %s3, %s162
      %s164 = smul.u32 98, %s14
      %p165 = scmp.lt.s32.totalorder %s164, 391
      %s166 = scalar_select %p165, %s164, 391
      %s167 = smul.addr %s166, 4
      %s168 = smul.addr %s167, 4
      %s169 = scalar_lea.vmem %s0, %s168
      %s170 = smul.u32 98, %s14
      %s171 = smul.u32 98, %s14
      %p172 = scmp.lt.s32.totalorder %s171, 391
      %s173 = scalar_select %p172, %s171, 391
      %s174 = smul.addr %s173, 4
      %s175 = scalar_lea.vmem %s3, %s174
      %s176 = smul.u32 98, %s14
      %v178 = vld [vmem:[%s169] sm:$0xff]
      %v179 = vld [vmem:[%s169 + $0x8] sm:$0xff]
      %v180 = vld [vmem:[%s169 + $0x10] sm:$0xff]
      %v181 = vld [vmem:[%s169 + $0x18] sm:$0xff]
      %v182 = vld [vmem:[%s169 + $0x20] sm:$0xff]
      %v183 = vld [vmem:[%s169 + $0x28] sm:$0xff]
      %v184 = vld [vmem:[%s169 + $0x30] sm:$0xff]
      %v185 = vld [vmem:[%s169 + $0x38] sm:$0xff]
      %v186 = vld [vmem:[%s169 + $0x40] sm:$0xff]
      %v187 = vld [vmem:[%s169 + $0x48] sm:$0xff]
      %v188 = vld [vmem:[%s169 + $0x50] sm:$0xff]
      %v189 = vld [vmem:[%s169 + $0x58] sm:$0xff]
      %v190 = vld [vmem:[%s169 + $0x60] sm:$0xff]
      %v191 = vld [vmem:[%s169 + $0x68] sm:$0xff]
      %v192 = vld [vmem:[%s169 + $0x70] sm:$0xff]
      %v193 = vld [vmem:[%s169 + $0x78] sm:$0xff]
      %v194 = vld [vmem:[%s169 + $0x80] sm:$0xff]
      %v195 = vld [vmem:[%s169 + $0x88] sm:$0xff]
      %v196 = vld [vmem:[%s169 + $0x90] sm:$0xff]
      %v197 = vld [vmem:[%s169 + $0x98] sm:$0xff]
      %v198 = vld [vmem:[%s169 + $0xa0] sm:$0xff]
      %v199 = vld [vmem:[%s169 + $0xa8] sm:$0xff]
      %v200 = vld [vmem:[%s169 + $0xb0] sm:$0xff]
      %v201 = vld [vmem:[%s169 + $0xb8] sm:$0xff]
      %v202 = vld [vmem:[%s169 + $0xc0] sm:$0xff]
      %v203 = vld [vmem:[%s169 + $0xc8] sm:$0xff]
      %v204 = vld [vmem:[%s169 + $0xd0] sm:$0xff]
      %v205 = vld [vmem:[%s169 + $0xd8] sm:$0xff]
      %v206 = vld [vmem:[%s169 + $0xe0] sm:$0xff]
      %v207 = vld [vmem:[%s169 + $0xe8] sm:$0xff]
      %v208 = vld [vmem:[%s169 + $0xf0] sm:$0xff]
      %v209 = vld [vmem:[%s169 + $0xf8] sm:$0xff]
      %v210 = vld [vmem:[%s169 + $0x100] sm:$0xff]
      %v211 = vld [vmem:[%s169 + $0x108] sm:$0xff]
      %v212 = vld [vmem:[%s169 + $0x110] sm:$0xff]
      %v213 = vld [vmem:[%s169 + $0x118] sm:$0xff]
      %v214 = vld [vmem:[%s169 + $0x120] sm:$0xff]
      %v215 = vld [vmem:[%s169 + $0x128] sm:$0xff]
      %v216 = vld [vmem:[%s169 + $0x130] sm:$0xff]
      %v217 = vld [vmem:[%s169 + $0x138] sm:$0xff]
      %v218 = vld [vmem:[%s169 + $0x140] sm:$0xff]
      %v219 = vld [vmem:[%s169 + $0x148] sm:$0xff]
      %v220 = vld [vmem:[%s169 + $0x150] sm:$0xff]
      %v221 = vld [vmem:[%s169 + $0x158] sm:$0xff]
      %v222 = vld [vmem:[%s169 + $0x160] sm:$0xff]
      %v223 = vld [vmem:[%s169 + $0x168] sm:$0xff]
      %v224 = vld [vmem:[%s169 + $0x170] sm:$0xff]
      %v225 = vld [vmem:[%s169 + $0x178] sm:$0xff]
      %v226 = vld [vmem:[%s169 + $0x180] sm:$0xff]
      %v227 = vld [vmem:[%s169 + $0x188] sm:$0xff]
      %v228 = vld [vmem:[%s169 + $0x190] sm:$0xff]
      %v229 = vld [vmem:[%s169 + $0x198] sm:$0xff]
      %v230 = vld [vmem:[%s169 + $0x1a0] sm:$0xff]
      %v231 = vld [vmem:[%s169 + $0x1a8] sm:$0xff]
      %v232 = vld [vmem:[%s169 + $0x1b0] sm:$0xff]
      %v233 = vld [vmem:[%s169 + $0x1b8] sm:$0xff]
      %v234 = vld [vmem:[%s169 + $0x1c0] sm:$0xff]
      %v235 = vld [vmem:[%s169 + $0x1c8] sm:$0xff]
      %v236 = vld [vmem:[%s169 + $0x1d0] sm:$0xff]
      %v237 = vld [vmem:[%s169 + $0x1d8] sm:$0xff]
      %v238 = vld [vmem:[%s169 + $0x1e0] sm:$0xff]
      %v239 = vld [vmem:[%s169 + $0x1e8] sm:$0xff]
      %v240 = vld [vmem:[%s169 + $0x1f0] sm:$0xff]
      %v241 = vld [vmem:[%s169 + $0x1f8] sm:$0xff]
      %v242 = vld [vmem:[%s169 + $0x200] sm:$0xff]
      %v243 = vld [vmem:[%s169 + $0x208] sm:$0xff]
      %v244 = vld [vmem:[%s169 + $0x210] sm:$0xff]
      %v245 = vld [vmem:[%s169 + $0x218] sm:$0xff]
      %v246 = vld [vmem:[%s169 + $0x220] sm:$0xff]
      %v247 = vld [vmem:[%s169 + $0x228] sm:$0xff]
      %v248 = vld [vmem:[%s169 + $0x230] sm:$0xff]
      %v249 = vld [vmem:[%s169 + $0x238] sm:$0xff]
      %v250 = vld [vmem:[%s169 + $0x240] sm:$0xff]
      %v251 = vld [vmem:[%s169 + $0x248] sm:$0xff]
      %v252 = vld [vmem:[%s169 + $0x250] sm:$0xff]
      %v253 = vld [vmem:[%s169 + $0x258] sm:$0xff]
      %v254 = vld [vmem:[%s169 + $0x260] sm:$0xff]
      %v255 = vld [vmem:[%s169 + $0x268] sm:$0xff]
      %v256 = vld [vmem:[%s169 + $0x270] sm:$0xff]
      %v257 = vld [vmem:[%s169 + $0x278] sm:$0xff]
      %v258 = vld [vmem:[%s169 + $0x280] sm:$0xff]
      %v259 = vld [vmem:[%s169 + $0x288] sm:$0xff]
      %v260 = vld [vmem:[%s169 + $0x290] sm:$0xff]
      %v261 = vld [vmem:[%s169 + $0x298] sm:$0xff]
      %v262 = vld [vmem:[%s169 + $0x2a0] sm:$0xff]
      %v263 = vld [vmem:[%s169 + $0x2a8] sm:$0xff]
      %v264 = vld [vmem:[%s169 + $0x2b0] sm:$0xff]
      %v265 = vld [vmem:[%s169 + $0x2b8] sm:$0xff]
      %v266 = vld [vmem:[%s169 + $0x2c0] sm:$0xff]
      %v267 = vld [vmem:[%s169 + $0x2c8] sm:$0xff]
      %v268 = vld [vmem:[%s169 + $0x2d0] sm:$0xff]
      %v269 = vld [vmem:[%s169 + $0x2d8] sm:$0xff]
      %v270 = vld [vmem:[%s169 + $0x2e0] sm:$0xff]
      %v271 = vld [vmem:[%s169 + $0x2e8] sm:$0xff]
      %v272 = vld [vmem:[%s169 + $0x2f0] sm:$0xff]
      %v273 = vld [vmem:[%s169 + $0x2f8] sm:$0xff]
      %v274 = vld [vmem:[%s169 + $0x300] sm:$0xff]
      %v275 = vld [vmem:[%s169 + $0x308] sm:$0xff]
      %v276 = vld [vmem:[%s169 + $0x310] sm:$0xff]
      %v277 = vld [vmem:[%s169 + $0x318] sm:$0xff]
      %v278 = vld [vmem:[%s169 + $0x320] sm:$0xff]
      %v279 = vld [vmem:[%s169 + $0x328] sm:$0xff]
      %v280 = vld [vmem:[%s169 + $0x330] sm:$0xff]
      %v281 = vld [vmem:[%s169 + $0x338] sm:$0xff]
      %v282 = vld [vmem:[%s169 + $0x340] sm:$0xff]
      %v283 = vld [vmem:[%s169 + $0x348] sm:$0xff]
      %v284 = vld [vmem:[%s169 + $0x350] sm:$0xff]
      %v285 = vld [vmem:[%s169 + $0x358] sm:$0xff]
      %v286 = vld [vmem:[%s169 + $0x360] sm:$0xff]
      %v287 = vld [vmem:[%s169 + $0x368] sm:$0xff]
      %v288 = vld [vmem:[%s169 + $0x370] sm:$0xff]
      %v289 = vld [vmem:[%s169 + $0x378] sm:$0xff]
      %v290 = vld [vmem:[%s169 + $0x380] sm:$0xff]
      %v291 = vld [vmem:[%s169 + $0x388] sm:$0xff]
      %v292 = vld [vmem:[%s169 + $0x390] sm:$0xff]
      %v293 = vld [vmem:[%s169 + $0x398] sm:$0xff]
      %v294 = vld [vmem:[%s169 + $0x3a0] sm:$0xff]
      %v295 = vld [vmem:[%s169 + $0x3a8] sm:$0xff]
      %v296 = vld [vmem:[%s169 + $0x3b0] sm:$0xff]
      %v297 = vld [vmem:[%s169 + $0x3b8] sm:$0xff]
      %v298 = vld [vmem:[%s169 + $0x3c0] sm:$0xff]
      %v299 = vld [vmem:[%s169 + $0x3c8] sm:$0xff]
      %v300 = vld [vmem:[%s169 + $0x3d0] sm:$0xff]
      %v301 = vld [vmem:[%s169 + $0x3d8] sm:$0xff]
      %v302 = vld [vmem:[%s169 + $0x3e0] sm:$0xff]
      %v303 = vld [vmem:[%s169 + $0x3e8] sm:$0xff]
      %v304 = vld [vmem:[%s169 + $0x3f0] sm:$0xff]
      %v305 = vld [vmem:[%s169 + $0x3f8] sm:$0xff]
      %v306 = vld [vmem:[%s169 + $0x400] sm:$0xff]
      %v307 = vld [vmem:[%s169 + $0x408] sm:$0xff]
      %v308 = vld [vmem:[%s169 + $0x410] sm:$0xff]
      %v309 = vld [vmem:[%s169 + $0x418] sm:$0xff]
      %v310 = vld [vmem:[%s169 + $0x420] sm:$0xff]
      %v311 = vld [vmem:[%s169 + $0x428] sm:$0xff]
      %v312 = vld [vmem:[%s169 + $0x430] sm:$0xff]
      %v313 = vld [vmem:[%s169 + $0x438] sm:$0xff]
      %v314 = vld [vmem:[%s169 + $0x440] sm:$0xff]
      %v315 = vld [vmem:[%s169 + $0x448] sm:$0xff]
      %v316 = vld [vmem:[%s169 + $0x450] sm:$0xff]
      %v317 = vld [vmem:[%s169 + $0x458] sm:$0xff]
      %v318 = vld [vmem:[%s169 + $0x460] sm:$0xff]
      %v319 = vld [vmem:[%s169 + $0x468] sm:$0xff]
      %v320 = vld [vmem:[%s169 + $0x470] sm:$0xff]
      %v321 = vld [vmem:[%s169 + $0x478] sm:$0xff]
      %v322 = vld [vmem:[%s169 + $0x480] sm:$0xff]
      %v323 = vld [vmem:[%s169 + $0x488] sm:$0xff]
      %v324 = vld [vmem:[%s169 + $0x490] sm:$0xff]
      %v325 = vld [vmem:[%s169 + $0x498] sm:$0xff]
      %v326 = vld [vmem:[%s169 + $0x4a0] sm:$0xff]
      %v327 = vld [vmem:[%s169 + $0x4a8] sm:$0xff]
      %v328 = vld [vmem:[%s169 + $0x4b0] sm:$0xff]
      %v329 = vld [vmem:[%s169 + $0x4b8] sm:$0xff]
      %v330 = vld [vmem:[%s169 + $0x4c0] sm:$0xff]
      %v331 = vld [vmem:[%s169 + $0x4c8] sm:$0xff]
      %v332 = vld [vmem:[%s169 + $0x4d0] sm:$0xff]
      %v333 = vld [vmem:[%s169 + $0x4d8] sm:$0xff]
      %v334 = vld [vmem:[%s169 + $0x4e0] sm:$0xff]
      %v335 = vld [vmem:[%s169 + $0x4e8] sm:$0xff]
      %v336 = vld [vmem:[%s169 + $0x4f0] sm:$0xff]
      %v337 = vld [vmem:[%s169 + $0x4f8] sm:$0xff]
      %v338 = vld [vmem:[%s169 + $0x500] sm:$0xff]
      %v339 = vld [vmem:[%s169 + $0x508] sm:$0xff]
      %v340 = vld [vmem:[%s169 + $0x510] sm:$0xff]
      %v341 = vld [vmem:[%s169 + $0x518] sm:$0xff]
      %v342 = vld [vmem:[%s169 + $0x520] sm:$0xff]
      %v343 = vld [vmem:[%s169 + $0x528] sm:$0xff]
      %v344 = vld [vmem:[%s169 + $0x530] sm:$0xff]
      %v345 = vld [vmem:[%s169 + $0x538] sm:$0xff]
      %v346 = vld [vmem:[%s169 + $0x540] sm:$0xff]
      %v347 = vld [vmem:[%s169 + $0x548] sm:$0xff]
      %v348 = vld [vmem:[%s169 + $0x550] sm:$0xff]
      %v349 = vld [vmem:[%s169 + $0x558] sm:$0xff]
      %v350 = vld [vmem:[%s169 + $0x560] sm:$0xff]
      %v351 = vld [vmem:[%s169 + $0x568] sm:$0xff]
      %v352 = vld [vmem:[%s169 + $0x570] sm:$0xff]
      %v353 = vld [vmem:[%s169 + $0x578] sm:$0xff]
      %v354 = vld [vmem:[%s169 + $0x580] sm:$0xff]
      %v355 = vld [vmem:[%s169 + $0x588] sm:$0xff]
      %v356 = vld [vmem:[%s169 + $0x590] sm:$0xff]
      %v357 = vld [vmem:[%s169 + $0x598] sm:$0xff]
      %v358 = vld [vmem:[%s169 + $0x5a0] sm:$0xff]
      %v359 = vld [vmem:[%s169 + $0x5a8] sm:$0xff]
      %v360 = vld [vmem:[%s169 + $0x5b0] sm:$0xff]
      %v361 = vld [vmem:[%s169 + $0x5b8] sm:$0xff]
      %v362 = vld [vmem:[%s169 + $0x5c0] sm:$0xff]
      %v363 = vld [vmem:[%s169 + $0x5c8] sm:$0xff]
      %v364 = vld [vmem:[%s169 + $0x5d0] sm:$0xff]
      %v365 = vld [vmem:[%s169 + $0x5d8] sm:$0xff]
      %v366 = vld [vmem:[%s169 + $0x5e0] sm:$0xff]
      %v367 = vld [vmem:[%s169 + $0x5e8] sm:$0xff]
      %v368 = vld [vmem:[%s169 + $0x5f0] sm:$0xff]
      %v369 = vld [vmem:[%s169 + $0x5f8] sm:$0xff]
      %v370 = vld [vmem:[%s169 + $0x600] sm:$0xff]
      %v371 = vld [vmem:[%s169 + $0x608] sm:$0xff]
      %v372 = vld [vmem:[%s169 + $0x610] sm:$0xff]
      %v373 = vld [vmem:[%s169 + $0x618] sm:$0xff]
      %v374 = vld [vmem:[%s1] sm:$0xf]
      %v375 = vld [vmem:[%s1 + $0x4] sm:$0xf]
      %v376 = vld [vmem:[%s1 + $0x8] sm:$0xf]
      %v377 = vld [vmem:[%s1 + $0xc] sm:$0xf]
      %v378 = vld [vmem:[%s1 + $0x10] sm:$0xf]
      %v379 = vld [vmem:[%s1 + $0x14] sm:$0xf]
      %v380 = vld [vmem:[%s1 + $0x18] sm:$0xf]
      %v381 = vld [vmem:[%s1 + $0x1c] sm:$0xf]
      %v382 = vld [vmem:[%s1 + $0x20] sm:$0xf]
      %v383 = vld [vmem:[%s1 + $0x24] sm:$0xf]
      %v384 = vld [vmem:[%s1 + $0x28] sm:$0xf]
      %v385 = vld [vmem:[%s1 + $0x2c] sm:$0xf]
      %v386 = vld [vmem:[%s1 + $0x30] sm:$0xf]
      %v387 = vld [vmem:[%s1 + $0x34] sm:$0xf]
      %v388 = vld [vmem:[%s1 + $0x38] sm:$0xf]
      %v389 = vld [vmem:[%s1 + $0x3c] sm:$0xf]
      %v390 = vld [vmem:[%s1 + $0x40] sm:$0xf]
      %v391 = vld [vmem:[%s1 + $0x44] sm:$0xf]
      %v392 = vld [vmem:[%s1 + $0x48] sm:$0xf]
      %v393 = vld [vmem:[%s1 + $0x4c] sm:$0xf]
      %v394 = vld [vmem:[%s1 + $0x50] sm:$0xf]
      %v395 = vld [vmem:[%s1 + $0x54] sm:$0xf]
      %v396 = vld [vmem:[%s1 + $0x58] sm:$0xf]
      %v397 = vld [vmem:[%s1 + $0x5c] sm:$0xf]
      %v398 = vld [vmem:[%s1 + $0x60] sm:$0xf]
      %v399 = vld [vmem:[%s1 + $0x64] sm:$0xf]
      %v400 = vld [vmem:[%s1 + $0x68] sm:$0xf]
      %v401 = vld [vmem:[%s1 + $0x6c] sm:$0xf]
      %v402 = vld [vmem:[%s1 + $0x70] sm:$0xf]
      %v403 = vld [vmem:[%s1 + $0x74] sm:$0xf]
      %v404 = vld [vmem:[%s1 + $0x78] sm:$0xf]
      %v405 = vld [vmem:[%s1 + $0x7c] sm:$0xf]
      %v406 = vld [vmem:[%s1 + $0x80] sm:$0xf]
      %v407 = vld [vmem:[%s1 + $0x84] sm:$0xf]
      %v408 = vld [vmem:[%s1 + $0x88] sm:$0xf]
      %v409 = vld [vmem:[%s1 + $0x8c] sm:$0xf]
      %v410 = vld [vmem:[%s1 + $0x90] sm:$0xf]
      %v411 = vld [vmem:[%s1 + $0x94] sm:$0xf]
      %v412 = vld [vmem:[%s1 + $0x98] sm:$0xf]
      %v413 = vld [vmem:[%s1 + $0x9c] sm:$0xf]
      %v414 = vld [vmem:[%s1 + $0xa0] sm:$0xf]
      %v415 = vld [vmem:[%s1 + $0xa4] sm:$0xf]
      %v416 = vld [vmem:[%s1 + $0xa8] sm:$0xf]
      %v417 = vld [vmem:[%s1 + $0xac] sm:$0xf]
      %v418 = vld [vmem:[%s1 + $0xb0] sm:$0xf]
      %v419 = vld [vmem:[%s1 + $0xb4] sm:$0xf]
      %v420 = vld [vmem:[%s1 + $0xb8] sm:$0xf]
      %v421 = vld [vmem:[%s1 + $0xbc] sm:$0xf]
      %v422 = vld [vmem:[%s1 + $0xc0] sm:$0xf]
      %v423 = vld [vmem:[%s1 + $0xc4] sm:$0xf]
      %v424 = vld [vmem:[%s2] sm:$0x1]
      %v426 = vlaneseq
      %v427 = vshrl.u32 %v426, 7
      %v428 = vsub.s32 0, %v427
      %v429 = vrot.slane %v424, %v428
      %v627 = vunpack.c.l.b16 %v178
      %v628 = vunpack.c.h.b16 %v178
      %v629 = vunpack.c.l.b16 %v179
      %v630 = vunpack.c.h.b16 %v179
      %v631 = vunpack.c.l.b16 %v180
      %v632 = vunpack.c.h.b16 %v180
      %v633 = vunpack.c.l.b16 %v181
      %v634 = vunpack.c.h.b16 %v181
      %v635 = vunpack.c.l.b16 %v182
      %v636 = vunpack.c.h.b16 %v182
      %v637 = vunpack.c.l.b16 %v183
      %v638 = vunpack.c.h.b16 %v183
      %v639 = vunpack.c.l.b16 %v184
      %v640 = vunpack.c.h.b16 %v184
      %v641 = vunpack.c.l.b16 %v185
      %v642 = vunpack.c.h.b16 %v185
      %v643 = vunpack.c.l.b16 %v186
      %v644 = vunpack.c.h.b16 %v186
      %v645 = vunpack.c.l.b16 %v187
      %v646 = vunpack.c.h.b16 %v187
      %v647 = vunpack.c.l.b16 %v188
      %v648 = vunpack.c.h.b16 %v188
      %v649 = vunpack.c.l.b16 %v189
      %v650 = vunpack.c.h.b16 %v189
      %v651 = vunpack.c.l.b16 %v190
      %v652 = vunpack.c.h.b16 %v190
      %v653 = vunpack.c.l.b16 %v191
      %v654 = vunpack.c.h.b16 %v191
      %v655 = vunpack.c.l.b16 %v192
      %v656 = vunpack.c.h.b16 %v192
      %v657 = vunpack.c.l.b16 %v193
      %v658 = vunpack.c.h.b16 %v193
      %v659 = vunpack.c.l.b16 %v194
      %v660 = vunpack.c.h.b16 %v194
      %v661 = vunpack.c.l.b16 %v195
      %v662 = vunpack.c.h.b16 %v195
      %v663 = vunpack.c.l.b16 %v196
      %v664 = vunpack.c.h.b16 %v196
      %v665 = vunpack.c.l.b16 %v197
      %v666 = vunpack.c.h.b16 %v197
      %v667 = vunpack.c.l.b16 %v198
      %v668 = vunpack.c.h.b16 %v198
      %v669 = vunpack.c.l.b16 %v199
      %v670 = vunpack.c.h.b16 %v199
      %v671 = vunpack.c.l.b16 %v200
      %v672 = vunpack.c.h.b16 %v200
      %v673 = vunpack.c.l.b16 %v201
      %v674 = vunpack.c.h.b16 %v201
      %v675 = vunpack.c.l.b16 %v202
      %v676 = vunpack.c.h.b16 %v202
      %v677 = vunpack.c.l.b16 %v203
      %v678 = vunpack.c.h.b16 %v203
      %v679 = vunpack.c.l.b16 %v204
      %v680 = vunpack.c.h.b16 %v204
      %v681 = vunpack.c.l.b16 %v205
      %v682 = vunpack.c.h.b16 %v205
      %v683 = vunpack.c.l.b16 %v206
      %v684 = vunpack.c.h.b16 %v206
      %v685 = vunpack.c.l.b16 %v207
      %v686 = vunpack.c.h.b16 %v207
      %v687 = vunpack.c.l.b16 %v208
      %v688 = vunpack.c.h.b16 %v208
      %v689 = vunpack.c.l.b16 %v209
      %v690 = vunpack.c.h.b16 %v209
      %v691 = vunpack.c.l.b16 %v210
      %v692 = vunpack.c.h.b16 %v210
      %v693 = vunpack.c.l.b16 %v211
      %v694 = vunpack.c.h.b16 %v211
      %v695 = vunpack.c.l.b16 %v212
      %v696 = vunpack.c.h.b16 %v212
      %v697 = vunpack.c.l.b16 %v213
      %v698 = vunpack.c.h.b16 %v213
      %v699 = vunpack.c.l.b16 %v214
      %v700 = vunpack.c.h.b16 %v214
      %v701 = vunpack.c.l.b16 %v215
      %v702 = vunpack.c.h.b16 %v215
      %v703 = vunpack.c.l.b16 %v216
      %v704 = vunpack.c.h.b16 %v216
      %v705 = vunpack.c.l.b16 %v217
      %v706 = vunpack.c.h.b16 %v217
      %v707 = vunpack.c.l.b16 %v218
      %v708 = vunpack.c.h.b16 %v218
      %v709 = vunpack.c.l.b16 %v219
      %v710 = vunpack.c.h.b16 %v219
      %v711 = vunpack.c.l.b16 %v220
      %v712 = vunpack.c.h.b16 %v220
      %v713 = vunpack.c.l.b16 %v221
      %v714 = vunpack.c.h.b16 %v221
      %v715 = vunpack.c.l.b16 %v222
      %v716 = vunpack.c.h.b16 %v222
      %v717 = vunpack.c.l.b16 %v223
      %v718 = vunpack.c.h.b16 %v223
      %v719 = vunpack.c.l.b16 %v224
      %v720 = vunpack.c.h.b16 %v224
      %v721 = vunpack.c.l.b16 %v225
      %v722 = vunpack.c.h.b16 %v225
      %v723 = vunpack.c.l.b16 %v226
      %v724 = vunpack.c.h.b16 %v226
      %v725 = vunpack.c.l.b16 %v227
      %v726 = vunpack.c.h.b16 %v227
      %v727 = vunpack.c.l.b16 %v228
      %v728 = vunpack.c.h.b16 %v228
      %v729 = vunpack.c.l.b16 %v229
      %v730 = vunpack.c.h.b16 %v229
      %v731 = vunpack.c.l.b16 %v230
      %v732 = vunpack.c.h.b16 %v230
      %v733 = vunpack.c.l.b16 %v231
      %v734 = vunpack.c.h.b16 %v231
      %v735 = vunpack.c.l.b16 %v232
      %v736 = vunpack.c.h.b16 %v232
      %v737 = vunpack.c.l.b16 %v233
      %v738 = vunpack.c.h.b16 %v233
      %v739 = vunpack.c.l.b16 %v234
      %v740 = vunpack.c.h.b16 %v234
      %v741 = vunpack.c.l.b16 %v235
      %v742 = vunpack.c.h.b16 %v235
      %v743 = vunpack.c.l.b16 %v236
      %v744 = vunpack.c.h.b16 %v236
      %v745 = vunpack.c.l.b16 %v237
      %v746 = vunpack.c.h.b16 %v237
      %v747 = vunpack.c.l.b16 %v238
      %v748 = vunpack.c.h.b16 %v238
      %v749 = vunpack.c.l.b16 %v239
      %v750 = vunpack.c.h.b16 %v239
      %v751 = vunpack.c.l.b16 %v240
      %v752 = vunpack.c.h.b16 %v240
      %v753 = vunpack.c.l.b16 %v241
      %v754 = vunpack.c.h.b16 %v241
      %v755 = vunpack.c.l.b16 %v242
      %v756 = vunpack.c.h.b16 %v242
      %v757 = vunpack.c.l.b16 %v243
      %v758 = vunpack.c.h.b16 %v243
      %v759 = vunpack.c.l.b16 %v244
      %v760 = vunpack.c.h.b16 %v244
      %v761 = vunpack.c.l.b16 %v245
      %v762 = vunpack.c.h.b16 %v245
      %v763 = vunpack.c.l.b16 %v246
      %v764 = vunpack.c.h.b16 %v246
      %v765 = vunpack.c.l.b16 %v247
      %v766 = vunpack.c.h.b16 %v247
      %v767 = vunpack.c.l.b16 %v248
      %v768 = vunpack.c.h.b16 %v248
      %v769 = vunpack.c.l.b16 %v249
      %v770 = vunpack.c.h.b16 %v249
      %v771 = vunpack.c.l.b16 %v250
      %v772 = vunpack.c.h.b16 %v250
      %v773 = vunpack.c.l.b16 %v251
      %v774 = vunpack.c.h.b16 %v251
      %v775 = vunpack.c.l.b16 %v252
      %v776 = vunpack.c.h.b16 %v252
      %v777 = vunpack.c.l.b16 %v253
      %v778 = vunpack.c.h.b16 %v253
      %v779 = vunpack.c.l.b16 %v254
      %v780 = vunpack.c.h.b16 %v254
      %v781 = vunpack.c.l.b16 %v255
      %v782 = vunpack.c.h.b16 %v255
      %v783 = vunpack.c.l.b16 %v256
      %v784 = vunpack.c.h.b16 %v256
      %v785 = vunpack.c.l.b16 %v257
      %v786 = vunpack.c.h.b16 %v257
      %v787 = vunpack.c.l.b16 %v258
      %v788 = vunpack.c.h.b16 %v258
      %v789 = vunpack.c.l.b16 %v259
      %v790 = vunpack.c.h.b16 %v259
      %v791 = vunpack.c.l.b16 %v260
      %v792 = vunpack.c.h.b16 %v260
      %v793 = vunpack.c.l.b16 %v261
      %v794 = vunpack.c.h.b16 %v261
      %v795 = vunpack.c.l.b16 %v262
      %v796 = vunpack.c.h.b16 %v262
      %v797 = vunpack.c.l.b16 %v263
      %v798 = vunpack.c.h.b16 %v263
      %v799 = vunpack.c.l.b16 %v264
      %v800 = vunpack.c.h.b16 %v264
      %v801 = vunpack.c.l.b16 %v265
      %v802 = vunpack.c.h.b16 %v265
      %v803 = vunpack.c.l.b16 %v266
      %v804 = vunpack.c.h.b16 %v266
      %v805 = vunpack.c.l.b16 %v267
      %v806 = vunpack.c.h.b16 %v267
      %v807 = vunpack.c.l.b16 %v268
      %v808 = vunpack.c.h.b16 %v268
      %v809 = vunpack.c.l.b16 %v269
      %v810 = vunpack.c.h.b16 %v269
      %v811 = vunpack.c.l.b16 %v270
      %v812 = vunpack.c.h.b16 %v270
      %v813 = vunpack.c.l.b16 %v271
      %v814 = vunpack.c.h.b16 %v271
      %v815 = vunpack.c.l.b16 %v272
      %v816 = vunpack.c.h.b16 %v272
      %v817 = vunpack.c.l.b16 %v273
      %v818 = vunpack.c.h.b16 %v273
      %v819 = vunpack.c.l.b16 %v274
      %v820 = vunpack.c.h.b16 %v274
      %v821 = vunpack.c.l.b16 %v275
      %v822 = vunpack.c.h.b16 %v275
      %v823 = vunpack.c.l.b16 %v276
      %v824 = vunpack.c.h.b16 %v276
      %v825 = vunpack.c.l.b16 %v277
      %v826 = vunpack.c.h.b16 %v277
      %v827 = vunpack.c.l.b16 %v278
      %v828 = vunpack.c.h.b16 %v278
      %v829 = vunpack.c.l.b16 %v279
      %v830 = vunpack.c.h.b16 %v279
      %v831 = vunpack.c.l.b16 %v280
      %v832 = vunpack.c.h.b16 %v280
      %v833 = vunpack.c.l.b16 %v281
      %v834 = vunpack.c.h.b16 %v281
      %v835 = vunpack.c.l.b16 %v282
      %v836 = vunpack.c.h.b16 %v282
      %v837 = vunpack.c.l.b16 %v283
      %v838 = vunpack.c.h.b16 %v283
      %v839 = vunpack.c.l.b16 %v284
      %v840 = vunpack.c.h.b16 %v284
      %v841 = vunpack.c.l.b16 %v285
      %v842 = vunpack.c.h.b16 %v285
      %v843 = vunpack.c.l.b16 %v286
      %v844 = vunpack.c.h.b16 %v286
      %v845 = vunpack.c.l.b16 %v287
      %v846 = vunpack.c.h.b16 %v287
      %v847 = vunpack.c.l.b16 %v288
      %v848 = vunpack.c.h.b16 %v288
      %v849 = vunpack.c.l.b16 %v289
      %v850 = vunpack.c.h.b16 %v289
      %v851 = vunpack.c.l.b16 %v290
      %v852 = vunpack.c.h.b16 %v290
      %v853 = vunpack.c.l.b16 %v291
      %v854 = vunpack.c.h.b16 %v291
      %v855 = vunpack.c.l.b16 %v292
      %v856 = vunpack.c.h.b16 %v292
      %v857 = vunpack.c.l.b16 %v293
      %v858 = vunpack.c.h.b16 %v293
      %v859 = vunpack.c.l.b16 %v294
      %v860 = vunpack.c.h.b16 %v294
      %v861 = vunpack.c.l.b16 %v295
      %v862 = vunpack.c.h.b16 %v295
      %v863 = vunpack.c.l.b16 %v296
      %v864 = vunpack.c.h.b16 %v296
      %v865 = vunpack.c.l.b16 %v297
      %v866 = vunpack.c.h.b16 %v297
      %v867 = vunpack.c.l.b16 %v298
      %v868 = vunpack.c.h.b16 %v298
      %v869 = vunpack.c.l.b16 %v299
      %v870 = vunpack.c.h.b16 %v299
      %v871 = vunpack.c.l.b16 %v300
      %v872 = vunpack.c.h.b16 %v300
      %v873 = vunpack.c.l.b16 %v301
      %v874 = vunpack.c.h.b16 %v301
      %v875 = vunpack.c.l.b16 %v302
      %v876 = vunpack.c.h.b16 %v302
      %v877 = vunpack.c.l.b16 %v303
      %v878 = vunpack.c.h.b16 %v303
      %v879 = vunpack.c.l.b16 %v304
      %v880 = vunpack.c.h.b16 %v304
      %v881 = vunpack.c.l.b16 %v305
      %v882 = vunpack.c.h.b16 %v305
      %v883 = vunpack.c.l.b16 %v306
      %v884 = vunpack.c.h.b16 %v306
      %v885 = vunpack.c.l.b16 %v307
      %v886 = vunpack.c.h.b16 %v307
      %v887 = vunpack.c.l.b16 %v308
      %v888 = vunpack.c.h.b16 %v308
      %v889 = vunpack.c.l.b16 %v309
      %v890 = vunpack.c.h.b16 %v309
      %v891 = vunpack.c.l.b16 %v310
      %v892 = vunpack.c.h.b16 %v310
      %v893 = vunpack.c.l.b16 %v311
      %v894 = vunpack.c.h.b16 %v311
      %v895 = vunpack.c.l.b16 %v312
      %v896 = vunpack.c.h.b16 %v312
      %v897 = vunpack.c.l.b16 %v313
      %v898 = vunpack.c.h.b16 %v313
      %v899 = vunpack.c.l.b16 %v314
      %v900 = vunpack.c.h.b16 %v314
      %v901 = vunpack.c.l.b16 %v315
      %v902 = vunpack.c.h.b16 %v315
      %v903 = vunpack.c.l.b16 %v316
      %v904 = vunpack.c.h.b16 %v316
      %v905 = vunpack.c.l.b16 %v317
      %v906 = vunpack.c.h.b16 %v317
      %v907 = vunpack.c.l.b16 %v318
      %v908 = vunpack.c.h.b16 %v318
      %v909 = vunpack.c.l.b16 %v319
      %v910 = vunpack.c.h.b16 %v319
      %v911 = vunpack.c.l.b16 %v320
      %v912 = vunpack.c.h.b16 %v320
      %v913 = vunpack.c.l.b16 %v321
      %v914 = vunpack.c.h.b16 %v321
      %v915 = vunpack.c.l.b16 %v322
      %v916 = vunpack.c.h.b16 %v322
      %v917 = vunpack.c.l.b16 %v323
      %v918 = vunpack.c.h.b16 %v323
      %v919 = vunpack.c.l.b16 %v324
      %v920 = vunpack.c.h.b16 %v324
      %v921 = vunpack.c.l.b16 %v325
      %v922 = vunpack.c.h.b16 %v325
      %v923 = vunpack.c.l.b16 %v326
      %v924 = vunpack.c.h.b16 %v326
      %v925 = vunpack.c.l.b16 %v327
      %v926 = vunpack.c.h.b16 %v327
      %v927 = vunpack.c.l.b16 %v328
      %v928 = vunpack.c.h.b16 %v328
      %v929 = vunpack.c.l.b16 %v329
      %v930 = vunpack.c.h.b16 %v329
      %v931 = vunpack.c.l.b16 %v330
      %v932 = vunpack.c.h.b16 %v330
      %v933 = vunpack.c.l.b16 %v331
      %v934 = vunpack.c.h.b16 %v331
      %v935 = vunpack.c.l.b16 %v332
      %v936 = vunpack.c.h.b16 %v332
      %v937 = vunpack.c.l.b16 %v333
      %v938 = vunpack.c.h.b16 %v333
      %v939 = vunpack.c.l.b16 %v334
      %v940 = vunpack.c.h.b16 %v334
      %v941 = vunpack.c.l.b16 %v335
      %v942 = vunpack.c.h.b16 %v335
      %v943 = vunpack.c.l.b16 %v336
      %v944 = vunpack.c.h.b16 %v336
      %v945 = vunpack.c.l.b16 %v337
      %v946 = vunpack.c.h.b16 %v337
      %v947 = vunpack.c.l.b16 %v338
      %v948 = vunpack.c.h.b16 %v338
      %v949 = vunpack.c.l.b16 %v339
      %v950 = vunpack.c.h.b16 %v339
      %v951 = vunpack.c.l.b16 %v340
      %v952 = vunpack.c.h.b16 %v340
      %v953 = vunpack.c.l.b16 %v341
      %v954 = vunpack.c.h.b16 %v341
      %v955 = vunpack.c.l.b16 %v342
      %v956 = vunpack.c.h.b16 %v342
      %v957 = vunpack.c.l.b16 %v343
      %v958 = vunpack.c.h.b16 %v343
      %v959 = vunpack.c.l.b16 %v344
      %v960 = vunpack.c.h.b16 %v344
      %v961 = vunpack.c.l.b16 %v345
      %v962 = vunpack.c.h.b16 %v345
      %v963 = vunpack.c.l.b16 %v346
      %v964 = vunpack.c.h.b16 %v346
      %v965 = vunpack.c.l.b16 %v347
      %v966 = vunpack.c.h.b16 %v347
      %v967 = vunpack.c.l.b16 %v348
      %v968 = vunpack.c.h.b16 %v348
      %v969 = vunpack.c.l.b16 %v349
      %v970 = vunpack.c.h.b16 %v349
      %v971 = vunpack.c.l.b16 %v350
      %v972 = vunpack.c.h.b16 %v350
      %v973 = vunpack.c.l.b16 %v351
      %v974 = vunpack.c.h.b16 %v351
      %v975 = vunpack.c.l.b16 %v352
      %v976 = vunpack.c.h.b16 %v352
      %v977 = vunpack.c.l.b16 %v353
      %v978 = vunpack.c.h.b16 %v353
      %v979 = vunpack.c.l.b16 %v354
      %v980 = vunpack.c.h.b16 %v354
      %v981 = vunpack.c.l.b16 %v355
      %v982 = vunpack.c.h.b16 %v355
      %v983 = vunpack.c.l.b16 %v356
      %v984 = vunpack.c.h.b16 %v356
      %v985 = vunpack.c.l.b16 %v357
      %v986 = vunpack.c.h.b16 %v357
      %v987 = vunpack.c.l.b16 %v358
      %v988 = vunpack.c.h.b16 %v358
      %v989 = vunpack.c.l.b16 %v359
      %v990 = vunpack.c.h.b16 %v359
      %v991 = vunpack.c.l.b16 %v360
      %v992 = vunpack.c.h.b16 %v360
      %v993 = vunpack.c.l.b16 %v361
      %v994 = vunpack.c.h.b16 %v361
      %v995 = vunpack.c.l.b16 %v362
      %v996 = vunpack.c.h.b16 %v362
      %v997 = vunpack.c.l.b16 %v363
      %v998 = vunpack.c.h.b16 %v363
      %v999 = vunpack.c.l.b16 %v364
      %v1000 = vunpack.c.h.b16 %v364
      %v1001 = vunpack.c.l.b16 %v365
      %v1002 = vunpack.c.h.b16 %v365
      %v1003 = vunpack.c.l.b16 %v366
      %v1004 = vunpack.c.h.b16 %v366
      %v1005 = vunpack.c.l.b16 %v367
      %v1006 = vunpack.c.h.b16 %v367
      %v1007 = vunpack.c.l.b16 %v368
      %v1008 = vunpack.c.h.b16 %v368
      %v1009 = vunpack.c.l.b16 %v369
      %v1010 = vunpack.c.h.b16 %v369
      %v1011 = vunpack.c.l.b16 %v370
      %v1012 = vunpack.c.h.b16 %v370
      %v1013 = vunpack.c.l.b16 %v371
      %v1014 = vunpack.c.h.b16 %v371
      %v1015 = vunpack.c.l.b16 %v372
      %v1016 = vunpack.c.h.b16 %v372
      %v1017 = vunpack.c.l.b16 %v373
      %v1018 = vunpack.c.h.b16 %v373
      %v1019 = vpack.c.b16 %v631, %v627
      %v1020 = vpack.c.b16 %v632, %v628
      %v1021 = vpack.c.b16 %v633, %v629
      %v1022 = vpack.c.b16 %v634, %v630
      %v1023 = vpack.c.b16 %v639, %v635
      %v1024 = vpack.c.b16 %v640, %v636
      %v1025 = vpack.c.b16 %v641, %v637
      %v1026 = vpack.c.b16 %v642, %v638
      %v1027 = vpack.c.b16 %v647, %v643
      %v1028 = vpack.c.b16 %v648, %v644
      %v1029 = vpack.c.b16 %v649, %v645
      %v1030 = vpack.c.b16 %v650, %v646
      %v1031 = vpack.c.b16 %v655, %v651
      %v1032 = vpack.c.b16 %v656, %v652
      %v1033 = vpack.c.b16 %v657, %v653
      %v1034 = vpack.c.b16 %v658, %v654
      %v1035 = vpack.c.b16 %v663, %v659
      %v1036 = vpack.c.b16 %v664, %v660
      %v1037 = vpack.c.b16 %v665, %v661
      %v1038 = vpack.c.b16 %v666, %v662
      %v1039 = vpack.c.b16 %v671, %v667
      %v1040 = vpack.c.b16 %v672, %v668
      %v1041 = vpack.c.b16 %v673, %v669
      %v1042 = vpack.c.b16 %v674, %v670
      %v1043 = vpack.c.b16 %v679, %v675
      %v1044 = vpack.c.b16 %v680, %v676
      %v1045 = vpack.c.b16 %v681, %v677
      %v1046 = vpack.c.b16 %v682, %v678
      %v1047 = vpack.c.b16 %v687, %v683
      %v1048 = vpack.c.b16 %v688, %v684
      %v1049 = vpack.c.b16 %v689, %v685
      %v1050 = vpack.c.b16 %v690, %v686
      %v1051 = vpack.c.b16 %v695, %v691
      %v1052 = vpack.c.b16 %v696, %v692
      %v1053 = vpack.c.b16 %v697, %v693
      %v1054 = vpack.c.b16 %v698, %v694
      %v1055 = vpack.c.b16 %v703, %v699
      %v1056 = vpack.c.b16 %v704, %v700
      %v1057 = vpack.c.b16 %v705, %v701
      %v1058 = vpack.c.b16 %v706, %v702
      %v1059 = vpack.c.b16 %v711, %v707
      %v1060 = vpack.c.b16 %v712, %v708
      %v1061 = vpack.c.b16 %v713, %v709
      %v1062 = vpack.c.b16 %v714, %v710
      %v1063 = vpack.c.b16 %v719, %v715
      %v1064 = vpack.c.b16 %v720, %v716
      %v1065 = vpack.c.b16 %v721, %v717
      %v1066 = vpack.c.b16 %v722, %v718
      %v1067 = vpack.c.b16 %v727, %v723
      %v1068 = vpack.c.b16 %v728, %v724
      %v1069 = vpack.c.b16 %v729, %v725
      %v1070 = vpack.c.b16 %v730, %v726
      %v1071 = vpack.c.b16 %v735, %v731
      %v1072 = vpack.c.b16 %v736, %v732
      %v1073 = vpack.c.b16 %v737, %v733
      %v1074 = vpack.c.b16 %v738, %v734
      %v1075 = vpack.c.b16 %v743, %v739
      %v1076 = vpack.c.b16 %v744, %v740
      %v1077 = vpack.c.b16 %v745, %v741
      %v1078 = vpack.c.b16 %v746, %v742
      %v1079 = vpack.c.b16 %v751, %v747
      %v1080 = vpack.c.b16 %v752, %v748
      %v1081 = vpack.c.b16 %v753, %v749
      %v1082 = vpack.c.b16 %v754, %v750
      %v1083 = vpack.c.b16 %v759, %v755
      %v1084 = vpack.c.b16 %v760, %v756
      %v1085 = vpack.c.b16 %v761, %v757
      %v1086 = vpack.c.b16 %v762, %v758
      %v1087 = vpack.c.b16 %v767, %v763
      %v1088 = vpack.c.b16 %v768, %v764
      %v1089 = vpack.c.b16 %v769, %v765
      %v1090 = vpack.c.b16 %v770, %v766
      %v1091 = vpack.c.b16 %v775, %v771
      %v1092 = vpack.c.b16 %v776, %v772
      %v1093 = vpack.c.b16 %v777, %v773
      %v1094 = vpack.c.b16 %v778, %v774
      %v1095 = vpack.c.b16 %v783, %v779
      %v1096 = vpack.c.b16 %v784, %v780
      %v1097 = vpack.c.b16 %v785, %v781
      %v1098 = vpack.c.b16 %v786, %v782
      %v1099 = vpack.c.b16 %v791, %v787
      %v1100 = vpack.c.b16 %v792, %v788
      %v1101 = vpack.c.b16 %v793, %v789
      %v1102 = vpack.c.b16 %v794, %v790
      %v1103 = vpack.c.b16 %v799, %v795
      %v1104 = vpack.c.b16 %v800, %v796
      %v1105 = vpack.c.b16 %v801, %v797
      %v1106 = vpack.c.b16 %v802, %v798
      %v1107 = vpack.c.b16 %v807, %v803
      %v1108 = vpack.c.b16 %v808, %v804
      %v1109 = vpack.c.b16 %v809, %v805
      %v1110 = vpack.c.b16 %v810, %v806
      %v1111 = vpack.c.b16 %v815, %v811
      %v1112 = vpack.c.b16 %v816, %v812
      %v1113 = vpack.c.b16 %v817, %v813
      %v1114 = vpack.c.b16 %v818, %v814
      %v1115 = vpack.c.b16 %v823, %v819
      %v1116 = vpack.c.b16 %v824, %v820
      %v1117 = vpack.c.b16 %v825, %v821
      %v1118 = vpack.c.b16 %v826, %v822
      %v1119 = vpack.c.b16 %v831, %v827
      %v1120 = vpack.c.b16 %v832, %v828
      %v1121 = vpack.c.b16 %v833, %v829
      %v1122 = vpack.c.b16 %v834, %v830
      %v1123 = vpack.c.b16 %v839, %v835
      %v1124 = vpack.c.b16 %v840, %v836
      %v1125 = vpack.c.b16 %v841, %v837
      %v1126 = vpack.c.b16 %v842, %v838
      %v1127 = vpack.c.b16 %v847, %v843
      %v1128 = vpack.c.b16 %v848, %v844
      %v1129 = vpack.c.b16 %v849, %v845
      %v1130 = vpack.c.b16 %v850, %v846
      %v1131 = vpack.c.b16 %v855, %v851
      %v1132 = vpack.c.b16 %v856, %v852
      %v1133 = vpack.c.b16 %v857, %v853
      %v1134 = vpack.c.b16 %v858, %v854
      %v1135 = vpack.c.b16 %v863, %v859
      %v1136 = vpack.c.b16 %v864, %v860
      %v1137 = vpack.c.b16 %v865, %v861
      %v1138 = vpack.c.b16 %v866, %v862
      %v1139 = vpack.c.b16 %v871, %v867
      %v1140 = vpack.c.b16 %v872, %v868
      %v1141 = vpack.c.b16 %v873, %v869
      %v1142 = vpack.c.b16 %v874, %v870
      %v1143 = vpack.c.b16 %v879, %v875
      %v1144 = vpack.c.b16 %v880, %v876
      %v1145 = vpack.c.b16 %v881, %v877
      %v1146 = vpack.c.b16 %v882, %v878
      %v1147 = vpack.c.b16 %v887, %v883
      %v1148 = vpack.c.b16 %v888, %v884
      %v1149 = vpack.c.b16 %v889, %v885
      %v1150 = vpack.c.b16 %v890, %v886
      %v1151 = vpack.c.b16 %v895, %v891
      %v1152 = vpack.c.b16 %v896, %v892
      %v1153 = vpack.c.b16 %v897, %v893
      %v1154 = vpack.c.b16 %v898, %v894
      %v1155 = vpack.c.b16 %v903, %v899
      %v1156 = vpack.c.b16 %v904, %v900
      %v1157 = vpack.c.b16 %v905, %v901
      %v1158 = vpack.c.b16 %v906, %v902
      %v1159 = vpack.c.b16 %v911, %v907
      %v1160 = vpack.c.b16 %v912, %v908
      %v1161 = vpack.c.b16 %v913, %v909
      %v1162 = vpack.c.b16 %v914, %v910
      %v1163 = vpack.c.b16 %v919, %v915
      %v1164 = vpack.c.b16 %v920, %v916
      %v1165 = vpack.c.b16 %v921, %v917
      %v1166 = vpack.c.b16 %v922, %v918
      %v1167 = vpack.c.b16 %v927, %v923
      %v1168 = vpack.c.b16 %v928, %v924
      %v1169 = vpack.c.b16 %v929, %v925
      %v1170 = vpack.c.b16 %v930, %v926
      %v1171 = vpack.c.b16 %v935, %v931
      %v1172 = vpack.c.b16 %v936, %v932
      %v1173 = vpack.c.b16 %v937, %v933
      %v1174 = vpack.c.b16 %v938, %v934
      %v1175 = vpack.c.b16 %v943, %v939
      %v1176 = vpack.c.b16 %v944, %v940
      %v1177 = vpack.c.b16 %v945, %v941
      %v1178 = vpack.c.b16 %v946, %v942
      %v1179 = vpack.c.b16 %v951, %v947
      %v1180 = vpack.c.b16 %v952, %v948
      %v1181 = vpack.c.b16 %v953, %v949
      %v1182 = vpack.c.b16 %v954, %v950
      %v1183 = vpack.c.b16 %v959, %v955
      %v1184 = vpack.c.b16 %v960, %v956
      %v1185 = vpack.c.b16 %v961, %v957
      %v1186 = vpack.c.b16 %v962, %v958
      %v1187 = vpack.c.b16 %v967, %v963
      %v1188 = vpack.c.b16 %v968, %v964
      %v1189 = vpack.c.b16 %v969, %v965
      %v1190 = vpack.c.b16 %v970, %v966
      %v1191 = vpack.c.b16 %v975, %v971
      %v1192 = vpack.c.b16 %v976, %v972
      %v1193 = vpack.c.b16 %v977, %v973
      %v1194 = vpack.c.b16 %v978, %v974
      %v1195 = vpack.c.b16 %v983, %v979
      %v1196 = vpack.c.b16 %v984, %v980
      %v1197 = vpack.c.b16 %v985, %v981
      %v1198 = vpack.c.b16 %v986, %v982
      %v1199 = vpack.c.b16 %v991, %v987
      %v1200 = vpack.c.b16 %v992, %v988
      %v1201 = vpack.c.b16 %v993, %v989
      %v1202 = vpack.c.b16 %v994, %v990
      %v1203 = vpack.c.b16 %v999, %v995
      %v1204 = vpack.c.b16 %v1000, %v996
      %v1205 = vpack.c.b16 %v1001, %v997
      %v1206 = vpack.c.b16 %v1002, %v998
      %v1207 = vpack.c.b16 %v1007, %v1003
      %v1208 = vpack.c.b16 %v1008, %v1004
      %v1209 = vpack.c.b16 %v1009, %v1005
      %v1210 = vpack.c.b16 %v1010, %v1006
      %v1211 = vpack.c.b16 %v1015, %v1011
      %v1212 = vpack.c.b16 %v1016, %v1012
      %v1213 = vpack.c.b16 %v1017, %v1013
      %v1214 = vpack.c.b16 %v1018, %v1014
      %v1412 = vunpack.c.l.b16 %v374
      %v1413 = vunpack.c.l.b16 %v375
      %v1414 = vunpack.c.l.b16 %v376
      %v1415 = vunpack.c.l.b16 %v377
      %v1416 = vunpack.c.l.b16 %v378
      %v1417 = vunpack.c.l.b16 %v379
      %v1418 = vunpack.c.l.b16 %v380
      %v1419 = vunpack.c.l.b16 %v381
      %v1420 = vunpack.c.l.b16 %v382
      %v1421 = vunpack.c.l.b16 %v383
      %v1422 = vunpack.c.l.b16 %v384
      %v1423 = vunpack.c.l.b16 %v385
      %v1424 = vunpack.c.l.b16 %v386
      %v1425 = vunpack.c.l.b16 %v387
      %v1426 = vunpack.c.l.b16 %v388
      %v1427 = vunpack.c.l.b16 %v389
      %v1428 = vunpack.c.l.b16 %v390
      %v1429 = vunpack.c.l.b16 %v391
      %v1430 = vunpack.c.l.b16 %v392
      %v1431 = vunpack.c.l.b16 %v393
      %v1432 = vunpack.c.l.b16 %v394
      %v1433 = vunpack.c.l.b16 %v395
      %v1434 = vunpack.c.l.b16 %v396
      %v1435 = vunpack.c.l.b16 %v397
      %v1436 = vunpack.c.l.b16 %v398
      %v1437 = vunpack.c.l.b16 %v399
      %v1438 = vunpack.c.l.b16 %v400
      %v1439 = vunpack.c.l.b16 %v401
      %v1440 = vunpack.c.l.b16 %v402
      %v1441 = vunpack.c.l.b16 %v403
      %v1442 = vunpack.c.l.b16 %v404
      %v1443 = vunpack.c.l.b16 %v405
      %v1444 = vunpack.c.l.b16 %v406
      %v1445 = vunpack.c.l.b16 %v407
      %v1446 = vunpack.c.l.b16 %v408
      %v1447 = vunpack.c.l.b16 %v409
      %v1448 = vunpack.c.l.b16 %v410
      %v1449 = vunpack.c.l.b16 %v411
      %v1450 = vunpack.c.l.b16 %v412
      %v1451 = vunpack.c.l.b16 %v413
      %v1452 = vunpack.c.l.b16 %v414
      %v1453 = vunpack.c.l.b16 %v415
      %v1454 = vunpack.c.l.b16 %v416
      %v1455 = vunpack.c.l.b16 %v417
      %v1456 = vunpack.c.l.b16 %v418
      %v1457 = vunpack.c.l.b16 %v419
      %v1458 = vunpack.c.l.b16 %v420
      %v1459 = vunpack.c.l.b16 %v421
      %v1460 = vunpack.c.l.b16 %v422
      %v1461 = vunpack.c.l.b16 %v423
      %v1462 = vpack.c.b16 %v1413, %v1412
      %v1463 = vpack.c.b16 %v1415, %v1414
      %v1464 = vpack.c.b16 %v1417, %v1416
      %v1465 = vpack.c.b16 %v1419, %v1418
      %v1466 = vpack.c.b16 %v1421, %v1420
      %v1467 = vpack.c.b16 %v1423, %v1422
      %v1468 = vpack.c.b16 %v1425, %v1424
      %v1469 = vpack.c.b16 %v1427, %v1426
      %v1470 = vpack.c.b16 %v1429, %v1428
      %v1471 = vpack.c.b16 %v1431, %v1430
      %v1472 = vpack.c.b16 %v1433, %v1432
      %v1473 = vpack.c.b16 %v1435, %v1434
      %v1474 = vpack.c.b16 %v1437, %v1436
      %v1475 = vpack.c.b16 %v1439, %v1438
      %v1476 = vpack.c.b16 %v1441, %v1440
      %v1477 = vpack.c.b16 %v1443, %v1442
      %v1478 = vpack.c.b16 %v1445, %v1444
      %v1479 = vpack.c.b16 %v1447, %v1446
      %v1480 = vpack.c.b16 %v1449, %v1448
      %v1481 = vpack.c.b16 %v1451, %v1450
      %v1482 = vpack.c.b16 %v1453, %v1452
      %v1483 = vpack.c.b16 %v1455, %v1454
      %v1484 = vpack.c.b16 %v1457, %v1456
      %v1485 = vpack.c.b16 %v1459, %v1458
      %v1486 = vpack.c.b16 %v1461, %v1460
      %vm1512 = vcmask 130048
      %v1514 = vsel %vm1512, %v1022, 0
      %v1517 = vsel %vm1512, %v1026, 0
      %v1520 = vsel %vm1512, %v1030, 0
      %v1523 = vsel %vm1512, %v1034, 0
      %v1526 = vsel %vm1512, %v1038, 0
      %v1529 = vsel %vm1512, %v1042, 0
      %v1532 = vsel %vm1512, %v1046, 0
      %v1535 = vsel %vm1512, %v1050, 0
      %v1538 = vsel %vm1512, %v1054, 0
      %v1541 = vsel %vm1512, %v1058, 0
      %v1544 = vsel %vm1512, %v1062, 0
      %v1547 = vsel %vm1512, %v1066, 0
      %v1550 = vsel %vm1512, %v1070, 0
      %v1553 = vsel %vm1512, %v1074, 0
      %v1556 = vsel %vm1512, %v1078, 0
      %v1559 = vsel %vm1512, %v1082, 0
      %v1562 = vsel %vm1512, %v1086, 0
      %v1565 = vsel %vm1512, %v1090, 0
      %v1568 = vsel %vm1512, %v1094, 0
      %v1571 = vsel %vm1512, %v1098, 0
      %v1574 = vsel %vm1512, %v1102, 0
      %v1577 = vsel %vm1512, %v1106, 0
      %v1580 = vsel %vm1512, %v1110, 0
      %v1583 = vsel %vm1512, %v1114, 0
      %v1586 = vsel %vm1512, %v1118, 0
      %v1589 = vsel %vm1512, %v1122, 0
      %v1592 = vsel %vm1512, %v1126, 0
      %v1595 = vsel %vm1512, %v1130, 0
      %v1598 = vsel %vm1512, %v1134, 0
      %v1601 = vsel %vm1512, %v1138, 0
      %v1604 = vsel %vm1512, %v1142, 0
      %v1607 = vsel %vm1512, %v1146, 0
      %v1610 = vsel %vm1512, %v1150, 0
      %v1613 = vsel %vm1512, %v1154, 0
      %v1616 = vsel %vm1512, %v1158, 0
      %v1619 = vsel %vm1512, %v1162, 0
      %v1622 = vsel %vm1512, %v1166, 0
      %v1625 = vsel %vm1512, %v1170, 0
      %v1628 = vsel %vm1512, %v1174, 0
      %v1631 = vsel %vm1512, %v1178, 0
      %v1634 = vsel %vm1512, %v1182, 0
      %v1637 = vsel %vm1512, %v1186, 0
      %v1640 = vsel %vm1512, %v1190, 0
      %v1643 = vsel %vm1512, %v1194, 0
      %v1646 = vsel %vm1512, %v1198, 0
      %v1649 = vsel %vm1512, %v1202, 0
      %v1652 = vsel %vm1512, %v1206, 0
      %v1655 = vsel %vm1512, %v1210, 0
      %v1658 = vsel %vm1512, %v1214, 0
      %1660 = vmatprep.subr.bf16.mxu0 0
      %1661 = vmatpush1.bf16.msra.mxu0 %v1469
      %1662 = vmatprep.subr.bf16.mxu0 0
      %1663 = vmatpush1.bf16.msra.mxu0 %v1468
      %1664 = vmatprep.subr.bf16.mxu0 0
      %1665 = vmatpush1.bf16.msra.mxu0 %v1467
      %1666 = vmatprep.subr.bf16.mxu0 0
      %1667 = vmatpush1.bf16.msra.mxu0 %v1466
      %1668 = vmatprep.subr.bf16.mxu0 0
      %1669 = vmatpush1.bf16.msra.mxu0 %v1465
      %1670 = vmatprep.subr.bf16.mxu0 0
      %1671 = vmatpush1.bf16.msra.mxu0 %v1464
      %1672 = vmatprep.subr.bf16.mxu0 0
      %1673 = vmatpush1.bf16.msra.mxu0 %v1463
      %1674 = vmatprep.subr.bf16.mxu0 0
      %1675 = vmatpush1.bf16.msra.mxu0 %v1462
      %1676 = vmatprep.subr.bf16.mxu0 0
      %1677 = vmatpush2.bf16.msra.mxu0 %v1477
      %1678 = vmatprep.subr.bf16.mxu0 0
      %1679 = vmatpush2.bf16.msra.mxu0 %v1476
      %1680 = vmatprep.subr.bf16.mxu0 0
      %1681 = vmatpush2.bf16.msra.mxu0 %v1475
      %1682 = vmatprep.subr.bf16.mxu0 0
      %1683 = vmatpush2.bf16.msra.mxu0 %v1474
      %1684 = vmatprep.subr.bf16.mxu0 0
      %1685 = vmatpush2.bf16.msra.mxu0 %v1473
      %1686 = vmatprep.subr.bf16.mxu0 0
      %1687 = vmatpush2.bf16.msra.mxu0 %v1472
      %1688 = vmatprep.subr.bf16.mxu0 0
      %1689 = vmatpush2.bf16.msra.mxu0 %v1471
      %1690 = vmatprep.subr.bf16.mxu0 0
      %1691 = vmatpush2.bf16.msra.mxu0 %v1470
      %1692 = vmatprep.mubr.bf16.mxu0 %v1020
      %1693 = vmatmul.mubr.bf16.gmra.mxu0 %v1019
      %v1694 = vpop.f32.mrf.mxu0
      %v1695 = vadd.f32 %v429, %v1694
      %v1696 = vpop.f32.mrf.mxu0
      %v1697 = vpop.f32.mrf.mxu0
      %v1698 = vadd.f32 %v429, %v1697
      %v1699 = vpop.f32.mrf.mxu0
      %1700 = vmatprep.mubr.bf16.mxu0 %v1024
      %1701 = vmatmul.mubr.bf16.gmra.mxu0 %v1023
      %v1702 = vpop.f32.mrf.mxu0
      %v1703 = vadd.f32 %v429, %v1702
      %v1704 = vpop.f32.mrf.mxu0
      %v1705 = vpop.f32.mrf.mxu0
      %v1706 = vadd.f32 %v429, %v1705
      %v1707 = vpop.f32.mrf.mxu0
      %1708 = vmatprep.mubr.bf16.mxu0 %v1028
      %1709 = vmatmul.mubr.bf16.gmra.mxu0 %v1027
      %v1710 = vpop.f32.mrf.mxu0
      %v1711 = vadd.f32 %v429, %v1710
      %v1712 = vpop.f32.mrf.mxu0
      %v1713 = vpop.f32.mrf.mxu0
      %v1714 = vadd.f32 %v429, %v1713
      %v1715 = vpop.f32.mrf.mxu0
      %1716 = vmatprep.mubr.bf16.mxu0 %v1032
      %1717 = vmatmul.mubr.bf16.gmra.mxu0 %v1031
      %v1718 = vpop.f32.mrf.mxu0
      %v1719 = vadd.f32 %v429, %v1718
      %v1720 = vpop.f32.mrf.mxu0
      %v1721 = vpop.f32.mrf.mxu0
      %v1722 = vadd.f32 %v429, %v1721
      %v1723 = vpop.f32.mrf.mxu0
      %1724 = vmatprep.mubr.bf16.mxu0 %v1036
      %1725 = vmatmul.mubr.bf16.gmra.mxu0 %v1035
      %v1726 = vpop.f32.mrf.mxu0
      %v1727 = vadd.f32 %v429, %v1726
      %v1728 = vpop.f32.mrf.mxu0
      %v1729 = vpop.f32.mrf.mxu0
      %v1730 = vadd.f32 %v429, %v1729
      %v1731 = vpop.f32.mrf.mxu0
      %1732 = vmatprep.mubr.bf16.mxu0 %v1040
      %1733 = vmatmul.mubr.bf16.gmra.mxu0 %v1039
      %v1734 = vpop.f32.mrf.mxu0
      %v1735 = vadd.f32 %v429, %v1734
      %v1736 = vpop.f32.mrf.mxu0
      %v1737 = vpop.f32.mrf.mxu0
      %v1738 = vadd.f32 %v429, %v1737
      %v1739 = vpop.f32.mrf.mxu0
      %1740 = vmatprep.mubr.bf16.mxu0 %v1044
      %1741 = vmatmul.mubr.bf16.gmra.mxu0 %v1043
      %v1742 = vpop.f32.mrf.mxu0
      %v1743 = vadd.f32 %v429, %v1742
      %v1744 = vpop.f32.mrf.mxu0
      %v1745 = vpop.f32.mrf.mxu0
      %v1746 = vadd.f32 %v429, %v1745
      %v1747 = vpop.f32.mrf.mxu0
      %1748 = vmatprep.mubr.bf16.mxu0 %v1048
      %1749 = vmatmul.mubr.bf16.gmra.mxu0 %v1047
      %v1750 = vpop.f32.mrf.mxu0
      %v1751 = vadd.f32 %v429, %v1750
      %v1752 = vpop.f32.mrf.mxu0
      %v1753 = vpop.f32.mrf.mxu0
      %v1754 = vadd.f32 %v429, %v1753
      %v1755 = vpop.f32.mrf.mxu0
      %1756 = vmatprep.mubr.bf16.mxu0 %v1052
      %1757 = vmatmul.mubr.bf16.gmra.mxu0 %v1051
      %v1758 = vpop.f32.mrf.mxu0
      %v1759 = vadd.f32 %v429, %v1758
      %v1760 = vpop.f32.mrf.mxu0
      %v1761 = vpop.f32.mrf.mxu0
      %v1762 = vadd.f32 %v429, %v1761
      %v1763 = vpop.f32.mrf.mxu0
      %1764 = vmatprep.mubr.bf16.mxu0 %v1056
      %1765 = vmatmul.mubr.bf16.gmra.mxu0 %v1055
      %v1766 = vpop.f32.mrf.mxu0
      %v1767 = vadd.f32 %v429, %v1766
      %v1768 = vpop.f32.mrf.mxu0
      %v1769 = vpop.f32.mrf.mxu0
      %v1770 = vadd.f32 %v429, %v1769
      %v1771 = vpop.f32.mrf.mxu0
      %1772 = vmatprep.mubr.bf16.mxu0 %v1060
      %1773 = vmatmul.mubr.bf16.gmra.mxu0 %v1059
      %v1774 = vpop.f32.mrf.mxu0
      %v1775 = vadd.f32 %v429, %v1774
      %v1776 = vpop.f32.mrf.mxu0
      %v1777 = vpop.f32.mrf.mxu0
      %v1778 = vadd.f32 %v429, %v1777
      %v1779 = vpop.f32.mrf.mxu0
      %1780 = vmatprep.mubr.bf16.mxu0 %v1064
      %1781 = vmatmul.mubr.bf16.gmra.mxu0 %v1063
      %v1782 = vpop.f32.mrf.mxu0
      %v1783 = vadd.f32 %v429, %v1782
      %v1784 = vpop.f32.mrf.mxu0
      %v1785 = vpop.f32.mrf.mxu0
      %v1786 = vadd.f32 %v429, %v1785
      %v1787 = vpop.f32.mrf.mxu0
      %1788 = vmatprep.mubr.bf16.mxu0 %v1068
      %1789 = vmatmul.mubr.bf16.gmra.mxu0 %v1067
      %v1790 = vpop.f32.mrf.mxu0
      %v1791 = vadd.f32 %v429, %v1790
      %v1792 = vpop.f32.mrf.mxu0
      %v1793 = vpop.f32.mrf.mxu0
      %v1794 = vadd.f32 %v429, %v1793
      %v1795 = vpop.f32.mrf.mxu0
      %1796 = vmatprep.mubr.bf16.mxu0 %v1072
      %1797 = vmatmul.mubr.bf16.gmra.mxu0 %v1071
      %v1798 = vpop.f32.mrf.mxu0
      %v1799 = vadd.f32 %v429, %v1798
      %v1800 = vpop.f32.mrf.mxu0
      %v1801 = vpop.f32.mrf.mxu0
      %v1802 = vadd.f32 %v429, %v1801
      %v1803 = vpop.f32.mrf.mxu0
      %1804 = vmatprep.mubr.bf16.mxu0 %v1076
      %1805 = vmatmul.mubr.bf16.gmra.mxu0 %v1075
      %v1806 = vpop.f32.mrf.mxu0
      %v1807 = vadd.f32 %v429, %v1806
      %v1808 = vpop.f32.mrf.mxu0
      %v1809 = vpop.f32.mrf.mxu0
      %v1810 = vadd.f32 %v429, %v1809
      %v1811 = vpop.f32.mrf.mxu0
      %1812 = vmatprep.mubr.bf16.mxu0 %v1080
      %1813 = vmatmul.mubr.bf16.gmra.mxu0 %v1079
      %v1814 = vpop.f32.mrf.mxu0
      %v1815 = vadd.f32 %v429, %v1814
      %v1816 = vpop.f32.mrf.mxu0
      %v1817 = vpop.f32.mrf.mxu0
      %v1818 = vadd.f32 %v429, %v1817
      %v1819 = vpop.f32.mrf.mxu0
      %1820 = vmatprep.mubr.bf16.mxu0 %v1084
      %1821 = vmatmul.mubr.bf16.gmra.mxu0 %v1083
      %v1822 = vpop.f32.mrf.mxu0
      %v1823 = vadd.f32 %v429, %v1822
      %v1824 = vpop.f32.mrf.mxu0
      %v1825 = vpop.f32.mrf.mxu0
      %v1826 = vadd.f32 %v429, %v1825
      %v1827 = vpop.f32.mrf.mxu0
      %1828 = vmatprep.mubr.bf16.mxu0 %v1088
      %1829 = vmatmul.mubr.bf16.gmra.mxu0 %v1087
      %v1830 = vpop.f32.mrf.mxu0
      %v1831 = vadd.f32 %v429, %v1830
      %v1832 = vpop.f32.mrf.mxu0
      %v1833 = vpop.f32.mrf.mxu0
      %v1834 = vadd.f32 %v429, %v1833
      %v1835 = vpop.f32.mrf.mxu0
      %1836 = vmatprep.mubr.bf16.mxu0 %v1092
      %1837 = vmatmul.mubr.bf16.gmra.mxu0 %v1091
      %v1838 = vpop.f32.mrf.mxu0
      %v1839 = vadd.f32 %v429, %v1838
      %v1840 = vpop.f32.mrf.mxu0
      %v1841 = vpop.f32.mrf.mxu0
      %v1842 = vadd.f32 %v429, %v1841
      %v1843 = vpop.f32.mrf.mxu0
      %1844 = vmatprep.mubr.bf16.mxu0 %v1096
      %1845 = vmatmul.mubr.bf16.gmra.mxu0 %v1095
      %v1846 = vpop.f32.mrf.mxu0
      %v1847 = vadd.f32 %v429, %v1846
      %v1848 = vpop.f32.mrf.mxu0
      %v1849 = vpop.f32.mrf.mxu0
      %v1850 = vadd.f32 %v429, %v1849
      %v1851 = vpop.f32.mrf.mxu0
      %1852 = vmatprep.mubr.bf16.mxu0 %v1100
      %1853 = vmatmul.mubr.bf16.gmra.mxu0 %v1099
      %v1854 = vpop.f32.mrf.mxu0
      %v1855 = vadd.f32 %v429, %v1854
      %v1856 = vpop.f32.mrf.mxu0
      %v1857 = vpop.f32.mrf.mxu0
      %v1858 = vadd.f32 %v429, %v1857
      %v1859 = vpop.f32.mrf.mxu0
      %1860 = vmatprep.mubr.bf16.mxu0 %v1104
      %1861 = vmatmul.mubr.bf16.gmra.mxu0 %v1103
      %v1862 = vpop.f32.mrf.mxu0
      %v1863 = vadd.f32 %v429, %v1862
      %v1864 = vpop.f32.mrf.mxu0
      %v1865 = vpop.f32.mrf.mxu0
      %v1866 = vadd.f32 %v429, %v1865
      %v1867 = vpop.f32.mrf.mxu0
      %1868 = vmatprep.mubr.bf16.mxu0 %v1108
      %1869 = vmatmul.mubr.bf16.gmra.mxu0 %v1107
      %v1870 = vpop.f32.mrf.mxu0
      %v1871 = vadd.f32 %v429, %v1870
      %v1872 = vpop.f32.mrf.mxu0
      %v1873 = vpop.f32.mrf.mxu0
      %v1874 = vadd.f32 %v429, %v1873
      %v1875 = vpop.f32.mrf.mxu0
      %1876 = vmatprep.mubr.bf16.mxu0 %v1112
      %1877 = vmatmul.mubr.bf16.gmra.mxu0 %v1111
      %v1878 = vpop.f32.mrf.mxu0
      %v1879 = vadd.f32 %v429, %v1878
      %v1880 = vpop.f32.mrf.mxu0
      %v1881 = vpop.f32.mrf.mxu0
      %v1882 = vadd.f32 %v429, %v1881
      %v1883 = vpop.f32.mrf.mxu0
      %1884 = vmatprep.mubr.bf16.mxu0 %v1116
      %1885 = vmatmul.mubr.bf16.gmra.mxu0 %v1115
      %v1886 = vpop.f32.mrf.mxu0
      %v1887 = vadd.f32 %v429, %v1886
      %v1888 = vpop.f32.mrf.mxu0
      %v1889 = vpop.f32.mrf.mxu0
      %v1890 = vadd.f32 %v429, %v1889
      %v1891 = vpop.f32.mrf.mxu0
      %1892 = vmatprep.mubr.bf16.mxu0 %v1120
      %1893 = vmatmul.mubr.bf16.gmra.mxu0 %v1119
      %v1894 = vpop.f32.mrf.mxu0
      %v1895 = vadd.f32 %v429, %v1894
      %v1896 = vpop.f32.mrf.mxu0
      %v1897 = vpop.f32.mrf.mxu0
      %v1898 = vadd.f32 %v429, %v1897
      %v1899 = vpop.f32.mrf.mxu0
      %1900 = vmatprep.mubr.bf16.mxu0 %v1124
      %1901 = vmatmul.mubr.bf16.gmra.mxu0 %v1123
      %v1902 = vpop.f32.mrf.mxu0
      %v1903 = vadd.f32 %v429, %v1902
      %v1904 = vpop.f32.mrf.mxu0
      %v1905 = vpop.f32.mrf.mxu0
      %v1906 = vadd.f32 %v429, %v1905
      %v1907 = vpop.f32.mrf.mxu0
      %1908 = vmatprep.mubr.bf16.mxu0 %v1128
      %1909 = vmatmul.mubr.bf16.gmra.mxu0 %v1127
      %v1910 = vpop.f32.mrf.mxu0
      %v1911 = vadd.f32 %v429, %v1910
      %v1912 = vpop.f32.mrf.mxu0
      %v1913 = vpop.f32.mrf.mxu0
      %v1914 = vadd.f32 %v429, %v1913
      %v1915 = vpop.f32.mrf.mxu0
      %1916 = vmatprep.mubr.bf16.mxu0 %v1132
      %1917 = vmatmul.mubr.bf16.gmra.mxu0 %v1131
      %v1918 = vpop.f32.mrf.mxu0
      %v1919 = vadd.f32 %v429, %v1918
      %v1920 = vpop.f32.mrf.mxu0
      %v1921 = vpop.f32.mrf.mxu0
      %v1922 = vadd.f32 %v429, %v1921
      %v1923 = vpop.f32.mrf.mxu0
      %1924 = vmatprep.mubr.bf16.mxu0 %v1136
      %1925 = vmatmul.mubr.bf16.gmra.mxu0 %v1135
      %v1926 = vpop.f32.mrf.mxu0
      %v1927 = vadd.f32 %v429, %v1926
      %v1928 = vpop.f32.mrf.mxu0
      %v1929 = vpop.f32.mrf.mxu0
      %v1930 = vadd.f32 %v429, %v1929
      %v1931 = vpop.f32.mrf.mxu0
      %1932 = vmatprep.mubr.bf16.mxu0 %v1140
      %1933 = vmatmul.mubr.bf16.gmra.mxu0 %v1139
      %v1934 = vpop.f32.mrf.mxu0
      %v1935 = vadd.f32 %v429, %v1934
      %v1936 = vpop.f32.mrf.mxu0
      %v1937 = vpop.f32.mrf.mxu0
      %v1938 = vadd.f32 %v429, %v1937
      %v1939 = vpop.f32.mrf.mxu0
      %1940 = vmatprep.mubr.bf16.mxu0 %v1144
      %1941 = vmatmul.mubr.bf16.gmra.mxu0 %v1143
      %v1942 = vpop.f32.mrf.mxu0
      %v1943 = vadd.f32 %v429, %v1942
      %v1944 = vpop.f32.mrf.mxu0
      %v1945 = vpop.f32.mrf.mxu0
      %v1946 = vadd.f32 %v429, %v1945
      %v1947 = vpop.f32.mrf.mxu0
      %1948 = vmatprep.mubr.bf16.mxu0 %v1148
      %1949 = vmatmul.mubr.bf16.gmra.mxu0 %v1147
      %v1950 = vpop.f32.mrf.mxu0
      %v1951 = vadd.f32 %v429, %v1950
      %v1952 = vpop.f32.mrf.mxu0
      %v1953 = vpop.f32.mrf.mxu0
      %v1954 = vadd.f32 %v429, %v1953
      %v1955 = vpop.f32.mrf.mxu0
      %1956 = vmatprep.mubr.bf16.mxu0 %v1152
      %1957 = vmatmul.mubr.bf16.gmra.mxu0 %v1151
      %v1958 = vpop.f32.mrf.mxu0
      %v1959 = vadd.f32 %v429, %v1958
      %v1960 = vpop.f32.mrf.mxu0
      %v1961 = vpop.f32.mrf.mxu0
      %v1962 = vadd.f32 %v429, %v1961
      %v1963 = vpop.f32.mrf.mxu0
      %1964 = vmatprep.mubr.bf16.mxu0 %v1156
      %1965 = vmatmul.mubr.bf16.gmra.mxu0 %v1155
      %v1966 = vpop.f32.mrf.mxu0
      %v1967 = vadd.f32 %v429, %v1966
      %v1968 = vpop.f32.mrf.mxu0
      %v1969 = vpop.f32.mrf.mxu0
      %v1970 = vadd.f32 %v429, %v1969
      %v1971 = vpop.f32.mrf.mxu0
      %1972 = vmatprep.mubr.bf16.mxu0 %v1160
      %1973 = vmatmul.mubr.bf16.gmra.mxu0 %v1159
      %v1974 = vpop.f32.mrf.mxu0
      %v1975 = vadd.f32 %v429, %v1974
      %v1976 = vpop.f32.mrf.mxu0
      %v1977 = vpop.f32.mrf.mxu0
      %v1978 = vadd.f32 %v429, %v1977
      %v1979 = vpop.f32.mrf.mxu0
      %1980 = vmatprep.mubr.bf16.mxu0 %v1164
      %1981 = vmatmul.mubr.bf16.gmra.mxu0 %v1163
      %v1982 = vpop.f32.mrf.mxu0
      %v1983 = vadd.f32 %v429, %v1982
      %v1984 = vpop.f32.mrf.mxu0
      %v1985 = vpop.f32.mrf.mxu0
      %v1986 = vadd.f32 %v429, %v1985
      %v1987 = vpop.f32.mrf.mxu0
      %1988 = vmatprep.mubr.bf16.mxu0 %v1168
      %1989 = vmatmul.mubr.bf16.gmra.mxu0 %v1167
      %v1990 = vpop.f32.mrf.mxu0
      %v1991 = vadd.f32 %v429, %v1990
      %v1992 = vpop.f32.mrf.mxu0
      %v1993 = vpop.f32.mrf.mxu0
      %v1994 = vadd.f32 %v429, %v1993
      %v1995 = vpop.f32.mrf.mxu0
      %1996 = vmatprep.mubr.bf16.mxu0 %v1172
      %1997 = vmatmul.mubr.bf16.gmra.mxu0 %v1171
      %v1998 = vpop.f32.mrf.mxu0
      %v1999 = vadd.f32 %v429, %v1998
      %v2000 = vpop.f32.mrf.mxu0
      %v2001 = vpop.f32.mrf.mxu0
      %v2002 = vadd.f32 %v429, %v2001
      %v2003 = vpop.f32.mrf.mxu0
      %2004 = vmatprep.mubr.bf16.mxu0 %v1176
      %2005 = vmatmul.mubr.bf16.gmra.mxu0 %v1175
      %v2006 = vpop.f32.mrf.mxu0
      %v2007 = vadd.f32 %v429, %v2006
      %v2008 = vpop.f32.mrf.mxu0
      %v2009 = vpop.f32.mrf.mxu0
      %v2010 = vadd.f32 %v429, %v2009
      %v2011 = vpop.f32.mrf.mxu0
      %2012 = vmatprep.mubr.bf16.mxu0 %v1180
      %2013 = vmatmul.mubr.bf16.gmra.mxu0 %v1179
      %v2014 = vpop.f32.mrf.mxu0
      %v2015 = vadd.f32 %v429, %v2014
      %v2016 = vpop.f32.mrf.mxu0
      %v2017 = vpop.f32.mrf.mxu0
      %v2018 = vadd.f32 %v429, %v2017
      %v2019 = vpop.f32.mrf.mxu0
      %2020 = vmatprep.mubr.bf16.mxu0 %v1184
      %2021 = vmatmul.mubr.bf16.gmra.mxu0 %v1183
      %v2022 = vpop.f32.mrf.mxu0
      %v2023 = vadd.f32 %v429, %v2022
      %v2024 = vpop.f32.mrf.mxu0
      %v2025 = vpop.f32.mrf.mxu0
      %v2026 = vadd.f32 %v429, %v2025
      %v2027 = vpop.f32.mrf.mxu0
      %2028 = vmatprep.mubr.bf16.mxu0 %v1188
      %2029 = vmatmul.mubr.bf16.gmra.mxu0 %v1187
      %v2030 = vpop.f32.mrf.mxu0
      %v2031 = vadd.f32 %v429, %v2030
      %v2032 = vpop.f32.mrf.mxu0
      %v2033 = vpop.f32.mrf.mxu0
      %v2034 = vadd.f32 %v429, %v2033
      %v2035 = vpop.f32.mrf.mxu0
      %2036 = vmatprep.mubr.bf16.mxu0 %v1192
      %2037 = vmatmul.mubr.bf16.gmra.mxu0 %v1191
      %v2038 = vpop.f32.mrf.mxu0
      %v2039 = vadd.f32 %v429, %v2038
      %v2040 = vpop.f32.mrf.mxu0
      %v2041 = vpop.f32.mrf.mxu0
      %v2042 = vadd.f32 %v429, %v2041
      %v2043 = vpop.f32.mrf.mxu0
      %2044 = vmatprep.mubr.bf16.mxu0 %v1196
      %2045 = vmatmul.mubr.bf16.gmra.mxu0 %v1195
      %v2046 = vpop.f32.mrf.mxu0
      %v2047 = vadd.f32 %v429, %v2046
      %v2048 = vpop.f32.mrf.mxu0
      %v2049 = vpop.f32.mrf.mxu0
      %v2050 = vadd.f32 %v429, %v2049
      %v2051 = vpop.f32.mrf.mxu0
      %2052 = vmatprep.mubr.bf16.mxu0 %v1200
      %2053 = vmatmul.mubr.bf16.gmra.mxu0 %v1199
      %v2054 = vpop.f32.mrf.mxu0
      %v2055 = vadd.f32 %v429, %v2054
      %v2056 = vpop.f32.mrf.mxu0
      %v2057 = vpop.f32.mrf.mxu0
      %v2058 = vadd.f32 %v429, %v2057
      %v2059 = vpop.f32.mrf.mxu0
      %2060 = vmatprep.mubr.bf16.mxu0 %v1204
      %2061 = vmatmul.mubr.bf16.gmra.mxu0 %v1203
      %v2062 = vpop.f32.mrf.mxu0
      %v2063 = vadd.f32 %v429, %v2062
      %v2064 = vpop.f32.mrf.mxu0
      %v2065 = vpop.f32.mrf.mxu0
      %v2066 = vadd.f32 %v429, %v2065
      %v2067 = vpop.f32.mrf.mxu0
      %2068 = vmatprep.mubr.bf16.mxu0 %v1208
      %2069 = vmatmul.mubr.bf16.gmra.mxu0 %v1207
      %v2070 = vpop.f32.mrf.mxu0
      %v2071 = vadd.f32 %v429, %v2070
      %v2072 = vpop.f32.mrf.mxu0
      %v2073 = vpop.f32.mrf.mxu0
      %v2074 = vadd.f32 %v429, %v2073
      %v2075 = vpop.f32.mrf.mxu0
      %2076 = vmatprep.mubr.bf16.mxu0 %v1212
      %2077 = vmatmul.mubr.bf16.gmra.mxu0 %v1211
      %v2078 = vpop.f32.mrf.mxu0
      %v2079 = vadd.f32 %v429, %v2078
      %v2080 = vpop.f32.mrf.mxu0
      %v2081 = vpop.f32.mrf.mxu0
      %v2082 = vadd.f32 %v429, %v2081
      %v2083 = vpop.f32.mrf.mxu0
      %2084 = vdwg.mxu0
      %2085 = vmatprep.subr.bf16.mxu0 0
      %2086 = vmatpush1.bf16.msra.mxu0 %v1485
      %2087 = vmatprep.subr.bf16.mxu0 0
      %2088 = vmatpush1.bf16.msra.mxu0 %v1484
      %2089 = vmatprep.subr.bf16.mxu0 0
      %2090 = vmatpush1.bf16.msra.mxu0 %v1483
      %2091 = vmatprep.subr.bf16.mxu0 0
      %2092 = vmatpush1.bf16.msra.mxu0 %v1482
      %2093 = vmatprep.subr.bf16.mxu0 0
      %2094 = vmatpush1.bf16.msra.mxu0 %v1481
      %2095 = vmatprep.subr.bf16.mxu0 0
      %2096 = vmatpush1.bf16.msra.mxu0 %v1480
      %2097 = vmatprep.subr.bf16.mxu0 0
      %2098 = vmatpush1.bf16.msra.mxu0 %v1479
      %2099 = vmatprep.subr.bf16.mxu0 0
      %2100 = vmatpush1.bf16.msra.mxu0 %v1478
      %2101 = vmatprep.subr.bf16.mxu0 0
      %2102 = vmatpush2.bf16.msra.mxu0 0
      %2103 = vmatprep.subr.bf16.mxu0 0
      %2104 = vmatpush2.bf16.msra.mxu0 0
      %2105 = vmatprep.subr.bf16.mxu0 0
      %2106 = vmatpush2.bf16.msra.mxu0 0
      %2107 = vmatprep.subr.bf16.mxu0 0
      %2108 = vmatpush2.bf16.msra.mxu0 0
      %2109 = vmatprep.subr.bf16.mxu0 0
      %2110 = vmatpush2.bf16.msra.mxu0 0
      %2111 = vmatprep.subr.bf16.mxu0 0
      %2112 = vmatpush2.bf16.msra.mxu0 0
      %2113 = vmatprep.subr.bf16.mxu0 0
      %2114 = vmatpush2.bf16.msra.mxu0 0
      %2115 = vmatprep.subr.bf16.mxu0 0
      %2116 = vmatpush2.bf16.msra.mxu0 %v1486
      %2117 = vmatprep.mubr.bf16.mxu0 %v1514
      %2118 = vmatmul.mubr.bf16.gmra.mxu0 %v1021
      %v2119 = vpop.f32.mrf.mxu0
      %v2120 = vadd.f32 %v1695, %v2119
      %v2121 = vpop.f32.mrf.mxu0
      %v2122 = vpop.f32.mrf.mxu0
      %v2123 = vadd.f32 %v1698, %v2122
      %v2124 = vpop.f32.mrf.mxu0
      %2125 = vmatprep.mubr.bf16.mxu0 %v1517
      %2126 = vmatmul.mubr.bf16.gmra.mxu0 %v1025
      %v2127 = vpop.f32.mrf.mxu0
      %v2128 = vadd.f32 %v1703, %v2127
      %v2129 = vpop.f32.mrf.mxu0
      %v2130 = vpop.f32.mrf.mxu0
      %v2131 = vadd.f32 %v1706, %v2130
      %v2132 = vpop.f32.mrf.mxu0
      %2133 = vmatprep.mubr.bf16.mxu0 %v1520
      %2134 = vmatmul.mubr.bf16.gmra.mxu0 %v1029
      %v2135 = vpop.f32.mrf.mxu0
      %v2136 = vadd.f32 %v1711, %v2135
      %v2137 = vpop.f32.mrf.mxu0
      %v2138 = vpop.f32.mrf.mxu0
      %v2139 = vadd.f32 %v1714, %v2138
      %v2140 = vpop.f32.mrf.mxu0
      %2141 = vmatprep.mubr.bf16.mxu0 %v1523
      %2142 = vmatmul.mubr.bf16.gmra.mxu0 %v1033
      %v2143 = vpop.f32.mrf.mxu0
      %v2144 = vadd.f32 %v1719, %v2143
      %v2145 = vpop.f32.mrf.mxu0
      %v2146 = vpop.f32.mrf.mxu0
      %v2147 = vadd.f32 %v1722, %v2146
      %v2148 = vpop.f32.mrf.mxu0
      %2149 = vmatprep.mubr.bf16.mxu0 %v1526
      %2150 = vmatmul.mubr.bf16.gmra.mxu0 %v1037
      %v2151 = vpop.f32.mrf.mxu0
      %v2152 = vadd.f32 %v1727, %v2151
      %v2153 = vpop.f32.mrf.mxu0
      %v2154 = vpop.f32.mrf.mxu0
      %v2155 = vadd.f32 %v1730, %v2154
      %v2156 = vpop.f32.mrf.mxu0
      %2157 = vmatprep.mubr.bf16.mxu0 %v1529
      %2158 = vmatmul.mubr.bf16.gmra.mxu0 %v1041
      %v2159 = vpop.f32.mrf.mxu0
      %v2160 = vadd.f32 %v1735, %v2159
      %v2161 = vpop.f32.mrf.mxu0
      %v2162 = vpop.f32.mrf.mxu0
      %v2163 = vadd.f32 %v1738, %v2162
      %v2164 = vpop.f32.mrf.mxu0
      %2165 = vmatprep.mubr.bf16.mxu0 %v1532
      %2166 = vmatmul.mubr.bf16.gmra.mxu0 %v1045
      %v2167 = vpop.f32.mrf.mxu0
      %v2168 = vadd.f32 %v1743, %v2167
      %v2169 = vpop.f32.mrf.mxu0
      %v2170 = vpop.f32.mrf.mxu0
      %v2171 = vadd.f32 %v1746, %v2170
      %v2172 = vpop.f32.mrf.mxu0
      %2173 = vmatprep.mubr.bf16.mxu0 %v1535
      %2174 = vmatmul.mubr.bf16.gmra.mxu0 %v1049
      %v2175 = vpop.f32.mrf.mxu0
      %v2176 = vadd.f32 %v1751, %v2175
      %v2177 = vpop.f32.mrf.mxu0
      %v2178 = vpop.f32.mrf.mxu0
      %v2179 = vadd.f32 %v1754, %v2178
      %v2180 = vpop.f32.mrf.mxu0
      %2181 = vmatprep.mubr.bf16.mxu0 %v1538
      %2182 = vmatmul.mubr.bf16.gmra.mxu0 %v1053
      %v2183 = vpop.f32.mrf.mxu0
      %v2184 = vadd.f32 %v1759, %v2183
      %v2185 = vpop.f32.mrf.mxu0
      %v2186 = vpop.f32.mrf.mxu0
      %v2187 = vadd.f32 %v1762, %v2186
      %v2188 = vpop.f32.mrf.mxu0
      %2189 = vmatprep.mubr.bf16.mxu0 %v1541
      %2190 = vmatmul.mubr.bf16.gmra.mxu0 %v1057
      %v2191 = vpop.f32.mrf.mxu0
      %v2192 = vadd.f32 %v1767, %v2191
      %v2193 = vpop.f32.mrf.mxu0
      %v2194 = vpop.f32.mrf.mxu0
      %v2195 = vadd.f32 %v1770, %v2194
      %v2196 = vpop.f32.mrf.mxu0
      %2197 = vmatprep.mubr.bf16.mxu0 %v1544
      %2198 = vmatmul.mubr.bf16.gmra.mxu0 %v1061
      %v2199 = vpop.f32.mrf.mxu0
      %v2200 = vadd.f32 %v1775, %v2199
      %v2201 = vpop.f32.mrf.mxu0
      %v2202 = vpop.f32.mrf.mxu0
      %v2203 = vadd.f32 %v1778, %v2202
      %v2204 = vpop.f32.mrf.mxu0
      %2205 = vmatprep.mubr.bf16.mxu0 %v1547
      %2206 = vmatmul.mubr.bf16.gmra.mxu0 %v1065
      %v2207 = vpop.f32.mrf.mxu0
      %v2208 = vadd.f32 %v1783, %v2207
      %v2209 = vpop.f32.mrf.mxu0
      %v2210 = vpop.f32.mrf.mxu0
      %v2211 = vadd.f32 %v1786, %v2210
      %v2212 = vpop.f32.mrf.mxu0
      %2213 = vmatprep.mubr.bf16.mxu0 %v1550
      %2214 = vmatmul.mubr.bf16.gmra.mxu0 %v1069
      %v2215 = vpop.f32.mrf.mxu0
      %v2216 = vadd.f32 %v1791, %v2215
      %v2217 = vpop.f32.mrf.mxu0
      %v2218 = vpop.f32.mrf.mxu0
      %v2219 = vadd.f32 %v1794, %v2218
      %v2220 = vpop.f32.mrf.mxu0
      %2221 = vmatprep.mubr.bf16.mxu0 %v1553
      %2222 = vmatmul.mubr.bf16.gmra.mxu0 %v1073
      %v2223 = vpop.f32.mrf.mxu0
      %v2224 = vadd.f32 %v1799, %v2223
      %v2225 = vpop.f32.mrf.mxu0
      %v2226 = vpop.f32.mrf.mxu0
      %v2227 = vadd.f32 %v1802, %v2226
      %v2228 = vpop.f32.mrf.mxu0
      %2229 = vmatprep.mubr.bf16.mxu0 %v1556
      %2230 = vmatmul.mubr.bf16.gmra.mxu0 %v1077
      %v2231 = vpop.f32.mrf.mxu0
      %v2232 = vadd.f32 %v1807, %v2231
      %v2233 = vpop.f32.mrf.mxu0
      %v2234 = vpop.f32.mrf.mxu0
      %v2235 = vadd.f32 %v1810, %v2234
      %v2236 = vpop.f32.mrf.mxu0
      %2237 = vmatprep.mubr.bf16.mxu0 %v1559
      %2238 = vmatmul.mubr.bf16.gmra.mxu0 %v1081
      %v2239 = vpop.f32.mrf.mxu0
      %v2240 = vadd.f32 %v1815, %v2239
      %v2241 = vpop.f32.mrf.mxu0
      %v2242 = vpop.f32.mrf.mxu0
      %v2243 = vadd.f32 %v1818, %v2242
      %v2244 = vpop.f32.mrf.mxu0
      %2245 = vmatprep.mubr.bf16.mxu0 %v1562
      %2246 = vmatmul.mubr.bf16.gmra.mxu0 %v1085
      %v2247 = vpop.f32.mrf.mxu0
      %v2248 = vadd.f32 %v1823, %v2247
      %v2249 = vpop.f32.mrf.mxu0
      %v2250 = vpop.f32.mrf.mxu0
      %v2251 = vadd.f32 %v1826, %v2250
      %v2252 = vpop.f32.mrf.mxu0
      %2253 = vmatprep.mubr.bf16.mxu0 %v1565
      %2254 = vmatmul.mubr.bf16.gmra.mxu0 %v1089
      %v2255 = vpop.f32.mrf.mxu0
      %v2256 = vadd.f32 %v1831, %v2255
      %v2257 = vpop.f32.mrf.mxu0
      %v2258 = vpop.f32.mrf.mxu0
      %v2259 = vadd.f32 %v1834, %v2258
      %v2260 = vpop.f32.mrf.mxu0
      %2261 = vmatprep.mubr.bf16.mxu0 %v1568
      %2262 = vmatmul.mubr.bf16.gmra.mxu0 %v1093
      %v2263 = vpop.f32.mrf.mxu0
      %v2264 = vadd.f32 %v1839, %v2263
      %v2265 = vpop.f32.mrf.mxu0
      %v2266 = vpop.f32.mrf.mxu0
      %v2267 = vadd.f32 %v1842, %v2266
      %v2268 = vpop.f32.mrf.mxu0
      %2269 = vmatprep.mubr.bf16.mxu0 %v1571
      %2270 = vmatmul.mubr.bf16.gmra.mxu0 %v1097
      %v2271 = vpop.f32.mrf.mxu0
      %v2272 = vadd.f32 %v1847, %v2271
      %v2273 = vpop.f32.mrf.mxu0
      %v2274 = vpop.f32.mrf.mxu0
      %v2275 = vadd.f32 %v1850, %v2274
      %v2276 = vpop.f32.mrf.mxu0
      %2277 = vmatprep.mubr.bf16.mxu0 %v1574
      %2278 = vmatmul.mubr.bf16.gmra.mxu0 %v1101
      %v2279 = vpop.f32.mrf.mxu0
      %v2280 = vadd.f32 %v1855, %v2279
      %v2281 = vpop.f32.mrf.mxu0
      %v2282 = vpop.f32.mrf.mxu0
      %v2283 = vadd.f32 %v1858, %v2282
      %v2284 = vpop.f32.mrf.mxu0
      %2285 = vmatprep.mubr.bf16.mxu0 %v1577
      %2286 = vmatmul.mubr.bf16.gmra.mxu0 %v1105
      %v2287 = vpop.f32.mrf.mxu0
      %v2288 = vadd.f32 %v1863, %v2287
      %v2289 = vpop.f32.mrf.mxu0
      %v2290 = vpop.f32.mrf.mxu0
      %v2291 = vadd.f32 %v1866, %v2290
      %v2292 = vpop.f32.mrf.mxu0
      %2293 = vmatprep.mubr.bf16.mxu0 %v1580
      %2294 = vmatmul.mubr.bf16.gmra.mxu0 %v1109
      %v2295 = vpop.f32.mrf.mxu0
      %v2296 = vadd.f32 %v1871, %v2295
      %v2297 = vpop.f32.mrf.mxu0
      %v2298 = vpop.f32.mrf.mxu0
      %v2299 = vadd.f32 %v1874, %v2298
      %v2300 = vpop.f32.mrf.mxu0
      %2301 = vmatprep.mubr.bf16.mxu0 %v1583
      %2302 = vmatmul.mubr.bf16.gmra.mxu0 %v1113
      %v2303 = vpop.f32.mrf.mxu0
      %v2304 = vadd.f32 %v1879, %v2303
      %v2305 = vpop.f32.mrf.mxu0
      %v2306 = vpop.f32.mrf.mxu0
      %v2307 = vadd.f32 %v1882, %v2306
      %v2308 = vpop.f32.mrf.mxu0
      %2309 = vmatprep.mubr.bf16.mxu0 %v1586
      %2310 = vmatmul.mubr.bf16.gmra.mxu0 %v1117
      %v2311 = vpop.f32.mrf.mxu0
      %v2312 = vadd.f32 %v1887, %v2311
      %v2313 = vpop.f32.mrf.mxu0
      %v2314 = vpop.f32.mrf.mxu0
      %v2315 = vadd.f32 %v1890, %v2314
      %v2316 = vpop.f32.mrf.mxu0
      %2317 = vmatprep.mubr.bf16.mxu0 %v1589
      %2318 = vmatmul.mubr.bf16.gmra.mxu0 %v1121
      %v2319 = vpop.f32.mrf.mxu0
      %v2320 = vadd.f32 %v1895, %v2319
      %v2321 = vpop.f32.mrf.mxu0
      %v2322 = vpop.f32.mrf.mxu0
      %v2323 = vadd.f32 %v1898, %v2322
      %v2324 = vpop.f32.mrf.mxu0
      %2325 = vmatprep.mubr.bf16.mxu0 %v1592
      %2326 = vmatmul.mubr.bf16.gmra.mxu0 %v1125
      %v2327 = vpop.f32.mrf.mxu0
      %v2328 = vadd.f32 %v1903, %v2327
      %v2329 = vpop.f32.mrf.mxu0
      %v2330 = vpop.f32.mrf.mxu0
      %v2331 = vadd.f32 %v1906, %v2330
      %v2332 = vpop.f32.mrf.mxu0
      %2333 = vmatprep.mubr.bf16.mxu0 %v1595
      %2334 = vmatmul.mubr.bf16.gmra.mxu0 %v1129
      %v2335 = vpop.f32.mrf.mxu0
      %v2336 = vadd.f32 %v1911, %v2335
      %v2337 = vpop.f32.mrf.mxu0
      %v2338 = vpop.f32.mrf.mxu0
      %v2339 = vadd.f32 %v1914, %v2338
      %v2340 = vpop.f32.mrf.mxu0
      %2341 = vmatprep.mubr.bf16.mxu0 %v1598
      %2342 = vmatmul.mubr.bf16.gmra.mxu0 %v1133
      %v2343 = vpop.f32.mrf.mxu0
      %v2344 = vadd.f32 %v1919, %v2343
      %v2345 = vpop.f32.mrf.mxu0
      %v2346 = vpop.f32.mrf.mxu0
      %v2347 = vadd.f32 %v1922, %v2346
      %v2348 = vpop.f32.mrf.mxu0
      %2349 = vmatprep.mubr.bf16.mxu0 %v1601
      %2350 = vmatmul.mubr.bf16.gmra.mxu0 %v1137
      %v2351 = vpop.f32.mrf.mxu0
      %v2352 = vadd.f32 %v1927, %v2351
      %v2353 = vpop.f32.mrf.mxu0
      %v2354 = vpop.f32.mrf.mxu0
      %v2355 = vadd.f32 %v1930, %v2354
      %v2356 = vpop.f32.mrf.mxu0
      %2357 = vmatprep.mubr.bf16.mxu0 %v1604
      %2358 = vmatmul.mubr.bf16.gmra.mxu0 %v1141
      %v2359 = vpop.f32.mrf.mxu0
      %v2360 = vadd.f32 %v1935, %v2359
      %v2361 = vpop.f32.mrf.mxu0
      %v2362 = vpop.f32.mrf.mxu0
      %v2363 = vadd.f32 %v1938, %v2362
      %v2364 = vpop.f32.mrf.mxu0
      %2365 = vmatprep.mubr.bf16.mxu0 %v1607
      %2366 = vmatmul.mubr.bf16.gmra.mxu0 %v1145
      %v2367 = vpop.f32.mrf.mxu0
      %v2368 = vadd.f32 %v1943, %v2367
      %v2369 = vpop.f32.mrf.mxu0
      %v2370 = vpop.f32.mrf.mxu0
      %v2371 = vadd.f32 %v1946, %v2370
      %v2372 = vpop.f32.mrf.mxu0
      %2373 = vmatprep.mubr.bf16.mxu0 %v1610
      %2374 = vmatmul.mubr.bf16.gmra.mxu0 %v1149
      %v2375 = vpop.f32.mrf.mxu0
      %v2376 = vadd.f32 %v1951, %v2375
      %v2377 = vpop.f32.mrf.mxu0
      %v2378 = vpop.f32.mrf.mxu0
      %v2379 = vadd.f32 %v1954, %v2378
      %v2380 = vpop.f32.mrf.mxu0
      %2381 = vmatprep.mubr.bf16.mxu0 %v1613
      %2382 = vmatmul.mubr.bf16.gmra.mxu0 %v1153
      %v2383 = vpop.f32.mrf.mxu0
      %v2384 = vadd.f32 %v1959, %v2383
      %v2385 = vpop.f32.mrf.mxu0
      %v2386 = vpop.f32.mrf.mxu0
      %v2387 = vadd.f32 %v1962, %v2386
      %v2388 = vpop.f32.mrf.mxu0
      %2389 = vmatprep.mubr.bf16.mxu0 %v1616
      %2390 = vmatmul.mubr.bf16.gmra.mxu0 %v1157
      %v2391 = vpop.f32.mrf.mxu0
      %v2392 = vadd.f32 %v1967, %v2391
      %v2393 = vpop.f32.mrf.mxu0
      %v2394 = vpop.f32.mrf.mxu0
      %v2395 = vadd.f32 %v1970, %v2394
      %v2396 = vpop.f32.mrf.mxu0
      %2397 = vmatprep.mubr.bf16.mxu0 %v1619
      %2398 = vmatmul.mubr.bf16.gmra.mxu0 %v1161
      %v2399 = vpop.f32.mrf.mxu0
      %v2400 = vadd.f32 %v1975, %v2399
      %v2401 = vpop.f32.mrf.mxu0
      %v2402 = vpop.f32.mrf.mxu0
      %v2403 = vadd.f32 %v1978, %v2402
      %v2404 = vpop.f32.mrf.mxu0
      %2405 = vmatprep.mubr.bf16.mxu0 %v1622
      %2406 = vmatmul.mubr.bf16.gmra.mxu0 %v1165
      %v2407 = vpop.f32.mrf.mxu0
      %v2408 = vadd.f32 %v1983, %v2407
      %v2409 = vpop.f32.mrf.mxu0
      %v2410 = vpop.f32.mrf.mxu0
      %v2411 = vadd.f32 %v1986, %v2410
      %v2412 = vpop.f32.mrf.mxu0
      %2413 = vmatprep.mubr.bf16.mxu0 %v1625
      %2414 = vmatmul.mubr.bf16.gmra.mxu0 %v1169
      %v2415 = vpop.f32.mrf.mxu0
      %v2416 = vadd.f32 %v1991, %v2415
      %v2417 = vpop.f32.mrf.mxu0
      %v2418 = vpop.f32.mrf.mxu0
      %v2419 = vadd.f32 %v1994, %v2418
      %v2420 = vpop.f32.mrf.mxu0
      %2421 = vmatprep.mubr.bf16.mxu0 %v1628
      %2422 = vmatmul.mubr.bf16.gmra.mxu0 %v1173
      %v2423 = vpop.f32.mrf.mxu0
      %v2424 = vadd.f32 %v1999, %v2423
      %v2425 = vpop.f32.mrf.mxu0
      %v2426 = vpop.f32.mrf.mxu0
      %v2427 = vadd.f32 %v2002, %v2426
      %v2428 = vpop.f32.mrf.mxu0
      %2429 = vmatprep.mubr.bf16.mxu0 %v1631
      %2430 = vmatmul.mubr.bf16.gmra.mxu0 %v1177
      %v2431 = vpop.f32.mrf.mxu0
      %v2432 = vadd.f32 %v2007, %v2431
      %v2433 = vpop.f32.mrf.mxu0
      %v2434 = vpop.f32.mrf.mxu0
      %v2435 = vadd.f32 %v2010, %v2434
      %v2436 = vpop.f32.mrf.mxu0
      %2437 = vmatprep.mubr.bf16.mxu0 %v1634
      %2438 = vmatmul.mubr.bf16.gmra.mxu0 %v1181
      %v2439 = vpop.f32.mrf.mxu0
      %v2440 = vadd.f32 %v2015, %v2439
      %v2441 = vpop.f32.mrf.mxu0
      %v2442 = vpop.f32.mrf.mxu0
      %v2443 = vadd.f32 %v2018, %v2442
      %v2444 = vpop.f32.mrf.mxu0
      %2445 = vmatprep.mubr.bf16.mxu0 %v1637
      %2446 = vmatmul.mubr.bf16.gmra.mxu0 %v1185
      %v2447 = vpop.f32.mrf.mxu0
      %v2448 = vadd.f32 %v2023, %v2447
      %v2449 = vpop.f32.mrf.mxu0
      %v2450 = vpop.f32.mrf.mxu0
      %v2451 = vadd.f32 %v2026, %v2450
      %v2452 = vpop.f32.mrf.mxu0
      %2453 = vmatprep.mubr.bf16.mxu0 %v1640
      %2454 = vmatmul.mubr.bf16.gmra.mxu0 %v1189
      %v2455 = vpop.f32.mrf.mxu0
      %v2456 = vadd.f32 %v2031, %v2455
      %v2457 = vpop.f32.mrf.mxu0
      %v2458 = vpop.f32.mrf.mxu0
      %v2459 = vadd.f32 %v2034, %v2458
      %v2460 = vpop.f32.mrf.mxu0
      %2461 = vmatprep.mubr.bf16.mxu0 %v1643
      %2462 = vmatmul.mubr.bf16.gmra.mxu0 %v1193
      %v2463 = vpop.f32.mrf.mxu0
      %v2464 = vadd.f32 %v2039, %v2463
      %v2465 = vpop.f32.mrf.mxu0
      %v2466 = vpop.f32.mrf.mxu0
      %v2467 = vadd.f32 %v2042, %v2466
      %v2468 = vpop.f32.mrf.mxu0
      %2469 = vmatprep.mubr.bf16.mxu0 %v1646
      %2470 = vmatmul.mubr.bf16.gmra.mxu0 %v1197
      %v2471 = vpop.f32.mrf.mxu0
      %v2472 = vadd.f32 %v2047, %v2471
      %v2473 = vpop.f32.mrf.mxu0
      %v2474 = vpop.f32.mrf.mxu0
      %v2475 = vadd.f32 %v2050, %v2474
      %v2476 = vpop.f32.mrf.mxu0
      %2477 = vmatprep.mubr.bf16.mxu0 %v1649
      %2478 = vmatmul.mubr.bf16.gmra.mxu0 %v1201
      %v2479 = vpop.f32.mrf.mxu0
      %v2480 = vadd.f32 %v2055, %v2479
      %v2481 = vpop.f32.mrf.mxu0
      %v2482 = vpop.f32.mrf.mxu0
      %v2483 = vadd.f32 %v2058, %v2482
      %v2484 = vpop.f32.mrf.mxu0
      %2485 = vmatprep.mubr.bf16.mxu0 %v1652
      %2486 = vmatmul.mubr.bf16.gmra.mxu0 %v1205
      %v2487 = vpop.f32.mrf.mxu0
      %v2488 = vadd.f32 %v2063, %v2487
      %v2489 = vpop.f32.mrf.mxu0
      %v2490 = vpop.f32.mrf.mxu0
      %v2491 = vadd.f32 %v2066, %v2490
      %v2492 = vpop.f32.mrf.mxu0
      %2493 = vmatprep.mubr.bf16.mxu0 %v1655
      %2494 = vmatmul.mubr.bf16.gmra.mxu0 %v1209
      %v2495 = vpop.f32.mrf.mxu0
      %v2496 = vadd.f32 %v2071, %v2495
      %v2497 = vpop.f32.mrf.mxu0
      %v2498 = vpop.f32.mrf.mxu0
      %v2499 = vadd.f32 %v2074, %v2498
      %v2500 = vpop.f32.mrf.mxu0
      %2501 = vmatprep.mubr.bf16.mxu0 %v1658
      %2502 = vmatmul.mubr.bf16.gmra.mxu0 %v1213
      %v2503 = vpop.f32.mrf.mxu0
      %v2504 = vadd.f32 %v2079, %v2503
      %v2505 = vpop.f32.mrf.mxu0
      %v2506 = vpop.f32.mrf.mxu0
      %v2507 = vadd.f32 %v2082, %v2506
      %v2508 = vpop.f32.mrf.mxu0
      %2509 = vdwg.mxu0
      %v2510 = vmax.f32 %v2120, 0.0
      %v2511 = vmax.f32 %v2123, 0.0
      %v2512 = vmax.f32 %v2128, 0.0
      %v2513 = vmax.f32 %v2131, 0.0
      %v2514 = vmax.f32 %v2136, 0.0
      %v2515 = vmax.f32 %v2139, 0.0
      %v2516 = vmax.f32 %v2144, 0.0
      %v2517 = vmax.f32 %v2147, 0.0
      %v2518 = vmax.f32 %v2152, 0.0
      %v2519 = vmax.f32 %v2155, 0.0
      %v2520 = vmax.f32 %v2160, 0.0
      %v2521 = vmax.f32 %v2163, 0.0
      %v2522 = vmax.f32 %v2168, 0.0
      %v2523 = vmax.f32 %v2171, 0.0
      %v2524 = vmax.f32 %v2176, 0.0
      %v2525 = vmax.f32 %v2179, 0.0
      %v2526 = vmax.f32 %v2184, 0.0
      %v2527 = vmax.f32 %v2187, 0.0
      %v2528 = vmax.f32 %v2192, 0.0
      %v2529 = vmax.f32 %v2195, 0.0
      %v2530 = vmax.f32 %v2200, 0.0
      %v2531 = vmax.f32 %v2203, 0.0
      %v2532 = vmax.f32 %v2208, 0.0
      %v2533 = vmax.f32 %v2211, 0.0
      %v2534 = vmax.f32 %v2216, 0.0
      %v2535 = vmax.f32 %v2219, 0.0
      %v2536 = vmax.f32 %v2224, 0.0
      %v2537 = vmax.f32 %v2227, 0.0
      %v2538 = vmax.f32 %v2232, 0.0
      %v2539 = vmax.f32 %v2235, 0.0
      %v2540 = vmax.f32 %v2240, 0.0
      %v2541 = vmax.f32 %v2243, 0.0
      %v2542 = vmax.f32 %v2248, 0.0
      %v2543 = vmax.f32 %v2251, 0.0
      %v2544 = vmax.f32 %v2256, 0.0
      %v2545 = vmax.f32 %v2259, 0.0
      %v2546 = vmax.f32 %v2264, 0.0
      %v2547 = vmax.f32 %v2267, 0.0
      %v2548 = vmax.f32 %v2272, 0.0
      %v2549 = vmax.f32 %v2275, 0.0
      %v2550 = vmax.f32 %v2280, 0.0
      %v2551 = vmax.f32 %v2283, 0.0
      %v2552 = vmax.f32 %v2288, 0.0
      %v2553 = vmax.f32 %v2291, 0.0
      %v2554 = vmax.f32 %v2296, 0.0
      %v2555 = vmax.f32 %v2299, 0.0
      %v2556 = vmax.f32 %v2304, 0.0
      %v2557 = vmax.f32 %v2307, 0.0
      %v2558 = vmax.f32 %v2312, 0.0
      %v2559 = vmax.f32 %v2315, 0.0
      %v2560 = vmax.f32 %v2320, 0.0
      %v2561 = vmax.f32 %v2323, 0.0
      %v2562 = vmax.f32 %v2328, 0.0
      %v2563 = vmax.f32 %v2331, 0.0
      %v2564 = vmax.f32 %v2336, 0.0
      %v2565 = vmax.f32 %v2339, 0.0
      %v2566 = vmax.f32 %v2344, 0.0
      %v2567 = vmax.f32 %v2347, 0.0
      %v2568 = vmax.f32 %v2352, 0.0
      %v2569 = vmax.f32 %v2355, 0.0
      %v2570 = vmax.f32 %v2360, 0.0
      %v2571 = vmax.f32 %v2363, 0.0
      %v2572 = vmax.f32 %v2368, 0.0
      %v2573 = vmax.f32 %v2371, 0.0
      %v2574 = vmax.f32 %v2376, 0.0
      %v2575 = vmax.f32 %v2379, 0.0
      %v2576 = vmax.f32 %v2384, 0.0
      %v2577 = vmax.f32 %v2387, 0.0
      %v2578 = vmax.f32 %v2392, 0.0
      %v2579 = vmax.f32 %v2395, 0.0
      %v2580 = vmax.f32 %v2400, 0.0
      %v2581 = vmax.f32 %v2403, 0.0
      %v2582 = vmax.f32 %v2408, 0.0
      %v2583 = vmax.f32 %v2411, 0.0
      %v2584 = vmax.f32 %v2416, 0.0
      %v2585 = vmax.f32 %v2419, 0.0
      %v2586 = vmax.f32 %v2424, 0.0
      %v2587 = vmax.f32 %v2427, 0.0
      %v2588 = vmax.f32 %v2432, 0.0
      %v2589 = vmax.f32 %v2435, 0.0
      %v2590 = vmax.f32 %v2440, 0.0
      %v2591 = vmax.f32 %v2443, 0.0
      %v2592 = vmax.f32 %v2448, 0.0
      %v2593 = vmax.f32 %v2451, 0.0
      %v2594 = vmax.f32 %v2456, 0.0
      %v2595 = vmax.f32 %v2459, 0.0
      %v2596 = vmax.f32 %v2464, 0.0
      %v2597 = vmax.f32 %v2467, 0.0
      %v2598 = vmax.f32 %v2472, 0.0
      %v2599 = vmax.f32 %v2475, 0.0
      %v2600 = vmax.f32 %v2480, 0.0
      %v2601 = vmax.f32 %v2483, 0.0
      %v2602 = vmax.f32 %v2488, 0.0
      %v2603 = vmax.f32 %v2491, 0.0
      %v2604 = vmax.f32 %v2496, 0.0
      %v2605 = vmax.f32 %v2499, 0.0
      %v2606 = vmax.f32 %v2504, 0.0
      %v2607 = vmax.f32 %v2507, 0.0
      %v2608 = vpack.c.bf16 %v2511, %v2510
      %v2609 = vpack.c.bf16 %v2513, %v2512
      %v2610 = vpack.c.bf16 %v2515, %v2514
      %v2611 = vpack.c.bf16 %v2517, %v2516
      %v2612 = vpack.c.bf16 %v2519, %v2518
      %v2613 = vpack.c.bf16 %v2521, %v2520
      %v2614 = vpack.c.bf16 %v2523, %v2522
      %v2615 = vpack.c.bf16 %v2525, %v2524
      %v2616 = vpack.c.bf16 %v2527, %v2526
      %v2617 = vpack.c.bf16 %v2529, %v2528
      %v2618 = vpack.c.bf16 %v2531, %v2530
      %v2619 = vpack.c.bf16 %v2533, %v2532
      %v2620 = vpack.c.bf16 %v2535, %v2534
      %v2621 = vpack.c.bf16 %v2537, %v2536
      %v2622 = vpack.c.bf16 %v2539, %v2538
      %v2623 = vpack.c.bf16 %v2541, %v2540
      %v2624 = vpack.c.bf16 %v2543, %v2542
      %v2625 = vpack.c.bf16 %v2545, %v2544
      %v2626 = vpack.c.bf16 %v2547, %v2546
      %v2627 = vpack.c.bf16 %v2549, %v2548
      %v2628 = vpack.c.bf16 %v2551, %v2550
      %v2629 = vpack.c.bf16 %v2553, %v2552
      %v2630 = vpack.c.bf16 %v2555, %v2554
      %v2631 = vpack.c.bf16 %v2557, %v2556
      %v2632 = vpack.c.bf16 %v2559, %v2558
      %v2633 = vpack.c.bf16 %v2561, %v2560
      %v2634 = vpack.c.bf16 %v2563, %v2562
      %v2635 = vpack.c.bf16 %v2565, %v2564
      %v2636 = vpack.c.bf16 %v2567, %v2566
      %v2637 = vpack.c.bf16 %v2569, %v2568
      %v2638 = vpack.c.bf16 %v2571, %v2570
      %v2639 = vpack.c.bf16 %v2573, %v2572
      %v2640 = vpack.c.bf16 %v2575, %v2574
      %v2641 = vpack.c.bf16 %v2577, %v2576
      %v2642 = vpack.c.bf16 %v2579, %v2578
      %v2643 = vpack.c.bf16 %v2581, %v2580
      %v2644 = vpack.c.bf16 %v2583, %v2582
      %v2645 = vpack.c.bf16 %v2585, %v2584
      %v2646 = vpack.c.bf16 %v2587, %v2586
      %v2647 = vpack.c.bf16 %v2589, %v2588
      %v2648 = vpack.c.bf16 %v2591, %v2590
      %v2649 = vpack.c.bf16 %v2593, %v2592
      %v2650 = vpack.c.bf16 %v2595, %v2594
      %v2651 = vpack.c.bf16 %v2597, %v2596
      %v2652 = vpack.c.bf16 %v2599, %v2598
      %v2653 = vpack.c.bf16 %v2601, %v2600
      %v2654 = vpack.c.bf16 %v2603, %v2602
      %v2655 = vpack.c.bf16 %v2605, %v2604
      %v2656 = vpack.c.bf16 %v2607, %v2606
      %v2706 = vunpack.c.l.b16 %v2608
      %v2707 = vunpack.c.h.b16 %v2608
      %v2708 = vunpack.c.l.b16 %v2609
      %v2709 = vunpack.c.h.b16 %v2609
      %v2710 = vunpack.c.l.b16 %v2610
      %v2711 = vunpack.c.h.b16 %v2610
      %v2712 = vunpack.c.l.b16 %v2611
      %v2713 = vunpack.c.h.b16 %v2611
      %v2714 = vunpack.c.l.b16 %v2612
      %v2715 = vunpack.c.h.b16 %v2612
      %v2716 = vunpack.c.l.b16 %v2613
      %v2717 = vunpack.c.h.b16 %v2613
      %v2718 = vunpack.c.l.b16 %v2614
      %v2719 = vunpack.c.h.b16 %v2614
      %v2720 = vunpack.c.l.b16 %v2615
      %v2721 = vunpack.c.h.b16 %v2615
      %v2722 = vunpack.c.l.b16 %v2616
      %v2723 = vunpack.c.h.b16 %v2616
      %v2724 = vunpack.c.l.b16 %v2617
      %v2725 = vunpack.c.h.b16 %v2617
      %v2726 = vunpack.c.l.b16 %v2618
      %v2727 = vunpack.c.h.b16 %v2618
      %v2728 = vunpack.c.l.b16 %v2619
      %v2729 = vunpack.c.h.b16 %v2619
      %v2730 = vunpack.c.l.b16 %v2620
      %v2731 = vunpack.c.h.b16 %v2620
      %v2732 = vunpack.c.l.b16 %v2621
      %v2733 = vunpack.c.h.b16 %v2621
      %v2734 = vunpack.c.l.b16 %v2622
      %v2735 = vunpack.c.h.b16 %v2622
      %v2736 = vunpack.c.l.b16 %v2623
      %v2737 = vunpack.c.h.b16 %v2623
      %v2738 = vunpack.c.l.b16 %v2624
      %v2739 = vunpack.c.h.b16 %v2624
      %v2740 = vunpack.c.l.b16 %v2625
      %v2741 = vunpack.c.h.b16 %v2625
      %v2742 = vunpack.c.l.b16 %v2626
      %v2743 = vunpack.c.h.b16 %v2626
      %v2744 = vunpack.c.l.b16 %v2627
      %v2745 = vunpack.c.h.b16 %v2627
      %v2746 = vunpack.c.l.b16 %v2628
      %v2747 = vunpack.c.h.b16 %v2628
      %v2748 = vunpack.c.l.b16 %v2629
      %v2749 = vunpack.c.h.b16 %v2629
      %v2750 = vunpack.c.l.b16 %v2630
      %v2751 = vunpack.c.h.b16 %v2630
      %v2752 = vunpack.c.l.b16 %v2631
      %v2753 = vunpack.c.h.b16 %v2631
      %v2754 = vunpack.c.l.b16 %v2632
      %v2755 = vunpack.c.h.b16 %v2632
      %v2756 = vunpack.c.l.b16 %v2633
      %v2757 = vunpack.c.h.b16 %v2633
      %v2758 = vunpack.c.l.b16 %v2634
      %v2759 = vunpack.c.h.b16 %v2634
      %v2760 = vunpack.c.l.b16 %v2635
      %v2761 = vunpack.c.h.b16 %v2635
      %v2762 = vunpack.c.l.b16 %v2636
      %v2763 = vunpack.c.h.b16 %v2636
      %v2764 = vunpack.c.l.b16 %v2637
      %v2765 = vunpack.c.h.b16 %v2637
      %v2766 = vunpack.c.l.b16 %v2638
      %v2767 = vunpack.c.h.b16 %v2638
      %v2768 = vunpack.c.l.b16 %v2639
      %v2769 = vunpack.c.h.b16 %v2639
      %v2770 = vunpack.c.l.b16 %v2640
      %v2771 = vunpack.c.h.b16 %v2640
      %v2772 = vunpack.c.l.b16 %v2641
      %v2773 = vunpack.c.h.b16 %v2641
      %v2774 = vunpack.c.l.b16 %v2642
      %v2775 = vunpack.c.h.b16 %v2642
      %v2776 = vunpack.c.l.b16 %v2643
      %v2777 = vunpack.c.h.b16 %v2643
      %v2778 = vunpack.c.l.b16 %v2644
      %v2779 = vunpack.c.h.b16 %v2644
      %v2780 = vunpack.c.l.b16 %v2645
      %v2781 = vunpack.c.h.b16 %v2645
      %v2782 = vunpack.c.l.b16 %v2646
      %v2783 = vunpack.c.h.b16 %v2646
      %v2784 = vunpack.c.l.b16 %v2647
      %v2785 = vunpack.c.h.b16 %v2647
      %v2786 = vunpack.c.l.b16 %v2648
      %v2787 = vunpack.c.h.b16 %v2648
      %v2788 = vunpack.c.l.b16 %v2649
      %v2789 = vunpack.c.h.b16 %v2649
      %v2790 = vunpack.c.l.b16 %v2650
      %v2791 = vunpack.c.h.b16 %v2650
      %v2792 = vunpack.c.l.b16 %v2651
      %v2793 = vunpack.c.h.b16 %v2651
      %v2794 = vunpack.c.l.b16 %v2652
      %v2795 = vunpack.c.h.b16 %v2652
      %v2796 = vunpack.c.l.b16 %v2653
      %v2797 = vunpack.c.h.b16 %v2653
      %v2798 = vunpack.c.l.b16 %v2654
      %v2799 = vunpack.c.h.b16 %v2654
      %v2800 = vunpack.c.l.b16 %v2655
      %v2801 = vunpack.c.h.b16 %v2655
      %v2802 = vunpack.c.l.b16 %v2656
      %v2803 = vunpack.c.h.b16 %v2656
      %v2804 = vpack.c.b16 %v2706, %v2706
      %v2805 = vpack.c.b16 %v2707, %v2707
      %v2806 = vpack.c.b16 %v2708, %v2708
      %v2807 = vpack.c.b16 %v2709, %v2709
      %v2808 = vpack.c.b16 %v2710, %v2710
      %v2809 = vpack.c.b16 %v2711, %v2711
      %v2810 = vpack.c.b16 %v2712, %v2712
      %v2811 = vpack.c.b16 %v2713, %v2713
      %v2812 = vpack.c.b16 %v2714, %v2714
      %v2813 = vpack.c.b16 %v2715, %v2715
      %v2814 = vpack.c.b16 %v2716, %v2716
      %v2815 = vpack.c.b16 %v2717, %v2717
      %v2816 = vpack.c.b16 %v2718, %v2718
      %v2817 = vpack.c.b16 %v2719, %v2719
      %v2818 = vpack.c.b16 %v2720, %v2720
      %v2819 = vpack.c.b16 %v2721, %v2721
      %v2820 = vpack.c.b16 %v2722, %v2722
      %v2821 = vpack.c.b16 %v2723, %v2723
      %v2822 = vpack.c.b16 %v2724, %v2724
      %v2823 = vpack.c.b16 %v2725, %v2725
      %v2824 = vpack.c.b16 %v2726, %v2726
      %v2825 = vpack.c.b16 %v2727, %v2727
      %v2826 = vpack.c.b16 %v2728, %v2728
      %v2827 = vpack.c.b16 %v2729, %v2729
      %v2828 = vpack.c.b16 %v2730, %v2730
      %v2829 = vpack.c.b16 %v2731, %v2731
      %v2830 = vpack.c.b16 %v2732, %v2732
      %v2831 = vpack.c.b16 %v2733, %v2733
      %v2832 = vpack.c.b16 %v2734, %v2734
      %v2833 = vpack.c.b16 %v2735, %v2735
      %v2834 = vpack.c.b16 %v2736, %v2736
      %v2835 = vpack.c.b16 %v2737, %v2737
      %v2836 = vpack.c.b16 %v2738, %v2738
      %v2837 = vpack.c.b16 %v2739, %v2739
      %v2838 = vpack.c.b16 %v2740, %v2740
      %v2839 = vpack.c.b16 %v2741, %v2741
      %v2840 = vpack.c.b16 %v2742, %v2742
      %v2841 = vpack.c.b16 %v2743, %v2743
      %v2842 = vpack.c.b16 %v2744, %v2744
      %v2843 = vpack.c.b16 %v2745, %v2745
      %v2844 = vpack.c.b16 %v2746, %v2746
      %v2845 = vpack.c.b16 %v2747, %v2747
      %v2846 = vpack.c.b16 %v2748, %v2748
      %v2847 = vpack.c.b16 %v2749, %v2749
      %v2848 = vpack.c.b16 %v2750, %v2750
      %v2849 = vpack.c.b16 %v2751, %v2751
      %v2850 = vpack.c.b16 %v2752, %v2752
      %v2851 = vpack.c.b16 %v2753, %v2753
      %v2852 = vpack.c.b16 %v2754, %v2754
      %v2853 = vpack.c.b16 %v2755, %v2755
      %v2854 = vpack.c.b16 %v2756, %v2756
      %v2855 = vpack.c.b16 %v2757, %v2757
      %v2856 = vpack.c.b16 %v2758, %v2758
      %v2857 = vpack.c.b16 %v2759, %v2759
      %v2858 = vpack.c.b16 %v2760, %v2760
      %v2859 = vpack.c.b16 %v2761, %v2761
      %v2860 = vpack.c.b16 %v2762, %v2762
      %v2861 = vpack.c.b16 %v2763, %v2763
      %v2862 = vpack.c.b16 %v2764, %v2764
      %v2863 = vpack.c.b16 %v2765, %v2765
      %v2864 = vpack.c.b16 %v2766, %v2766
      %v2865 = vpack.c.b16 %v2767, %v2767
      %v2866 = vpack.c.b16 %v2768, %v2768
      %v2867 = vpack.c.b16 %v2769, %v2769
      %v2868 = vpack.c.b16 %v2770, %v2770
      %v2869 = vpack.c.b16 %v2771, %v2771
      %v2870 = vpack.c.b16 %v2772, %v2772
      %v2871 = vpack.c.b16 %v2773, %v2773
      %v2872 = vpack.c.b16 %v2774, %v2774
      %v2873 = vpack.c.b16 %v2775, %v2775
      %v2874 = vpack.c.b16 %v2776, %v2776
      %v2875 = vpack.c.b16 %v2777, %v2777
      %v2876 = vpack.c.b16 %v2778, %v2778
      %v2877 = vpack.c.b16 %v2779, %v2779
      %v2878 = vpack.c.b16 %v2780, %v2780
      %v2879 = vpack.c.b16 %v2781, %v2781
      %v2880 = vpack.c.b16 %v2782, %v2782
      %v2881 = vpack.c.b16 %v2783, %v2783
      %v2882 = vpack.c.b16 %v2784, %v2784
      %v2883 = vpack.c.b16 %v2785, %v2785
      %v2884 = vpack.c.b16 %v2786, %v2786
      %v2885 = vpack.c.b16 %v2787, %v2787
      %v2886 = vpack.c.b16 %v2788, %v2788
      %v2887 = vpack.c.b16 %v2789, %v2789
      %v2888 = vpack.c.b16 %v2790, %v2790
      %v2889 = vpack.c.b16 %v2791, %v2791
      %v2890 = vpack.c.b16 %v2792, %v2792
      %v2891 = vpack.c.b16 %v2793, %v2793
      %v2892 = vpack.c.b16 %v2794, %v2794
      %v2893 = vpack.c.b16 %v2795, %v2795
      %v2894 = vpack.c.b16 %v2796, %v2796
      %v2895 = vpack.c.b16 %v2797, %v2797
      %v2896 = vpack.c.b16 %v2798, %v2798
      %v2897 = vpack.c.b16 %v2799, %v2799
      %v2898 = vpack.c.b16 %v2800, %v2800
      %v2899 = vpack.c.b16 %v2801, %v2801
      %v2900 = vpack.c.b16 %v2802, %v2802
      %v2901 = vpack.c.b16 %v2803, %v2803
      %3000 = vst [vmem:[%s175] sm:$0xf] %v2804
      %3001 = vst [vmem:[%s175 + $0x4] sm:$0xf] %v2805
      %3002 = vst [vmem:[%s175 + $0x8] sm:$0xf] %v2806
      %3003 = vst [vmem:[%s175 + $0xc] sm:$0xf] %v2807
      %3004 = vst [vmem:[%s175 + $0x10] sm:$0xf] %v2808
      %3005 = vst [vmem:[%s175 + $0x14] sm:$0xf] %v2809
      %3006 = vst [vmem:[%s175 + $0x18] sm:$0xf] %v2810
      %3007 = vst [vmem:[%s175 + $0x1c] sm:$0xf] %v2811
      %3008 = vst [vmem:[%s175 + $0x20] sm:$0xf] %v2812
      %3009 = vst [vmem:[%s175 + $0x24] sm:$0xf] %v2813
      %3010 = vst [vmem:[%s175 + $0x28] sm:$0xf] %v2814
      %3011 = vst [vmem:[%s175 + $0x2c] sm:$0xf] %v2815
      %3012 = vst [vmem:[%s175 + $0x30] sm:$0xf] %v2816
      %3013 = vst [vmem:[%s175 + $0x34] sm:$0xf] %v2817
      %3014 = vst [vmem:[%s175 + $0x38] sm:$0xf] %v2818
      %3015 = vst [vmem:[%s175 + $0x3c] sm:$0xf] %v2819
      %3016 = vst [vmem:[%s175 + $0x40] sm:$0xf] %v2820
      %3017 = vst [vmem:[%s175 + $0x44] sm:$0xf] %v2821
      %3018 = vst [vmem:[%s175 + $0x48] sm:$0xf] %v2822
      %3019 = vst [vmem:[%s175 + $0x4c] sm:$0xf] %v2823
      %3020 = vst [vmem:[%s175 + $0x50] sm:$0xf] %v2824
      %3021 = vst [vmem:[%s175 + $0x54] sm:$0xf] %v2825
      %3022 = vst [vmem:[%s175 + $0x58] sm:$0xf] %v2826
      %3023 = vst [vmem:[%s175 + $0x5c] sm:$0xf] %v2827
      %3024 = vst [vmem:[%s175 + $0x60] sm:$0xf] %v2828
      %3025 = vst [vmem:[%s175 + $0x64] sm:$0xf] %v2829
      %3026 = vst [vmem:[%s175 + $0x68] sm:$0xf] %v2830
      %3027 = vst [vmem:[%s175 + $0x6c] sm:$0xf] %v2831
      %3028 = vst [vmem:[%s175 + $0x70] sm:$0xf] %v2832
      %3029 = vst [vmem:[%s175 + $0x74] sm:$0xf] %v2833
      %3030 = vst [vmem:[%s175 + $0x78] sm:$0xf] %v2834
      %3031 = vst [vmem:[%s175 + $0x7c] sm:$0xf] %v2835
      %3032 = vst [vmem:[%s175 + $0x80] sm:$0xf] %v2836
      %3033 = vst [vmem:[%s175 + $0x84] sm:$0xf] %v2837
      %3034 = vst [vmem:[%s175 + $0x88] sm:$0xf] %v2838
      %3035 = vst [vmem:[%s175 + $0x8c] sm:$0xf] %v2839
      %3036 = vst [vmem:[%s175 + $0x90] sm:$0xf] %v2840
      %3037 = vst [vmem:[%s175 + $0x94] sm:$0xf] %v2841
      %3038 = vst [vmem:[%s175 + $0x98] sm:$0xf] %v2842
      %3039 = vst [vmem:[%s175 + $0x9c] sm:$0xf] %v2843
      %3040 = vst [vmem:[%s175 + $0xa0] sm:$0xf] %v2844
      %3041 = vst [vmem:[%s175 + $0xa4] sm:$0xf] %v2845
      %3042 = vst [vmem:[%s175 + $0xa8] sm:$0xf] %v2846
      %3043 = vst [vmem:[%s175 + $0xac] sm:$0xf] %v2847
      %3044 = vst [vmem:[%s175 + $0xb0] sm:$0xf] %v2848
      %3045 = vst [vmem:[%s175 + $0xb4] sm:$0xf] %v2849
      %3046 = vst [vmem:[%s175 + $0xb8] sm:$0xf] %v2850
      %3047 = vst [vmem:[%s175 + $0xbc] sm:$0xf] %v2851
      %3048 = vst [vmem:[%s175 + $0xc0] sm:$0xf] %v2852
      %3049 = vst [vmem:[%s175 + $0xc4] sm:$0xf] %v2853
      %3050 = vst [vmem:[%s175 + $0xc8] sm:$0xf] %v2854
      %3051 = vst [vmem:[%s175 + $0xcc] sm:$0xf] %v2855
      %3052 = vst [vmem:[%s175 + $0xd0] sm:$0xf] %v2856
      %3053 = vst [vmem:[%s175 + $0xd4] sm:$0xf] %v2857
      %3054 = vst [vmem:[%s175 + $0xd8] sm:$0xf] %v2858
      %3055 = vst [vmem:[%s175 + $0xdc] sm:$0xf] %v2859
      %3056 = vst [vmem:[%s175 + $0xe0] sm:$0xf] %v2860
      %3057 = vst [vmem:[%s175 + $0xe4] sm:$0xf] %v2861
      %3058 = vst [vmem:[%s175 + $0xe8] sm:$0xf] %v2862
      %3059 = vst [vmem:[%s175 + $0xec] sm:$0xf] %v2863
      %3060 = vst [vmem:[%s175 + $0xf0] sm:$0xf] %v2864
      %3061 = vst [vmem:[%s175 + $0xf4] sm:$0xf] %v2865
      %3062 = vst [vmem:[%s175 + $0xf8] sm:$0xf] %v2866
      %3063 = vst [vmem:[%s175 + $0xfc] sm:$0xf] %v2867
      %3064 = vst [vmem:[%s175 + $0x100] sm:$0xf] %v2868
      %3065 = vst [vmem:[%s175 + $0x104] sm:$0xf] %v2869
      %3066 = vst [vmem:[%s175 + $0x108] sm:$0xf] %v2870
      %3067 = vst [vmem:[%s175 + $0x10c] sm:$0xf] %v2871
      %3068 = vst [vmem:[%s175 + $0x110] sm:$0xf] %v2872
      %3069 = vst [vmem:[%s175 + $0x114] sm:$0xf] %v2873
      %3070 = vst [vmem:[%s175 + $0x118] sm:$0xf] %v2874
      %3071 = vst [vmem:[%s175 + $0x11c] sm:$0xf] %v2875
      %3072 = vst [vmem:[%s175 + $0x120] sm:$0xf] %v2876
      %3073 = vst [vmem:[%s175 + $0x124] sm:$0xf] %v2877
      %3074 = vst [vmem:[%s175 + $0x128] sm:$0xf] %v2878
      %3075 = vst [vmem:[%s175 + $0x12c] sm:$0xf] %v2879
      %3076 = vst [vmem:[%s175 + $0x130] sm:$0xf] %v2880
      %3077 = vst [vmem:[%s175 + $0x134] sm:$0xf] %v2881
      %3078 = vst [vmem:[%s175 + $0x138] sm:$0xf] %v2882
      %3079 = vst [vmem:[%s175 + $0x13c] sm:$0xf] %v2883
      %3080 = vst [vmem:[%s175 + $0x140] sm:$0xf] %v2884
      %3081 = vst [vmem:[%s175 + $0x144] sm:$0xf] %v2885
      %3082 = vst [vmem:[%s175 + $0x148] sm:$0xf] %v2886
      %3083 = vst [vmem:[%s175 + $0x14c] sm:$0xf] %v2887
      %3084 = vst [vmem:[%s175 + $0x150] sm:$0xf] %v2888
      %3085 = vst [vmem:[%s175 + $0x154] sm:$0xf] %v2889
      %3086 = vst [vmem:[%s175 + $0x158] sm:$0xf] %v2890
      %3087 = vst [vmem:[%s175 + $0x15c] sm:$0xf] %v2891
      %3088 = vst [vmem:[%s175 + $0x160] sm:$0xf] %v2892
      %3089 = vst [vmem:[%s175 + $0x164] sm:$0xf] %v2893
      %3090 = vst [vmem:[%s175 + $0x168] sm:$0xf] %v2894
      %3091 = vst [vmem:[%s175 + $0x16c] sm:$0xf] %v2895
      %3092 = vst [vmem:[%s175 + $0x170] sm:$0xf] %v2896
      %3093 = vst [vmem:[%s175 + $0x174] sm:$0xf] %v2897
      %3094 = vst [vmem:[%s175 + $0x178] sm:$0xf] %v2898
      %3095 = vst [vmem:[%s175 + $0x17c] sm:$0xf] %v2899
      %3096 = vst [vmem:[%s175 + $0x180] sm:$0xf] %v2900
      %3097 = vst [vmem:[%s175 + $0x184] sm:$0xf] %v2901
      %s3098 = smul.u32 98, %s14
      %p3099 = scmp.lt.s32.totalorder %s3098, 391
      %s3100 = scalar_select %p3099, %s3098, 391
      %s3101 = smul.addr %s3100, 4
      %s3102 = scalar_lea.vmem %s3, %s3101
      // Predicated region
      $region33: #{hypernet_forward_numeric.3} parent=31 // pred_check
        %p3103 = pneg %p100
      $region34: #{hypernet_forward_numeric.3} parent=31 // pred_check_branch
        %3105 = sbr.rel (%p3103) target = $region36
      $region35: #{hypernet_forward_numeric.3} parent=31 // pred_region
        %s3106 = smul.u32 98, %s14
      $region36: #{hypernet_forward_numeric.3} parent=31 // pred_fallthru
        _
    $region32: #{hypernet_forward_numeric.3} parent=5 // pred_fallthru
      _
    %p3107 = scmp.le.s32.totalorder 2, %s9
    // Predicated region
    $region37: #{hypernet_forward_numeric.3} parent=5 // pred_check
      %p3108 = pneg %p3107
    $region38: #{hypernet_forward_numeric.3} parent=5 // pred_check_branch
      %3110 = sbr.rel (%p3108) target = $region40
    $region39: #{hypernet_forward_numeric.3} parent=5 // pred_region
      %s3111 = ssub.s32 %s9, 2
      // Predicated region
      $region41: #{hypernet_forward_numeric.3} parent=39 // pred_check
        %p3112 = pneg %p106
      $region42: #{hypernet_forward_numeric.3} parent=39 // pred_check_branch
        %3114 = sbr.rel (%p3112) target = $region44
      $region43: #{hypernet_forward_numeric.3} parent=39 // pred_region
        %s3115 = smul.u32 98, %s15
        %p3116 = scmp.lt.s32.totalorder %s3115, 391
        %s3117 = scalar_select %p3116, %s3115, 391
        %s3118 = smul.addr %s3117, 4
        %s3119 = scalar_lea.vmem %s3, %s3118
      $region44: #{hypernet_forward_numeric.3} parent=39 // pred_fallthru
        _
    $region40: #{hypernet_forward_numeric.3} parent=5 // pred_fallthru
      _
  $region6: #{hypernet_forward_numeric.3} parent=0 // loop_footer
    %s13 = sadd.s32 1, %s9
  $region7: #{hypernet_forward_numeric.3} parent=0 // loop_footer_branch
    %8 = sbr.rel target = $region3
  $region8: #{hypernet_forward_numeric.3} parent=0 // loop_exit
    _

// kernel: hypernet_forward_numeric.4
$region0: #{hypernet_forward_numeric.4}
  #allocation0 [shape = 'u32[]', space=smem, size = 0x4, offset = 0x4, fixed_abs, tag = 'smem constant byte address 0x4 - core index']
  #allocation1 [shape = 'u32[144,128]{1,0:T(1,128)}', space=vmem, size = 0x12000, scoped, tag = 'internal scratch']
  %s0 = inlined_call_operand.vmem [shape: bf16[400,3200], index: 0, kind: input, shape index: {}]
  %s1 = inlined_call_operand.vmem [shape: bf16[3200,128], index: 1, kind: input, shape index: {}]
  %s2 = inlined_call_operand.vmem [shape: f32[1,128], index: 2, kind: input, shape index: {}]
  %s3 = inlined_call_operand.vmem [shape: bf16[400,128], index: 3, kind: output, shape index: {}]
  %s4 = sld [smem:[#allocation0]]
  $region45: #{hypernet_forward_numeric.4} parent=0
    _
  %s6 = ssub.s32 1, %s4
  %s7 = scalar_select 0, %s6, %s4
  loop: start=0, step=1, limit=4
  $region2: #{hypernet_forward_numeric.4} parent=0 // loop_pre_header
    _
  $region3: #{hypernet_forward_numeric.4} parent=0 // loop_header
    %s9 = sphi 0, %s13
    %p10 = scmp.ge.s32.totalorder %s9, 4
    %s19 = sphi 0, %s21
    %s22 = sphi 0, %s19
    %s23 = sphi 0, %s22
    %s39 = sphi 0, %s23
    %s43 = sphi 0, %s43
    %s45 = sphi 0, %s43
    %s46 = sphi 0, %s45
    %s60 = sphi 0, %s46
    %s64 = sphi 0, %s64
    %s66 = sphi 0, %s64
    %s67 = sphi 0, %s66
    %s81 = sphi 0, %s67
    %s87 = sphi 0, %s89
    %s90 = sphi 0, %s87
    %s91 = sphi 0, %s90
    %s107 = sphi 0, %s91
  $region4: #{hypernet_forward_numeric.4} parent=0 // loop_header_branch
    %12 = sbr.rel (%p10) target = $region8
  $region5: #{hypernet_forward_numeric.4} parent=0 // loop_body
    %s14 = ssub.s32 %s9, 1
    %s15 = ssub.s32 %s9, 2
    %s16 = sadd.s32 %s9, 1
    %s17 = ssub.s32 %s9, %s16
    %p18 = scmp.eq.s32.totalorder %s17, 0
    %s20 = sadd.s32 %s19, 1
    %s21 = scalar_select %p18, %s19, %s20
    %p24 = pneg %p18
    %p25 = scmp.eq.s32.totalorder %s9, 1
    %p26 = por %p24, %p25
    %p27 = scmp.ne.s32.totalorder %s19, %s22
    %p28 = scmp.eq.s32.totalorder %s9, 0
    %p29 = por %p27, %p28
    %p30 = scmp.ne.s32.totalorder %s19, %s22
    %p31 = scmp.eq.s32.totalorder %s14, 1
    %p32 = por %p30, %p31
    %p33 = scmp.ne.s32.totalorder %s22, %s23
    %p34 = scmp.eq.s32.totalorder %s14, 0
    %p35 = por %p33, %p34
    %p36 = scmp.ne.s32.totalorder %s22, %s23
    %p37 = scmp.eq.s32.totalorder %s15, 1
    %p38 = por %p36, %p37
    %p40 = scmp.ne.s32.totalorder %s23, %s39
    %p41 = scmp.eq.s32.totalorder %s15, 0
    %p42 = por %p40, %p41
    %s44 = sadd.s32 %s43, 1
    %p47 = scmp.eq.s32.totalorder %s9, 1
    %p48 = scmp.ne.s32.totalorder %s43, %s45
    %p49 = scmp.eq.s32.totalorder %s9, 0
    %p50 = por %p48, %p49
    %p51 = scmp.ne.s32.totalorder %s43, %s45
    %p52 = scmp.eq.s32.totalorder %s14, 1
    %p53 = por %p51, %p52
    %p54 = scmp.ne.s32.totalorder %s45, %s46
    %p55 = scmp.eq.s32.totalorder %s14, 0
    %p56 = por %p54, %p55
    %p57 = scmp.ne.s32.totalorder %s45, %s46
    %p58 = scmp.eq.s32.totalorder %s15, 1
    %p59 = por %p57, %p58
    %p61 = scmp.ne.s32.totalorder %s46, %s60
    %p62 = scmp.eq.s32.totalorder %s15, 0
    %p63 = por %p61, %p62
    %s65 = sadd.s32 %s64, 1
    %p68 = scmp.eq.s32.totalorder %s9, 1
    %p69 = scmp.ne.s32.totalorder %s64, %s66
    %p70 = scmp.eq.s32.totalorder %s9, 0
    %p71 = por %p69, %p70
    %p72 = scmp.ne.s32.totalorder %s64, %s66
    %p73 = scmp.eq.s32.totalorder %s14, 1
    %p74 = por %p72, %p73
    %p75 = scmp.ne.s32.totalorder %s66, %s67
    %p76 = scmp.eq.s32.totalorder %s14, 0
    %p77 = por %p75, %p76
    %p78 = scmp.ne.s32.totalorder %s66, %s67
    %p79 = scmp.eq.s32.totalorder %s15, 1
    %p80 = por %p78, %p79
    %p82 = scmp.ne.s32.totalorder %s67, %s81
    %p83 = scmp.eq.s32.totalorder %s15, 0
    %p84 = por %p82, %p83
    %s85 = ssub.s32 %s9, %s16
    %p86 = scmp.eq.s32.totalorder %s85, 0
    %s88 = sadd.s32 %s87, 1
    %s89 = scalar_select %p86, %s87, %s88
    %p92 = pneg %p86
    %p93 = scmp.eq.s32.totalorder %s9, 1
    %p94 = por %p92, %p93
    %p95 = scmp.ne.s32.totalorder %s87, %s90
    %p96 = scmp.eq.s32.totalorder %s9, 0
    %p97 = por %p95, %p96
    %p98 = scmp.ne.s32.totalorder %s87, %s90
    %p99 = scmp.eq.s32.totalorder %s14, 1
    %p100 = por %p98, %p99
    %p101 = scmp.ne.s32.totalorder %s90, %s91
    %p102 = scmp.eq.s32.totalorder %s14, 0
    %p103 = por %p101, %p102
    %p104 = scmp.ne.s32.totalorder %s90, %s91
    %p105 = scmp.eq.s32.totalorder %s15, 1
    %p106 = por %p104, %p105
    %p108 = scmp.ne.s32.totalorder %s91, %s107
    %p109 = scmp.eq.s32.totalorder %s15, 0
    %p110 = por %p108, %p109
    %p111 = scmp.le.s32.totalorder 1, %s9
    %p112 = scmp.lt.s32.totalorder %s9, 3
    %p113 = pnand %p111, %p112
    %p114 = pneg %p113
    // Predicated region
    $region9: #{hypernet_forward_numeric.4} parent=5 // pred_check
      _
    $region10: #{hypernet_forward_numeric.4} parent=5 // pred_check_branch
      %116 = sbr.rel (%p113) target = $region12
    $region11: #{hypernet_forward_numeric.4} parent=5 // pred_region
      %s117 = ssub.s32 %s9, 1
      // Predicated region
      $region13: #{hypernet_forward_numeric.4} parent=11 // pred_check
        %p118 = pneg %p56
      $region14: #{hypernet_forward_numeric.4} parent=11 // pred_check_branch
        %120 = sbr.rel (%p118) target = $region16
      $region15: #{hypernet_forward_numeric.4} parent=11 // pred_region
        _
      $region16: #{hypernet_forward_numeric.4} parent=11 // pred_fallthru
        _
      // Predicated region
      $region17: #{hypernet_forward_numeric.4} parent=11 // pred_check
        %p121 = pneg %p77
      $region18: #{hypernet_forward_numeric.4} parent=11 // pred_check_branch
        %123 = sbr.rel (%p121) target = $region20
      $region19: #{hypernet_forward_numeric.4} parent=11 // pred_region
        _
      $region20: #{hypernet_forward_numeric.4} parent=11 // pred_fallthru
        _
    $region12: #{hypernet_forward_numeric.4} parent=5 // pred_fallthru
      _
    %p124 = scmp.lt.s32.totalorder %s9, 2
    // Predicated region
    $region21: #{hypernet_forward_numeric.4} parent=5 // pred_check
      %p125 = pneg %p124
    $region22: #{hypernet_forward_numeric.4} parent=5 // pred_check_branch
      %127 = sbr.rel (%p125) target = $region24
    $region23: #{hypernet_forward_numeric.4} parent=5 // pred_region
      // Predicated region
      $region25: #{hypernet_forward_numeric.4} parent=23 // pred_check
        %p128 = pneg %p29
      $region26: #{hypernet_forward_numeric.4} parent=23 // pred_check_branch
        %130 = sbr.rel (%p128) target = $region28
      $region27: #{hypernet_forward_numeric.4} parent=23 // pred_region
        %s131 = smul.u32 25, %s9
        %p132 = scmp.lt.s32.totalorder %s131, 49
        %s133 = scalar_select %p132, %s131, 49
        %s134 = smul.addr %s133, 25
        %s135 = smul.addr %s134, 4
        %s136 = scalar_lea.vmem %s0, %s135
        %s137 = smul.u32 25, %s9
      $region28: #{hypernet_forward_numeric.4} parent=23 // pred_fallthru
        _
    $region24: #{hypernet_forward_numeric.4} parent=5 // pred_fallthru
      _
    %p138 = scmp.le.s32.totalorder 1, %s9
    %p139 = scmp.lt.s32.totalorder %s9, 3
    %p140 = pnand %p138, %p139
    %p141 = pneg %p140
    // Predicated region
    $region29: #{hypernet_forward_numeric.4} parent=5 // pred_check
      _
    $region30: #{hypernet_forward_numeric.4} parent=5 // pred_check_branch
      %143 = sbr.rel (%p140) target = $region32
    $region31: #{hypernet_forward_numeric.4} parent=5 // pred_region
      %s144 = ssub.s32 %s9, 1
      %s145 = smul.u32 25, %s14
      %p146 = scmp.lt.s32.totalorder %s145, 49
      %s147 = scalar_select %p146, %s145, 49
      %s148 = smul.addr %s147, 25
      %s149 = smul.addr %s148, 4
      %s150 = scalar_lea.vmem %s0, %s149
      %p151 = pneg %p35
      %p152 = pneg %p32
      %p153 = pneg %p56
      %p154 = pneg %p53
      %p155 = pneg %p77
      %p156 = pneg %p74
      %p157 = pneg %p103
      %p158 = pneg %p100
      %s159 = smul.u32 25, %s14
      %p160 = scmp.lt.s32.totalorder %s159, 49
      %s161 = scalar_select %p160, %s159, 49
      %s162 = smul.addr %s161, 4
      %s163 = scalar_lea.vmem %s3, %s162
      %s164 = smul.u32 25, %s14
      %p165 = scmp.lt.s32.totalorder %s164, 49
      %s166 = scalar_select %p165, %s164, 49
      %s167 = smul.addr %s166, 25
      %s168 = smul.addr %s167, 4
      %s169 = scalar_lea.vmem %s0, %s168
      %s170 = smul.u32 25, %s14
      %s171 = smul.u32 25, %s14
      %p172 = scmp.lt.s32.totalorder %s171, 49
      %s173 = scalar_select %p172, %s171, 49
      %s174 = smul.addr %s173, 4
      %s175 = scalar_lea.vmem %s3, %s174
      %s176 = smul.u32 25, %s14
      %v178 = vld [vmem:[%s169] sm:$0xff]
      %v179 = vld [vmem:[%s169 + $0x8] sm:$0xff]
      %v180 = vld [vmem:[%s169 + $0x10] sm:$0xff]
      %v181 = vld [vmem:[%s169 + $0x18] sm:$0xff]
      %v182 = vld [vmem:[%s169 + $0x20] sm:$0xff]
      %v183 = vld [vmem:[%s169 + $0x28] sm:$0xff]
      %v184 = vld [vmem:[%s169 + $0x30] sm:$0xff]
      %v185 = vld [vmem:[%s169 + $0x38] sm:$0xff]
      %v186 = vld [vmem:[%s169 + $0x40] sm:$0xff]
      %v187 = vld [vmem:[%s169 + $0x48] sm:$0xff]
      %v188 = vld [vmem:[%s169 + $0x50] sm:$0xff]
      %v189 = vld [vmem:[%s169 + $0x58] sm:$0xff]
      %v190 = vld [vmem:[%s169 + $0x60] sm:$0xf]
      %v191 = vld [vmem:[%s169 + $0x64] sm:$0xff]
      %v192 = vld [vmem:[%s169 + $0x6c] sm:$0xff]
      %v193 = vld [vmem:[%s169 + $0x74] sm:$0xff]
      %v194 = vld [vmem:[%s169 + $0x7c] sm:$0xff]
      %v195 = vld [vmem:[%s169 + $0x84] sm:$0xff]
      %v196 = vld [vmem:[%s169 + $0x8c] sm:$0xff]
      %v197 = vld [vmem:[%s169 + $0x94] sm:$0xff]
      %v198 = vld [vmem:[%s169 + $0x9c] sm:$0xff]
      %v199 = vld [vmem:[%s169 + $0xa4] sm:$0xff]
      %v200 = vld [vmem:[%s169 + $0xac] sm:$0xff]
      %v201 = vld [vmem:[%s169 + $0xb4] sm:$0xff]
      %v202 = vld [vmem:[%s169 + $0xbc] sm:$0xff]
      %v203 = vld [vmem:[%s169 + $0xc4] sm:$0xf]
      %v204 = vld [vmem:[%s169 + $0xc8] sm:$0xff]
      %v205 = vld [vmem:[%s169 + $0xd0] sm:$0xff]
      %v206 = vld [vmem:[%s169 + $0xd8] sm:$0xff]
      %v207 = vld [vmem:[%s169 + $0xe0] sm:$0xff]
      %v208 = vld [vmem:[%s169 + $0xe8] sm:$0xff]
      %v209 = vld [vmem:[%s169 + $0xf0] sm:$0xff]
      %v210 = vld [vmem:[%s169 + $0xf8] sm:$0xff]
      %v211 = vld [vmem:[%s169 + $0x100] sm:$0xff]
      %v212 = vld [vmem:[%s169 + $0x108] sm:$0xff]
      %v213 = vld [vmem:[%s169 + $0x110] sm:$0xff]
      %v214 = vld [vmem:[%s169 + $0x118] sm:$0xff]
      %v215 = vld [vmem:[%s169 + $0x120] sm:$0xff]
      %v216 = vld [vmem:[%s169 + $0x128] sm:$0xf]
      %v217 = vld [vmem:[%s169 + $0x12c] sm:$0xff]
      %v218 = vld [vmem:[%s169 + $0x134] sm:$0xff]
      %v219 = vld [vmem:[%s169 + $0x13c] sm:$0xff]
      %v220 = vld [vmem:[%s169 + $0x144] sm:$0xff]
      %v221 = vld [vmem:[%s169 + $0x14c] sm:$0xff]
      %v222 = vld [vmem:[%s169 + $0x154] sm:$0xff]
      %v223 = vld [vmem:[%s169 + $0x15c] sm:$0xff]
      %v224 = vld [vmem:[%s169 + $0x164] sm:$0xff]
      %v225 = vld [vmem:[%s169 + $0x16c] sm:$0xff]
      %v226 = vld [vmem:[%s169 + $0x174] sm:$0xff]
      %v227 = vld [vmem:[%s169 + $0x17c] sm:$0xff]
      %v228 = vld [vmem:[%s169 + $0x184] sm:$0xff]
      %v229 = vld [vmem:[%s169 + $0x18c] sm:$0xf]
      %v230 = vld [vmem:[%s169 + $0x190] sm:$0xff]
      %v231 = vld [vmem:[%s169 + $0x198] sm:$0xff]
      %v232 = vld [vmem:[%s169 + $0x1a0] sm:$0xff]
      %v233 = vld [vmem:[%s169 + $0x1a8] sm:$0xff]
      %v234 = vld [vmem:[%s169 + $0x1b0] sm:$0xff]
      %v235 = vld [vmem:[%s169 + $0x1b8] sm:$0xff]
      %v236 = vld [vmem:[%s169 + $0x1c0] sm:$0xff]
      %v237 = vld [vmem:[%s169 + $0x1c8] sm:$0xff]
      %v238 = vld [vmem:[%s169 + $0x1d0] sm:$0xff]
      %v239 = vld [vmem:[%s169 + $0x1d8] sm:$0xff]
      %v240 = vld [vmem:[%s169 + $0x1e0] sm:$0xff]
      %v241 = vld [vmem:[%s169 + $0x1e8] sm:$0xff]
      %v242 = vld [vmem:[%s169 + $0x1f0] sm:$0xf]
      %v243 = vld [vmem:[%s169 + $0x1f4] sm:$0xff]
      %v244 = vld [vmem:[%s169 + $0x1fc] sm:$0xff]
      %v245 = vld [vmem:[%s169 + $0x204] sm:$0xff]
      %v246 = vld [vmem:[%s169 + $0x20c] sm:$0xff]
      %v247 = vld [vmem:[%s169 + $0x214] sm:$0xff]
      %v248 = vld [vmem:[%s169 + $0x21c] sm:$0xff]
      %v249 = vld [vmem:[%s169 + $0x224] sm:$0xff]
      %v250 = vld [vmem:[%s169 + $0x22c] sm:$0xff]
      %v251 = vld [vmem:[%s169 + $0x234] sm:$0xff]
      %v252 = vld [vmem:[%s169 + $0x23c] sm:$0xff]
      %v253 = vld [vmem:[%s169 + $0x244] sm:$0xff]
      %v254 = vld [vmem:[%s169 + $0x24c] sm:$0xff]
      %v255 = vld [vmem:[%s169 + $0x254] sm:$0xf]
      %v256 = vld [vmem:[%s169 + $0x258] sm:$0xff]
      %v257 = vld [vmem:[%s169 + $0x260] sm:$0xff]
      %v258 = vld [vmem:[%s169 + $0x268] sm:$0xff]
      %v259 = vld [vmem:[%s169 + $0x270] sm:$0xff]
      %v260 = vld [vmem:[%s169 + $0x278] sm:$0xff]
      %v261 = vld [vmem:[%s169 + $0x280] sm:$0xff]
      %v262 = vld [vmem:[%s169 + $0x288] sm:$0xff]
      %v263 = vld [vmem:[%s169 + $0x290] sm:$0xff]
      %v264 = vld [vmem:[%s169 + $0x298] sm:$0xff]
      %v265 = vld [vmem:[%s169 + $0x2a0] sm:$0xff]
      %v266 = vld [vmem:[%s169 + $0x2a8] sm:$0xff]
      %v267 = vld [vmem:[%s169 + $0x2b0] sm:$0xff]
      %v268 = vld [vmem:[%s169 + $0x2b8] sm:$0xf]
      %v269 = vld [vmem:[%s169 + $0x2bc] sm:$0xff]
      %v270 = vld [vmem:[%s169 + $0x2c4] sm:$0xff]
      %v271 = vld [vmem:[%s169 + $0x2cc] sm:$0xff]
      %v272 = vld [vmem:[%s169 + $0x2d4] sm:$0xff]
      %v273 = vld [vmem:[%s169 + $0x2dc] sm:$0xff]
      %v274 = vld [vmem:[%s169 + $0x2e4] sm:$0xff]
      %v275 = vld [vmem:[%s169 + $0x2ec] sm:$0xff]
      %v276 = vld [vmem:[%s169 + $0x2f4] sm:$0xff]
      %v277 = vld [vmem:[%s169 + $0x2fc] sm:$0xff]
      %v278 = vld [vmem:[%s169 + $0x304] sm:$0xff]
      %v279 = vld [vmem:[%s169 + $0x30c] sm:$0xff]
      %v280 = vld [vmem:[%s169 + $0x314] sm:$0xff]
      %v281 = vld [vmem:[%s169 + $0x31c] sm:$0xf]
      %v282 = vld [vmem:[%s169 + $0x320] sm:$0xff]
      %v283 = vld [vmem:[%s169 + $0x328] sm:$0xff]
      %v284 = vld [vmem:[%s169 + $0x330] sm:$0xff]
      %v285 = vld [vmem:[%s169 + $0x338] sm:$0xff]
      %v286 = vld [vmem:[%s169 + $0x340] sm:$0xff]
      %v287 = vld [vmem:[%s169 + $0x348] sm:$0xff]
      %v288 = vld [vmem:[%s169 + $0x350] sm:$0xff]
      %v289 = vld [vmem:[%s169 + $0x358] sm:$0xff]
      %v290 = vld [vmem:[%s169 + $0x360] sm:$0xff]
      %v291 = vld [vmem:[%s169 + $0x368] sm:$0xff]
      %v292 = vld [vmem:[%s169 + $0x370] sm:$0xff]
      %v293 = vld [vmem:[%s169 + $0x378] sm:$0xff]
      %v294 = vld [vmem:[%s169 + $0x380] sm:$0xf]
      %v295 = vld [vmem:[%s169 + $0x384] sm:$0xff]
      %v296 = vld [vmem:[%s169 + $0x38c] sm:$0xff]
      %v297 = vld [vmem:[%s169 + $0x394] sm:$0xff]
      %v298 = vld [vmem:[%s169 + $0x39c] sm:$0xff]
      %v299 = vld [vmem:[%s169 + $0x3a4] sm:$0xff]
      %v300 = vld [vmem:[%s169 + $0x3ac] sm:$0xff]
      %v301 = vld [vmem:[%s169 + $0x3b4] sm:$0xff]
      %v302 = vld [vmem:[%s169 + $0x3bc] sm:$0xff]
      %v303 = vld [vmem:[%s169 + $0x3c4] sm:$0xff]
      %v304 = vld [vmem:[%s169 + $0x3cc] sm:$0xff]
      %v305 = vld [vmem:[%s169 + $0x3d4] sm:$0xff]
      %v306 = vld [vmem:[%s169 + $0x3dc] sm:$0xff]
      %v307 = vld [vmem:[%s169 + $0x3e4] sm:$0xf]
      %v308 = vld [vmem:[%s169 + $0x3e8] sm:$0xff]
      %v309 = vld [vmem:[%s169 + $0x3f0] sm:$0xff]
      %v310 = vld [vmem:[%s169 + $0x3f8] sm:$0xff]
      %v311 = vld [vmem:[%s169 + $0x400] sm:$0xff]
      %v312 = vld [vmem:[%s169 + $0x408] sm:$0xff]
      %v313 = vld [vmem:[%s169 + $0x410] sm:$0xff]
      %v314 = vld [vmem:[%s169 + $0x418] sm:$0xff]
      %v315 = vld [vmem:[%s169 + $0x420] sm:$0xff]
      %v316 = vld [vmem:[%s169 + $0x428] sm:$0xff]
      %v317 = vld [vmem:[%s169 + $0x430] sm:$0xff]
      %v318 = vld [vmem:[%s169 + $0x438] sm:$0xff]
      %v319 = vld [vmem:[%s169 + $0x440] sm:$0xff]
      %v320 = vld [vmem:[%s169 + $0x448] sm:$0xf]
      %v321 = vld [vmem:[%s169 + $0x44c] sm:$0xff]
      %v322 = vld [vmem:[%s169 + $0x454] sm:$0xff]
      %v323 = vld [vmem:[%s169 + $0x45c] sm:$0xff]
      %v324 = vld [vmem:[%s169 + $0x464] sm:$0xff]
      %v325 = vld [vmem:[%s169 + $0x46c] sm:$0xff]
      %v326 = vld [vmem:[%s169 + $0x474] sm:$0xff]
      %v327 = vld [vmem:[%s169 + $0x47c] sm:$0xff]
      %v328 = vld [vmem:[%s169 + $0x484] sm:$0xff]
      %v329 = vld [vmem:[%s169 + $0x48c] sm:$0xff]
      %v330 = vld [vmem:[%s169 + $0x494] sm:$0xff]
      %v331 = vld [vmem:[%s169 + $0x49c] sm:$0xff]
      %v332 = vld [vmem:[%s169 + $0x4a4] sm:$0xff]
      %v333 = vld [vmem:[%s169 + $0x4ac] sm:$0xf]
      %v334 = vld [vmem:[%s169 + $0x4b0] sm:$0xff]
      %v335 = vld [vmem:[%s169 + $0x4b8] sm:$0xff]
      %v336 = vld [vmem:[%s169 + $0x4c0] sm:$0xff]
      %v337 = vld [vmem:[%s169 + $0x4c8] sm:$0xff]
      %v338 = vld [vmem:[%s169 + $0x4d0] sm:$0xff]
      %v339 = vld [vmem:[%s169 + $0x4d8] sm:$0xff]
      %v340 = vld [vmem:[%s169 + $0x4e0] sm:$0xff]
      %v341 = vld [vmem:[%s169 + $0x4e8] sm:$0xff]
      %v342 = vld [vmem:[%s169 + $0x4f0] sm:$0xff]
      %v343 = vld [vmem:[%s169 + $0x4f8] sm:$0xff]
      %v344 = vld [vmem:[%s169 + $0x500] sm:$0xff]
      %v345 = vld [vmem:[%s169 + $0x508] sm:$0xff]
      %v346 = vld [vmem:[%s169 + $0x510] sm:$0xf]
      %v347 = vld [vmem:[%s169 + $0x514] sm:$0xff]
      %v348 = vld [vmem:[%s169 + $0x51c] sm:$0xff]
      %v349 = vld [vmem:[%s169 + $0x524] sm:$0xff]
      %v350 = vld [vmem:[%s169 + $0x52c] sm:$0xff]
      %v351 = vld [vmem:[%s169 + $0x534] sm:$0xff]
      %v352 = vld [vmem:[%s169 + $0x53c] sm:$0xff]
      %v353 = vld [vmem:[%s169 + $0x544] sm:$0xff]
      %v354 = vld [vmem:[%s169 + $0x54c] sm:$0xff]
      %v355 = vld [vmem:[%s169 + $0x554] sm:$0xff]
      %v356 = vld [vmem:[%s169 + $0x55c] sm:$0xff]
      %v357 = vld [vmem:[%s169 + $0x564] sm:$0xff]
      %v358 = vld [vmem:[%s169 + $0x56c] sm:$0xff]
      %v359 = vld [vmem:[%s169 + $0x574] sm:$0xf]
      %v360 = vld [vmem:[%s169 + $0x578] sm:$0xff]
      %v361 = vld [vmem:[%s169 + $0x580] sm:$0xff]
      %v362 = vld [vmem:[%s169 + $0x588] sm:$0xff]
      %v363 = vld [vmem:[%s169 + $0x590] sm:$0xff]
      %v364 = vld [vmem:[%s169 + $0x598] sm:$0xff]
      %v365 = vld [vmem:[%s169 + $0x5a0] sm:$0xff]
      %v366 = vld [vmem:[%s169 + $0x5a8] sm:$0xff]
      %v367 = vld [vmem:[%s169 + $0x5b0] sm:$0xff]
      %v368 = vld [vmem:[%s169 + $0x5b8] sm:$0xff]
      %v369 = vld [vmem:[%s169 + $0x5c0] sm:$0xff]
      %v370 = vld [vmem:[%s169 + $0x5c8] sm:$0xff]
      %v371 = vld [vmem:[%s169 + $0x5d0] sm:$0xff]
      %v372 = vld [vmem:[%s169 + $0x5d8] sm:$0xf]
      %v373 = vld [vmem:[%s169 + $0x5dc] sm:$0xff]
      %v374 = vld [vmem:[%s169 + $0x5e4] sm:$0xff]
      %v375 = vld [vmem:[%s169 + $0x5ec] sm:$0xff]
      %v376 = vld [vmem:[%s169 + $0x5f4] sm:$0xff]
      %v377 = vld [vmem:[%s169 + $0x5fc] sm:$0xff]
      %v378 = vld [vmem:[%s169 + $0x604] sm:$0xff]
      %v379 = vld [vmem:[%s169 + $0x60c] sm:$0xff]
      %v380 = vld [vmem:[%s169 + $0x614] sm:$0xff]
      %v381 = vld [vmem:[%s169 + $0x61c] sm:$0xff]
      %v382 = vld [vmem:[%s169 + $0x624] sm:$0xff]
      %v383 = vld [vmem:[%s169 + $0x62c] sm:$0xff]
      %v384 = vld [vmem:[%s169 + $0x634] sm:$0xff]
      %v385 = vld [vmem:[%s169 + $0x63c] sm:$0xf]
      %v386 = vld [vmem:[%s169 + $0x640] sm:$0xff]
      %v387 = vld [vmem:[%s169 + $0x648] sm:$0xff]
      %v388 = vld [vmem:[%s169 + $0x650] sm:$0xff]
      %v389 = vld [vmem:[%s169 + $0x658] sm:$0xff]
      %v390 = vld [vmem:[%s169 + $0x660] sm:$0xff]
      %v391 = vld [vmem:[%s169 + $0x668] sm:$0xff]
      %v392 = vld [vmem:[%s169 + $0x670] sm:$0xff]
      %v393 = vld [vmem:[%s169 + $0x678] sm:$0xff]
      %v394 = vld [vmem:[%s169 + $0x680] sm:$0xff]
      %v395 = vld [vmem:[%s169 + $0x688] sm:$0xff]
      %v396 = vld [vmem:[%s169 + $0x690] sm:$0xff]
      %v397 = vld [vmem:[%s169 + $0x698] sm:$0xff]
      %v398 = vld [vmem:[%s169 + $0x6a0] sm:$0xf]
      %v399 = vld [vmem:[%s169 + $0x6a4] sm:$0xff]
      %v400 = vld [vmem:[%s169 + $0x6ac] sm:$0xff]
      %v401 = vld [vmem:[%s169 + $0x6b4] sm:$0xff]
      %v402 = vld [vmem:[%s169 + $0x6bc] sm:$0xff]
      %v403 = vld [vmem:[%s169 + $0x6c4] sm:$0xff]
      %v404 = vld [vmem:[%s169 + $0x6cc] sm:$0xff]
      %v405 = vld [vmem:[%s169 + $0x6d4] sm:$0xff]
      %v406 = vld [vmem:[%s169 + $0x6dc] sm:$0xff]
      %v407 = vld [vmem:[%s169 + $0x6e4] sm:$0xff]
      %v408 = vld [vmem:[%s169 + $0x6ec] sm:$0xff]
      %v409 = vld [vmem:[%s169 + $0x6f4] sm:$0xff]
      %v410 = vld [vmem:[%s169 + $0x6fc] sm:$0xff]
      %v411 = vld [vmem:[%s169 + $0x704] sm:$0xf]
      %v412 = vld [vmem:[%s169 + $0x708] sm:$0xff]
      %v413 = vld [vmem:[%s169 + $0x710] sm:$0xff]
      %v414 = vld [vmem:[%s169 + $0x718] sm:$0xff]
      %v415 = vld [vmem:[%s169 + $0x720] sm:$0xff]
      %v416 = vld [vmem:[%s169 + $0x728] sm:$0xff]
      %v417 = vld [vmem:[%s169 + $0x730] sm:$0xff]
      %v418 = vld [vmem:[%s169 + $0x738] sm:$0xff]
      %v419 = vld [vmem:[%s169 + $0x740] sm:$0xff]
      %v420 = vld [vmem:[%s169 + $0x748] sm:$0xff]
      %v421 = vld [vmem:[%s169 + $0x750] sm:$0xff]
      %v422 = vld [vmem:[%s169 + $0x758] sm:$0xff]
      %v423 = vld [vmem:[%s169 + $0x760] sm:$0xff]
      %v424 = vld [vmem:[%s169 + $0x768] sm:$0xf]
      %v425 = vld [vmem:[%s169 + $0x76c] sm:$0xff]
      %v426 = vld [vmem:[%s169 + $0x774] sm:$0xff]
      %v427 = vld [vmem:[%s169 + $0x77c] sm:$0xff]
      %v428 = vld [vmem:[%s169 + $0x784] sm:$0xff]
      %v429 = vld [vmem:[%s169 + $0x78c] sm:$0xff]
      %v430 = vld [vmem:[%s169 + $0x794] sm:$0xff]
      %v431 = vld [vmem:[%s169 + $0x79c] sm:$0xff]
      %v432 = vld [vmem:[%s169 + $0x7a4] sm:$0xff]
      %v433 = vld [vmem:[%s169 + $0x7ac] sm:$0xff]
      %v434 = vld [vmem:[%s169 + $0x7b4] sm:$0xff]
      %v435 = vld [vmem:[%s169 + $0x7bc] sm:$0xff]
      %v436 = vld [vmem:[%s169 + $0x7c4] sm:$0xff]
      %v437 = vld [vmem:[%s169 + $0x7cc] sm:$0xf]
      %v438 = vld [vmem:[%s169 + $0x7d0] sm:$0xff]
      %v439 = vld [vmem:[%s169 + $0x7d8] sm:$0xff]
      %v440 = vld [vmem:[%s169 + $0x7e0] sm:$0xff]
      %v441 = vld [vmem:[%s169 + $0x7e8] sm:$0xff]
      %v442 = vld [vmem:[%s169 + $0x7f0] sm:$0xff]
      %v443 = vld [vmem:[%s169 + $0x7f8] sm:$0xff]
      %v444 = vld [vmem:[%s169 + $0x800] sm:$0xff]
      %v445 = vld [vmem:[%s169 + $0x808] sm:$0xff]
      %v446 = vld [vmem:[%s169 + $0x810] sm:$0xff]
      %v447 = vld [vmem:[%s169 + $0x818] sm:$0xff]
      %v448 = vld [vmem:[%s169 + $0x820] sm:$0xff]
      %v449 = vld [vmem:[%s169 + $0x828] sm:$0xff]
      %v450 = vld [vmem:[%s169 + $0x830] sm:$0xf]
      %v451 = vld [vmem:[%s169 + $0x834] sm:$0xff]
      %v452 = vld [vmem:[%s169 + $0x83c] sm:$0xff]
      %v453 = vld [vmem:[%s169 + $0x844] sm:$0xff]
      %v454 = vld [vmem:[%s169 + $0x84c] sm:$0xff]
      %v455 = vld [vmem:[%s169 + $0x854] sm:$0xff]
      %v456 = vld [vmem:[%s169 + $0x85c] sm:$0xff]
      %v457 = vld [vmem:[%s169 + $0x864] sm:$0xff]
      %v458 = vld [vmem:[%s169 + $0x86c] sm:$0xff]
      %v459 = vld [vmem:[%s169 + $0x874] sm:$0xff]
      %v460 = vld [vmem:[%s169 + $0x87c] sm:$0xff]
      %v461 = vld [vmem:[%s169 + $0x884] sm:$0xff]
      %v462 = vld [vmem:[%s169 + $0x88c] sm:$0xff]
      %v463 = vld [vmem:[%s169 + $0x894] sm:$0xf]
      %v464 = vld [vmem:[%s169 + $0x898] sm:$0xff]
      %v465 = vld [vmem:[%s169 + $0x8a0] sm:$0xff]
      %v466 = vld [vmem:[%s169 + $0x8a8] sm:$0xff]
      %v467 = vld [vmem:[%s169 + $0x8b0] sm:$0xff]
      %v468 = vld [vmem:[%s169 + $0x8b8] sm:$0xff]
      %v469 = vld [vmem:[%s169 + $0x8c0] sm:$0xff]
      %v470 = vld [vmem:[%s169 + $0x8c8] sm:$0xff]
      %v471 = vld [vmem:[%s169 + $0x8d0] sm:$0xff]
      %v472 = vld [vmem:[%s169 + $0x8d8] sm:$0xff]
      %v473 = vld [vmem:[%s169 + $0x8e0] sm:$0xff]
      %v474 = vld [vmem:[%s169 + $0x8e8] sm:$0xff]
      %v475 = vld [vmem:[%s169 + $0x8f0] sm:$0xff]
      %v476 = vld [vmem:[%s169 + $0x8f8] sm:$0xf]
      %v477 = vld [vmem:[%s169 + $0x8fc] sm:$0xff]
      %v478 = vld [vmem:[%s169 + $0x904] sm:$0xff]
      %v479 = vld [vmem:[%s169 + $0x90c] sm:$0xff]
      %v480 = vld [vmem:[%s169 + $0x914] sm:$0xff]
      %v481 = vld [vmem:[%s169 + $0x91c] sm:$0xff]
      %v482 = vld [vmem:[%s169 + $0x924] sm:$0xff]
      %v483 = vld [vmem:[%s169 + $0x92c] sm:$0xff]
      %v484 = vld [vmem:[%s169 + $0x934] sm:$0xff]
      %v485 = vld [vmem:[%s169 + $0x93c] sm:$0xff]
      %v486 = vld [vmem:[%s169 + $0x944] sm:$0xff]
      %v487 = vld [vmem:[%s169 + $0x94c] sm:$0xff]
      %v488 = vld [vmem:[%s169 + $0x954] sm:$0xff]
      %v489 = vld [vmem:[%s169 + $0x95c] sm:$0xf]
      %v490 = vld [vmem:[%s169 + $0x960] sm:$0xff]
      %v491 = vld [vmem:[%s169 + $0x968] sm:$0xff]
      %v492 = vld [vmem:[%s169 + $0x970] sm:$0xff]
      %v493 = vld [vmem:[%s169 + $0x978] sm:$0xff]
      %v494 = vld [vmem:[%s169 + $0x980] sm:$0xff]
      %v495 = vld [vmem:[%s169 + $0x988] sm:$0xff]
      %v496 = vld [vmem:[%s169 + $0x990] sm:$0xff]
      %v497 = vld [vmem:[%s169 + $0x998] sm:$0xff]
      %v498 = vld [vmem:[%s169 + $0x9a0] sm:$0xff]
      %v499 = vld [vmem:[%s169 + $0x9a8] sm:$0xff]
      %v500 = vld [vmem:[%s169 + $0x9b0] sm:$0xff]
      %v501 = vld [vmem:[%s169 + $0x9b8] sm:$0xff]
      %v502 = vld [vmem:[%s169 + $0x9c0] sm:$0xf]
      %v503 = vld [vmem:[%s1] sm:$0xf]
      %v504 = vld [vmem:[%s1 + $0x4] sm:$0xf]
      %v505 = vld [vmem:[%s1 + $0x8] sm:$0xf]
      %v506 = vld [vmem:[%s1 + $0xc] sm:$0xf]
      %v507 = vld [vmem:[%s1 + $0x10] sm:$0xf]
      %v508 = vld [vmem:[%s1 + $0x14] sm:$0xf]
      %v509 = vld [vmem:[%s1 + $0x18] sm:$0xf]
      %v510 = vld [vmem:[%s1 + $0x1c] sm:$0xf]
      %v511 = vld [vmem:[%s1 + $0x20] sm:$0xf]
      %v512 = vld [vmem:[%s1 + $0x24] sm:$0xf]
      %v513 = vld [vmem:[%s1 + $0x28] sm:$0xf]
      %v514 = vld [vmem:[%s1 + $0x2c] sm:$0xf]
      %v515 = vld [vmem:[%s1 + $0x30] sm:$0xf]
      %v516 = vld [vmem:[%s1 + $0x34] sm:$0xf]
      %v517 = vld [vmem:[%s1 + $0x38] sm:$0xf]
      %v518 = vld [vmem:[%s1 + $0x3c] sm:$0xf]
      %v519 = vld [vmem:[%s1 + $0x40] sm:$0xf]
      %v520 = vld [vmem:[%s1 + $0x44] sm:$0xf]
      %v521 = vld [vmem:[%s1 + $0x48] sm:$0xf]
      %v522 = vld [vmem:[%s1 + $0x4c] sm:$0xf]
      %v523 = vld [vmem:[%s1 + $0x50] sm:$0xf]
      %v524 = vld [vmem:[%s1 + $0x54] sm:$0xf]
      %v525 = vld [vmem:[%s1 + $0x58] sm:$0xf]
      %v526 = vld [vmem:[%s1 + $0x5c] sm:$0xf]
      %v527 = vld [vmem:[%s1 + $0x60] sm:$0xf]
      %v528 = vld [vmem:[%s1 + $0x64] sm:$0xf]
      %v529 = vld [vmem:[%s1 + $0x68] sm:$0xf]
      %v530 = vld [vmem:[%s1 + $0x6c] sm:$0xf]
      %v531 = vld [vmem:[%s1 + $0x70] sm:$0xf]
      %v532 = vld [vmem:[%s1 + $0x74] sm:$0xf]
      %v533 = vld [vmem:[%s1 + $0x78] sm:$0xf]
      %v534 = vld [vmem:[%s1 + $0x7c] sm:$0xf]
      %v535 = vld [vmem:[%s1 + $0x80] sm:$0xf]
      %v536 = vld [vmem:[%s1 + $0x84] sm:$0xf]
      %v537 = vld [vmem:[%s1 + $0x88] sm:$0xf]
      %v538 = vld [vmem:[%s1 + $0x8c] sm:$0xf]
      %v539 = vld [vmem:[%s1 + $0x90] sm:$0xf]
      %v540 = vld [vmem:[%s1 + $0x94] sm:$0xf]
      %v541 = vld [vmem:[%s1 + $0x98] sm:$0xf]
      %v542 = vld [vmem:[%s1 + $0x9c] sm:$0xf]
      %v543 = vld [vmem:[%s1 + $0xa0] sm:$0xf]
      %v544 = vld [vmem:[%s1 + $0xa4] sm:$0xf]
      %v545 = vld [vmem:[%s1 + $0xa8] sm:$0xf]
      %v546 = vld [vmem:[%s1 + $0xac] sm:$0xf]
      %v547 = vld [vmem:[%s1 + $0xb0] sm:$0xf]
      %v548 = vld [vmem:[%s1 + $0xb4] sm:$0xf]
      %v549 = vld [vmem:[%s1 + $0xb8] sm:$0xf]
      %v550 = vld [vmem:[%s1 + $0xbc] sm:$0xf]
      %v551 = vld [vmem:[%s1 + $0xc0] sm:$0xf]
      %v552 = vld [vmem:[%s1 + $0xc4] sm:$0xf]
      %v553 = vld [vmem:[%s1 + $0xc8] sm:$0xf]
      %v554 = vld [vmem:[%s1 + $0xcc] sm:$0xf]
      %v555 = vld [vmem:[%s1 + $0xd0] sm:$0xf]
      %v556 = vld [vmem:[%s1 + $0xd4] sm:$0xf]
      %v557 = vld [vmem:[%s1 + $0xd8] sm:$0xf]
      %v558 = vld [vmem:[%s1 + $0xdc] sm:$0xf]
      %v559 = vld [vmem:[%s1 + $0xe0] sm:$0xf]
      %v560 = vld [vmem:[%s1 + $0xe4] sm:$0xf]
      %v561 = vld [vmem:[%s1 + $0xe8] sm:$0xf]
      %v562 = vld [vmem:[%s1 + $0xec] sm:$0xf]
      %v563 = vld [vmem:[%s1 + $0xf0] sm:$0xf]
      %v564 = vld [vmem:[%s1 + $0xf4] sm:$0xf]
      %v565 = vld [vmem:[%s1 + $0xf8] sm:$0xf]
      %v566 = vld [vmem:[%s1 + $0xfc] sm:$0xf]
      %v567 = vld [vmem:[%s1 + $0x100] sm:$0xf]
      %v568 = vld [vmem:[%s1 + $0x104] sm:$0xf]
      %v569 = vld [vmem:[%s1 + $0x108] sm:$0xf]
      %v570 = vld [vmem:[%s1 + $0x10c] sm:$0xf]
      %v571 = vld [vmem:[%s1 + $0x110] sm:$0xf]
      %v572 = vld [vmem:[%s1 + $0x114] sm:$0xf]
      %v573 = vld [vmem:[%s1 + $0x118] sm:$0xf]
      %v574 = vld [vmem:[%s1 + $0x11c] sm:$0xf]
      %v575 = vld [vmem:[%s1 + $0x120] sm:$0xf]
      %v576 = vld [vmem:[%s1 + $0x124] sm:$0xf]
      %v577 = vld [vmem:[%s1 + $0x128] sm:$0xf]
      %v578 = vld [vmem:[%s1 + $0x12c] sm:$0xf]
      %v579 = vld [vmem:[%s1 + $0x130] sm:$0xf]
      %v580 = vld [vmem:[%s1 + $0x134] sm:$0xf]
      %v581 = vld [vmem:[%s1 + $0x138] sm:$0xf]
      %v582 = vld [vmem:[%s1 + $0x13c] sm:$0xf]
      %v583 = vld [vmem:[%s1 + $0x140] sm:$0xf]
      %v584 = vld [vmem:[%s1 + $0x144] sm:$0xf]
      %v585 = vld [vmem:[%s1 + $0x148] sm:$0xf]
      %v586 = vld [vmem:[%s1 + $0x14c] sm:$0xf]
      %v587 = vld [vmem:[%s1 + $0x150] sm:$0xf]
      %v588 = vld [vmem:[%s1 + $0x154] sm:$0xf]
      %v589 = vld [vmem:[%s1 + $0x158] sm:$0xf]
      %v590 = vld [vmem:[%s1 + $0x15c] sm:$0xf]
      %v591 = vld [vmem:[%s1 + $0x160] sm:$0xf]
      %v592 = vld [vmem:[%s1 + $0x164] sm:$0xf]
      %v593 = vld [vmem:[%s1 + $0x168] sm:$0xf]
      %v594 = vld [vmem:[%s1 + $0x16c] sm:$0xf]
      %v595 = vld [vmem:[%s1 + $0x170] sm:$0xf]
      %v596 = vld [vmem:[%s1 + $0x174] sm:$0xf]
      %v597 = vld [vmem:[%s1 + $0x178] sm:$0xf]
      %v598 = vld [vmem:[%s1 + $0x17c] sm:$0xf]
      %v599 = vld [vmem:[%s1 + $0x180] sm:$0xf]
      %v600 = vld [vmem:[%s1 + $0x184] sm:$0xf]
      %v601 = vld [vmem:[%s1 + $0x188] sm:$0xf]
      %v602 = vld [vmem:[%s1 + $0x18c] sm:$0xf]
      %v603 = vld [vmem:[%s1 + $0x190] sm:$0xf]
      %v604 = vld [vmem:[%s1 + $0x194] sm:$0xf]
      %v605 = vld [vmem:[%s1 + $0x198] sm:$0xf]
      %v606 = vld [vmem:[%s1 + $0x19c] sm:$0xf]
      %v607 = vld [vmem:[%s1 + $0x1a0] sm:$0xf]
      %v608 = vld [vmem:[%s1 + $0x1a4] sm:$0xf]
      %v609 = vld [vmem:[%s1 + $0x1a8] sm:$0xf]
      %v610 = vld [vmem:[%s1 + $0x1ac] sm:$0xf]
      %v611 = vld [vmem:[%s1 + $0x1b0] sm:$0xf]
      %v612 = vld [vmem:[%s1 + $0x1b4] sm:$0xf]
      %v613 = vld [vmem:[%s1 + $0x1b8] sm:$0xf]
      %v614 = vld [vmem:[%s1 + $0x1bc] sm:$0xf]
      %v615 = vld [vmem:[%s1 + $0x1c0] sm:$0xf]
      %v616 = vld [vmem:[%s1 + $0x1c4] sm:$0xf]
      %v617 = vld [vmem:[%s1 + $0x1c8] sm:$0xf]
      %v618 = vld [vmem:[%s1 + $0x1cc] sm:$0xf]
      %v619 = vld [vmem:[%s1 + $0x1d0] sm:$0xf]
      %v620 = vld [vmem:[%s1 + $0x1d4] sm:$0xf]
      %v621 = vld [vmem:[%s1 + $0x1d8] sm:$0xf]
      %v622 = vld [vmem:[%s1 + $0x1dc] sm:$0xf]
      %v623 = vld [vmem:[%s1 + $0x1e0] sm:$0xf]
      %v624 = vld [vmem:[%s1 + $0x1e4] sm:$0xf]
      %v625 = vld [vmem:[%s1 + $0x1e8] sm:$0xf]
      %v626 = vld [vmem:[%s1 + $0x1ec] sm:$0xf]
      %v627 = vld [vmem:[%s1 + $0x1f0] sm:$0xf]
      %v628 = vld [vmem:[%s1 + $0x1f4] sm:$0xf]
      %v629 = vld [vmem:[%s1 + $0x1f8] sm:$0xf]
      %v630 = vld [vmem:[%s1 + $0x1fc] sm:$0xf]
      %v631 = vld [vmem:[%s1 + $0x200] sm:$0xf]
      %v632 = vld [vmem:[%s1 + $0x204] sm:$0xf]
      %v633 = vld [vmem:[%s1 + $0x208] sm:$0xf]
      %v634 = vld [vmem:[%s1 + $0x20c] sm:$0xf]
      %v635 = vld [vmem:[%s1 + $0x210] sm:$0xf]
      %v636 = vld [vmem:[%s1 + $0x214] sm:$0xf]
      %v637 = vld [vmem:[%s1 + $0x218] sm:$0xf]
      %v638 = vld [vmem:[%s1 + $0x21c] sm:$0xf]
      %v639 = vld [vmem:[%s1 + $0x220] sm:$0xf]
      %v640 = vld [vmem:[%s1 + $0x224] sm:$0xf]
      %v641 = vld [vmem:[%s1 + $0x228] sm:$0xf]
      %v642 = vld [vmem:[%s1 + $0x22c] sm:$0xf]
      %v643 = vld [vmem:[%s1 + $0x230] sm:$0xf]
      %v644 = vld [vmem:[%s1 + $0x234] sm:$0xf]
      %v645 = vld [vmem:[%s1 + $0x238] sm:$0xf]
      %v646 = vld [vmem:[%s1 + $0x23c] sm:$0xf]
      %v647 = vld [vmem:[%s1 + $0x240] sm:$0xf]
      %v648 = vld [vmem:[%s1 + $0x244] sm:$0xf]
      %v649 = vld [vmem:[%s1 + $0x248] sm:$0xf]
      %v650 = vld [vmem:[%s1 + $0x24c] sm:$0xf]
      %v651 = vld [vmem:[%s1 + $0x250] sm:$0xf]
      %v652 = vld [vmem:[%s1 + $0x254] sm:$0xf]
      %v653 = vld [vmem:[%s1 + $0x258] sm:$0xf]
      %v654 = vld [vmem:[%s1 + $0x25c] sm:$0xf]
      %v655 = vld [vmem:[%s1 + $0x260] sm:$0xf]
      %v656 = vld [vmem:[%s1 + $0x264] sm:$0xf]
      %v657 = vld [vmem:[%s1 + $0x268] sm:$0xf]
      %v658 = vld [vmem:[%s1 + $0x26c] sm:$0xf]
      %v659 = vld [vmem:[%s1 + $0x270] sm:$0xf]
      %v660 = vld [vmem:[%s1 + $0x274] sm:$0xf]
      %v661 = vld [vmem:[%s1 + $0x278] sm:$0xf]
      %v662 = vld [vmem:[%s1 + $0x27c] sm:$0xf]
      %v663 = vld [vmem:[%s1 + $0x280] sm:$0xf]
      %v664 = vld [vmem:[%s1 + $0x284] sm:$0xf]
      %v665 = vld [vmem:[%s1 + $0x288] sm:$0xf]
      %v666 = vld [vmem:[%s1 + $0x28c] sm:$0xf]
      %v667 = vld [vmem:[%s1 + $0x290] sm:$0xf]
      %v668 = vld [vmem:[%s1 + $0x294] sm:$0xf]
      %v669 = vld [vmem:[%s1 + $0x298] sm:$0xf]
      %v670 = vld [vmem:[%s1 + $0x29c] sm:$0xf]
      %v671 = vld [vmem:[%s1 + $0x2a0] sm:$0xf]
      %v672 = vld [vmem:[%s1 + $0x2a4] sm:$0xf]
      %v673 = vld [vmem:[%s1 + $0x2a8] sm:$0xf]
      %v674 = vld [vmem:[%s1 + $0x2ac] sm:$0xf]
      %v675 = vld [vmem:[%s1 + $0x2b0] sm:$0xf]
      %v676 = vld [vmem:[%s1 + $0x2b4] sm:$0xf]
      %v677 = vld [vmem:[%s1 + $0x2b8] sm:$0xf]
      %v678 = vld [vmem:[%s1 + $0x2bc] sm:$0xf]
      %v679 = vld [vmem:[%s1 + $0x2c0] sm:$0xf]
      %v680 = vld [vmem:[%s1 + $0x2c4] sm:$0xf]
      %v681 = vld [vmem:[%s1 + $0x2c8] sm:$0xf]
      %v682 = vld [vmem:[%s1 + $0x2cc] sm:$0xf]
      %v683 = vld [vmem:[%s1 + $0x2d0] sm:$0xf]
      %v684 = vld [vmem:[%s1 + $0x2d4] sm:$0xf]
      %v685 = vld [vmem:[%s1 + $0x2d8] sm:$0xf]
      %v686 = vld [vmem:[%s1 + $0x2dc] sm:$0xf]
      %v687 = vld [vmem:[%s1 + $0x2e0] sm:$0xf]
      %v688 = vld [vmem:[%s1 + $0x2e4] sm:$0xf]
      %v689 = vld [vmem:[%s1 + $0x2e8] sm:$0xf]
      %v690 = vld [vmem:[%s1 + $0x2ec] sm:$0xf]
      %v691 = vld [vmem:[%s1 + $0x2f0] sm:$0xf]
      %v692 = vld [vmem:[%s1 + $0x2f4] sm:$0xf]
      %v693 = vld [vmem:[%s1 + $0x2f8] sm:$0xf]
      %v694 = vld [vmem:[%s1 + $0x2fc] sm:$0xf]
      %v695 = vld [vmem:[%s1 + $0x300] sm:$0xf]
      %v696 = vld [vmem:[%s1 + $0x304] sm:$0xf]
      %v697 = vld [vmem:[%s1 + $0x308] sm:$0xf]
      %v698 = vld [vmem:[%s1 + $0x30c] sm:$0xf]
      %v699 = vld [vmem:[%s1 + $0x310] sm:$0xf]
      %v700 = vld [vmem:[%s1 + $0x314] sm:$0xf]
      %v701 = vld [vmem:[%s1 + $0x318] sm:$0xf]
      %v702 = vld [vmem:[%s1 + $0x31c] sm:$0xf]
      %v703 = vld [vmem:[%s1 + $0x320] sm:$0xf]
      %v704 = vld [vmem:[%s1 + $0x324] sm:$0xf]
      %v705 = vld [vmem:[%s1 + $0x328] sm:$0xf]
      %v706 = vld [vmem:[%s1 + $0x32c] sm:$0xf]
      %v707 = vld [vmem:[%s1 + $0x330] sm:$0xf]
      %v708 = vld [vmem:[%s1 + $0x334] sm:$0xf]
      %v709 = vld [vmem:[%s1 + $0x338] sm:$0xf]
      %v710 = vld [vmem:[%s1 + $0x33c] sm:$0xf]
      %v711 = vld [vmem:[%s1 + $0x340] sm:$0xf]
      %v712 = vld [vmem:[%s1 + $0x344] sm:$0xf]
      %v713 = vld [vmem:[%s1 + $0x348] sm:$0xf]
      %v714 = vld [vmem:[%s1 + $0x34c] sm:$0xf]
      %v715 = vld [vmem:[%s1 + $0x350] sm:$0xf]
      %v716 = vld [vmem:[%s1 + $0x354] sm:$0xf]
      %v717 = vld [vmem:[%s1 + $0x358] sm:$0xf]
      %v718 = vld [vmem:[%s1 + $0x35c] sm:$0xf]
      %v719 = vld [vmem:[%s1 + $0x360] sm:$0xf]
      %v720 = vld [vmem:[%s1 + $0x364] sm:$0xf]
      %v721 = vld [vmem:[%s1 + $0x368] sm:$0xf]
      %v722 = vld [vmem:[%s1 + $0x36c] sm:$0xf]
      %v723 = vld [vmem:[%s1 + $0x370] sm:$0xf]
      %v724 = vld [vmem:[%s1 + $0x374] sm:$0xf]
      %v725 = vld [vmem:[%s1 + $0x378] sm:$0xf]
      %v726 = vld [vmem:[%s1 + $0x37c] sm:$0xf]
      %v727 = vld [vmem:[%s1 + $0x380] sm:$0xf]
      %v728 = vld [vmem:[%s1 + $0x384] sm:$0xf]
      %v729 = vld [vmem:[%s1 + $0x388] sm:$0xf]
      %v730 = vld [vmem:[%s1 + $0x38c] sm:$0xf]
      %v731 = vld [vmem:[%s1 + $0x390] sm:$0xf]
      %v732 = vld [vmem:[%s1 + $0x394] sm:$0xf]
      %v733 = vld [vmem:[%s1 + $0x398] sm:$0xf]
      %v734 = vld [vmem:[%s1 + $0x39c] sm:$0xf]
      %v735 = vld [vmem:[%s1 + $0x3a0] sm:$0xf]
      %v736 = vld [vmem:[%s1 + $0x3a4] sm:$0xf]
      %v737 = vld [vmem:[%s1 + $0x3a8] sm:$0xf]
      %v738 = vld [vmem:[%s1 + $0x3ac] sm:$0xf]
      %v739 = vld [vmem:[%s1 + $0x3b0] sm:$0xf]
      %v740 = vld [vmem:[%s1 + $0x3b4] sm:$0xf]
      %v741 = vld [vmem:[%s1 + $0x3b8] sm:$0xf]
      %v742 = vld [vmem:[%s1 + $0x3bc] sm:$0xf]
      %v743 = vld [vmem:[%s1 + $0x3c0] sm:$0xf]
      %v744 = vld [vmem:[%s1 + $0x3c4] sm:$0xf]
      %v745 = vld [vmem:[%s1 + $0x3c8] sm:$0xf]
      %v746 = vld [vmem:[%s1 + $0x3cc] sm:$0xf]
      %v747 = vld [vmem:[%s1 + $0x3d0] sm:$0xf]
      %v748 = vld [vmem:[%s1 + $0x3d4] sm:$0xf]
      %v749 = vld [vmem:[%s1 + $0x3d8] sm:$0xf]
      %v750 = vld [vmem:[%s1 + $0x3dc] sm:$0xf]
      %v751 = vld [vmem:[%s1 + $0x3e0] sm:$0xf]
      %v752 = vld [vmem:[%s1 + $0x3e4] sm:$0xf]
      %v753 = vld [vmem:[%s1 + $0x3e8] sm:$0xf]
      %v754 = vld [vmem:[%s1 + $0x3ec] sm:$0xf]
      %v755 = vld [vmem:[%s1 + $0x3f0] sm:$0xf]
      %v756 = vld [vmem:[%s1 + $0x3f4] sm:$0xf]
      %v757 = vld [vmem:[%s1 + $0x3f8] sm:$0xf]
      %v758 = vld [vmem:[%s1 + $0x3fc] sm:$0xf]
      %v759 = vld [vmem:[%s1 + $0x400] sm:$0xf]
      %v760 = vld [vmem:[%s1 + $0x404] sm:$0xf]
      %v761 = vld [vmem:[%s1 + $0x408] sm:$0xf]
      %v762 = vld [vmem:[%s1 + $0x40c] sm:$0xf]
      %v763 = vld [vmem:[%s1 + $0x410] sm:$0xf]
      %v764 = vld [vmem:[%s1 + $0x414] sm:$0xf]
      %v765 = vld [vmem:[%s1 + $0x418] sm:$0xf]
      %v766 = vld [vmem:[%s1 + $0x41c] sm:$0xf]
      %v767 = vld [vmem:[%s1 + $0x420] sm:$0xf]
      %v768 = vld [vmem:[%s1 + $0x424] sm:$0xf]
      %v769 = vld [vmem:[%s1 + $0x428] sm:$0xf]
      %v770 = vld [vmem:[%s1 + $0x42c] sm:$0xf]
      %v771 = vld [vmem:[%s1 + $0x430] sm:$0xf]
      %v772 = vld [vmem:[%s1 + $0x434] sm:$0xf]
      %v773 = vld [vmem:[%s1 + $0x438] sm:$0xf]
      %v774 = vld [vmem:[%s1 + $0x43c] sm:$0xf]
      %v775 = vld [vmem:[%s1 + $0x440] sm:$0xf]
      %v776 = vld [vmem:[%s1 + $0x444] sm:$0xf]
      %v777 = vld [vmem:[%s1 + $0x448] sm:$0xf]
      %v778 = vld [vmem:[%s1 + $0x44c] sm:$0xf]
      %v779 = vld [vmem:[%s1 + $0x450] sm:$0xf]
      %v780 = vld [vmem:[%s1 + $0x454] sm:$0xf]
      %v781 = vld [vmem:[%s1 + $0x458] sm:$0xf]
      %v782 = vld [vmem:[%s1 + $0x45c] sm:$0xf]
      %v783 = vld [vmem:[%s1 + $0x460] sm:$0xf]
      %v784 = vld [vmem:[%s1 + $0x464] sm:$0xf]
      %v785 = vld [vmem:[%s1 + $0x468] sm:$0xf]
      %v786 = vld [vmem:[%s1 + $0x46c] sm:$0xf]
      %v787 = vld [vmem:[%s1 + $0x470] sm:$0xf]
      %v788 = vld [vmem:[%s1 + $0x474] sm:$0xf]
      %v789 = vld [vmem:[%s1 + $0x478] sm:$0xf]
      %v790 = vld [vmem:[%s1 + $0x47c] sm:$0xf]
      %v791 = vld [vmem:[%s1 + $0x480] sm:$0xf]
      %v792 = vld [vmem:[%s1 + $0x484] sm:$0xf]
      %v793 = vld [vmem:[%s1 + $0x488] sm:$0xf]
      %v794 = vld [vmem:[%s1 + $0x48c] sm:$0xf]
      %v795 = vld [vmem:[%s1 + $0x490] sm:$0xf]
      %v796 = vld [vmem:[%s1 + $0x494] sm:$0xf]
      %v797 = vld [vmem:[%s1 + $0x498] sm:$0xf]
      %v798 = vld [vmem:[%s1 + $0x49c] sm:$0xf]
      %v799 = vld [vmem:[%s1 + $0x4a0] sm:$0xf]
      %v800 = vld [vmem:[%s1 + $0x4a4] sm:$0xf]
      %v801 = vld [vmem:[%s1 + $0x4a8] sm:$0xf]
      %v802 = vld [vmem:[%s1 + $0x4ac] sm:$0xf]
      %v803 = vld [vmem:[%s1 + $0x4b0] sm:$0xf]
      %v804 = vld [vmem:[%s1 + $0x4b4] sm:$0xf]
      %v805 = vld [vmem:[%s1 + $0x4b8] sm:$0xf]
      %v806 = vld [vmem:[%s1 + $0x4bc] sm:$0xf]
      %v807 = vld [vmem:[%s1 + $0x4c0] sm:$0xf]
      %v808 = vld [vmem:[%s1 + $0x4c4] sm:$0xf]
      %v809 = vld [vmem:[%s1 + $0x4c8] sm:$0xf]
      %v810 = vld [vmem:[%s1 + $0x4cc] sm:$0xf]
      %v811 = vld [vmem:[%s1 + $0x4d0] sm:$0xf]
      %v812 = vld [vmem:[%s1 + $0x4d4] sm:$0xf]
      %v813 = vld [vmem:[%s1 + $0x4d8] sm:$0xf]
      %v814 = vld [vmem:[%s1 + $0x4dc] sm:$0xf]
      %v815 = vld [vmem:[%s1 + $0x4e0] sm:$0xf]
      %v816 = vld [vmem:[%s1 + $0x4e4] sm:$0xf]
      %v817 = vld [vmem:[%s1 + $0x4e8] sm:$0xf]
      %v818 = vld [vmem:[%s1 + $0x4ec] sm:$0xf]
      %v819 = vld [vmem:[%s1 + $0x4f0] sm:$0xf]
      %v820 = vld [vmem:[%s1 + $0x4f4] sm:$0xf]
      %v821 = vld [vmem:[%s1 + $0x4f8] sm:$0xf]
      %v822 = vld [vmem:[%s1 + $0x4fc] sm:$0xf]
      %v823 = vld [vmem:[%s1 + $0x500] sm:$0xf]
      %v824 = vld [vmem:[%s1 + $0x504] sm:$0xf]
      %v825 = vld [vmem:[%s1 + $0x508] sm:$0xf]
      %v826 = vld [vmem:[%s1 + $0x50c] sm:$0xf]
      %v827 = vld [vmem:[%s1 + $0x510] sm:$0xf]
      %v828 = vld [vmem:[%s1 + $0x514] sm:$0xf]
      %v829 = vld [vmem:[%s1 + $0x518] sm:$0xf]
      %v830 = vld [vmem:[%s1 + $0x51c] sm:$0xf]
      %v831 = vld [vmem:[%s1 + $0x520] sm:$0xf]
      %v832 = vld [vmem:[%s1 + $0x524] sm:$0xf]
      %v833 = vld [vmem:[%s1 + $0x528] sm:$0xf]
      %v834 = vld [vmem:[%s1 + $0x52c] sm:$0xf]
      %v835 = vld [vmem:[%s1 + $0x530] sm:$0xf]
      %v836 = vld [vmem:[%s1 + $0x534] sm:$0xf]
      %v837 = vld [vmem:[%s1 + $0x538] sm:$0xf]
      %v838 = vld [vmem:[%s1 + $0x53c] sm:$0xf]
      %v839 = vld [vmem:[%s1 + $0x540] sm:$0xf]
      %v840 = vld [vmem:[%s1 + $0x544] sm:$0xf]
      %v841 = vld [vmem:[%s1 + $0x548] sm:$0xf]
      %v842 = vld [vmem:[%s1 + $0x54c] sm:$0xf]
      %v843 = vld [vmem:[%s1 + $0x550] sm:$0xf]
      %v844 = vld [vmem:[%s1 + $0x554] sm:$0xf]
      %v845 = vld [vmem:[%s1 + $0x558] sm:$0xf]
      %v846 = vld [vmem:[%s1 + $0x55c] sm:$0xf]
      %v847 = vld [vmem:[%s1 + $0x560] sm:$0xf]
      %v848 = vld [vmem:[%s1 + $0x564] sm:$0xf]
      %v849 = vld [vmem:[%s1 + $0x568] sm:$0xf]
      %v850 = vld [vmem:[%s1 + $0x56c] sm:$0xf]
      %v851 = vld [vmem:[%s1 + $0x570] sm:$0xf]
      %v852 = vld [vmem:[%s1 + $0x574] sm:$0xf]
      %v853 = vld [vmem:[%s1 + $0x578] sm:$0xf]
      %v854 = vld [vmem:[%s1 + $0x57c] sm:$0xf]
      %v855 = vld [vmem:[%s1 + $0x580] sm:$0xf]
      %v856 = vld [vmem:[%s1 + $0x584] sm:$0xf]
      %v857 = vld [vmem:[%s1 + $0x588] sm:$0xf]
      %v858 = vld [vmem:[%s1 + $0x58c] sm:$0xf]
      %v859 = vld [vmem:[%s1 + $0x590] sm:$0xf]
      %v860 = vld [vmem:[%s1 + $0x594] sm:$0xf]
      %v861 = vld [vmem:[%s1 + $0x598] sm:$0xf]
      %v862 = vld [vmem:[%s1 + $0x59c] sm:$0xf]
      %v863 = vld [vmem:[%s1 + $0x5a0] sm:$0xf]
      %v864 = vld [vmem:[%s1 + $0x5a4] sm:$0xf]
      %v865 = vld [vmem:[%s1 + $0x5a8] sm:$0xf]
      %v866 = vld [vmem:[%s1 + $0x5ac] sm:$0xf]
      %v867 = vld [vmem:[%s1 + $0x5b0] sm:$0xf]
      %v868 = vld [vmem:[%s1 + $0x5b4] sm:$0xf]
      %v869 = vld [vmem:[%s1 + $0x5b8] sm:$0xf]
      %v870 = vld [vmem:[%s1 + $0x5bc] sm:$0xf]
      %v871 = vld [vmem:[%s1 + $0x5c0] sm:$0xf]
      %v872 = vld [vmem:[%s1 + $0x5c4] sm:$0xf]
      %v873 = vld [vmem:[%s1 + $0x5c8] sm:$0xf]
      %v874 = vld [vmem:[%s1 + $0x5cc] sm:$0xf]
      %v875 = vld [vmem:[%s1 + $0x5d0] sm:$0xf]
      %v876 = vld [vmem:[%s1 + $0x5d4] sm:$0xf]
      %v877 = vld [vmem:[%s1 + $0x5d8] sm:$0xf]
      %v878 = vld [vmem:[%s1 + $0x5dc] sm:$0xf]
      %v879 = vld [vmem:[%s1 + $0x5e0] sm:$0xf]
      %v880 = vld [vmem:[%s1 + $0x5e4] sm:$0xf]
      %v881 = vld [vmem:[%s1 + $0x5e8] sm:$0xf]
      %v882 = vld [vmem:[%s1 + $0x5ec] sm:$0xf]
      %v883 = vld [vmem:[%s1 + $0x5f0] sm:$0xf]
      %v884 = vld [vmem:[%s1 + $0x5f4] sm:$0xf]
      %v885 = vld [vmem:[%s1 + $0x5f8] sm:$0xf]
      %v886 = vld [vmem:[%s1 + $0x5fc] sm:$0xf]
      %v887 = vld [vmem:[%s1 + $0x600] sm:$0xf]
      %v888 = vld [vmem:[%s1 + $0x604] sm:$0xf]
      %v889 = vld [vmem:[%s1 + $0x608] sm:$0xf]
      %v890 = vld [vmem:[%s1 + $0x60c] sm:$0xf]
      %v891 = vld [vmem:[%s1 + $0x610] sm:$0xf]
      %v892 = vld [vmem:[%s1 + $0x614] sm:$0xf]
      %v893 = vld [vmem:[%s1 + $0x618] sm:$0xf]
      %v894 = vld [vmem:[%s1 + $0x61c] sm:$0xf]
      %v895 = vld [vmem:[%s1 + $0x620] sm:$0xf]
      %v896 = vld [vmem:[%s1 + $0x624] sm:$0xf]
      %v897 = vld [vmem:[%s1 + $0x628] sm:$0xf]
      %v898 = vld [vmem:[%s1 + $0x62c] sm:$0xf]
      %v899 = vld [vmem:[%s1 + $0x630] sm:$0xf]
      %v900 = vld [vmem:[%s1 + $0x634] sm:$0xf]
      %v901 = vld [vmem:[%s1 + $0x638] sm:$0xf]
      %v902 = vld [vmem:[%s1 + $0x63c] sm:$0xf]
      %v903 = vld [vmem:[%s2] sm:$0x1]
      %v905 = vlaneseq
      %v906 = vshrl.u32 %v905, 7
      %v907 = vsub.s32 0, %v906
      %v908 = vrot.slane %v903, %v907
      %v1235 = vunpack.c.l.b16 %v178
      %v1236 = vunpack.c.h.b16 %v178
      %v1237 = vunpack.c.l.b16 %v179
      %v1238 = vunpack.c.h.b16 %v179
      %v1239 = vunpack.c.l.b16 %v180
      %v1240 = vunpack.c.h.b16 %v180
      %v1241 = vunpack.c.l.b16 %v181
      %v1242 = vunpack.c.h.b16 %v181
      %v1243 = vunpack.c.l.b16 %v182
      %v1244 = vunpack.c.h.b16 %v182
      %v1245 = vunpack.c.l.b16 %v183
      %v1246 = vunpack.c.h.b16 %v183
      %v1247 = vunpack.c.l.b16 %v184
      %v1248 = vunpack.c.h.b16 %v184
      %v1249 = vunpack.c.l.b16 %v185
      %v1250 = vunpack.c.h.b16 %v185
      %v1251 = vunpack.c.l.b16 %v186
      %v1252 = vunpack.c.h.b16 %v186
      %v1253 = vunpack.c.l.b16 %v187
      %v1254 = vunpack.c.h.b16 %v187
      %v1255 = vunpack.c.l.b16 %v188
      %v1256 = vunpack.c.h.b16 %v188
      %v1257 = vunpack.c.l.b16 %v189
      %v1258 = vunpack.c.h.b16 %v189
      %v1259 = vunpack.c.l.b16 %v190
      %v1260 = vunpack.c.l.b16 %v191
      %v1261 = vunpack.c.h.b16 %v191
      %v1262 = vunpack.c.l.b16 %v192
      %v1263 = vunpack.c.h.b16 %v192
      %v1264 = vunpack.c.l.b16 %v193
      %v1265 = vunpack.c.h.b16 %v193
      %v1266 = vunpack.c.l.b16 %v194
      %v1267 = vunpack.c.h.b16 %v194
      %v1268 = vunpack.c.l.b16 %v195
      %v1269 = vunpack.c.h.b16 %v195
      %v1270 = vunpack.c.l.b16 %v196
      %v1271 = vunpack.c.h.b16 %v196
      %v1272 = vunpack.c.l.b16 %v197
      %v1273 = vunpack.c.h.b16 %v197
      %v1274 = vunpack.c.l.b16 %v198
      %v1275 = vunpack.c.h.b16 %v198
      %v1276 = vunpack.c.l.b16 %v199
      %v1277 = vunpack.c.h.b16 %v199
      %v1278 = vunpack.c.l.b16 %v200
      %v1279 = vunpack.c.h.b16 %v200
      %v1280 = vunpack.c.l.b16 %v201
      %v1281 = vunpack.c.h.b16 %v201
      %v1282 = vunpack.c.l.b16 %v202
      %v1283 = vunpack.c.h.b16 %v202
      %v1284 = vunpack.c.l.b16 %v203
      %v1285 = vunpack.c.l.b16 %v204
      %v1286 = vunpack.c.h.b16 %v204
      %v1287 = vunpack.c.l.b16 %v205
      %v1288 = vunpack.c.h.b16 %v205
      %v1289 = vunpack.c.l.b16 %v206
      %v1290 = vunpack.c.h.b16 %v206
      %v1291 = vunpack.c.l.b16 %v207
      %v1292 = vunpack.c.h.b16 %v207
      %v1293 = vunpack.c.l.b16 %v208
      %v1294 = vunpack.c.h.b16 %v208
      %v1295 = vunpack.c.l.b16 %v209
      %v1296 = vunpack.c.h.b16 %v209
      %v1297 = vunpack.c.l.b16 %v210
      %v1298 = vunpack.c.h.b16 %v210
      %v1299 = vunpack.c.l.b16 %v211
      %v1300 = vunpack.c.h.b16 %v211
      %v1301 = vunpack.c.l.b16 %v212
      %v1302 = vunpack.c.h.b16 %v212
      %v1303 = vunpack.c.l.b16 %v213
      %v1304 = vunpack.c.h.b16 %v213
      %v1305 = vunpack.c.l.b16 %v214
      %v1306 = vunpack.c.h.b16 %v214
      %v1307 = vunpack.c.l.b16 %v215
      %v1308 = vunpack.c.h.b16 %v215
      %v1309 = vunpack.c.l.b16 %v216
      %v1310 = vunpack.c.l.b16 %v217
      %v1311 = vunpack.c.h.b16 %v217
      %v1312 = vunpack.c.l.b16 %v218
      %v1313 = vunpack.c.h.b16 %v218
      %v1314 = vunpack.c.l.b16 %v219
      %v1315 = vunpack.c.h.b16 %v219
      %v1316 = vunpack.c.l.b16 %v220
      %v1317 = vunpack.c.h.b16 %v220
      %v1318 = vunpack.c.l.b16 %v221
      %v1319 = vunpack.c.h.b16 %v221
      %v1320 = vunpack.c.l.b16 %v222
      %v1321 = vunpack.c.h.b16 %v222
      %v1322 = vunpack.c.l.b16 %v223
      %v1323 = vunpack.c.h.b16 %v223
      %v1324 = vunpack.c.l.b16 %v224
      %v1325 = vunpack.c.h.b16 %v224
      %v1326 = vunpack.c.l.b16 %v225
      %v1327 = vunpack.c.h.b16 %v225
      %v1328 = vunpack.c.l.b16 %v226
      %v1329 = vunpack.c.h.b16 %v226
      %v1330 = vunpack.c.l.b16 %v227
      %v1331 = vunpack.c.h.b16 %v227
      %v1332 = vunpack.c.l.b16 %v228
      %v1333 = vunpack.c.h.b16 %v228
      %v1334 = vunpack.c.l.b16 %v229
      %v1335 = vunpack.c.l.b16 %v230
      %v1336 = vunpack.c.h.b16 %v230
      %v1337 = vunpack.c.l.b16 %v231
      %v1338 = vunpack.c.h.b16 %v231
      %v1339 = vunpack.c.l.b16 %v232
      %v1340 = vunpack.c.h.b16 %v232
      %v1341 = vunpack.c.l.b16 %v233
      %v1342 = vunpack.c.h.b16 %v233
      %v1343 = vunpack.c.l.b16 %v234
      %v1344 = vunpack.c.h.b16 %v234
      %v1345 = vunpack.c.l.b16 %v235
      %v1346 = vunpack.c.h.b16 %v235
      %v1347 = vunpack.c.l.b16 %v236
      %v1348 = vunpack.c.h.b16 %v236
      %v1349 = vunpack.c.l.b16 %v237
      %v1350 = vunpack.c.h.b16 %v237
      %v1351 = vunpack.c.l.b16 %v238
      %v1352 = vunpack.c.h.b16 %v238
      %v1353 = vunpack.c.l.b16 %v239
      %v1354 = vunpack.c.h.b16 %v239
      %v1355 = vunpack.c.l.b16 %v240
      %v1356 = vunpack.c.h.b16 %v240
      %v1357 = vunpack.c.l.b16 %v241
      %v1358 = vunpack.c.h.b16 %v241
      %v1359 = vunpack.c.l.b16 %v242
      %v1360 = vunpack.c.l.b16 %v243
      %v1361 = vunpack.c.h.b16 %v243
      %v1362 = vunpack.c.l.b16 %v244
      %v1363 = vunpack.c.h.b16 %v244
      %v1364 = vunpack.c.l.b16 %v245
      %v1365 = vunpack.c.h.b16 %v245
      %v1366 = vunpack.c.l.b16 %v246
      %v1367 = vunpack.c.h.b16 %v246
      %v1368 = vunpack.c.l.b16 %v247
      %v1369 = vunpack.c.h.b16 %v247
      %v1370 = vunpack.c.l.b16 %v248
      %v1371 = vunpack.c.h.b16 %v248
      %v1372 = vunpack.c.l.b16 %v249
      %v1373 = vunpack.c.h.b16 %v249
      %v1374 = vunpack.c.l.b16 %v250
      %v1375 = vunpack.c.h.b16 %v250
      %v1376 = vunpack.c.l.b16 %v251
      %v1377 = vunpack.c.h.b16 %v251
      %v1378 = vunpack.c.l.b16 %v252
      %v1379 = vunpack.c.h.b16 %v252
      %v1380 = vunpack.c.l.b16 %v253
      %v1381 = vunpack.c.h.b16 %v253
      %v1382 = vunpack.c.l.b16 %v254
      %v1383 = vunpack.c.h.b16 %v254
      %v1384 = vunpack.c.l.b16 %v255
      %v1385 = vunpack.c.l.b16 %v256
      %v1386 = vunpack.c.h.b16 %v256
      %v1387 = vunpack.c.l.b16 %v257
      %v1388 = vunpack.c.h.b16 %v257
      %v1389 = vunpack.c.l.b16 %v258
      %v1390 = vunpack.c.h.b16 %v258
      %v1391 = vunpack.c.l.b16 %v259
      %v1392 = vunpack.c.h.b16 %v259
      %v1393 = vunpack.c.l.b16 %v260
      %v1394 = vunpack.c.h.b16 %v260
      %v1395 = vunpack.c.l.b16 %v261
      %v1396 = vunpack.c.h.b16 %v261
      %v1397 = vunpack.c.l.b16 %v262
      %v1398 = vunpack.c.h.b16 %v262
      %v1399 = vunpack.c.l.b16 %v263
      %v1400 = vunpack.c.h.b16 %v263
      %v1401 = vunpack.c.l.b16 %v264
      %v1402 = vunpack.c.h.b16 %v264
      %v1403 = vunpack.c.l.b16 %v265
      %v1404 = vunpack.c.h.b16 %v265
      %v1405 = vunpack.c.l.b16 %v266
      %v1406 = vunpack.c.h.b16 %v266
      %v1407 = vunpack.c.l.b16 %v267
      %v1408 = vunpack.c.h.b16 %v267
      %v1409 = vunpack.c.l.b16 %v268
      %v1410 = vunpack.c.l.b16 %v269
      %v1411 = vunpack.c.h.b16 %v269
      %v1412 = vunpack.c.l.b16 %v270
      %v1413 = vunpack.c.h.b16 %v270
      %v1414 = vunpack.c.l.b16 %v271
      %v1415 = vunpack.c.h.b16 %v271
      %v1416 = vunpack.c.l.b16 %v272
      %v1417 = vunpack.c.h.b16 %v272
      %v1418 = vunpack.c.l.b16 %v273
      %v1419 = vunpack.c.h.b16 %v273
      %v1420 = vunpack.c.l.b16 %v274
      %v1421 = vunpack.c.h.b16 %v274
      %v1422 = vunpack.c.l.b16 %v275
      %v1423 = vunpack.c.h.b16 %v275
      %v1424 = vunpack.c.l.b16 %v276
      %v1425 = vunpack.c.h.b16 %v276
      %v1426 = vunpack.c.l.b16 %v277
      %v1427 = vunpack.c.h.b16 %v277
      %v1428 = vunpack.c.l.b16 %v278
      %v1429 = vunpack.c.h.b16 %v278
      %v1430 = vunpack.c.l.b16 %v279
      %v1431 = vunpack.c.h.b16 %v279
      %v1432 = vunpack.c.l.b16 %v280
      %v1433 = vunpack.c.h.b16 %v280
      %v1434 = vunpack.c.l.b16 %v281
      %v1435 = vunpack.c.l.b16 %v282
      %v1436 = vunpack.c.h.b16 %v282
      %v1437 = vunpack.c.l.b16 %v283
      %v1438 = vunpack.c.h.b16 %v283
      %v1439 = vunpack.c.l.b16 %v284
      %v1440 = vunpack.c.h.b16 %v284
      %v1441 = vunpack.c.l.b16 %v285
      %v1442 = vunpack.c.h.b16 %v285
      %v1443 = vunpack.c.l.b16 %v286
      %v1444 = vunpack.c.h.b16 %v286
      %v1445 = vunpack.c.l.b16 %v287
      %v1446 = vunpack.c.h.b16 %v287
      %v1447 = vunpack.c.l.b16 %v288
      %v1448 = vunpack.c.h.b16 %v288
      %v1449 = vunpack.c.l.b16 %v289
      %v1450 = vunpack.c.h.b16 %v289
      %v1451 = vunpack.c.l.b16 %v290
      %v1452 = vunpack.c.h.b16 %v290
      %v1453 = vunpack.c.l.b16 %v291
      %v1454 = vunpack.c.h.b16 %v291
      %v1455 = vunpack.c.l.b16 %v292
      %v1456 = vunpack.c.h.b16 %v292
      %v1457 = vunpack.c.l.b16 %v293
      %v1458 = vunpack.c.h.b16 %v293
      %v1459 = vunpack.c.l.b16 %v294
      %v1460 = vunpack.c.l.b16 %v295
      %v1461 = vunpack.c.h.b16 %v295
      %v1462 = vunpack.c.l.b16 %v296
      %v1463 = vunpack.c.h.b16 %v296
      %v1464 = vunpack.c.l.b16 %v297
      %v1465 = vunpack.c.h.b16 %v297
      %v1466 = vunpack.c.l.b16 %v298
      %v1467 = vunpack.c.h.b16 %v298
      %v1468 = vunpack.c.l.b16 %v299
      %v1469 = vunpack.c.h.b16 %v299
      %v1470 = vunpack.c.l.b16 %v300
      %v1471 = vunpack.c.h.b16 %v300
      %v1472 = vunpack.c.l.b16 %v301
      %v1473 = vunpack.c.h.b16 %v301
      %v1474 = vunpack.c.l.b16 %v302
      %v1475 = vunpack.c.h.b16 %v302
      %v1476 = vunpack.c.l.b16 %v303
      %v1477 = vunpack.c.h.b16 %v303
      %v1478 = vunpack.c.l.b16 %v304
      %v1479 = vunpack.c.h.b16 %v304
      %v1480 = vunpack.c.l.b16 %v305
      %v1481 = vunpack.c.h.b16 %v305
      %v1482 = vunpack.c.l.b16 %v306
      %v1483 = vunpack.c.h.b16 %v306
      %v1484 = vunpack.c.l.b16 %v307
      %v1485 = vunpack.c.l.b16 %v308
      %v1486 = vunpack.c.h.b16 %v308
      %v1487 = vunpack.c.l.b16 %v309
      %v1488 = vunpack.c.h.b16 %v309
      %v1489 = vunpack.c.l.b16 %v310
      %v1490 = vunpack.c.h.b16 %v310
      %v1491 = vunpack.c.l.b16 %v311
      %v1492 = vunpack.c.h.b16 %v311
      %v1493 = vunpack.c.l.b16 %v312
      %v1494 = vunpack.c.h.b16 %v312
      %v1495 = vunpack.c.l.b16 %v313
      %v1496 = vunpack.c.h.b16 %v313
      %v1497 = vunpack.c.l.b16 %v314
      %v1498 = vunpack.c.h.b16 %v314
      %v1499 = vunpack.c.l.b16 %v315
      %v1500 = vunpack.c.h.b16 %v315
      %v1501 = vunpack.c.l.b16 %v316
      %v1502 = vunpack.c.h.b16 %v316
      %v1503 = vunpack.c.l.b16 %v317
      %v1504 = vunpack.c.h.b16 %v317
      %v1505 = vunpack.c.l.b16 %v318
      %v1506 = vunpack.c.h.b16 %v318
      %v1507 = vunpack.c.l.b16 %v319
      %v1508 = vunpack.c.h.b16 %v319
      %v1509 = vunpack.c.l.b16 %v320
      %v1510 = vunpack.c.l.b16 %v321
      %v1511 = vunpack.c.h.b16 %v321
      %v1512 = vunpack.c.l.b16 %v322
      %v1513 = vunpack.c.h.b16 %v322
      %v1514 = vunpack.c.l.b16 %v323
      %v1515 = vunpack.c.h.b16 %v323
      %v1516 = vunpack.c.l.b16 %v324
      %v1517 = vunpack.c.h.b16 %v324
      %v1518 = vunpack.c.l.b16 %v325
      %v1519 = vunpack.c.h.b16 %v325
      %v1520 = vunpack.c.l.b16 %v326
      %v1521 = vunpack.c.h.b16 %v326
      %v1522 = vunpack.c.l.b16 %v327
      %v1523 = vunpack.c.h.b16 %v327
      %v1524 = vunpack.c.l.b16 %v328
      %v1525 = vunpack.c.h.b16 %v328
      %v1526 = vunpack.c.l.b16 %v329
      %v1527 = vunpack.c.h.b16 %v329
      %v1528 = vunpack.c.l.b16 %v330
      %v1529 = vunpack.c.h.b16 %v330
      %v1530 = vunpack.c.l.b16 %v331
      %v1531 = vunpack.c.h.b16 %v331
      %v1532 = vunpack.c.l.b16 %v332
      %v1533 = vunpack.c.h.b16 %v332
      %v1534 = vunpack.c.l.b16 %v333
      %v1535 = vunpack.c.l.b16 %v334
      %v1536 = vunpack.c.h.b16 %v334
      %v1537 = vunpack.c.l.b16 %v335
      %v1538 = vunpack.c.h.b16 %v335
      %v1539 = vunpack.c.l.b16 %v336
      %v1540 = vunpack.c.h.b16 %v336
      %v1541 = vunpack.c.l.b16 %v337
      %v1542 = vunpack.c.h.b16 %v337
      %v1543 = vunpack.c.l.b16 %v338
      %v1544 = vunpack.c.h.b16 %v338
      %v1545 = vunpack.c.l.b16 %v339
      %v1546 = vunpack.c.h.b16 %v339
      %v1547 = vunpack.c.l.b16 %v340
      %v1548 = vunpack.c.h.b16 %v340
      %v1549 = vunpack.c.l.b16 %v341
      %v1550 = vunpack.c.h.b16 %v341
      %v1551 = vunpack.c.l.b16 %v342
      %v1552 = vunpack.c.h.b16 %v342
      %v1553 = vunpack.c.l.b16 %v343
      %v1554 = vunpack.c.h.b16 %v343
      %v1555 = vunpack.c.l.b16 %v344
      %v1556 = vunpack.c.h.b16 %v344
      %v1557 = vunpack.c.l.b16 %v345
      %v1558 = vunpack.c.h.b16 %v345
      %v1559 = vunpack.c.l.b16 %v346
      %v1560 = vunpack.c.l.b16 %v347
      %v1561 = vunpack.c.h.b16 %v347
      %v1562 = vunpack.c.l.b16 %v348
      %v1563 = vunpack.c.h.b16 %v348
      %v1564 = vunpack.c.l.b16 %v349
      %v1565 = vunpack.c.h.b16 %v349
      %v1566 = vunpack.c.l.b16 %v350
      %v1567 = vunpack.c.h.b16 %v350
      %v1568 = vunpack.c.l.b16 %v351
      %v1569 = vunpack.c.h.b16 %v351
      %v1570 = vunpack.c.l.b16 %v352
      %v1571 = vunpack.c.h.b16 %v352
      %v1572 = vunpack.c.l.b16 %v353
      %v1573 = vunpack.c.h.b16 %v353
      %v1574 = vunpack.c.l.b16 %v354
      %v1575 = vunpack.c.h.b16 %v354
      %v1576 = vunpack.c.l.b16 %v355
      %v1577 = vunpack.c.h.b16 %v355
      %v1578 = vunpack.c.l.b16 %v356
      %v1579 = vunpack.c.h.b16 %v356
      %v1580 = vunpack.c.l.b16 %v357
      %v1581 = vunpack.c.h.b16 %v357
      %v1582 = vunpack.c.l.b16 %v358
      %v1583 = vunpack.c.h.b16 %v358
      %v1584 = vunpack.c.l.b16 %v359
      %v1585 = vunpack.c.l.b16 %v360
      %v1586 = vunpack.c.h.b16 %v360
      %v1587 = vunpack.c.l.b16 %v361
      %v1588 = vunpack.c.h.b16 %v361
      %v1589 = vunpack.c.l.b16 %v362
      %v1590 = vunpack.c.h.b16 %v362
      %v1591 = vunpack.c.l.b16 %v363
      %v1592 = vunpack.c.h.b16 %v363
      %v1593 = vunpack.c.l.b16 %v364
      %v1594 = vunpack.c.h.b16 %v364
      %v1595 = vunpack.c.l.b16 %v365
      %v1596 = vunpack.c.h.b16 %v365
      %v1597 = vunpack.c.l.b16 %v366
      %v1598 = vunpack.c.h.b16 %v366
      %v1599 = vunpack.c.l.b16 %v367
      %v1600 = vunpack.c.h.b16 %v367
      %v1601 = vunpack.c.l.b16 %v368
      %v1602 = vunpack.c.h.b16 %v368
      %v1603 = vunpack.c.l.b16 %v369
      %v1604 = vunpack.c.h.b16 %v369
      %v1605 = vunpack.c.l.b16 %v370
      %v1606 = vunpack.c.h.b16 %v370
      %v1607 = vunpack.c.l.b16 %v371
      %v1608 = vunpack.c.h.b16 %v371
      %v1609 = vunpack.c.l.b16 %v372
      %v1610 = vunpack.c.l.b16 %v373
      %v1611 = vunpack.c.h.b16 %v373
      %v1612 = vunpack.c.l.b16 %v374
      %v1613 = vunpack.c.h.b16 %v374
      %v1614 = vunpack.c.l.b16 %v375
      %v1615 = vunpack.c.h.b16 %v375
      %v1616 = vunpack.c.l.b16 %v376
      %v1617 = vunpack.c.h.b16 %v376
      %v1618 = vunpack.c.l.b16 %v377
      %v1619 = vunpack.c.h.b16 %v377
      %v1620 = vunpack.c.l.b16 %v378
      %v1621 = vunpack.c.h.b16 %v378
      %v1622 = vunpack.c.l.b16 %v379
      %v1623 = vunpack.c.h.b16 %v379
      %v1624 = vunpack.c.l.b16 %v380
      %v1625 = vunpack.c.h.b16 %v380
      %v1626 = vunpack.c.l.b16 %v381
      %v1627 = vunpack.c.h.b16 %v381
      %v1628 = vunpack.c.l.b16 %v382
      %v1629 = vunpack.c.h.b16 %v382
      %v1630 = vunpack.c.l.b16 %v383
      %v1631 = vunpack.c.h.b16 %v383
      %v1632 = vunpack.c.l.b16 %v384
      %v1633 = vunpack.c.h.b16 %v384
      %v1634 = vunpack.c.l.b16 %v385
      %v1635 = vunpack.c.l.b16 %v386
      %v1636 = vunpack.c.h.b16 %v386
      %v1637 = vunpack.c.l.b16 %v387
      %v1638 = vunpack.c.h.b16 %v387
      %v1639 = vunpack.c.l.b16 %v388
      %v1640 = vunpack.c.h.b16 %v388
      %v1641 = vunpack.c.l.b16 %v389
      %v1642 = vunpack.c.h.b16 %v389
      %v1643 = vunpack.c.l.b16 %v390
      %v1644 = vunpack.c.h.b16 %v390
      %v1645 = vunpack.c.l.b16 %v391
      %v1646 = vunpack.c.h.b16 %v391
      %v1647 = vunpack.c.l.b16 %v392
      %v1648 = vunpack.c.h.b16 %v392
      %v1649 = vunpack.c.l.b16 %v393
      %v1650 = vunpack.c.h.b16 %v393
      %v1651 = vunpack.c.l.b16 %v394
      %v1652 = vunpack.c.h.b16 %v394
      %v1653 = vunpack.c.l.b16 %v395
      %v1654 = vunpack.c.h.b16 %v395
      %v1655 = vunpack.c.l.b16 %v396
      %v1656 = vunpack.c.h.b16 %v396
      %v1657 = vunpack.c.l.b16 %v397
      %v1658 = vunpack.c.h.b16 %v397
      %v1659 = vunpack.c.l.b16 %v398
      %v1660 = vunpack.c.l.b16 %v399
      %v1661 = vunpack.c.h.b16 %v399
      %v1662 = vunpack.c.l.b16 %v400
      %v1663 = vunpack.c.h.b16 %v400
      %v1664 = vunpack.c.l.b16 %v401
      %v1665 = vunpack.c.h.b16 %v401
      %v1666 = vunpack.c.l.b16 %v402
      %v1667 = vunpack.c.h.b16 %v402
      %v1668 = vunpack.c.l.b16 %v403
      %v1669 = vunpack.c.h.b16 %v403
      %v1670 = vunpack.c.l.b16 %v404
      %v1671 = vunpack.c.h.b16 %v404
      %v1672 = vunpack.c.l.b16 %v405
      %v1673 = vunpack.c.h.b16 %v405
      %v1674 = vunpack.c.l.b16 %v406
      %v1675 = vunpack.c.h.b16 %v406
      %v1676 = vunpack.c.l.b16 %v407
      %v1677 = vunpack.c.h.b16 %v407
      %v1678 = vunpack.c.l.b16 %v408
      %v1679 = vunpack.c.h.b16 %v408
      %v1680 = vunpack.c.l.b16 %v409
      %v1681 = vunpack.c.h.b16 %v409
      %v1682 = vunpack.c.l.b16 %v410
      %v1683 = vunpack.c.h.b16 %v410
      %v1684 = vunpack.c.l.b16 %v411
      %v1685 = vunpack.c.l.b16 %v412
      %v1686 = vunpack.c.h.b16 %v412
      %v1687 = vunpack.c.l.b16 %v413
      %v1688 = vunpack.c.h.b16 %v413
      %v1689 = vunpack.c.l.b16 %v414
      %v1690 = vunpack.c.h.b16 %v414
      %v1691 = vunpack.c.l.b16 %v415
      %v1692 = vunpack.c.h.b16 %v415
      %v1693 = vunpack.c.l.b16 %v416
      %v1694 = vunpack.c.h.b16 %v416
      %v1695 = vunpack.c.l.b16 %v417
      %v1696 = vunpack.c.h.b16 %v417
      %v1697 = vunpack.c.l.b16 %v418
      %v1698 = vunpack.c.h.b16 %v418
      %v1699 = vunpack.c.l.b16 %v419
      %v1700 = vunpack.c.h.b16 %v419
      %v1701 = vunpack.c.l.b16 %v420
      %v1702 = vunpack.c.h.b16 %v420
      %v1703 = vunpack.c.l.b16 %v421
      %v1704 = vunpack.c.h.b16 %v421
      %v1705 = vunpack.c.l.b16 %v422
      %v1706 = vunpack.c.h.b16 %v422
      %v1707 = vunpack.c.l.b16 %v423
      %v1708 = vunpack.c.h.b16 %v423
      %v1709 = vunpack.c.l.b16 %v424
      %v1710 = vunpack.c.l.b16 %v425
      %v1711 = vunpack.c.h.b16 %v425
      %v1712 = vunpack.c.l.b16 %v426
      %v1713 = vunpack.c.h.b16 %v426
      %v1714 = vunpack.c.l.b16 %v427
      %v1715 = vunpack.c.h.b16 %v427
      %v1716 = vunpack.c.l.b16 %v428
      %v1717 = vunpack.c.h.b16 %v428
      %v1718 = vunpack.c.l.b16 %v429
      %v1719 = vunpack.c.h.b16 %v429
      %v1720 = vunpack.c.l.b16 %v430
      %v1721 = vunpack.c.h.b16 %v430
      %v1722 = vunpack.c.l.b16 %v431
      %v1723 = vunpack.c.h.b16 %v431
      %v1724 = vunpack.c.l.b16 %v432
      %v1725 = vunpack.c.h.b16 %v432
      %v1726 = vunpack.c.l.b16 %v433
      %v1727 = vunpack.c.h.b16 %v433
      %v1728 = vunpack.c.l.b16 %v434
      %v1729 = vunpack.c.h.b16 %v434
      %v1730 = vunpack.c.l.b16 %v435
      %v1731 = vunpack.c.h.b16 %v435
      %v1732 = vunpack.c.l.b16 %v436
      %v1733 = vunpack.c.h.b16 %v436
      %v1734 = vunpack.c.l.b16 %v437
      %v1735 = vunpack.c.l.b16 %v438
      %v1736 = vunpack.c.h.b16 %v438
      %v1737 = vunpack.c.l.b16 %v439
      %v1738 = vunpack.c.h.b16 %v439
      %v1739 = vunpack.c.l.b16 %v440
      %v1740 = vunpack.c.h.b16 %v440
      %v1741 = vunpack.c.l.b16 %v441
      %v1742 = vunpack.c.h.b16 %v441
      %v1743 = vunpack.c.l.b16 %v442
      %v1744 = vunpack.c.h.b16 %v442
      %v1745 = vunpack.c.l.b16 %v443
      %v1746 = vunpack.c.h.b16 %v443
      %v1747 = vunpack.c.l.b16 %v444
      %v1748 = vunpack.c.h.b16 %v444
      %v1749 = vunpack.c.l.b16 %v445
      %v1750 = vunpack.c.h.b16 %v445
      %v1751 = vunpack.c.l.b16 %v446
      %v1752 = vunpack.c.h.b16 %v446
      %v1753 = vunpack.c.l.b16 %v447
      %v1754 = vunpack.c.h.b16 %v447
      %v1755 = vunpack.c.l.b16 %v448
      %v1756 = vunpack.c.h.b16 %v448
      %v1757 = vunpack.c.l.b16 %v449
      %v1758 = vunpack.c.h.b16 %v449
      %v1759 = vunpack.c.l.b16 %v450
      %v1760 = vunpack.c.l.b16 %v451
      %v1761 = vunpack.c.h.b16 %v451
      %v1762 = vunpack.c.l.b16 %v452
      %v1763 = vunpack.c.h.b16 %v452
      %v1764 = vunpack.c.l.b16 %v453
      %v1765 = vunpack.c.h.b16 %v453
      %v1766 = vunpack.c.l.b16 %v454
      %v1767 = vunpack.c.h.b16 %v454
      %v1768 = vunpack.c.l.b16 %v455
      %v1769 = vunpack.c.h.b16 %v455
      %v1770 = vunpack.c.l.b16 %v456
      %v1771 = vunpack.c.h.b16 %v456
      %v1772 = vunpack.c.l.b16 %v457
      %v1773 = vunpack.c.h.b16 %v457
      %v1774 = vunpack.c.l.b16 %v458
      %v1775 = vunpack.c.h.b16 %v458
      %v1776 = vunpack.c.l.b16 %v459
      %v1777 = vunpack.c.h.b16 %v459
      %v1778 = vunpack.c.l.b16 %v460
      %v1779 = vunpack.c.h.b16 %v460
      %v1780 = vunpack.c.l.b16 %v461
      %v1781 = vunpack.c.h.b16 %v461
      %v1782 = vunpack.c.l.b16 %v462
      %v1783 = vunpack.c.h.b16 %v462
      %v1784 = vunpack.c.l.b16 %v463
      %v1785 = vunpack.c.l.b16 %v464
      %v1786 = vunpack.c.h.b16 %v464
      %v1787 = vunpack.c.l.b16 %v465
      %v1788 = vunpack.c.h.b16 %v465
      %v1789 = vunpack.c.l.b16 %v466
      %v1790 = vunpack.c.h.b16 %v466
      %v1791 = vunpack.c.l.b16 %v467
      %v1792 = vunpack.c.h.b16 %v467
      %v1793 = vunpack.c.l.b16 %v468
      %v1794 = vunpack.c.h.b16 %v468
      %v1795 = vunpack.c.l.b16 %v469
      %v1796 = vunpack.c.h.b16 %v469
      %v1797 = vunpack.c.l.b16 %v470
      %v1798 = vunpack.c.h.b16 %v470
      %v1799 = vunpack.c.l.b16 %v471
      %v1800 = vunpack.c.h.b16 %v471
      %v1801 = vunpack.c.l.b16 %v472
      %v1802 = vunpack.c.h.b16 %v472
      %v1803 = vunpack.c.l.b16 %v473
      %v1804 = vunpack.c.h.b16 %v473
      %v1805 = vunpack.c.l.b16 %v474
      %v1806 = vunpack.c.h.b16 %v474
      %v1807 = vunpack.c.l.b16 %v475
      %v1808 = vunpack.c.h.b16 %v475
      %v1809 = vunpack.c.l.b16 %v476
      %v1810 = vunpack.c.l.b16 %v477
      %v1811 = vunpack.c.h.b16 %v477
      %v1812 = vunpack.c.l.b16 %v478
      %v1813 = vunpack.c.h.b16 %v478
      %v1814 = vunpack.c.l.b16 %v479
      %v1815 = vunpack.c.h.b16 %v479
      %v1816 = vunpack.c.l.b16 %v480
      %v1817 = vunpack.c.h.b16 %v480
      %v1818 = vunpack.c.l.b16 %v481
      %v1819 = vunpack.c.h.b16 %v481
      %v1820 = vunpack.c.l.b16 %v482
      %v1821 = vunpack.c.h.b16 %v482
      %v1822 = vunpack.c.l.b16 %v483
      %v1823 = vunpack.c.h.b16 %v483
      %v1824 = vunpack.c.l.b16 %v484
      %v1825 = vunpack.c.h.b16 %v484
      %v1826 = vunpack.c.l.b16 %v485
      %v1827 = vunpack.c.h.b16 %v485
      %v1828 = vunpack.c.l.b16 %v486
      %v1829 = vunpack.c.h.b16 %v486
      %v1830 = vunpack.c.l.b16 %v487
      %v1831 = vunpack.c.h.b16 %v487
      %v1832 = vunpack.c.l.b16 %v488
      %v1833 = vunpack.c.h.b16 %v488
      %v1834 = vunpack.c.l.b16 %v489
      %v1835 = vunpack.c.l.b16 %v490
      %v1836 = vunpack.c.h.b16 %v490
      %v1837 = vunpack.c.l.b16 %v491
      %v1838 = vunpack.c.h.b16 %v491
      %v1839 = vunpack.c.l.b16 %v492
      %v1840 = vunpack.c.h.b16 %v492
      %v1841 = vunpack.c.l.b16 %v493
      %v1842 = vunpack.c.h.b16 %v493
      %v1843 = vunpack.c.l.b16 %v494
      %v1844 = vunpack.c.h.b16 %v494
      %v1845 = vunpack.c.l.b16 %v495
      %v1846 = vunpack.c.h.b16 %v495
      %v1847 = vunpack.c.l.b16 %v496
      %v1848 = vunpack.c.h.b16 %v496
      %v1849 = vunpack.c.l.b16 %v497
      %v1850 = vunpack.c.h.b16 %v497
      %v1851 = vunpack.c.l.b16 %v498
      %v1852 = vunpack.c.h.b16 %v498
      %v1853 = vunpack.c.l.b16 %v499
      %v1854 = vunpack.c.h.b16 %v499
      %v1855 = vunpack.c.l.b16 %v500
      %v1856 = vunpack.c.h.b16 %v500
      %v1857 = vunpack.c.l.b16 %v501
      %v1858 = vunpack.c.h.b16 %v501
      %v1859 = vunpack.c.l.b16 %v502
      %v1860 = vpack.c.b16 %v1260, %v1235
      %v1861 = vpack.c.b16 %v1261, %v1236
      %v1862 = vpack.c.b16 %v1262, %v1237
      %v1863 = vpack.c.b16 %v1263, %v1238
      %v1864 = vpack.c.b16 %v1264, %v1239
      %v1865 = vpack.c.b16 %v1265, %v1240
      %v1866 = vpack.c.b16 %v1266, %v1241
      %v1867 = vpack.c.b16 %v1267, %v1242
      %v1868 = vpack.c.b16 %v1268, %v1243
      %v1869 = vpack.c.b16 %v1269, %v1244
      %v1870 = vpack.c.b16 %v1270, %v1245
      %v1871 = vpack.c.b16 %v1271, %v1246
      %v1872 = vpack.c.b16 %v1272, %v1247
      %v1873 = vpack.c.b16 %v1273, %v1248
      %v1874 = vpack.c.b16 %v1274, %v1249
      %v1875 = vpack.c.b16 %v1275, %v1250
      %v1876 = vpack.c.b16 %v1276, %v1251
      %v1877 = vpack.c.b16 %v1277, %v1252
      %v1878 = vpack.c.b16 %v1278, %v1253
      %v1879 = vpack.c.b16 %v1279, %v1254
      %v1880 = vpack.c.b16 %v1280, %v1255
      %v1881 = vpack.c.b16 %v1281, %v1256
      %v1882 = vpack.c.b16 %v1282, %v1257
      %v1883 = vpack.c.b16 %v1283, %v1258
      %v1884 = vpack.c.b16 %v1284, %v1259
      %v1885 = vpack.c.b16 %v1310, %v1285
      %v1886 = vpack.c.b16 %v1311, %v1286
      %v1887 = vpack.c.b16 %v1312, %v1287
      %v1888 = vpack.c.b16 %v1313, %v1288
      %v1889 = vpack.c.b16 %v1314, %v1289
      %v1890 = vpack.c.b16 %v1315, %v1290
      %v1891 = vpack.c.b16 %v1316, %v1291
      %v1892 = vpack.c.b16 %v1317, %v1292
      %v1893 = vpack.c.b16 %v1318, %v1293
      %v1894 = vpack.c.b16 %v1319, %v1294
      %v1895 = vpack.c.b16 %v1320, %v1295
      %v1896 = vpack.c.b16 %v1321, %v1296
      %v1897 = vpack.c.b16 %v1322, %v1297
      %v1898 = vpack.c.b16 %v1323, %v1298
      %v1899 = vpack.c.b16 %v1324, %v1299
      %v1900 = vpack.c.b16 %v1325, %v1300
      %v1901 = vpack.c.b16 %v1326, %v1301
      %v1902 = vpack.c.b16 %v1327, %v1302
      %v1903 = vpack.c.b16 %v1328, %v1303
      %v1904 = vpack.c.b16 %v1329, %v1304
      %v1905 = vpack.c.b16 %v1330, %v1305
      %v1906 = vpack.c.b16 %v1331, %v1306
      %v1907 = vpack.c.b16 %v1332, %v1307
      %v1908 = vpack.c.b16 %v1333, %v1308
      %v1909 = vpack.c.b16 %v1334, %v1309
      %v1910 = vpack.c.b16 %v1360, %v1335
      %v1911 = vpack.c.b16 %v1361, %v1336
      %v1912 = vpack.c.b16 %v1362, %v1337
      %v1913 = vpack.c.b16 %v1363, %v1338
      %v1914 = vpack.c.b16 %v1364, %v1339
      %v1915 = vpack.c.b16 %v1365, %v1340
      %v1916 = vpack.c.b16 %v1366, %v1341
      %v1917 = vpack.c.b16 %v1367, %v1342
      %v1918 = vpack.c.b16 %v1368, %v1343
      %v1919 = vpack.c.b16 %v1369, %v1344
      %v1920 = vpack.c.b16 %v1370, %v1345
      %v1921 = vpack.c.b16 %v1371, %v1346
      %v1922 = vpack.c.b16 %v1372, %v1347
      %v1923 = vpack.c.b16 %v1373, %v1348
      %v1924 = vpack.c.b16 %v1374, %v1349
      %v1925 = vpack.c.b16 %v1375, %v1350
      %v1926 = vpack.c.b16 %v1376, %v1351
      %v1927 = vpack.c.b16 %v1377, %v1352
      %v1928 = vpack.c.b16 %v1378, %v1353
      %v1929 = vpack.c.b16 %v1379, %v1354
      %v1930 = vpack.c.b16 %v1380, %v1355
      %v1931 = vpack.c.b16 %v1381, %v1356
      %v1932 = vpack.c.b16 %v1382, %v1357
      %v1933 = vpack.c.b16 %v1383, %v1358
      %v1934 = vpack.c.b16 %v1384, %v1359
      %v1935 = vpack.c.b16 %v1410, %v1385
      %v1936 = vpack.c.b16 %v1411, %v1386
      %v1937 = vpack.c.b16 %v1412, %v1387
      %v1938 = vpack.c.b16 %v1413, %v1388
      %v1939 = vpack.c.b16 %v1414, %v1389
      %v1940 = vpack.c.b16 %v1415, %v1390
      %v1941 = vpack.c.b16 %v1416, %v1391
      %v1942 = vpack.c.b16 %v1417, %v1392
      %v1943 = vpack.c.b16 %v1418, %v1393
      %v1944 = vpack.c.b16 %v1419, %v1394
      %v1945 = vpack.c.b16 %v1420, %v1395
      %v1946 = vpack.c.b16 %v1421, %v1396
      %v1947 = vpack.c.b16 %v1422, %v1397
      %v1948 = vpack.c.b16 %v1423, %v1398
      %v1949 = vpack.c.b16 %v1424, %v1399
      %v1950 = vpack.c.b16 %v1425, %v1400
      %v1951 = vpack.c.b16 %v1426, %v1401
      %v1952 = vpack.c.b16 %v1427, %v1402
      %v1953 = vpack.c.b16 %v1428, %v1403
      %v1954 = vpack.c.b16 %v1429, %v1404
      %v1955 = vpack.c.b16 %v1430, %v1405
      %v1956 = vpack.c.b16 %v1431, %v1406
      %v1957 = vpack.c.b16 %v1432, %v1407
      %v1958 = vpack.c.b16 %v1433, %v1408
      %v1959 = vpack.c.b16 %v1434, %v1409
      %v1960 = vpack.c.b16 %v1460, %v1435
      %v1961 = vpack.c.b16 %v1461, %v1436
      %v1962 = vpack.c.b16 %v1462, %v1437
      %v1963 = vpack.c.b16 %v1463, %v1438
      %v1964 = vpack.c.b16 %v1464, %v1439
      %v1965 = vpack.c.b16 %v1465, %v1440
      %v1966 = vpack.c.b16 %v1466, %v1441
      %v1967 = vpack.c.b16 %v1467, %v1442
      %v1968 = vpack.c.b16 %v1468, %v1443
      %v1969 = vpack.c.b16 %v1469, %v1444
      %v1970 = vpack.c.b16 %v1470, %v1445
      %v1971 = vpack.c.b16 %v1471, %v1446
      %v1972 = vpack.c.b16 %v1472, %v1447
      %v1973 = vpack.c.b16 %v1473, %v1448
      %v1974 = vpack.c.b16 %v1474, %v1449
      %v1975 = vpack.c.b16 %v1475, %v1450
      %v1976 = vpack.c.b16 %v1476, %v1451
      %v1977 = vpack.c.b16 %v1477, %v1452
      %v1978 = vpack.c.b16 %v1478, %v1453
      %v1979 = vpack.c.b16 %v1479, %v1454
      %v1980 = vpack.c.b16 %v1480, %v1455
      %v1981 = vpack.c.b16 %v1481, %v1456
      %v1982 = vpack.c.b16 %v1482, %v1457
      %v1983 = vpack.c.b16 %v1483, %v1458
      %v1984 = vpack.c.b16 %v1484, %v1459
      %v1985 = vpack.c.b16 %v1510, %v1485
      %v1986 = vpack.c.b16 %v1511, %v1486
      %v1987 = vpack.c.b16 %v1512, %v1487
      %v1988 = vpack.c.b16 %v1513, %v1488
      %v1989 = vpack.c.b16 %v1514, %v1489
      %v1990 = vpack.c.b16 %v1515, %v1490
      %v1991 = vpack.c.b16 %v1516, %v1491
      %v1992 = vpack.c.b16 %v1517, %v1492
      %v1993 = vpack.c.b16 %v1518, %v1493
      %v1994 = vpack.c.b16 %v1519, %v1494
      %v1995 = vpack.c.b16 %v1520, %v1495
      %v1996 = vpack.c.b16 %v1521, %v1496
      %v1997 = vpack.c.b16 %v1522, %v1497
      %v1998 = vpack.c.b16 %v1523, %v1498
      %v1999 = vpack.c.b16 %v1524, %v1499
      %v2000 = vpack.c.b16 %v1525, %v1500
      %v2001 = vpack.c.b16 %v1526, %v1501
      %v2002 = vpack.c.b16 %v1527, %v1502
      %v2003 = vpack.c.b16 %v1528, %v1503
      %v2004 = vpack.c.b16 %v1529, %v1504
      %v2005 = vpack.c.b16 %v1530, %v1505
      %v2006 = vpack.c.b16 %v1531, %v1506
      %v2007 = vpack.c.b16 %v1532, %v1507
      %v2008 = vpack.c.b16 %v1533, %v1508
      %v2009 = vpack.c.b16 %v1534, %v1509
      %v2010 = vpack.c.b16 %v1560, %v1535
      %v2011 = vpack.c.b16 %v1561, %v1536
      %v2012 = vpack.c.b16 %v1562, %v1537
      %v2013 = vpack.c.b16 %v1563, %v1538
      %v2014 = vpack.c.b16 %v1564, %v1539
      %v2015 = vpack.c.b16 %v1565, %v1540
      %v2016 = vpack.c.b16 %v1566, %v1541
      %v2017 = vpack.c.b16 %v1567, %v1542
      %v2018 = vpack.c.b16 %v1568, %v1543
      %v2019 = vpack.c.b16 %v1569, %v1544
      %v2020 = vpack.c.b16 %v1570, %v1545
      %v2021 = vpack.c.b16 %v1571, %v1546
      %v2022 = vpack.c.b16 %v1572, %v1547
      %v2023 = vpack.c.b16 %v1573, %v1548
      %v2024 = vpack.c.b16 %v1574, %v1549
      %v2025 = vpack.c.b16 %v1575, %v1550
      %v2026 = vpack.c.b16 %v1576, %v1551
      %v2027 = vpack.c.b16 %v1577, %v1552
      %v2028 = vpack.c.b16 %v1578, %v1553
      %v2029 = vpack.c.b16 %v1579, %v1554
      %v2030 = vpack.c.b16 %v1580, %v1555
      %v2031 = vpack.c.b16 %v1581, %v1556
      %v2032 = vpack.c.b16 %v1582, %v1557
      %v2033 = vpack.c.b16 %v1583, %v1558
      %v2034 = vpack.c.b16 %v1584, %v1559
      %v2035 = vpack.c.b16 %v1610, %v1585
      %v2036 = vpack.c.b16 %v1611, %v1586
      %v2037 = vpack.c.b16 %v1612, %v1587
      %v2038 = vpack.c.b16 %v1613, %v1588
      %v2039 = vpack.c.b16 %v1614, %v1589
      %v2040 = vpack.c.b16 %v1615, %v1590
      %v2041 = vpack.c.b16 %v1616, %v1591
      %v2042 = vpack.c.b16 %v1617, %v1592
      %v2043 = vpack.c.b16 %v1618, %v1593
      %v2044 = vpack.c.b16 %v1619, %v1594
      %v2045 = vpack.c.b16 %v1620, %v1595
      %v2046 = vpack.c.b16 %v1621, %v1596
      %v2047 = vpack.c.b16 %v1622, %v1597
      %v2048 = vpack.c.b16 %v1623, %v1598
      %v2049 = vpack.c.b16 %v1624, %v1599
      %v2050 = vpack.c.b16 %v1625, %v1600
      %v2051 = vpack.c.b16 %v1626, %v1601
      %v2052 = vpack.c.b16 %v1627, %v1602
      %v2053 = vpack.c.b16 %v1628, %v1603
      %v2054 = vpack.c.b16 %v1629, %v1604
      %v2055 = vpack.c.b16 %v1630, %v1605
      %v2056 = vpack.c.b16 %v1631, %v1606
      %v2057 = vpack.c.b16 %v1632, %v1607
      %v2058 = vpack.c.b16 %v1633, %v1608
      %v2059 = vpack.c.b16 %v1634, %v1609
      %v2060 = vpack.c.b16 %v1660, %v1635
      %v2061 = vpack.c.b16 %v1661, %v1636
      %v2062 = vpack.c.b16 %v1662, %v1637
      %v2063 = vpack.c.b16 %v1663, %v1638
      %v2064 = vpack.c.b16 %v1664, %v1639
      %v2065 = vpack.c.b16 %v1665, %v1640
      %v2066 = vpack.c.b16 %v1666, %v1641
      %v2067 = vpack.c.b16 %v1667, %v1642
      %v2068 = vpack.c.b16 %v1668, %v1643
      %v2069 = vpack.c.b16 %v1669, %v1644
      %v2070 = vpack.c.b16 %v1670, %v1645
      %v2071 = vpack.c.b16 %v1671, %v1646
      %v2072 = vpack.c.b16 %v1672, %v1647
      %v2073 = vpack.c.b16 %v1673, %v1648
      %v2074 = vpack.c.b16 %v1674, %v1649
      %v2075 = vpack.c.b16 %v1675, %v1650
      %v2076 = vpack.c.b16 %v1676, %v1651
      %v2077 = vpack.c.b16 %v1677, %v1652
      %v2078 = vpack.c.b16 %v1678, %v1653
      %v2079 = vpack.c.b16 %v1679, %v1654
      %v2080 = vpack.c.b16 %v1680, %v1655
      %v2081 = vpack.c.b16 %v1681, %v1656
      %v2082 = vpack.c.b16 %v1682, %v1657
      %v2083 = vpack.c.b16 %v1683, %v1658
      %v2084 = vpack.c.b16 %v1684, %v1659
      %v2085 = vpack.c.b16 %v1710, %v1685
      %v2086 = vpack.c.b16 %v1711, %v1686
      %v2087 = vpack.c.b16 %v1712, %v1687
      %v2088 = vpack.c.b16 %v1713, %v1688
      %v2089 = vpack.c.b16 %v1714, %v1689
      %v2090 = vpack.c.b16 %v1715, %v1690
      %v2091 = vpack.c.b16 %v1716, %v1691
      %v2092 = vpack.c.b16 %v1717, %v1692
      %v2093 = vpack.c.b16 %v1718, %v1693
      %v2094 = vpack.c.b16 %v1719, %v1694
      %v2095 = vpack.c.b16 %v1720, %v1695
      %v2096 = vpack.c.b16 %v1721, %v1696
      %v2097 = vpack.c.b16 %v1722, %v1697
      %v2098 = vpack.c.b16 %v1723, %v1698
      %v2099 = vpack.c.b16 %v1724, %v1699
      %v2100 = vpack.c.b16 %v1725, %v1700
      %v2101 = vpack.c.b16 %v1726, %v1701
      %v2102 = vpack.c.b16 %v1727, %v1702
      %v2103 = vpack.c.b16 %v1728, %v1703
      %v2104 = vpack.c.b16 %v1729, %v1704
      %v2105 = vpack.c.b16 %v1730, %v1705
      %v2106 = vpack.c.b16 %v1731, %v1706
      %v2107 = vpack.c.b16 %v1732, %v1707
      %v2108 = vpack.c.b16 %v1733, %v1708
      %v2109 = vpack.c.b16 %v1734, %v1709
      %v2110 = vpack.c.b16 %v1760, %v1735
      %v2111 = vpack.c.b16 %v1761, %v1736
      %v2112 = vpack.c.b16 %v1762, %v1737
      %v2113 = vpack.c.b16 %v1763, %v1738
      %v2114 = vpack.c.b16 %v1764, %v1739
      %v2115 = vpack.c.b16 %v1765, %v1740
      %v2116 = vpack.c.b16 %v1766, %v1741
      %v2117 = vpack.c.b16 %v1767, %v1742
      %v2118 = vpack.c.b16 %v1768, %v1743
      %v2119 = vpack.c.b16 %v1769, %v1744
      %v2120 = vpack.c.b16 %v1770, %v1745
      %v2121 = vpack.c.b16 %v1771, %v1746
      %v2122 = vpack.c.b16 %v1772, %v1747
      %v2123 = vpack.c.b16 %v1773, %v1748
      %v2124 = vpack.c.b16 %v1774, %v1749
      %v2125 = vpack.c.b16 %v1775, %v1750
      %v2126 = vpack.c.b16 %v1776, %v1751
      %v2127 = vpack.c.b16 %v1777, %v1752
      %v2128 = vpack.c.b16 %v1778, %v1753
      %v2129 = vpack.c.b16 %v1779, %v1754
      %v2130 = vpack.c.b16 %v1780, %v1755
      %v2131 = vpack.c.b16 %v1781, %v1756
      %v2132 = vpack.c.b16 %v1782, %v1757
      %v2133 = vpack.c.b16 %v1783, %v1758
      %v2134 = vpack.c.b16 %v1784, %v1759
      %v2135 = vpack.c.b16 %v1810, %v1785
      %v2136 = vpack.c.b16 %v1811, %v1786
      %v2137 = vpack.c.b16 %v1812, %v1787
      %v2138 = vpack.c.b16 %v1813, %v1788
      %v2139 = vpack.c.b16 %v1814, %v1789
      %v2140 = vpack.c.b16 %v1815, %v1790
      %v2141 = vpack.c.b16 %v1816, %v1791
      %v2142 = vpack.c.b16 %v1817, %v1792
      %v2143 = vpack.c.b16 %v1818, %v1793
      %v2144 = vpack.c.b16 %v1819, %v1794
      %v2145 = vpack.c.b16 %v1820, %v1795
      %v2146 = vpack.c.b16 %v1821, %v1796
      %v2147 = vpack.c.b16 %v1822, %v1797
      %v2148 = vpack.c.b16 %v1823, %v1798
      %v2149 = vpack.c.b16 %v1824, %v1799
      %v2150 = vpack.c.b16 %v1825, %v1800
      %v2151 = vpack.c.b16 %v1826, %v1801
      %v2152 = vpack.c.b16 %v1827, %v1802
      %v2153 = vpack.c.b16 %v1828, %v1803
      %v2154 = vpack.c.b16 %v1829, %v1804
      %v2155 = vpack.c.b16 %v1830, %v1805
      %v2156 = vpack.c.b16 %v1831, %v1806
      %v2157 = vpack.c.b16 %v1832, %v1807
      %v2158 = vpack.c.b16 %v1833, %v1808
      %v2159 = vpack.c.b16 %v1834, %v1809
      %v2160 = vpack.c.b16 %v1835, %v1835
      %v2161 = vpack.c.b16 %v1836, %v1836
      %v2162 = vpack.c.b16 %v1837, %v1837
      %v2163 = vpack.c.b16 %v1838, %v1838
      %v2164 = vpack.c.b16 %v1839, %v1839
      %v2165 = vpack.c.b16 %v1840, %v1840
      %v2166 = vpack.c.b16 %v1841, %v1841
      %v2167 = vpack.c.b16 %v1842, %v1842
      %v2168 = vpack.c.b16 %v1843, %v1843
      %v2169 = vpack.c.b16 %v1844, %v1844
      %v2170 = vpack.c.b16 %v1845, %v1845
      %v2171 = vpack.c.b16 %v1846, %v1846
      %v2172 = vpack.c.b16 %v1847, %v1847
      %v2173 = vpack.c.b16 %v1848, %v1848
      %v2174 = vpack.c.b16 %v1849, %v1849
      %v2175 = vpack.c.b16 %v1850, %v1850
      %v2176 = vpack.c.b16 %v1851, %v1851
      %v2177 = vpack.c.b16 %v1852, %v1852
      %v2178 = vpack.c.b16 %v1853, %v1853
      %v2179 = vpack.c.b16 %v1854, %v1854
      %v2180 = vpack.c.b16 %v1855, %v1855
      %v2181 = vpack.c.b16 %v1856, %v1856
      %v2182 = vpack.c.b16 %v1857, %v1857
      %v2183 = vpack.c.b16 %v1858, %v1858
      %v2184 = vpack.c.b16 %v1859, %v1859
      %v2910 = vunpack.c.l.b16 %v503
      %v2911 = vunpack.c.l.b16 %v504
      %v2912 = vunpack.c.l.b16 %v505
      %v2913 = vunpack.c.l.b16 %v506
      %v2914 = vunpack.c.l.b16 %v507
      %v2915 = vunpack.c.l.b16 %v508
      %v2916 = vunpack.c.l.b16 %v509
      %v2917 = vunpack.c.l.b16 %v510
      %v2918 = vunpack.c.l.b16 %v511
      %v2919 = vunpack.c.l.b16 %v512
      %v2920 = vunpack.c.l.b16 %v513
      %v2921 = vunpack.c.l.b16 %v514
      %v2922 = vunpack.c.l.b16 %v515
      %v2923 = vunpack.c.l.b16 %v516
      %v2924 = vunpack.c.l.b16 %v517
      %v2925 = vunpack.c.l.b16 %v518
      %v2926 = vunpack.c.l.b16 %v519
      %v2927 = vunpack.c.l.b16 %v520
      %v2928 = vunpack.c.l.b16 %v521
      %v2929 = vunpack.c.l.b16 %v522
      %v2930 = vunpack.c.l.b16 %v523
      %v2931 = vunpack.c.l.b16 %v524
      %v2932 = vunpack.c.l.b16 %v525
      %v2933 = vunpack.c.l.b16 %v526
      %v2934 = vunpack.c.l.b16 %v527
      %v2935 = vunpack.c.l.b16 %v528
      %v2936 = vunpack.c.l.b16 %v529
      %v2937 = vunpack.c.l.b16 %v530
      %v2938 = vunpack.c.l.b16 %v531
      %v2939 = vunpack.c.l.b16 %v532
      %v2940 = vunpack.c.l.b16 %v533
      %v2941 = vunpack.c.l.b16 %v534
      %v2942 = vunpack.c.l.b16 %v535
      %v2943 = vunpack.c.l.b16 %v536
      %v2944 = vunpack.c.l.b16 %v537
      %v2945 = vunpack.c.l.b16 %v538
      %v2946 = vunpack.c.l.b16 %v539
      %v2947 = vunpack.c.l.b16 %v540
      %v2948 = vunpack.c.l.b16 %v541
      %v2949 = vunpack.c.l.b16 %v542
      %v2950 = vunpack.c.l.b16 %v543
      %v2951 = vunpack.c.l.b16 %v544
      %v2952 = vunpack.c.l.b16 %v545
      %v2953 = vunpack.c.l.b16 %v546
      %v2954 = vunpack.c.l.b16 %v547
      %v2955 = vunpack.c.l.b16 %v548
      %v2956 = vunpack.c.l.b16 %v549
      %v2957 = vunpack.c.l.b16 %v550
      %v2958 = vunpack.c.l.b16 %v551
      %v2959 = vunpack.c.l.b16 %v552
      %v2960 = vunpack.c.l.b16 %v553
      %v2961 = vunpack.c.l.b16 %v554
      %v2962 = vunpack.c.l.b16 %v555
      %v2963 = vunpack.c.l.b16 %v556
      %v2964 = vunpack.c.l.b16 %v557
      %v2965 = vunpack.c.l.b16 %v558
      %v2966 = vunpack.c.l.b16 %v559
      %v2967 = vunpack.c.l.b16 %v560
      %v2968 = vunpack.c.l.b16 %v561
      %v2969 = vunpack.c.l.b16 %v562
      %v2970 = vunpack.c.l.b16 %v563
      %v2971 = vunpack.c.l.b16 %v564
      %v2972 = vunpack.c.l.b16 %v565
      %v2973 = vunpack.c.l.b16 %v566
      %v2974 = vunpack.c.l.b16 %v567
      %v2975 = vunpack.c.l.b16 %v568
      %v2976 = vunpack.c.l.b16 %v569
      %v2977 = vunpack.c.l.b16 %v570
      %v2978 = vunpack.c.l.b16 %v571
      %v2979 = vunpack.c.l.b16 %v572
      %v2980 = vunpack.c.l.b16 %v573
      %v2981 = vunpack.c.l.b16 %v574
      %v2982 = vunpack.c.l.b16 %v575
      %v2983 = vunpack.c.l.b16 %v576
      %v2984 = vunpack.c.l.b16 %v577
      %v2985 = vunpack.c.l.b16 %v578
      %v2986 = vunpack.c.l.b16 %v579
      %v2987 = vunpack.c.l.b16 %v580
      %v2988 = vunpack.c.l.b16 %v581
      %v2989 = vunpack.c.l.b16 %v582
      %v2990 = vunpack.c.l.b16 %v583
      %v2991 = vunpack.c.l.b16 %v584
      %v2992 = vunpack.c.l.b16 %v585
      %v2993 = vunpack.c.l.b16 %v586
      %v2994 = vunpack.c.l.b16 %v587
      %v2995 = vunpack.c.l.b16 %v588
      %v2996 = vunpack.c.l.b16 %v589
      %v2997 = vunpack.c.l.b16 %v590
      %v2998 = vunpack.c.l.b16 %v591
      %v2999 = vunpack.c.l.b16 %v592
      %v3000 = vunpack.c.l.b16 %v593
      %v3001 = vunpack.c.l.b16 %v594
      %v3002 = vunpack.c.l.b16 %v595
      %v3003 = vunpack.c.l.b16 %v596
      %v3004 = vunpack.c.l.b16 %v597
      %v3005 = vunpack.c.l.b16 %v598
      %v3006 = vunpack.c.l.b16 %v599
      %v3007 = vunpack.c.l.b16 %v600
      %v3008 = vunpack.c.l.b16 %v601
      %v3009 = vunpack.c.l.b16 %v602
      %v3010 = vunpack.c.l.b16 %v603
      %v3011 = vunpack.c.l.b16 %v604
      %v3012 = vunpack.c.l.b16 %v605
      %v3013 = vunpack.c.l.b16 %v606
      %v3014 = vunpack.c.l.b16 %v607
      %v3015 = vunpack.c.l.b16 %v608
      %v3016 = vunpack.c.l.b16 %v609
      %v3017 = vunpack.c.l.b16 %v610
      %v3018 = vunpack.c.l.b16 %v611
      %v3019 = vunpack.c.l.b16 %v612
      %v3020 = vunpack.c.l.b16 %v613
      %v3021 = vunpack.c.l.b16 %v614
      %v3022 = vunpack.c.l.b16 %v615
      %v3023 = vunpack.c.l.b16 %v616
      %v3024 = vunpack.c.l.b16 %v617
      %v3025 = vunpack.c.l.b16 %v618
      %v3026 = vunpack.c.l.b16 %v619
      %v3027 = vunpack.c.l.b16 %v620
      %v3028 = vunpack.c.l.b16 %v621
      %v3029 = vunpack.c.l.b16 %v622
      %v3030 = vunpack.c.l.b16 %v623
      %v3031 = vunpack.c.l.b16 %v624
      %v3032 = vunpack.c.l.b16 %v625
      %v3033 = vunpack.c.l.b16 %v626
      %v3034 = vunpack.c.l.b16 %v627
      %v3035 = vunpack.c.l.b16 %v628
      %v3036 = vunpack.c.l.b16 %v629
      %v3037 = vunpack.c.l.b16 %v630
      %v3038 = vunpack.c.l.b16 %v631
      %v3039 = vunpack.c.l.b16 %v632
      %v3040 = vunpack.c.l.b16 %v633
      %v3041 = vunpack.c.l.b16 %v634
      %v3042 = vunpack.c.l.b16 %v635
      %v3043 = vunpack.c.l.b16 %v636
      %v3044 = vunpack.c.l.b16 %v637
      %v3045 = vunpack.c.l.b16 %v638
      %v3046 = vunpack.c.l.b16 %v639
      %v3047 = vunpack.c.l.b16 %v640
      %v3048 = vunpack.c.l.b16 %v641
      %v3049 = vunpack.c.l.b16 %v642
      %v3050 = vunpack.c.l.b16 %v643
      %v3051 = vunpack.c.l.b16 %v644
      %v3052 = vunpack.c.l.b16 %v645
      %v3053 = vunpack.c.l.b16 %v646
      %v3054 = vunpack.c.l.b16 %v647
      %v3055 = vunpack.c.l.b16 %v648
      %v3056 = vunpack.c.l.b16 %v649
      %v3057 = vunpack.c.l.b16 %v650
      %v3058 = vunpack.c.l.b16 %v651
      %v3059 = vunpack.c.l.b16 %v652
      %v3060 = vunpack.c.l.b16 %v653
      %v3061 = vunpack.c.l.b16 %v654
      %v3062 = vunpack.c.l.b16 %v655
      %v3063 = vunpack.c.l.b16 %v656
      %v3064 = vunpack.c.l.b16 %v657
      %v3065 = vunpack.c.l.b16 %v658
      %v3066 = vunpack.c.l.b16 %v659
      %v3067 = vunpack.c.l.b16 %v660
      %v3068 = vunpack.c.l.b16 %v661
      %v3069 = vunpack.c.l.b16 %v662
      %v3070 = vunpack.c.l.b16 %v663
      %v3071 = vunpack.c.l.b16 %v664
      %v3072 = vunpack.c.l.b16 %v665
      %v3073 = vunpack.c.l.b16 %v666
      %v3074 = vunpack.c.l.b16 %v667
      %v3075 = vunpack.c.l.b16 %v668
      %v3076 = vunpack.c.l.b16 %v669
      %v3077 = vunpack.c.l.b16 %v670
      %v3078 = vunpack.c.l.b16 %v671
      %v3079 = vunpack.c.l.b16 %v672
      %v3080 = vunpack.c.l.b16 %v673
      %v3081 = vunpack.c.l.b16 %v674
      %v3082 = vunpack.c.l.b16 %v675
      %v3083 = vunpack.c.l.b16 %v676
      %v3084 = vunpack.c.l.b16 %v677
      %v3085 = vunpack.c.l.b16 %v678
      %v3086 = vunpack.c.l.b16 %v679
      %v3087 = vunpack.c.l.b16 %v680
      %v3088 = vunpack.c.l.b16 %v681
      %v3089 = vunpack.c.l.b16 %v682
      %v3090 = vunpack.c.l.b16 %v683
      %v3091 = vunpack.c.l.b16 %v684
      %v3092 = vunpack.c.l.b16 %v685
      %v3093 = vunpack.c.l.b16 %v686
      %v3094 = vunpack.c.l.b16 %v687
      %v3095 = vunpack.c.l.b16 %v688
      %v3096 = vunpack.c.l.b16 %v689
      %v3097 = vunpack.c.l.b16 %v690
      %v3098 = vunpack.c.l.b16 %v691
      %v3099 = vunpack.c.l.b16 %v692
      %v3100 = vunpack.c.l.b16 %v693
      %v3101 = vunpack.c.l.b16 %v694
      %v3102 = vunpack.c.l.b16 %v695
      %v3103 = vunpack.c.l.b16 %v696
      %v3104 = vunpack.c.l.b16 %v697
      %v3105 = vunpack.c.l.b16 %v698
      %v3106 = vunpack.c.l.b16 %v699
      %v3107 = vunpack.c.l.b16 %v700
      %v3108 = vunpack.c.l.b16 %v701
      %v3109 = vunpack.c.l.b16 %v702
      %v3110 = vunpack.c.l.b16 %v703
      %v3111 = vunpack.c.l.b16 %v704
      %v3112 = vunpack.c.l.b16 %v705
      %v3113 = vunpack.c.l.b16 %v706
      %v3114 = vunpack.c.l.b16 %v707
      %v3115 = vunpack.c.l.b16 %v708
      %v3116 = vunpack.c.l.b16 %v709
      %v3117 = vunpack.c.l.b16 %v710
      %v3118 = vunpack.c.l.b16 %v711
      %v3119 = vunpack.c.l.b16 %v712
      %v3120 = vunpack.c.l.b16 %v713
      %v3121 = vunpack.c.l.b16 %v714
      %v3122 = vunpack.c.l.b16 %v715
      %v3123 = vunpack.c.l.b16 %v716
      %v3124 = vunpack.c.l.b16 %v717
      %v3125 = vunpack.c.l.b16 %v718
      %v3126 = vunpack.c.l.b16 %v719
      %v3127 = vunpack.c.l.b16 %v720
      %v3128 = vunpack.c.l.b16 %v721
      %v3129 = vunpack.c.l.b16 %v722
      %v3130 = vunpack.c.l.b16 %v723
      %v3131 = vunpack.c.l.b16 %v724
      %v3132 = vunpack.c.l.b16 %v725
      %v3133 = vunpack.c.l.b16 %v726
      %v3134 = vunpack.c.l.b16 %v727
      %v3135 = vunpack.c.l.b16 %v728
      %v3136 = vunpack.c.l.b16 %v729
      %v3137 = vunpack.c.l.b16 %v730
      %v3138 = vunpack.c.l.b16 %v731
      %v3139 = vunpack.c.l.b16 %v732
      %v3140 = vunpack.c.l.b16 %v733
      %v3141 = vunpack.c.l.b16 %v734
      %v3142 = vunpack.c.l.b16 %v735
      %v3143 = vunpack.c.l.b16 %v736
      %v3144 = vunpack.c.l.b16 %v737
      %v3145 = vunpack.c.l.b16 %v738
      %v3146 = vunpack.c.l.b16 %v739
      %v3147 = vunpack.c.l.b16 %v740
      %v3148 = vunpack.c.l.b16 %v741
      %v3149 = vunpack.c.l.b16 %v742
      %v3150 = vunpack.c.l.b16 %v743
      %v3151 = vunpack.c.l.b16 %v744
      %v3152 = vunpack.c.l.b16 %v745
      %v3153 = vunpack.c.l.b16 %v746
      %v3154 = vunpack.c.l.b16 %v747
      %v3155 = vunpack.c.l.b16 %v748
      %v3156 = vunpack.c.l.b16 %v749
      %v3157 = vunpack.c.l.b16 %v750
      %v3158 = vunpack.c.l.b16 %v751
      %v3159 = vunpack.c.l.b16 %v752
      %v3160 = vunpack.c.l.b16 %v753
      %v3161 = vunpack.c.l.b16 %v754
      %v3162 = vunpack.c.l.b16 %v755
      %v3163 = vunpack.c.l.b16 %v756
      %v3164 = vunpack.c.l.b16 %v757
      %v3165 = vunpack.c.l.b16 %v758
      %v3166 = vunpack.c.l.b16 %v759
      %v3167 = vunpack.c.l.b16 %v760
      %v3168 = vunpack.c.l.b16 %v761
      %v3169 = vunpack.c.l.b16 %v762
      %v3170 = vunpack.c.l.b16 %v763
      %v3171 = vunpack.c.l.b16 %v764
      %v3172 = vunpack.c.l.b16 %v765
      %v3173 = vunpack.c.l.b16 %v766
      %v3174 = vunpack.c.l.b16 %v767
      %v3175 = vunpack.c.l.b16 %v768
      %v3176 = vunpack.c.l.b16 %v769
      %v3177 = vunpack.c.l.b16 %v770
      %v3178 = vunpack.c.l.b16 %v771
      %v3179 = vunpack.c.l.b16 %v772
      %v3180 = vunpack.c.l.b16 %v773
      %v3181 = vunpack.c.l.b16 %v774
      %v3182 = vunpack.c.l.b16 %v775
      %v3183 = vunpack.c.l.b16 %v776
      %v3184 = vunpack.c.l.b16 %v777
      %v3185 = vunpack.c.l.b16 %v778
      %v3186 = vunpack.c.l.b16 %v779
      %v3187 = vunpack.c.l.b16 %v780
      %v3188 = vunpack.c.l.b16 %v781
      %v3189 = vunpack.c.l.b16 %v782
      %v3190 = vunpack.c.l.b16 %v783
      %v3191 = vunpack.c.l.b16 %v784
      %v3192 = vunpack.c.l.b16 %v785
      %v3193 = vunpack.c.l.b16 %v786
      %v3194 = vunpack.c.l.b16 %v787
      %v3195 = vunpack.c.l.b16 %v788
      %v3196 = vunpack.c.l.b16 %v789
      %v3197 = vunpack.c.l.b16 %v790
      %v3198 = vunpack.c.l.b16 %v791
      %v3199 = vunpack.c.l.b16 %v792
      %v3200 = vunpack.c.l.b16 %v793
      %v3201 = vunpack.c.l.b16 %v794
      %v3202 = vunpack.c.l.b16 %v795
      %v3203 = vunpack.c.l.b16 %v796
      %v3204 = vunpack.c.l.b16 %v797
      %v3205 = vunpack.c.l.b16 %v798
      %v3206 = vunpack.c.l.b16 %v799
      %v3207 = vunpack.c.l.b16 %v800
      %v3208 = vunpack.c.l.b16 %v801
      %v3209 = vunpack.c.l.b16 %v802
      %v3210 = vunpack.c.l.b16 %v803
      %v3211 = vunpack.c.l.b16 %v804
      %v3212 = vunpack.c.l.b16 %v805
      %v3213 = vunpack.c.l.b16 %v806
      %v3214 = vunpack.c.l.b16 %v807
      %v3215 = vunpack.c.l.b16 %v808
      %v3216 = vunpack.c.l.b16 %v809
      %v3217 = vunpack.c.l.b16 %v810
      %v3218 = vunpack.c.l.b16 %v811
      %v3219 = vunpack.c.l.b16 %v812
      %v3220 = vunpack.c.l.b16 %v813
      %v3221 = vunpack.c.l.b16 %v814
      %v3222 = vunpack.c.l.b16 %v815
      %v3223 = vunpack.c.l.b16 %v816
      %v3224 = vunpack.c.l.b16 %v817
      %v3225 = vunpack.c.l.b16 %v818
      %v3226 = vunpack.c.l.b16 %v819
      %v3227 = vunpack.c.l.b16 %v820
      %v3228 = vunpack.c.l.b16 %v821
      %v3229 = vunpack.c.l.b16 %v822
      %v3230 = vunpack.c.l.b16 %v823
      %v3231 = vunpack.c.l.b16 %v824
      %v3232 = vunpack.c.l.b16 %v825
      %v3233 = vunpack.c.l.b16 %v826
      %v3234 = vunpack.c.l.b16 %v827
      %v3235 = vunpack.c.l.b16 %v828
      %v3236 = vunpack.c.l.b16 %v829
      %v3237 = vunpack.c.l.b16 %v830
      %v3238 = vunpack.c.l.b16 %v831
      %v3239 = vunpack.c.l.b16 %v832
      %v3240 = vunpack.c.l.b16 %v833
      %v3241 = vunpack.c.l.b16 %v834
      %v3242 = vunpack.c.l.b16 %v835
      %v3243 = vunpack.c.l.b16 %v836
      %v3244 = vunpack.c.l.b16 %v837
      %v3245 = vunpack.c.l.b16 %v838
      %v3246 = vunpack.c.l.b16 %v839
      %v3247 = vunpack.c.l.b16 %v840
      %v3248 = vunpack.c.l.b16 %v841
      %v3249 = vunpack.c.l.b16 %v842
      %v3250 = vunpack.c.l.b16 %v843
      %v3251 = vunpack.c.l.b16 %v844
      %v3252 = vunpack.c.l.b16 %v845
      %v3253 = vunpack.c.l.b16 %v846
      %v3254 = vunpack.c.l.b16 %v847
      %v3255 = vunpack.c.l.b16 %v848
      %v3256 = vunpack.c.l.b16 %v849
      %v3257 = vunpack.c.l.b16 %v850
      %v3258 = vunpack.c.l.b16 %v851
      %v3259 = vunpack.c.l.b16 %v852
      %v3260 = vunpack.c.l.b16 %v853
      %v3261 = vunpack.c.l.b16 %v854
      %v3262 = vunpack.c.l.b16 %v855
      %v3263 = vunpack.c.l.b16 %v856
      %v3264 = vunpack.c.l.b16 %v857
      %v3265 = vunpack.c.l.b16 %v858
      %v3266 = vunpack.c.l.b16 %v859
      %v3267 = vunpack.c.l.b16 %v860
      %v3268 = vunpack.c.l.b16 %v861
      %v3269 = vunpack.c.l.b16 %v862
      %v3270 = vunpack.c.l.b16 %v863
      %v3271 = vunpack.c.l.b16 %v864
      %v3272 = vunpack.c.l.b16 %v865
      %v3273 = vunpack.c.l.b16 %v866
      %v3274 = vunpack.c.l.b16 %v867
      %v3275 = vunpack.c.l.b16 %v868
      %v3276 = vunpack.c.l.b16 %v869
      %v3277 = vunpack.c.l.b16 %v870
      %v3278 = vunpack.c.l.b16 %v871
      %v3279 = vunpack.c.l.b16 %v872
      %v3280 = vunpack.c.l.b16 %v873
      %v3281 = vunpack.c.l.b16 %v874
      %v3282 = vunpack.c.l.b16 %v875
      %v3283 = vunpack.c.l.b16 %v876
      %v3284 = vunpack.c.l.b16 %v877
      %v3285 = vunpack.c.l.b16 %v878
      %v3286 = vunpack.c.l.b16 %v879
      %v3287 = vunpack.c.l.b16 %v880
      %v3288 = vunpack.c.l.b16 %v881
      %v3289 = vunpack.c.l.b16 %v882
      %v3290 = vunpack.c.l.b16 %v883
      %v3291 = vunpack.c.l.b16 %v884
      %v3292 = vunpack.c.l.b16 %v885
      %v3293 = vunpack.c.l.b16 %v886
      %v3294 = vunpack.c.l.b16 %v887
      %v3295 = vunpack.c.l.b16 %v888
      %v3296 = vunpack.c.l.b16 %v889
      %v3297 = vunpack.c.l.b16 %v890
      %v3298 = vunpack.c.l.b16 %v891
      %v3299 = vunpack.c.l.b16 %v892
      %v3300 = vunpack.c.l.b16 %v893
      %v3301 = vunpack.c.l.b16 %v894
      %v3302 = vunpack.c.l.b16 %v895
      %v3303 = vunpack.c.l.b16 %v896
      %v3304 = vunpack.c.l.b16 %v897
      %v3305 = vunpack.c.l.b16 %v898
      %v3306 = vunpack.c.l.b16 %v899
      %v3307 = vunpack.c.l.b16 %v900
      %v3308 = vunpack.c.l.b16 %v901
      %v3309 = vunpack.c.l.b16 %v902
      %v3310 = vpack.c.b16 %v2911, %v2910
      %v3311 = vpack.c.b16 %v2913, %v2912
      %v3312 = vpack.c.b16 %v2915, %v2914
      %v3313 = vpack.c.b16 %v2917, %v2916
      %v3314 = vpack.c.b16 %v2919, %v2918
      %v3315 = vpack.c.b16 %v2921, %v2920
      %v3316 = vpack.c.b16 %v2923, %v2922
      %v3317 = vpack.c.b16 %v2925, %v2924
      %v3318 = vpack.c.b16 %v2927, %v2926
      %v3319 = vpack.c.b16 %v2929, %v2928
      %v3320 = vpack.c.b16 %v2931, %v2930
      %v3321 = vpack.c.b16 %v2933, %v2932
      %v3322 = vpack.c.b16 %v2935, %v2934
      %v3323 = vpack.c.b16 %v2937, %v2936
      %v3324 = vpack.c.b16 %v2939, %v2938
      %v3325 = vpack.c.b16 %v2941, %v2940
      %v3326 = vpack.c.b16 %v2943, %v2942
      %v3327 = vpack.c.b16 %v2945, %v2944
      %v3328 = vpack.c.b16 %v2947, %v2946
      %v3329 = vpack.c.b16 %v2949, %v2948
      %v3330 = vpack.c.b16 %v2951, %v2950
      %v3331 = vpack.c.b16 %v2953, %v2952
      %v3332 = vpack.c.b16 %v2955, %v2954
      %v3333 = vpack.c.b16 %v2957, %v2956
      %v3334 = vpack.c.b16 %v2959, %v2958
      %v3335 = vpack.c.b16 %v2961, %v2960
      %v3336 = vpack.c.b16 %v2963, %v2962
      %v3337 = vpack.c.b16 %v2965, %v2964
      %v3338 = vpack.c.b16 %v2967, %v2966
      %v3339 = vpack.c.b16 %v2969, %v2968
      %v3340 = vpack.c.b16 %v2971, %v2970
      %v3341 = vpack.c.b16 %v2973, %v2972
      %v3342 = vpack.c.b16 %v2975, %v2974
      %v3343 = vpack.c.b16 %v2977, %v2976
      %v3344 = vpack.c.b16 %v2979, %v2978
      %v3345 = vpack.c.b16 %v2981, %v2980
      %v3346 = vpack.c.b16 %v2983, %v2982
      %v3347 = vpack.c.b16 %v2985, %v2984
      %v3348 = vpack.c.b16 %v2987, %v2986
      %v3349 = vpack.c.b16 %v2989, %v2988
      %v3350 = vpack.c.b16 %v2991, %v2990
      %v3351 = vpack.c.b16 %v2993, %v2992
      %v3352 = vpack.c.b16 %v2995, %v2994
      %v3353 = vpack.c.b16 %v2997, %v2996
      %v3354 = vpack.c.b16 %v2999, %v2998
      %v3355 = vpack.c.b16 %v3001, %v3000
      %v3356 = vpack.c.b16 %v3003, %v3002
      %v3357 = vpack.c.b16 %v3005, %v3004
      %v3358 = vpack.c.b16 %v3007, %v3006
      %v3359 = vpack.c.b16 %v3009, %v3008
      %v3360 = vpack.c.b16 %v3011, %v3010
      %v3361 = vpack.c.b16 %v3013, %v3012
      %v3362 = vpack.c.b16 %v3015, %v3014
      %v3363 = vpack.c.b16 %v3017, %v3016
      %v3364 = vpack.c.b16 %v3019, %v3018
      %v3365 = vpack.c.b16 %v3021, %v3020
      %v3366 = vpack.c.b16 %v3023, %v3022
      %v3367 = vpack.c.b16 %v3025, %v3024
      %v3368 = vpack.c.b16 %v3027, %v3026
      %v3369 = vpack.c.b16 %v3029, %v3028
      %v3370 = vpack.c.b16 %v3031, %v3030
      %v3371 = vpack.c.b16 %v3033, %v3032
      %v3372 = vpack.c.b16 %v3035, %v3034
      %v3373 = vpack.c.b16 %v3037, %v3036
      %v3374 = vpack.c.b16 %v3039, %v3038
      %v3375 = vpack.c.b16 %v3041, %v3040
      %v3376 = vpack.c.b16 %v3043, %v3042
      %v3377 = vpack.c.b16 %v3045, %v3044
      %v3378 = vpack.c.b16 %v3047, %v3046
      %v3379 = vpack.c.b16 %v3049, %v3048
      %v3380 = vpack.c.b16 %v3051, %v3050
      %v3381 = vpack.c.b16 %v3053, %v3052
      %v3382 = vpack.c.b16 %v3055, %v3054
      %v3383 = vpack.c.b16 %v3057, %v3056
      %v3384 = vpack.c.b16 %v3059, %v3058
      %v3385 = vpack.c.b16 %v3061, %v3060
      %v3386 = vpack.c.b16 %v3063, %v3062
      %v3387 = vpack.c.b16 %v3065, %v3064
      %v3388 = vpack.c.b16 %v3067, %v3066
      %v3389 = vpack.c.b16 %v3069, %v3068
      %v3390 = vpack.c.b16 %v3071, %v3070
      %v3391 = vpack.c.b16 %v3073, %v3072
      %v3392 = vpack.c.b16 %v3075, %v3074
      %v3393 = vpack.c.b16 %v3077, %v3076
      %v3394 = vpack.c.b16 %v3079, %v3078
      %v3395 = vpack.c.b16 %v3081, %v3080
      %v3396 = vpack.c.b16 %v3083, %v3082
      %v3397 = vpack.c.b16 %v3085, %v3084
      %v3398 = vpack.c.b16 %v3087, %v3086
      %v3399 = vpack.c.b16 %v3089, %v3088
      %v3400 = vpack.c.b16 %v3091, %v3090
      %v3401 = vpack.c.b16 %v3093, %v3092
      %v3402 = vpack.c.b16 %v3095, %v3094
      %v3403 = vpack.c.b16 %v3097, %v3096
      %v3404 = vpack.c.b16 %v3099, %v3098
      %v3405 = vpack.c.b16 %v3101, %v3100
      %v3406 = vpack.c.b16 %v3103, %v3102
      %v3407 = vpack.c.b16 %v3105, %v3104
      %v3408 = vpack.c.b16 %v3107, %v3106
      %v3409 = vpack.c.b16 %v3109, %v3108
      %v3410 = vpack.c.b16 %v3111, %v3110
      %v3411 = vpack.c.b16 %v3113, %v3112
      %v3412 = vpack.c.b16 %v3115, %v3114
      %v3413 = vpack.c.b16 %v3117, %v3116
      %v3414 = vpack.c.b16 %v3119, %v3118
      %v3415 = vpack.c.b16 %v3121, %v3120
      %v3416 = vpack.c.b16 %v3123, %v3122
      %v3417 = vpack.c.b16 %v3125, %v3124
      %v3418 = vpack.c.b16 %v3127, %v3126
      %v3419 = vpack.c.b16 %v3129, %v3128
      %v3420 = vpack.c.b16 %v3131, %v3130
      %v3421 = vpack.c.b16 %v3133, %v3132
      %v3422 = vpack.c.b16 %v3135, %v3134
      %v3423 = vpack.c.b16 %v3137, %v3136
      %v3424 = vpack.c.b16 %v3139, %v3138
      %v3425 = vpack.c.b16 %v3141, %v3140
      %v3426 = vpack.c.b16 %v3143, %v3142
      %v3427 = vpack.c.b16 %v3145, %v3144
      %v3428 = vpack.c.b16 %v3147, %v3146
      %v3429 = vpack.c.b16 %v3149, %v3148
      %v3430 = vpack.c.b16 %v3151, %v3150
      %v3431 = vpack.c.b16 %v3153, %v3152
      %v3432 = vpack.c.b16 %v3155, %v3154
      %v3433 = vpack.c.b16 %v3157, %v3156
      %v3434 = vpack.c.b16 %v3159, %v3158
      %v3435 = vpack.c.b16 %v3161, %v3160
      %v3436 = vpack.c.b16 %v3163, %v3162
      %v3437 = vpack.c.b16 %v3165, %v3164
      %v3438 = vpack.c.b16 %v3167, %v3166
      %v3439 = vpack.c.b16 %v3169, %v3168
      %v3440 = vpack.c.b16 %v3171, %v3170
      %v3441 = vpack.c.b16 %v3173, %v3172
      %v3442 = vpack.c.b16 %v3175, %v3174
      %v3443 = vpack.c.b16 %v3177, %v3176
      %v3444 = vpack.c.b16 %v3179, %v3178
      %v3445 = vpack.c.b16 %v3181, %v3180
      %v3446 = vpack.c.b16 %v3183, %v3182
      %v3447 = vpack.c.b16 %v3185, %v3184
      %v3448 = vpack.c.b16 %v3187, %v3186
      %v3449 = vpack.c.b16 %v3189, %v3188
      %v3450 = vpack.c.b16 %v3191, %v3190
      %v3451 = vpack.c.b16 %v3193, %v3192
      %v3452 = vpack.c.b16 %v3195, %v3194
      %v3453 = vpack.c.b16 %v3197, %v3196
      %v3454 = vpack.c.b16 %v3199, %v3198
      %v3455 = vpack.c.b16 %v3201, %v3200
      %v3456 = vpack.c.b16 %v3203, %v3202
      %v3457 = vpack.c.b16 %v3205, %v3204
      %v3458 = vpack.c.b16 %v3207, %v3206
      %v3459 = vpack.c.b16 %v3209, %v3208
      %v3460 = vpack.c.b16 %v3211, %v3210
      %v3461 = vpack.c.b16 %v3213, %v3212
      %v3462 = vpack.c.b16 %v3215, %v3214
      %v3463 = vpack.c.b16 %v3217, %v3216
      %v3464 = vpack.c.b16 %v3219, %v3218
      %v3465 = vpack.c.b16 %v3221, %v3220
      %v3466 = vpack.c.b16 %v3223, %v3222
      %v3467 = vpack.c.b16 %v3225, %v3224
      %v3468 = vpack.c.b16 %v3227, %v3226
      %v3469 = vpack.c.b16 %v3229, %v3228
      %v3470 = vpack.c.b16 %v3231, %v3230
      %v3471 = vpack.c.b16 %v3233, %v3232
      %v3472 = vpack.c.b16 %v3235, %v3234
      %v3473 = vpack.c.b16 %v3237, %v3236
      %v3474 = vpack.c.b16 %v3239, %v3238
      %v3475 = vpack.c.b16 %v3241, %v3240
      %v3476 = vpack.c.b16 %v3243, %v3242
      %v3477 = vpack.c.b16 %v3245, %v3244
      %v3478 = vpack.c.b16 %v3247, %v3246
      %v3479 = vpack.c.b16 %v3249, %v3248
      %v3480 = vpack.c.b16 %v3251, %v3250
      %v3481 = vpack.c.b16 %v3253, %v3252
      %v3482 = vpack.c.b16 %v3255, %v3254
      %v3483 = vpack.c.b16 %v3257, %v3256
      %v3484 = vpack.c.b16 %v3259, %v3258
      %v3485 = vpack.c.b16 %v3261, %v3260
      %v3486 = vpack.c.b16 %v3263, %v3262
      %v3487 = vpack.c.b16 %v3265, %v3264
      %v3488 = vpack.c.b16 %v3267, %v3266
      %v3489 = vpack.c.b16 %v3269, %v3268
      %v3490 = vpack.c.b16 %v3271, %v3270
      %v3491 = vpack.c.b16 %v3273, %v3272
      %v3492 = vpack.c.b16 %v3275, %v3274
      %v3493 = vpack.c.b16 %v3277, %v3276
      %v3494 = vpack.c.b16 %v3279, %v3278
      %v3495 = vpack.c.b16 %v3281, %v3280
      %v3496 = vpack.c.b16 %v3283, %v3282
      %v3497 = vpack.c.b16 %v3285, %v3284
      %v3498 = vpack.c.b16 %v3287, %v3286
      %v3499 = vpack.c.b16 %v3289, %v3288
      %v3500 = vpack.c.b16 %v3291, %v3290
      %v3501 = vpack.c.b16 %v3293, %v3292
      %v3502 = vpack.c.b16 %v3295, %v3294
      %v3503 = vpack.c.b16 %v3297, %v3296
      %v3504 = vpack.c.b16 %v3299, %v3298
      %v3505 = vpack.c.b16 %v3301, %v3300
      %v3506 = vpack.c.b16 %v3303, %v3302
      %v3507 = vpack.c.b16 %v3305, %v3304
      %v3508 = vpack.c.b16 %v3307, %v3306
      %v3509 = vpack.c.b16 %v3309, %v3308
      %3710 = vmatprep.subr.bf16.mxu0 0
      %3711 = vmatpush1.bf16.msra.mxu0 %v3317
      %3712 = vmatprep.subr.bf16.mxu0 0
      %3713 = vmatpush1.bf16.msra.mxu0 %v3316
      %3714 = vmatprep.subr.bf16.mxu0 0
      %3715 = vmatpush1.bf16.msra.mxu0 %v3315
      %3716 = vmatprep.subr.bf16.mxu0 0
      %3717 = vmatpush1.bf16.msra.mxu0 %v3314
      %3718 = vmatprep.subr.bf16.mxu0 0
      %3719 = vmatpush1.bf16.msra.mxu0 %v3313
      %3720 = vmatprep.subr.bf16.mxu0 0
      %3721 = vmatpush1.bf16.msra.mxu0 %v3312
      %3722 = vmatprep.subr.bf16.mxu0 0
      %3723 = vmatpush1.bf16.msra.mxu0 %v3311
      %3724 = vmatprep.subr.bf16.mxu0 0
      %3725 = vmatpush1.bf16.msra.mxu0 %v3310
      %3726 = vmatprep.subr.bf16.mxu0 0
      %3727 = vmatpush2.bf16.msra.mxu0 %v3325
      %3728 = vmatprep.subr.bf16.mxu0 0
      %3729 = vmatpush2.bf16.msra.mxu0 %v3324
      %3730 = vmatprep.subr.bf16.mxu0 0
      %3731 = vmatpush2.bf16.msra.mxu0 %v3323
      %3732 = vmatprep.subr.bf16.mxu0 0
      %3733 = vmatpush2.bf16.msra.mxu0 %v3322
      %3734 = vmatprep.subr.bf16.mxu0 0
      %3735 = vmatpush2.bf16.msra.mxu0 %v3321
      %3736 = vmatprep.subr.bf16.mxu0 0
      %3737 = vmatpush2.bf16.msra.mxu0 %v3320
      %3738 = vmatprep.subr.bf16.mxu0 0
      %3739 = vmatpush2.bf16.msra.mxu0 %v3319
      %3740 = vmatprep.subr.bf16.mxu0 0
      %3741 = vmatpush2.bf16.msra.mxu0 %v3318
      %3742 = vmatprep.mubr.bf16.mxu0 %v1861
      %3743 = vmatmul.mubr.bf16.gmra.mxu0 %v1860
      %v3744 = vpop.f32.mrf.mxu0
      %v3745 = vadd.f32 %v908, %v3744
      %v3746 = vpop.f32.mrf.mxu0
      %v3747 = vpop.f32.mrf.mxu0
      %v3748 = vadd.f32 %v908, %v3747
      %v3749 = vpop.f32.mrf.mxu0
      %3750 = vmatprep.mubr.bf16.mxu0 %v1886
      %3751 = vmatmul.mubr.bf16.gmra.mxu0 %v1885
      %v3752 = vpop.f32.mrf.mxu0
      %v3753 = vadd.f32 %v908, %v3752
      %v3754 = vpop.f32.mrf.mxu0
      %v3755 = vpop.f32.mrf.mxu0
      %v3756 = vadd.f32 %v908, %v3755
      %v3757 = vpop.f32.mrf.mxu0
      %3758 = vmatprep.mubr.bf16.mxu0 %v1911
      %3759 = vmatmul.mubr.bf16.gmra.mxu0 %v1910
      %v3760 = vpop.f32.mrf.mxu0
      %v3761 = vadd.f32 %v908, %v3760
      %v3762 = vpop.f32.mrf.mxu0
      %v3763 = vpop.f32.mrf.mxu0
      %v3764 = vadd.f32 %v908, %v3763
      %v3765 = vpop.f32.mrf.mxu0
      %3766 = vmatprep.mubr.bf16.mxu0 %v1936
      %3767 = vmatmul.mubr.bf16.gmra.mxu0 %v1935
      %v3768 = vpop.f32.mrf.mxu0
      %v3769 = vadd.f32 %v908, %v3768
      %v3770 = vpop.f32.mrf.mxu0
      %v3771 = vpop.f32.mrf.mxu0
      %v3772 = vadd.f32 %v908, %v3771
      %v3773 = vpop.f32.mrf.mxu0
      %3774 = vmatprep.mubr.bf16.mxu0 %v1961
      %3775 = vmatmul.mubr.bf16.gmra.mxu0 %v1960
      %v3776 = vpop.f32.mrf.mxu0
      %v3777 = vadd.f32 %v908, %v3776
      %v3778 = vpop.f32.mrf.mxu0
      %v3779 = vpop.f32.mrf.mxu0
      %v3780 = vadd.f32 %v908, %v3779
      %v3781 = vpop.f32.mrf.mxu0
      %3782 = vmatprep.mubr.bf16.mxu0 %v1986
      %3783 = vmatmul.mubr.bf16.gmra.mxu0 %v1985
      %v3784 = vpop.f32.mrf.mxu0
      %v3785 = vadd.f32 %v908, %v3784
      %v3786 = vpop.f32.mrf.mxu0
      %v3787 = vpop.f32.mrf.mxu0
      %v3788 = vadd.f32 %v908, %v3787
      %v3789 = vpop.f32.mrf.mxu0
      %3790 = vmatprep.mubr.bf16.mxu0 %v2011
      %3791 = vmatmul.mubr.bf16.gmra.mxu0 %v2010
      %v3792 = vpop.f32.mrf.mxu0
      %v3793 = vadd.f32 %v908, %v3792
      %v3794 = vpop.f32.mrf.mxu0
      %v3795 = vpop.f32.mrf.mxu0
      %v3796 = vadd.f32 %v908, %v3795
      %v3797 = vpop.f32.mrf.mxu0
      %3798 = vmatprep.mubr.bf16.mxu0 %v2036
      %3799 = vmatmul.mubr.bf16.gmra.mxu0 %v2035
      %v3800 = vpop.f32.mrf.mxu0
      %v3801 = vadd.f32 %v908, %v3800
      %v3802 = vpop.f32.mrf.mxu0
      %v3803 = vpop.f32.mrf.mxu0
      %v3804 = vadd.f32 %v908, %v3803
      %v3805 = vpop.f32.mrf.mxu0
      %3806 = vmatprep.mubr.bf16.mxu0 %v2061
      %3807 = vmatmul.mubr.bf16.gmra.mxu0 %v2060
      %v3808 = vpop.f32.mrf.mxu0
      %v3809 = vadd.f32 %v908, %v3808
      %v3810 = vpop.f32.mrf.mxu0
      %v3811 = vpop.f32.mrf.mxu0
      %v3812 = vadd.f32 %v908, %v3811
      %v3813 = vpop.f32.mrf.mxu0
      %3814 = vmatprep.mubr.bf16.mxu0 %v2086
      %3815 = vmatmul.mubr.bf16.gmra.mxu0 %v2085
      %v3816 = vpop.f32.mrf.mxu0
      %v3817 = vadd.f32 %v908, %v3816
      %v3818 = vpop.f32.mrf.mxu0
      %v3819 = vpop.f32.mrf.mxu0
      %v3820 = vadd.f32 %v908, %v3819
      %v3821 = vpop.f32.mrf.mxu0
      %3822 = vmatprep.mubr.bf16.mxu0 %v2111
      %3823 = vmatmul.mubr.bf16.gmra.mxu0 %v2110
      %v3824 = vpop.f32.mrf.mxu0
      %v3825 = vadd.f32 %v908, %v3824
      %v3826 = vpop.f32.mrf.mxu0
      %v3827 = vpop.f32.mrf.mxu0
      %v3828 = vadd.f32 %v908, %v3827
      %v3829 = vpop.f32.mrf.mxu0
      %3830 = vmatprep.mubr.bf16.mxu0 %v2136
      %3831 = vmatmul.mubr.bf16.gmra.mxu0 %v2135
      %v3832 = vpop.f32.mrf.mxu0
      %v3833 = vadd.f32 %v908, %v3832
      %v3834 = vpop.f32.mrf.mxu0
      %v3835 = vpop.f32.mrf.mxu0
      %v3836 = vadd.f32 %v908, %v3835
      %v3837 = vpop.f32.mrf.mxu0
      %3838 = vmatprep.mubr.bf16.mxu0 %v2161
      %3839 = vmatmul.mubr.bf16.gmra.mxu0 %v2160
      %v3840 = vpop.f32.mrf.mxu0
      %v3841 = vadd.f32 %v908, %v3840
      %v3842 = vpop.f32.mrf.mxu0
      %v3843 = vpop.f32.mrf.mxu0
      %v3844 = vpop.f32.mrf.mxu0
      %3845 = vdwg.mxu0
      %3846 = vmatprep.subr.bf16.mxu0 0
      %3847 = vmatpush1.bf16.msra.mxu0 %v3333
      %3848 = vmatprep.subr.bf16.mxu0 0
      %3849 = vmatpush1.bf16.msra.mxu0 %v3332
      %3850 = vmatprep.subr.bf16.mxu0 0
      %3851 = vmatpush1.bf16.msra.mxu0 %v3331
      %3852 = vmatprep.subr.bf16.mxu0 0
      %3853 = vmatpush1.bf16.msra.mxu0 %v3330
      %3854 = vmatprep.subr.bf16.mxu0 0
      %3855 = vmatpush1.bf16.msra.mxu0 %v3329
      %3856 = vmatprep.subr.bf16.mxu0 0
      %3857 = vmatpush1.bf16.msra.mxu0 %v3328
      %3858 = vmatprep.subr.bf16.mxu0 0
      %3859 = vmatpush1.bf16.msra.mxu0 %v3327
      %3860 = vmatprep.subr.bf16.mxu0 0
      %3861 = vmatpush1.bf16.msra.mxu0 %v3326
      %3862 = vmatprep.subr.bf16.mxu0 0
      %3863 = vmatpush2.bf16.msra.mxu0 %v3341
      %3864 = vmatprep.subr.bf16.mxu0 0
      %3865 = vmatpush2.bf16.msra.mxu0 %v3340
      %3866 = vmatprep.subr.bf16.mxu0 0
      %3867 = vmatpush2.bf16.msra.mxu0 %v3339
      %3868 = vmatprep.subr.bf16.mxu0 0
      %3869 = vmatpush2.bf16.msra.mxu0 %v3338
      %3870 = vmatprep.subr.bf16.mxu0 0
      %3871 = vmatpush2.bf16.msra.mxu0 %v3337
      %3872 = vmatprep.subr.bf16.mxu0 0
      %3873 = vmatpush2.bf16.msra.mxu0 %v3336
      %3874 = vmatprep.subr.bf16.mxu0 0
      %3875 = vmatpush2.bf16.msra.mxu0 %v3335
      %3876 = vmatprep.subr.bf16.mxu0 0
      %3877 = vmatpush2.bf16.msra.mxu0 %v3334
      %3878 = vmatprep.mubr.bf16.mxu0 %v1863
      %3879 = vmatmul.mubr.bf16.gmra.mxu0 %v1862
      %v3880 = vpop.f32.mrf.mxu0
      %v3881 = vadd.f32 %v3745, %v3880
      %v3882 = vpop.f32.mrf.mxu0
      %v3883 = vpop.f32.mrf.mxu0
      %v3884 = vadd.f32 %v3748, %v3883
      %v3885 = vpop.f32.mrf.mxu0
      %3886 = vmatprep.mubr.bf16.mxu0 %v1888
      %3887 = vmatmul.mubr.bf16.gmra.mxu0 %v1887
      %v3888 = vpop.f32.mrf.mxu0
      %v3889 = vadd.f32 %v3753, %v3888
      %v3890 = vpop.f32.mrf.mxu0
      %v3891 = vpop.f32.mrf.mxu0
      %v3892 = vadd.f32 %v3756, %v3891
      %v3893 = vpop.f32.mrf.mxu0
      %3894 = vmatprep.mubr.bf16.mxu0 %v1913
      %3895 = vmatmul.mubr.bf16.gmra.mxu0 %v1912
      %v3896 = vpop.f32.mrf.mxu0
      %v3897 = vadd.f32 %v3761, %v3896
      %v3898 = vpop.f32.mrf.mxu0
      %v3899 = vpop.f32.mrf.mxu0
      %v3900 = vadd.f32 %v3764, %v3899
      %v3901 = vpop.f32.mrf.mxu0
      %3902 = vmatprep.mubr.bf16.mxu0 %v1938
      %3903 = vmatmul.mubr.bf16.gmra.mxu0 %v1937
      %v3904 = vpop.f32.mrf.mxu0
      %v3905 = vadd.f32 %v3769, %v3904
      %v3906 = vpop.f32.mrf.mxu0
      %v3907 = vpop.f32.mrf.mxu0
      %v3908 = vadd.f32 %v3772, %v3907
      %v3909 = vpop.f32.mrf.mxu0
      %3910 = vmatprep.mubr.bf16.mxu0 %v1963
      %3911 = vmatmul.mubr.bf16.gmra.mxu0 %v1962
      %v3912 = vpop.f32.mrf.mxu0
      %v3913 = vadd.f32 %v3777, %v3912
      %v3914 = vpop.f32.mrf.mxu0
      %v3915 = vpop.f32.mrf.mxu0
      %v3916 = vadd.f32 %v3780, %v3915
      %v3917 = vpop.f32.mrf.mxu0
      %3918 = vmatprep.mubr.bf16.mxu0 %v1988
      %3919 = vmatmul.mubr.bf16.gmra.mxu0 %v1987
      %v3920 = vpop.f32.mrf.mxu0
      %v3921 = vadd.f32 %v3785, %v3920
      %v3922 = vpop.f32.mrf.mxu0
      %v3923 = vpop.f32.mrf.mxu0
      %v3924 = vadd.f32 %v3788, %v3923
      %v3925 = vpop.f32.mrf.mxu0
      %3926 = vmatprep.mubr.bf16.mxu0 %v2013
      %3927 = vmatmul.mubr.bf16.gmra.mxu0 %v2012
      %v3928 = vpop.f32.mrf.mxu0
      %v3929 = vadd.f32 %v3793, %v3928
      %v3930 = vpop.f32.mrf.mxu0
      %v3931 = vpop.f32.mrf.mxu0
      %v3932 = vadd.f32 %v3796, %v3931
      %v3933 = vpop.f32.mrf.mxu0
      %3934 = vmatprep.mubr.bf16.mxu0 %v2038
      %3935 = vmatmul.mubr.bf16.gmra.mxu0 %v2037
      %v3936 = vpop.f32.mrf.mxu0
      %v3937 = vadd.f32 %v3801, %v3936
      %v3938 = vpop.f32.mrf.mxu0
      %v3939 = vpop.f32.mrf.mxu0
      %v3940 = vadd.f32 %v3804, %v3939
      %v3941 = vpop.f32.mrf.mxu0
      %3942 = vmatprep.mubr.bf16.mxu0 %v2063
      %3943 = vmatmul.mubr.bf16.gmra.mxu0 %v2062
      %v3944 = vpop.f32.mrf.mxu0
      %v3945 = vadd.f32 %v3809, %v3944
      %v3946 = vpop.f32.mrf.mxu0
      %v3947 = vpop.f32.mrf.mxu0
      %v3948 = vadd.f32 %v3812, %v3947
      %v3949 = vpop.f32.mrf.mxu0
      %3950 = vmatprep.mubr.bf16.mxu0 %v2088
      %3951 = vmatmul.mubr.bf16.gmra.mxu0 %v2087
      %v3952 = vpop.f32.mrf.mxu0
      %v3953 = vadd.f32 %v3817, %v3952
      %v3954 = vpop.f32.mrf.mxu0
      %v3955 = vpop.f32.mrf.mxu0
      %v3956 = vadd.f32 %v3820, %v3955
      %v3957 = vpop.f32.mrf.mxu0
      %3958 = vmatprep.mubr.bf16.mxu0 %v2113
      %3959 = vmatmul.mubr.bf16.gmra.mxu0 %v2112
      %v3960 = vpop.f32.mrf.mxu0
      %v3961 = vadd.f32 %v3825, %v3960
      %v3962 = vpop.f32.mrf.mxu0
      %v3963 = vpop.f32.mrf.mxu0
      %v3964 = vadd.f32 %v3828, %v3963
      %v3965 = vpop.f32.mrf.mxu0
      %3966 = vmatprep.mubr.bf16.mxu0 %v2138
      %3967 = vmatmul.mubr.bf16.gmra.mxu0 %v2137
      %v3968 = vpop.f32.mrf.mxu0
      %v3969 = vadd.f32 %v3833, %v3968
      %v3970 = vpop.f32.mrf.mxu0
      %v3971 = vpop.f32.mrf.mxu0
      %v3972 = vadd.f32 %v3836, %v3971
      %v3973 = vpop.f32.mrf.mxu0
      %3974 = vmatprep.mubr.bf16.mxu0 %v2163
      %3975 = vmatmul.mubr.bf16.gmra.mxu0 %v2162
      %v3976 = vpop.f32.mrf.mxu0
      %v3977 = vadd.f32 %v3841, %v3976
      %v3978 = vpop.f32.mrf.mxu0
      %v3979 = vpop.f32.mrf.mxu0
      %v3980 = vpop.f32.mrf.mxu0
      %3981 = vdwg.mxu0
      %3982 = vmatprep.subr.bf16.mxu0 0
      %3983 = vmatpush1.bf16.msra.mxu0 %v3349
      %3984 = vmatprep.subr.bf16.mxu0 0
      %3985 = vmatpush1.bf16.msra.mxu0 %v3348
      %3986 = vmatprep.subr.bf16.mxu0 0
      %3987 = vmatpush1.bf16.msra.mxu0 %v3347
      %3988 = vmatprep.subr.bf16.mxu0 0
      %3989 = vmatpush1.bf16.msra.mxu0 %v3346
      %3990 = vmatprep.subr.bf16.mxu0 0
      %3991 = vmatpush1.bf16.msra.mxu0 %v3345
      %3992 = vmatprep.subr.bf16.mxu0 0
      %3993 = vmatpush1.bf16.msra.mxu0 %v3344
      %3994 = vmatprep.subr.bf16.mxu0 0
      %3995 = vmatpush1.bf16.msra.mxu0 %v3343
      %3996 = vmatprep.subr.bf16.mxu0 0
      %3997 = vmatpush1.bf16.msra.mxu0 %v3342
      %3998 = vmatprep.subr.bf16.mxu0 0
      %3999 = vmatpush2.bf16.msra.mxu0 %v3357
      %4000 = vmatprep.subr.bf16.mxu0 0
      %4001 = vmatpush2.bf16.msra.mxu0 %v3356
      %4002 = vmatprep.subr.bf16.mxu0 0
      %4003 = vmatpush2.bf16.msra.mxu0 %v3355
      %4004 = vmatprep.subr.bf16.mxu0 0
      %4005 = vmatpush2.bf16.msra.mxu0 %v3354
      %4006 = vmatprep.subr.bf16.mxu0 0
      %4007 = vmatpush2.bf16.msra.mxu0 %v3353
      %4008 = vmatprep.subr.bf16.mxu0 0
      %4009 = vmatpush2.bf16.msra.mxu0 %v3352
      %4010 = vmatprep.subr.bf16.mxu0 0
      %4011 = vmatpush2.bf16.msra.mxu0 %v3351
      %4012 = vmatprep.subr.bf16.mxu0 0
      %4013 = vmatpush2.bf16.msra.mxu0 %v3350
      %4014 = vmatprep.mubr.bf16.mxu0 %v1865
      %4015 = vmatmul.mubr.bf16.gmra.mxu0 %v1864
      %v4016 = vpop.f32.mrf.mxu0
      %v4017 = vadd.f32 %v3881, %v4016
      %v4018 = vpop.f32.mrf.mxu0
      %v4019 = vpop.f32.mrf.mxu0
      %v4020 = vadd.f32 %v3884, %v4019
      %v4021 = vpop.f32.mrf.mxu0
      %4022 = vmatprep.mubr.bf16.mxu0 %v1890
      %4023 = vmatmul.mubr.bf16.gmra.mxu0 %v1889
      %v4024 = vpop.f32.mrf.mxu0
      %v4025 = vadd.f32 %v3889, %v4024
      %v4026 = vpop.f32.mrf.mxu0
      %v4027 = vpop.f32.mrf.mxu0
      %v4028 = vadd.f32 %v3892, %v4027
      %v4029 = vpop.f32.mrf.mxu0
      %4030 = vmatprep.mubr.bf16.mxu0 %v1915
      %4031 = vmatmul.mubr.bf16.gmra.mxu0 %v1914
      %v4032 = vpop.f32.mrf.mxu0
      %v4033 = vadd.f32 %v3897, %v4032
      %v4034 = vpop.f32.mrf.mxu0
      %v4035 = vpop.f32.mrf.mxu0
      %v4036 = vadd.f32 %v3900, %v4035
      %v4037 = vpop.f32.mrf.mxu0
      %4038 = vmatprep.mubr.bf16.mxu0 %v1940
      %4039 = vmatmul.mubr.bf16.gmra.mxu0 %v1939
      %v4040 = vpop.f32.mrf.mxu0
      %v4041 = vadd.f32 %v3905, %v4040
      %v4042 = vpop.f32.mrf.mxu0
      %v4043 = vpop.f32.mrf.mxu0
      %v4044 = vadd.f32 %v3908, %v4043
      %v4045 = vpop.f32.mrf.mxu0
      %4046 = vmatprep.mubr.bf16.mxu0 %v1965
      %4047 = vmatmul.mubr.bf16.gmra.mxu0 %v1964
      %v4048 = vpop.f32.mrf.mxu0
      %v4049 = vadd.f32 %v3913, %v4048
      %v4050 = vpop.f32.mrf.mxu0
      %v4051 = vpop.f32.mrf.mxu0
      %v4052 = vadd.f32 %v3916, %v4051
      %v4053 = vpop.f32.mrf.mxu0
      %4054 = vmatprep.mubr.bf16.mxu0 %v1990
      %4055 = vmatmul.mubr.bf16.gmra.mxu0 %v1989
      %v4056 = vpop.f32.mrf.mxu0
      %v4057 = vadd.f32 %v3921, %v4056
      %v4058 = vpop.f32.mrf.mxu0
      %v4059 = vpop.f32.mrf.mxu0
      %v4060 = vadd.f32 %v3924, %v4059
      %v4061 = vpop.f32.mrf.mxu0
      %4062 = vmatprep.mubr.bf16.mxu0 %v2015
      %4063 = vmatmul.mubr.bf16.gmra.mxu0 %v2014
      %v4064 = vpop.f32.mrf.mxu0
      %v4065 = vadd.f32 %v3929, %v4064
      %v4066 = vpop.f32.mrf.mxu0
      %v4067 = vpop.f32.mrf.mxu0
      %v4068 = vadd.f32 %v3932, %v4067
      %v4069 = vpop.f32.mrf.mxu0
      %4070 = vmatprep.mubr.bf16.mxu0 %v2040
      %4071 = vmatmul.mubr.bf16.gmra.mxu0 %v2039
      %v4072 = vpop.f32.mrf.mxu0
      %v4073 = vadd.f32 %v3937, %v4072
      %v4074 = vpop.f32.mrf.mxu0
      %v4075 = vpop.f32.mrf.mxu0
      %v4076 = vadd.f32 %v3940, %v4075
      %v4077 = vpop.f32.mrf.mxu0
      %4078 = vmatprep.mubr.bf16.mxu0 %v2065
      %4079 = vmatmul.mubr.bf16.gmra.mxu0 %v2064
      %v4080 = vpop.f32.mrf.mxu0
      %v4081 = vadd.f32 %v3945, %v4080
      %v4082 = vpop.f32.mrf.mxu0
      %v4083 = vpop.f32.mrf.mxu0
      %v4084 = vadd.f32 %v3948, %v4083
      %v4085 = vpop.f32.mrf.mxu0
      %4086 = vmatprep.mubr.bf16.mxu0 %v2090
      %4087 = vmatmul.mubr.bf16.gmra.mxu0 %v2089
      %v4088 = vpop.f32.mrf.mxu0
      %v4089 = vadd.f32 %v3953, %v4088
      %v4090 = vpop.f32.mrf.mxu0
      %v4091 = vpop.f32.mrf.mxu0
      %v4092 = vadd.f32 %v3956, %v4091
      %v4093 = vpop.f32.mrf.mxu0
      %4094 = vmatprep.mubr.bf16.mxu0 %v2115
      %4095 = vmatmul.mubr.bf16.gmra.mxu0 %v2114
      %v4096 = vpop.f32.mrf.mxu0
      %v4097 = vadd.f32 %v3961, %v4096
      %v4098 = vpop.f32.mrf.mxu0
      %v4099 = vpop.f32.mrf.mxu0
      %v4100 = vadd.f32 %v3964, %v4099
      %v4101 = vpop.f32.mrf.mxu0
      %4102 = vmatprep.mubr.bf16.mxu0 %v2140
      %4103 = vmatmul.mubr.bf16.gmra.mxu0 %v2139
      %v4104 = vpop.f32.mrf.mxu0
      %v4105 = vadd.f32 %v3969, %v4104
      %v4106 = vpop.f32.mrf.mxu0
      %v4107 = vpop.f32.mrf.mxu0
      %v4108 = vadd.f32 %v3972, %v4107
      %v4109 = vpop.f32.mrf.mxu0
      %4110 = vmatprep.mubr.bf16.mxu0 %v2165
      %4111 = vmatmul.mubr.bf16.gmra.mxu0 %v2164
      %v4112 = vpop.f32.mrf.mxu0
      %v4113 = vadd.f32 %v3977, %v4112
      %v4114 = vpop.f32.mrf.mxu0
      %v4115 = vpop.f32.mrf.mxu0
      %v4116 = vpop.f32.mrf.mxu0
      %4117 = vdwg.mxu0
      %4118 = vmatprep.subr.bf16.mxu0 0
      %4119 = vmatpush1.bf16.msra.mxu0 %v3365
      %4120 = vmatprep.subr.bf16.mxu0 0
      %4121 = vmatpush1.bf16.msra.mxu0 %v3364
      %4122 = vmatprep.subr.bf16.mxu0 0
      %4123 = vmatpush1.bf16.msra.mxu0 %v3363
      %4124 = vmatprep.subr.bf16.mxu0 0
      %4125 = vmatpush1.bf16.msra.mxu0 %v3362
      %4126 = vmatprep.subr.bf16.mxu0 0
      %4127 = vmatpush1.bf16.msra.mxu0 %v3361
      %4128 = vmatprep.subr.bf16.mxu0 0
      %4129 = vmatpush1.bf16.msra.mxu0 %v3360
      %4130 = vmatprep.subr.bf16.mxu0 0
      %4131 = vmatpush1.bf16.msra.mxu0 %v3359
      %4132 = vmatprep.subr.bf16.mxu0 0
      %4133 = vmatpush1.bf16.msra.mxu0 %v3358
      %4134 = vmatprep.subr.bf16.mxu0 0
      %4135 = vmatpush2.bf16.msra.mxu0 %v3373
      %4136 = vmatprep.subr.bf16.mxu0 0
      %4137 = vmatpush2.bf16.msra.mxu0 %v3372
      %4138 = vmatprep.subr.bf16.mxu0 0
      %4139 = vmatpush2.bf16.msra.mxu0 %v3371
      %4140 = vmatprep.subr.bf16.mxu0 0
      %4141 = vmatpush2.bf16.msra.mxu0 %v3370
      %4142 = vmatprep.subr.bf16.mxu0 0
      %4143 = vmatpush2.bf16.msra.mxu0 %v3369
      %4144 = vmatprep.subr.bf16.mxu0 0
      %4145 = vmatpush2.bf16.msra.mxu0 %v3368
      %4146 = vmatprep.subr.bf16.mxu0 0
      %4147 = vmatpush2.bf16.msra.mxu0 %v3367
      %4148 = vmatprep.subr.bf16.mxu0 0
      %4149 = vmatpush2.bf16.msra.mxu0 %v3366
      %4150 = vmatprep.mubr.bf16.mxu0 %v1867
      %4151 = vmatmul.mubr.bf16.gmra.mxu0 %v1866
      %v4152 = vpop.f32.mrf.mxu0
      %v4153 = vadd.f32 %v4017, %v4152
      %v4154 = vpop.f32.mrf.mxu0
      %v4155 = vpop.f32.mrf.mxu0
      %v4156 = vadd.f32 %v4020, %v4155
      %v4157 = vpop.f32.mrf.mxu0
      %4158 = vmatprep.mubr.bf16.mxu0 %v1892
      %4159 = vmatmul.mubr.bf16.gmra.mxu0 %v1891
      %v4160 = vpop.f32.mrf.mxu0
      %v4161 = vadd.f32 %v4025, %v4160
      %v4162 = vpop.f32.mrf.mxu0
      %v4163 = vpop.f32.mrf.mxu0
      %v4164 = vadd.f32 %v4028, %v4163
      %v4165 = vpop.f32.mrf.mxu0
      %4166 = vmatprep.mubr.bf16.mxu0 %v1917
      %4167 = vmatmul.mubr.bf16.gmra.mxu0 %v1916
      %v4168 = vpop.f32.mrf.mxu0
      %v4169 = vadd.f32 %v4033, %v4168
      %v4170 = vpop.f32.mrf.mxu0
      %v4171 = vpop.f32.mrf.mxu0
      %v4172 = vadd.f32 %v4036, %v4171
      %v4173 = vpop.f32.mrf.mxu0
      %4174 = vmatprep.mubr.bf16.mxu0 %v1942
      %4175 = vmatmul.mubr.bf16.gmra.mxu0 %v1941
      %v4176 = vpop.f32.mrf.mxu0
      %v4177 = vadd.f32 %v4041, %v4176
      %v4178 = vpop.f32.mrf.mxu0
      %v4179 = vpop.f32.mrf.mxu0
      %v4180 = vadd.f32 %v4044, %v4179
      %v4181 = vpop.f32.mrf.mxu0
      %4182 = vmatprep.mubr.bf16.mxu0 %v1967
      %4183 = vmatmul.mubr.bf16.gmra.mxu0 %v1966
      %v4184 = vpop.f32.mrf.mxu0
      %v4185 = vadd.f32 %v4049, %v4184
      %v4186 = vpop.f32.mrf.mxu0
      %v4187 = vpop.f32.mrf.mxu0
      %v4188 = vadd.f32 %v4052, %v4187
      %v4189 = vpop.f32.mrf.mxu0
      %4190 = vmatprep.mubr.bf16.mxu0 %v1992
      %4191 = vmatmul.mubr.bf16.gmra.mxu0 %v1991
      %v4192 = vpop.f32.mrf.mxu0
      %v4193 = vadd.f32 %v4057, %v4192
      %v4194 = vpop.f32.mrf.mxu0
      %v4195 = vpop.f32.mrf.mxu0
      %v4196 = vadd.f32 %v4060, %v4195
      %v4197 = vpop.f32.mrf.mxu0
      %4198 = vmatprep.mubr.bf16.mxu0 %v2017
      %4199 = vmatmul.mubr.bf16.gmra.mxu0 %v2016
      %v4200 = vpop.f32.mrf.mxu0
      %v4201 = vadd.f32 %v4065, %v4200
      %v4202 = vpop.f32.mrf.mxu0
      %v4203 = vpop.f32.mrf.mxu0
      %v4204 = vadd.f32 %v4068, %v4203
      %v4205 = vpop.f32.mrf.mxu0
      %4206 = vmatprep.mubr.bf16.mxu0 %v2042
      %4207 = vmatmul.mubr.bf16.gmra.mxu0 %v2041
      %v4208 = vpop.f32.mrf.mxu0
      %v4209 = vadd.f32 %v4073, %v4208
      %v4210 = vpop.f32.mrf.mxu0
      %v4211 = vpop.f32.mrf.mxu0
      %v4212 = vadd.f32 %v4076, %v4211
      %v4213 = vpop.f32.mrf.mxu0
      %4214 = vmatprep.mubr.bf16.mxu0 %v2067
      %4215 = vmatmul.mubr.bf16.gmra.mxu0 %v2066
      %v4216 = vpop.f32.mrf.mxu0
      %v4217 = vadd.f32 %v4081, %v4216
      %v4218 = vpop.f32.mrf.mxu0
      %v4219 = vpop.f32.mrf.mxu0
      %v4220 = vadd.f32 %v4084, %v4219
      %v4221 = vpop.f32.mrf.mxu0
      %4222 = vmatprep.mubr.bf16.mxu0 %v2092
      %4223 = vmatmul.mubr.bf16.gmra.mxu0 %v2091
      %v4224 = vpop.f32.mrf.mxu0
      %v4225 = vadd.f32 %v4089, %v4224
      %v4226 = vpop.f32.mrf.mxu0
      %v4227 = vpop.f32.mrf.mxu0
      %v4228 = vadd.f32 %v4092, %v4227
      %v4229 = vpop.f32.mrf.mxu0
      %4230 = vmatprep.mubr.bf16.mxu0 %v2117
      %4231 = vmatmul.mubr.bf16.gmra.mxu0 %v2116
      %v4232 = vpop.f32.mrf.mxu0
      %v4233 = vadd.f32 %v4097, %v4232
      %v4234 = vpop.f32.mrf.mxu0
      %v4235 = vpop.f32.mrf.mxu0
      %v4236 = vadd.f32 %v4100, %v4235
      %v4237 = vpop.f32.mrf.mxu0
      %4238 = vmatprep.mubr.bf16.mxu0 %v2142
      %4239 = vmatmul.mubr.bf16.gmra.mxu0 %v2141
      %v4240 = vpop.f32.mrf.mxu0
      %v4241 = vadd.f32 %v4105, %v4240
      %v4242 = vpop.f32.mrf.mxu0
      %v4243 = vpop.f32.mrf.mxu0
      %v4244 = vadd.f32 %v4108, %v4243
      %v4245 = vpop.f32.mrf.mxu0
      %4246 = vmatprep.mubr.bf16.mxu0 %v2167
      %4247 = vmatmul.mubr.bf16.gmra.mxu0 %v2166
      %v4248 = vpop.f32.mrf.mxu0
      %v4249 = vadd.f32 %v4113, %v4248
      %v4250 = vpop.f32.mrf.mxu0
      %v4251 = vpop.f32.mrf.mxu0
      %v4252 = vpop.f32.mrf.mxu0
      %4253 = vdwg.mxu0
      %4254 = vmatprep.subr.bf16.mxu0 0
      %4255 = vmatpush1.bf16.msra.mxu0 %v3381
      %4256 = vmatprep.subr.bf16.mxu0 0
      %4257 = vmatpush1.bf16.msra.mxu0 %v3380
      %4258 = vmatprep.subr.bf16.mxu0 0
      %4259 = vmatpush1.bf16.msra.mxu0 %v3379
      %4260 = vmatprep.subr.bf16.mxu0 0
      %4261 = vmatpush1.bf16.msra.mxu0 %v3378
      %4262 = vmatprep.subr.bf16.mxu0 0
      %4263 = vmatpush1.bf16.msra.mxu0 %v3377
      %4264 = vmatprep.subr.bf16.mxu0 0
      %4265 = vmatpush1.bf16.msra.mxu0 %v3376
      %4266 = vmatprep.subr.bf16.mxu0 0
      %4267 = vmatpush1.bf16.msra.mxu0 %v3375
      %4268 = vmatprep.subr.bf16.mxu0 0
      %4269 = vmatpush1.bf16.msra.mxu0 %v3374
      %4270 = vmatprep.subr.bf16.mxu0 0
      %4271 = vmatpush2.bf16.msra.mxu0 %v3389
      %4272 = vmatprep.subr.bf16.mxu0 0
      %4273 = vmatpush2.bf16.msra.mxu0 %v3388
      %4274 = vmatprep.subr.bf16.mxu0 0
      %4275 = vmatpush2.bf16.msra.mxu0 %v3387
      %4276 = vmatprep.subr.bf16.mxu0 0
      %4277 = vmatpush2.bf16.msra.mxu0 %v3386
      %4278 = vmatprep.subr.bf16.mxu0 0
      %4279 = vmatpush2.bf16.msra.mxu0 %v3385
      %4280 = vmatprep.subr.bf16.mxu0 0
      %4281 = vmatpush2.bf16.msra.mxu0 %v3384
      %4282 = vmatprep.subr.bf16.mxu0 0
      %4283 = vmatpush2.bf16.msra.mxu0 %v3383
      %4284 = vmatprep.subr.bf16.mxu0 0
      %4285 = vmatpush2.bf16.msra.mxu0 %v3382
      %4286 = vmatprep.mubr.bf16.mxu0 %v1869
      %4287 = vmatmul.mubr.bf16.gmra.mxu0 %v1868
      %v4288 = vpop.f32.mrf.mxu0
      %v4289 = vadd.f32 %v4153, %v4288
      %v4290 = vpop.f32.mrf.mxu0
      %v4291 = vpop.f32.mrf.mxu0
      %v4292 = vadd.f32 %v4156, %v4291
      %v4293 = vpop.f32.mrf.mxu0
      %4294 = vmatprep.mubr.bf16.mxu0 %v1894
      %4295 = vmatmul.mubr.bf16.gmra.mxu0 %v1893
      %v4296 = vpop.f32.mrf.mxu0
      %v4297 = vadd.f32 %v4161, %v4296
      %v4298 = vpop.f32.mrf.mxu0
      %v4299 = vpop.f32.mrf.mxu0
      %v4300 = vadd.f32 %v4164, %v4299
      %v4301 = vpop.f32.mrf.mxu0
      %4302 = vmatprep.mubr.bf16.mxu0 %v1919
      %4303 = vmatmul.mubr.bf16.gmra.mxu0 %v1918
      %v4304 = vpop.f32.mrf.mxu0
      %v4305 = vadd.f32 %v4169, %v4304
      %v4306 = vpop.f32.mrf.mxu0
      %v4307 = vpop.f32.mrf.mxu0
      %v4308 = vadd.f32 %v4172, %v4307
      %v4309 = vpop.f32.mrf.mxu0
      %4310 = vmatprep.mubr.bf16.mxu0 %v1944
      %4311 = vmatmul.mubr.bf16.gmra.mxu0 %v1943
      %v4312 = vpop.f32.mrf.mxu0
      %v4313 = vadd.f32 %v4177, %v4312
      %v4314 = vpop.f32.mrf.mxu0
      %v4315 = vpop.f32.mrf.mxu0
      %v4316 = vadd.f32 %v4180, %v4315
      %v4317 = vpop.f32.mrf.mxu0
      %4318 = vmatprep.mubr.bf16.mxu0 %v1969
      %4319 = vmatmul.mubr.bf16.gmra.mxu0 %v1968
      %v4320 = vpop.f32.mrf.mxu0
      %v4321 = vadd.f32 %v4185, %v4320
      %v4322 = vpop.f32.mrf.mxu0
      %v4323 = vpop.f32.mrf.mxu0
      %v4324 = vadd.f32 %v4188, %v4323
      %v4325 = vpop.f32.mrf.mxu0
      %4326 = vmatprep.mubr.bf16.mxu0 %v1994
      %4327 = vmatmul.mubr.bf16.gmra.mxu0 %v1993
      %v4328 = vpop.f32.mrf.mxu0
      %v4329 = vadd.f32 %v4193, %v4328
      %v4330 = vpop.f32.mrf.mxu0
      %v4331 = vpop.f32.mrf.mxu0
      %v4332 = vadd.f32 %v4196, %v4331
      %v4333 = vpop.f32.mrf.mxu0
      %4334 = vmatprep.mubr.bf16.mxu0 %v2019
      %4335 = vmatmul.mubr.bf16.gmra.mxu0 %v2018
      %v4336 = vpop.f32.mrf.mxu0
      %v4337 = vadd.f32 %v4201, %v4336
      %v4338 = vpop.f32.mrf.mxu0
      %v4339 = vpop.f32.mrf.mxu0
      %v4340 = vadd.f32 %v4204, %v4339
      %v4341 = vpop.f32.mrf.mxu0
      %4342 = vmatprep.mubr.bf16.mxu0 %v2044
      %4343 = vmatmul.mubr.bf16.gmra.mxu0 %v2043
      %v4344 = vpop.f32.mrf.mxu0
      %v4345 = vadd.f32 %v4209, %v4344
      %v4346 = vpop.f32.mrf.mxu0
      %v4347 = vpop.f32.mrf.mxu0
      %v4348 = vadd.f32 %v4212, %v4347
      %v4349 = vpop.f32.mrf.mxu0
      %4350 = vmatprep.mubr.bf16.mxu0 %v2069
      %4351 = vmatmul.mubr.bf16.gmra.mxu0 %v2068
      %v4352 = vpop.f32.mrf.mxu0
      %v4353 = vadd.f32 %v4217, %v4352
      %v4354 = vpop.f32.mrf.mxu0
      %v4355 = vpop.f32.mrf.mxu0
      %v4356 = vadd.f32 %v4220, %v4355
      %v4357 = vpop.f32.mrf.mxu0
      %4358 = vmatprep.mubr.bf16.mxu0 %v2094
      %4359 = vmatmul.mubr.bf16.gmra.mxu0 %v2093
      %v4360 = vpop.f32.mrf.mxu0
      %v4361 = vadd.f32 %v4225, %v4360
      %v4362 = vpop.f32.mrf.mxu0
      %v4363 = vpop.f32.mrf.mxu0
      %v4364 = vadd.f32 %v4228, %v4363
      %v4365 = vpop.f32.mrf.mxu0
      %4366 = vmatprep.mubr.bf16.mxu0 %v2119
      %4367 = vmatmul.mubr.bf16.gmra.mxu0 %v2118
      %v4368 = vpop.f32.mrf.mxu0
      %v4369 = vadd.f32 %v4233, %v4368
      %v4370 = vpop.f32.mrf.mxu0
      %v4371 = vpop.f32.mrf.mxu0
      %v4372 = vadd.f32 %v4236, %v4371
      %v4373 = vpop.f32.mrf.mxu0
      %4374 = vmatprep.mubr.bf16.mxu0 %v2144
      %4375 = vmatmul.mubr.bf16.gmra.mxu0 %v2143
      %v4376 = vpop.f32.mrf.mxu0
      %v4377 = vadd.f32 %v4241, %v4376
      %v4378 = vpop.f32.mrf.mxu0
      %v4379 = vpop.f32.mrf.mxu0
      %v4380 = vadd.f32 %v4244, %v4379
      %v4381 = vpop.f32.mrf.mxu0
      %4382 = vmatprep.mubr.bf16.mxu0 %v2169
      %4383 = vmatmul.mubr.bf16.gmra.mxu0 %v2168
      %v4384 = vpop.f32.mrf.mxu0
      %v4385 = vadd.f32 %v4249, %v4384
      %v4386 = vpop.f32.mrf.mxu0
      %v4387 = vpop.f32.mrf.mxu0
      %v4388 = vpop.f32.mrf.mxu0
      %4389 = vdwg.mxu0
      %4390 = vmatprep.subr.bf16.mxu0 0
      %4391 = vmatpush1.bf16.msra.mxu0 %v3397
      %4392 = vmatprep.subr.bf16.mxu0 0
      %4393 = vmatpush1.bf16.msra.mxu0 %v3396
      %4394 = vmatprep.subr.bf16.mxu0 0
      %4395 = vmatpush1.bf16.msra.mxu0 %v3395
      %4396 = vmatprep.subr.bf16.mxu0 0
      %4397 = vmatpush1.bf16.msra.mxu0 %v3394
      %4398 = vmatprep.subr.bf16.mxu0 0
      %4399 = vmatpush1.bf16.msra.mxu0 %v3393
      %4400 = vmatprep.subr.bf16.mxu0 0
      %4401 = vmatpush1.bf16.msra.mxu0 %v3392
      %4402 = vmatprep.subr.bf16.mxu0 0
      %4403 = vmatpush1.bf16.msra.mxu0 %v3391
      %4404 = vmatprep.subr.bf16.mxu0 0
      %4405 = vmatpush1.bf16.msra.mxu0 %v3390
      %4406 = vmatprep.subr.bf16.mxu0 0
      %4407 = vmatpush2.bf16.msra.mxu0 %v3405
      %4408 = vmatprep.subr.bf16.mxu0 0
      %4409 = vmatpush2.bf16.msra.mxu0 %v3404
      %4410 = vmatprep.subr.bf16.mxu0 0
      %4411 = vmatpush2.bf16.msra.mxu0 %v3403
      %4412 = vmatprep.subr.bf16.mxu0 0
      %4413 = vmatpush2.bf16.msra.mxu0 %v3402
      %4414 = vmatprep.subr.bf16.mxu0 0
      %4415 = vmatpush2.bf16.msra.mxu0 %v3401
      %4416 = vmatprep.subr.bf16.mxu0 0
      %4417 = vmatpush2.bf16.msra.mxu0 %v3400
      %4418 = vmatprep.subr.bf16.mxu0 0
      %4419 = vmatpush2.bf16.msra.mxu0 %v3399
      %4420 = vmatprep.subr.bf16.mxu0 0
      %4421 = vmatpush2.bf16.msra.mxu0 %v3398
      %4422 = vmatprep.mubr.bf16.mxu0 %v1871
      %4423 = vmatmul.mubr.bf16.gmra.mxu0 %v1870
      %v4424 = vpop.f32.mrf.mxu0
      %v4425 = vadd.f32 %v4289, %v4424
      %v4426 = vpop.f32.mrf.mxu0
      %v4427 = vpop.f32.mrf.mxu0
      %v4428 = vadd.f32 %v4292, %v4427
      %v4429 = vpop.f32.mrf.mxu0
      %4430 = vmatprep.mubr.bf16.mxu0 %v1896
      %4431 = vmatmul.mubr.bf16.gmra.mxu0 %v1895
      %v4432 = vpop.f32.mrf.mxu0
      %v4433 = vadd.f32 %v4297, %v4432
      %v4434 = vpop.f32.mrf.mxu0
      %v4435 = vpop.f32.mrf.mxu0
      %v4436 = vadd.f32 %v4300, %v4435
      %v4437 = vpop.f32.mrf.mxu0
      %4438 = vmatprep.mubr.bf16.mxu0 %v1921
      %4439 = vmatmul.mubr.bf16.gmra.mxu0 %v1920
      %v4440 = vpop.f32.mrf.mxu0
      %v4441 = vadd.f32 %v4305, %v4440
      %v4442 = vpop.f32.mrf.mxu0
      %v4443 = vpop.f32.mrf.mxu0
      %v4444 = vadd.f32 %v4308, %v4443
      %v4445 = vpop.f32.mrf.mxu0
      %4446 = vmatprep.mubr.bf16.mxu0 %v1946
      %4447 = vmatmul.mubr.bf16.gmra.mxu0 %v1945
      %v4448 = vpop.f32.mrf.mxu0
      %v4449 = vadd.f32 %v4313, %v4448
      %v4450 = vpop.f32.mrf.mxu0
      %v4451 = vpop.f32.mrf.mxu0
      %v4452 = vadd.f32 %v4316, %v4451
      %v4453 = vpop.f32.mrf.mxu0
      %4454 = vmatprep.mubr.bf16.mxu0 %v1971
      %4455 = vmatmul.mubr.bf16.gmra.mxu0 %v1970
      %v4456 = vpop.f32.mrf.mxu0
      %v4457 = vadd.f32 %v4321, %v4456
      %v4458 = vpop.f32.mrf.mxu0
      %v4459 = vpop.f32.mrf.mxu0
      %v4460 = vadd.f32 %v4324, %v4459
      %v4461 = vpop.f32.mrf.mxu0
      %4462 = vmatprep.mubr.bf16.mxu0 %v1996
      %4463 = vmatmul.mubr.bf16.gmra.mxu0 %v1995
      %v4464 = vpop.f32.mrf.mxu0
      %v4465 = vadd.f32 %v4329, %v4464
      %v4466 = vpop.f32.mrf.mxu0
      %v4467 = vpop.f32.mrf.mxu0
      %v4468 = vadd.f32 %v4332, %v4467
      %v4469 = vpop.f32.mrf.mxu0
      %4470 = vmatprep.mubr.bf16.mxu0 %v2021
      %4471 = vmatmul.mubr.bf16.gmra.mxu0 %v2020
      %v4472 = vpop.f32.mrf.mxu0
      %v4473 = vadd.f32 %v4337, %v4472
      %v4474 = vpop.f32.mrf.mxu0
      %v4475 = vpop.f32.mrf.mxu0
      %v4476 = vadd.f32 %v4340, %v4475
      %v4477 = vpop.f32.mrf.mxu0
      %4478 = vmatprep.mubr.bf16.mxu0 %v2046
      %4479 = vmatmul.mubr.bf16.gmra.mxu0 %v2045
      %v4480 = vpop.f32.mrf.mxu0
      %v4481 = vadd.f32 %v4345, %v4480
      %v4482 = vpop.f32.mrf.mxu0
      %v4483 = vpop.f32.mrf.mxu0
      %v4484 = vadd.f32 %v4348, %v4483
      %v4485 = vpop.f32.mrf.mxu0
      %4486 = vmatprep.mubr.bf16.mxu0 %v2071
      %4487 = vmatmul.mubr.bf16.gmra.mxu0 %v2070
      %v4488 = vpop.f32.mrf.mxu0
      %v4489 = vadd.f32 %v4353, %v4488
      %v4490 = vpop.f32.mrf.mxu0
      %v4491 = vpop.f32.mrf.mxu0
      %v4492 = vadd.f32 %v4356, %v4491
      %v4493 = vpop.f32.mrf.mxu0
      %4494 = vmatprep.mubr.bf16.mxu0 %v2096
      %4495 = vmatmul.mubr.bf16.gmra.mxu0 %v2095
      %v4496 = vpop.f32.mrf.mxu0
      %v4497 = vadd.f32 %v4361, %v4496
      %v4498 = vpop.f32.mrf.mxu0
      %v4499 = vpop.f32.mrf.mxu0
      %v4500 = vadd.f32 %v4364, %v4499
      %v4501 = vpop.f32.mrf.mxu0
      %4502 = vmatprep.mubr.bf16.mxu0 %v2121
      %4503 = vmatmul.mubr.bf16.gmra.mxu0 %v2120
      %v4504 = vpop.f32.mrf.mxu0
      %v4505 = vadd.f32 %v4369, %v4504
      %v4506 = vpop.f32.mrf.mxu0
      %v4507 = vpop.f32.mrf.mxu0
      %v4508 = vadd.f32 %v4372, %v4507
      %v4509 = vpop.f32.mrf.mxu0
      %4510 = vmatprep.mubr.bf16.mxu0 %v2146
      %4511 = vmatmul.mubr.bf16.gmra.mxu0 %v2145
      %v4512 = vpop.f32.mrf.mxu0
      %v4513 = vadd.f32 %v4377, %v4512
      %v4514 = vpop.f32.mrf.mxu0
      %v4515 = vpop.f32.mrf.mxu0
      %v4516 = vadd.f32 %v4380, %v4515
      %v4517 = vpop.f32.mrf.mxu0
      %4518 = vmatprep.mubr.bf16.mxu0 %v2171
      %4519 = vmatmul.mubr.bf16.gmra.mxu0 %v2170
      %v4520 = vpop.f32.mrf.mxu0
      %v4521 = vadd.f32 %v4385, %v4520
      %v4522 = vpop.f32.mrf.mxu0
      %v4523 = vpop.f32.mrf.mxu0
      %v4524 = vpop.f32.mrf.mxu0
      %4525 = vdwg.mxu0
      %4526 = vmatprep.subr.bf16.mxu0 0
      %4527 = vmatpush1.bf16.msra.mxu0 %v3413
      %4528 = vmatprep.subr.bf16.mxu0 0
      %4529 = vmatpush1.bf16.msra.mxu0 %v3412
      %4530 = vmatprep.subr.bf16.mxu0 0
      %4531 = vmatpush1.bf16.msra.mxu0 %v3411
      %4532 = vmatprep.subr.bf16.mxu0 0
      %4533 = vmatpush1.bf16.msra.mxu0 %v3410
      %4534 = vmatprep.subr.bf16.mxu0 0
      %4535 = vmatpush1.bf16.msra.mxu0 %v3409
      %4536 = vmatprep.subr.bf16.mxu0 0
      %4537 = vmatpush1.bf16.msra.mxu0 %v3408
      %4538 = vmatprep.subr.bf16.mxu0 0
      %4539 = vmatpush1.bf16.msra.mxu0 %v3407
      %4540 = vmatprep.subr.bf16.mxu0 0
      %4541 = vmatpush1.bf16.msra.mxu0 %v3406
      %4542 = vmatprep.subr.bf16.mxu0 0
      %4543 = vmatpush2.bf16.msra.mxu0 %v3421
      %4544 = vmatprep.subr.bf16.mxu0 0
      %4545 = vmatpush2.bf16.msra.mxu0 %v3420
      %4546 = vmatprep.subr.bf16.mxu0 0
      %4547 = vmatpush2.bf16.msra.mxu0 %v3419
      %4548 = vmatprep.subr.bf16.mxu0 0
      %4549 = vmatpush2.bf16.msra.mxu0 %v3418
      %4550 = vmatprep.subr.bf16.mxu0 0
      %4551 = vmatpush2.bf16.msra.mxu0 %v3417
      %4552 = vmatprep.subr.bf16.mxu0 0
      %4553 = vmatpush2.bf16.msra.mxu0 %v3416
      %4554 = vmatprep.subr.bf16.mxu0 0
      %4555 = vmatpush2.bf16.msra.mxu0 %v3415
      %4556 = vmatprep.subr.bf16.mxu0 0
      %4557 = vmatpush2.bf16.msra.mxu0 %v3414
      %4558 = vmatprep.mubr.bf16.mxu0 %v1873
      %4559 = vmatmul.mubr.bf16.gmra.mxu0 %v1872
      %v4560 = vpop.f32.mrf.mxu0
      %v4561 = vadd.f32 %v4425, %v4560
      %v4562 = vpop.f32.mrf.mxu0
      %v4563 = vpop.f32.mrf.mxu0
      %v4564 = vadd.f32 %v4428, %v4563
      %v4565 = vpop.f32.mrf.mxu0
      %4566 = vmatprep.mubr.bf16.mxu0 %v1898
      %4567 = vmatmul.mubr.bf16.gmra.mxu0 %v1897
      %v4568 = vpop.f32.mrf.mxu0
      %v4569 = vadd.f32 %v4433, %v4568
      %v4570 = vpop.f32.mrf.mxu0
      %v4571 = vpop.f32.mrf.mxu0
      %v4572 = vadd.f32 %v4436, %v4571
      %v4573 = vpop.f32.mrf.mxu0
      %4574 = vmatprep.mubr.bf16.mxu0 %v1923
      %4575 = vmatmul.mubr.bf16.gmra.mxu0 %v1922
      %v4576 = vpop.f32.mrf.mxu0
      %v4577 = vadd.f32 %v4441, %v4576
      %v4578 = vpop.f32.mrf.mxu0
      %v4579 = vpop.f32.mrf.mxu0
      %v4580 = vadd.f32 %v4444, %v4579
      %v4581 = vpop.f32.mrf.mxu0
      %4582 = vmatprep.mubr.bf16.mxu0 %v1948
      %4583 = vmatmul.mubr.bf16.gmra.mxu0 %v1947
      %v4584 = vpop.f32.mrf.mxu0
      %v4585 = vadd.f32 %v4449, %v4584
      %v4586 = vpop.f32.mrf.mxu0
      %v4587 = vpop.f32.mrf.mxu0
      %v4588 = vadd.f32 %v4452, %v4587
      %v4589 = vpop.f32.mrf.mxu0
      %4590 = vmatprep.mubr.bf16.mxu0 %v1973
      %4591 = vmatmul.mubr.bf16.gmra.mxu0 %v1972
      %v4592 = vpop.f32.mrf.mxu0
      %v4593 = vadd.f32 %v4457, %v4592
      %v4594 = vpop.f32.mrf.mxu0
      %v4595 = vpop.f32.mrf.mxu0
      %v4596 = vadd.f32 %v4460, %v4595
      %v4597 = vpop.f32.mrf.mxu0
      %4598 = vmatprep.mubr.bf16.mxu0 %v1998
      %4599 = vmatmul.mubr.bf16.gmra.mxu0 %v1997
      %v4600 = vpop.f32.mrf.mxu0
      %v4601 = vadd.f32 %v4465, %v4600
      %v4602 = vpop.f32.mrf.mxu0
      %v4603 = vpop.f32.mrf.mxu0
      %v4604 = vadd.f32 %v4468, %v4603
      %v4605 = vpop.f32.mrf.mxu0
      %4606 = vmatprep.mubr.bf16.mxu0 %v2023
      %4607 = vmatmul.mubr.bf16.gmra.mxu0 %v2022
      %v4608 = vpop.f32.mrf.mxu0
      %v4609 = vadd.f32 %v4473, %v4608
      %v4610 = vpop.f32.mrf.mxu0
      %v4611 = vpop.f32.mrf.mxu0
      %v4612 = vadd.f32 %v4476, %v4611
      %v4613 = vpop.f32.mrf.mxu0
      %4614 = vmatprep.mubr.bf16.mxu0 %v2048
      %4615 = vmatmul.mubr.bf16.gmra.mxu0 %v2047
      %v4616 = vpop.f32.mrf.mxu0
      %v4617 = vadd.f32 %v4481, %v4616
      %v4618 = vpop.f32.mrf.mxu0
      %v4619 = vpop.f32.mrf.mxu0
      %v4620 = vadd.f32 %v4484, %v4619
      %v4621 = vpop.f32.mrf.mxu0
      %4622 = vmatprep.mubr.bf16.mxu0 %v2073
      %4623 = vmatmul.mubr.bf16.gmra.mxu0 %v2072
      %v4624 = vpop.f32.mrf.mxu0
      %v4625 = vadd.f32 %v4489, %v4624
      %v4626 = vpop.f32.mrf.mxu0
      %v4627 = vpop.f32.mrf.mxu0
      %v4628 = vadd.f32 %v4492, %v4627
      %v4629 = vpop.f32.mrf.mxu0
      %4630 = vmatprep.mubr.bf16.mxu0 %v2098
      %4631 = vmatmul.mubr.bf16.gmra.mxu0 %v2097
      %v4632 = vpop.f32.mrf.mxu0
      %v4633 = vadd.f32 %v4497, %v4632
      %v4634 = vpop.f32.mrf.mxu0
      %v4635 = vpop.f32.mrf.mxu0
      %v4636 = vadd.f32 %v4500, %v4635
      %v4637 = vpop.f32.mrf.mxu0
      %4638 = vmatprep.mubr.bf16.mxu0 %v2123
      %4639 = vmatmul.mubr.bf16.gmra.mxu0 %v2122
      %v4640 = vpop.f32.mrf.mxu0
      %v4641 = vadd.f32 %v4505, %v4640
      %v4642 = vpop.f32.mrf.mxu0
      %v4643 = vpop.f32.mrf.mxu0
      %v4644 = vadd.f32 %v4508, %v4643
      %v4645 = vpop.f32.mrf.mxu0
      %4646 = vmatprep.mubr.bf16.mxu0 %v2148
      %4647 = vmatmul.mubr.bf16.gmra.mxu0 %v2147
      %v4648 = vpop.f32.mrf.mxu0
      %v4649 = vadd.f32 %v4513, %v4648
      %v4650 = vpop.f32.mrf.mxu0
      %v4651 = vpop.f32.mrf.mxu0
      %v4652 = vadd.f32 %v4516, %v4651
      %v4653 = vpop.f32.mrf.mxu0
      %4654 = vmatprep.mubr.bf16.mxu0 %v2173
      %4655 = vmatmul.mubr.bf16.gmra.mxu0 %v2172
      %v4656 = vpop.f32.mrf.mxu0
      %v4657 = vadd.f32 %v4521, %v4656
      %v4658 = vpop.f32.mrf.mxu0
      %v4659 = vpop.f32.mrf.mxu0
      %v4660 = vpop.f32.mrf.mxu0
      %4661 = vdwg.mxu0
      %4662 = vmatprep.subr.bf16.mxu0 0
      %4663 = vmatpush1.bf16.msra.mxu0 %v3429
      %4664 = vmatprep.subr.bf16.mxu0 0
      %4665 = vmatpush1.bf16.msra.mxu0 %v3428
      %4666 = vmatprep.subr.bf16.mxu0 0
      %4667 = vmatpush1.bf16.msra.mxu0 %v3427
      %4668 = vmatprep.subr.bf16.mxu0 0
      %4669 = vmatpush1.bf16.msra.mxu0 %v3426
      %4670 = vmatprep.subr.bf16.mxu0 0
      %4671 = vmatpush1.bf16.msra.mxu0 %v3425
      %4672 = vmatprep.subr.bf16.mxu0 0
      %4673 = vmatpush1.bf16.msra.mxu0 %v3424
      %4674 = vmatprep.subr.bf16.mxu0 0
      %4675 = vmatpush1.bf16.msra.mxu0 %v3423
      %4676 = vmatprep.subr.bf16.mxu0 0
      %4677 = vmatpush1.bf16.msra.mxu0 %v3422
      %4678 = vmatprep.subr.bf16.mxu0 0
      %4679 = vmatpush2.bf16.msra.mxu0 %v3437
      %4680 = vmatprep.subr.bf16.mxu0 0
      %4681 = vmatpush2.bf16.msra.mxu0 %v3436
      %4682 = vmatprep.subr.bf16.mxu0 0
      %4683 = vmatpush2.bf16.msra.mxu0 %v3435
      %4684 = vmatprep.subr.bf16.mxu0 0
      %4685 = vmatpush2.bf16.msra.mxu0 %v3434
      %4686 = vmatprep.subr.bf16.mxu0 0
      %4687 = vmatpush2.bf16.msra.mxu0 %v3433
      %4688 = vmatprep.subr.bf16.mxu0 0
      %4689 = vmatpush2.bf16.msra.mxu0 %v3432
      %4690 = vmatprep.subr.bf16.mxu0 0
      %4691 = vmatpush2.bf16.msra.mxu0 %v3431
      %4692 = vmatprep.subr.bf16.mxu0 0
      %4693 = vmatpush2.bf16.msra.mxu0 %v3430
      %4694 = vmatprep.mubr.bf16.mxu0 %v1875
      %4695 = vmatmul.mubr.bf16.gmra.mxu0 %v1874
      %v4696 = vpop.f32.mrf.mxu0
      %v4697 = vadd.f32 %v4561, %v4696
      %v4698 = vpop.f32.mrf.mxu0
      %v4699 = vpop.f32.mrf.mxu0
      %v4700 = vadd.f32 %v4564, %v4699
      %v4701 = vpop.f32.mrf.mxu0
      %4702 = vmatprep.mubr.bf16.mxu0 %v1900
      %4703 = vmatmul.mubr.bf16.gmra.mxu0 %v1899
      %v4704 = vpop.f32.mrf.mxu0
      %v4705 = vadd.f32 %v4569, %v4704
      %v4706 = vpop.f32.mrf.mxu0
      %v4707 = vpop.f32.mrf.mxu0
      %v4708 = vadd.f32 %v4572, %v4707
      %v4709 = vpop.f32.mrf.mxu0
      %4710 = vmatprep.mubr.bf16.mxu0 %v1925
      %4711 = vmatmul.mubr.bf16.gmra.mxu0 %v1924
      %v4712 = vpop.f32.mrf.mxu0
      %v4713 = vadd.f32 %v4577, %v4712
      %v4714 = vpop.f32.mrf.mxu0
      %v4715 = vpop.f32.mrf.mxu0
      %v4716 = vadd.f32 %v4580, %v4715
      %v4717 = vpop.f32.mrf.mxu0
      %4718 = vmatprep.mubr.bf16.mxu0 %v1950
      %4719 = vmatmul.mubr.bf16.gmra.mxu0 %v1949
      %v4720 = vpop.f32.mrf.mxu0
      %v4721 = vadd.f32 %v4585, %v4720
      %v4722 = vpop.f32.mrf.mxu0
      %v4723 = vpop.f32.mrf.mxu0
      %v4724 = vadd.f32 %v4588, %v4723
      %v4725 = vpop.f32.mrf.mxu0
      %4726 = vmatprep.mubr.bf16.mxu0 %v1975
      %4727 = vmatmul.mubr.bf16.gmra.mxu0 %v1974
      %v4728 = vpop.f32.mrf.mxu0
      %v4729 = vadd.f32 %v4593, %v4728
      %v4730 = vpop.f32.mrf.mxu0
      %v4731 = vpop.f32.mrf.mxu0
      %v4732 = vadd.f32 %v4596, %v4731
      %v4733 = vpop.f32.mrf.mxu0
      %4734 = vmatprep.mubr.bf16.mxu0 %v2000
      %4735 = vmatmul.mubr.bf16.gmra.mxu0 %v1999
      %v4736 = vpop.f32.mrf.mxu0
      %v4737 = vadd.f32 %v4601, %v4736
      %v4738 = vpop.f32.mrf.mxu0
      %v4739 = vpop.f32.mrf.mxu0
      %v4740 = vadd.f32 %v4604, %v4739
      %v4741 = vpop.f32.mrf.mxu0
      %4742 = vmatprep.mubr.bf16.mxu0 %v2025
      %4743 = vmatmul.mubr.bf16.gmra.mxu0 %v2024
      %v4744 = vpop.f32.mrf.mxu0
      %v4745 = vadd.f32 %v4609, %v4744
      %v4746 = vpop.f32.mrf.mxu0
      %v4747 = vpop.f32.mrf.mxu0
      %v4748 = vadd.f32 %v4612, %v4747
      %v4749 = vpop.f32.mrf.mxu0
      %4750 = vmatprep.mubr.bf16.mxu0 %v2050
      %4751 = vmatmul.mubr.bf16.gmra.mxu0 %v2049
      %v4752 = vpop.f32.mrf.mxu0
      %v4753 = vadd.f32 %v4617, %v4752
      %v4754 = vpop.f32.mrf.mxu0
      %v4755 = vpop.f32.mrf.mxu0
      %v4756 = vadd.f32 %v4620, %v4755
      %v4757 = vpop.f32.mrf.mxu0
      %4758 = vmatprep.mubr.bf16.mxu0 %v2075
      %4759 = vmatmul.mubr.bf16.gmra.mxu0 %v2074
      %v4760 = vpop.f32.mrf.mxu0
      %v4761 = vadd.f32 %v4625, %v4760
      %v4762 = vpop.f32.mrf.mxu0
      %v4763 = vpop.f32.mrf.mxu0
      %v4764 = vadd.f32 %v4628, %v4763
      %v4765 = vpop.f32.mrf.mxu0
      %4766 = vmatprep.mubr.bf16.mxu0 %v2100
      %4767 = vmatmul.mubr.bf16.gmra.mxu0 %v2099
      %v4768 = vpop.f32.mrf.mxu0
      %v4769 = vadd.f32 %v4633, %v4768
      %v4770 = vpop.f32.mrf.mxu0
      %v4771 = vpop.f32.mrf.mxu0
      %v4772 = vadd.f32 %v4636, %v4771
      %v4773 = vpop.f32.mrf.mxu0
      %4774 = vmatprep.mubr.bf16.mxu0 %v2125
      %4775 = vmatmul.mubr.bf16.gmra.mxu0 %v2124
      %v4776 = vpop.f32.mrf.mxu0
      %v4777 = vadd.f32 %v4641, %v4776
      %v4778 = vpop.f32.mrf.mxu0
      %v4779 = vpop.f32.mrf.mxu0
      %v4780 = vadd.f32 %v4644, %v4779
      %v4781 = vpop.f32.mrf.mxu0
      %4782 = vmatprep.mubr.bf16.mxu0 %v2150
      %4783 = vmatmul.mubr.bf16.gmra.mxu0 %v2149
      %v4784 = vpop.f32.mrf.mxu0
      %v4785 = vadd.f32 %v4649, %v4784
      %v4786 = vpop.f32.mrf.mxu0
      %v4787 = vpop.f32.mrf.mxu0
      %v4788 = vadd.f32 %v4652, %v4787
      %v4789 = vpop.f32.mrf.mxu0
      %4790 = vmatprep.mubr.bf16.mxu0 %v2175
      %4791 = vmatmul.mubr.bf16.gmra.mxu0 %v2174
      %v4792 = vpop.f32.mrf.mxu0
      %v4793 = vadd.f32 %v4657, %v4792
      %v4794 = vpop.f32.mrf.mxu0
      %v4795 = vpop.f32.mrf.mxu0
      %v4796 = vpop.f32.mrf.mxu0
      %4797 = vdwg.mxu0
      %4798 = vmatprep.subr.bf16.mxu0 0
      %4799 = vmatpush1.bf16.msra.mxu0 %v3445
      %4800 = vmatprep.subr.bf16.mxu0 0
      %4801 = vmatpush1.bf16.msra.mxu0 %v3444
      %4802 = vmatprep.subr.bf16.mxu0 0
      %4803 = vmatpush1.bf16.msra.mxu0 %v3443
      %4804 = vmatprep.subr.bf16.mxu0 0
      %4805 = vmatpush1.bf16.msra.mxu0 %v3442
      %4806 = vmatprep.subr.bf16.mxu0 0
      %4807 = vmatpush1.bf16.msra.mxu0 %v3441
      %4808 = vmatprep.subr.bf16.mxu0 0
      %4809 = vmatpush1.bf16.msra.mxu0 %v3440
      %4810 = vmatprep.subr.bf16.mxu0 0
      %4811 = vmatpush1.bf16.msra.mxu0 %v3439
      %4812 = vmatprep.subr.bf16.mxu0 0
      %4813 = vmatpush1.bf16.msra.mxu0 %v3438
      %4814 = vmatprep.subr.bf16.mxu0 0
      %4815 = vmatpush2.bf16.msra.mxu0 %v3453
      %4816 = vmatprep.subr.bf16.mxu0 0
      %4817 = vmatpush2.bf16.msra.mxu0 %v3452
      %4818 = vmatprep.subr.bf16.mxu0 0
      %4819 = vmatpush2.bf16.msra.mxu0 %v3451
      %4820 = vmatprep.subr.bf16.mxu0 0
      %4821 = vmatpush2.bf16.msra.mxu0 %v3450
      %4822 = vmatprep.subr.bf16.mxu0 0
      %4823 = vmatpush2.bf16.msra.mxu0 %v3449
      %4824 = vmatprep.subr.bf16.mxu0 0
      %4825 = vmatpush2.bf16.msra.mxu0 %v3448
      %4826 = vmatprep.subr.bf16.mxu0 0
      %4827 = vmatpush2.bf16.msra.mxu0 %v3447
      %4828 = vmatprep.subr.bf16.mxu0 0
      %4829 = vmatpush2.bf16.msra.mxu0 %v3446
      %4830 = vmatprep.mubr.bf16.mxu0 %v1877
      %4831 = vmatmul.mubr.bf16.gmra.mxu0 %v1876
      %v4832 = vpop.f32.mrf.mxu0
      %v4833 = vadd.f32 %v4697, %v4832
      %v4834 = vpop.f32.mrf.mxu0
      %v4835 = vpop.f32.mrf.mxu0
      %v4836 = vadd.f32 %v4700, %v4835
      %v4837 = vpop.f32.mrf.mxu0
      %4838 = vmatprep.mubr.bf16.mxu0 %v1902
      %4839 = vmatmul.mubr.bf16.gmra.mxu0 %v1901
      %v4840 = vpop.f32.mrf.mxu0
      %v4841 = vadd.f32 %v4705, %v4840
      %v4842 = vpop.f32.mrf.mxu0
      %v4843 = vpop.f32.mrf.mxu0
      %v4844 = vadd.f32 %v4708, %v4843
      %v4845 = vpop.f32.mrf.mxu0
      %4846 = vmatprep.mubr.bf16.mxu0 %v1927
      %4847 = vmatmul.mubr.bf16.gmra.mxu0 %v1926
      %v4848 = vpop.f32.mrf.mxu0
      %v4849 = vadd.f32 %v4713, %v4848
      %v4850 = vpop.f32.mrf.mxu0
      %v4851 = vpop.f32.mrf.mxu0
      %v4852 = vadd.f32 %v4716, %v4851
      %v4853 = vpop.f32.mrf.mxu0
      %4854 = vmatprep.mubr.bf16.mxu0 %v1952
      %4855 = vmatmul.mubr.bf16.gmra.mxu0 %v1951
      %v4856 = vpop.f32.mrf.mxu0
      %v4857 = vadd.f32 %v4721, %v4856
      %v4858 = vpop.f32.mrf.mxu0
      %v4859 = vpop.f32.mrf.mxu0
      %v4860 = vadd.f32 %v4724, %v4859
      %v4861 = vpop.f32.mrf.mxu0
      %4862 = vmatprep.mubr.bf16.mxu0 %v1977
      %4863 = vmatmul.mubr.bf16.gmra.mxu0 %v1976
      %v4864 = vpop.f32.mrf.mxu0
      %v4865 = vadd.f32 %v4729, %v4864
      %v4866 = vpop.f32.mrf.mxu0
      %v4867 = vpop.f32.mrf.mxu0
      %v4868 = vadd.f32 %v4732, %v4867
      %v4869 = vpop.f32.mrf.mxu0
      %4870 = vmatprep.mubr.bf16.mxu0 %v2002
      %4871 = vmatmul.mubr.bf16.gmra.mxu0 %v2001
      %v4872 = vpop.f32.mrf.mxu0
      %v4873 = vadd.f32 %v4737, %v4872
      %v4874 = vpop.f32.mrf.mxu0
      %v4875 = vpop.f32.mrf.mxu0
      %v4876 = vadd.f32 %v4740, %v4875
      %v4877 = vpop.f32.mrf.mxu0
      %4878 = vmatprep.mubr.bf16.mxu0 %v2027
      %4879 = vmatmul.mubr.bf16.gmra.mxu0 %v2026
      %v4880 = vpop.f32.mrf.mxu0
      %v4881 = vadd.f32 %v4745, %v4880
      %v4882 = vpop.f32.mrf.mxu0
      %v4883 = vpop.f32.mrf.mxu0
      %v4884 = vadd.f32 %v4748, %v4883
      %v4885 = vpop.f32.mrf.mxu0
      %4886 = vmatprep.mubr.bf16.mxu0 %v2052
      %4887 = vmatmul.mubr.bf16.gmra.mxu0 %v2051
      %v4888 = vpop.f32.mrf.mxu0
      %v4889 = vadd.f32 %v4753, %v4888
      %v4890 = vpop.f32.mrf.mxu0
      %v4891 = vpop.f32.mrf.mxu0
      %v4892 = vadd.f32 %v4756, %v4891
      %v4893 = vpop.f32.mrf.mxu0
      %4894 = vmatprep.mubr.bf16.mxu0 %v2077
      %4895 = vmatmul.mubr.bf16.gmra.mxu0 %v2076
      %v4896 = vpop.f32.mrf.mxu0
      %v4897 = vadd.f32 %v4761, %v4896
      %v4898 = vpop.f32.mrf.mxu0
      %v4899 = vpop.f32.mrf.mxu0
      %v4900 = vadd.f32 %v4764, %v4899
      %v4901 = vpop.f32.mrf.mxu0
      %4902 = vmatprep.mubr.bf16.mxu0 %v2102
      %4903 = vmatmul.mubr.bf16.gmra.mxu0 %v2101
      %v4904 = vpop.f32.mrf.mxu0
      %v4905 = vadd.f32 %v4769, %v4904
      %v4906 = vpop.f32.mrf.mxu0
      %v4907 = vpop.f32.mrf.mxu0
      %v4908 = vadd.f32 %v4772, %v4907
      %v4909 = vpop.f32.mrf.mxu0
      %4910 = vmatprep.mubr.bf16.mxu0 %v2127
      %4911 = vmatmul.mubr.bf16.gmra.mxu0 %v2126
      %v4912 = vpop.f32.mrf.mxu0
      %v4913 = vadd.f32 %v4777, %v4912
      %v4914 = vpop.f32.mrf.mxu0
      %v4915 = vpop.f32.mrf.mxu0
      %v4916 = vadd.f32 %v4780, %v4915
      %v4917 = vpop.f32.mrf.mxu0
      %4918 = vmatprep.mubr.bf16.mxu0 %v2152
      %4919 = vmatmul.mubr.bf16.gmra.mxu0 %v2151
      %v4920 = vpop.f32.mrf.mxu0
      %v4921 = vadd.f32 %v4785, %v4920
      %v4922 = vpop.f32.mrf.mxu0
      %v4923 = vpop.f32.mrf.mxu0
      %v4924 = vadd.f32 %v4788, %v4923
      %v4925 = vpop.f32.mrf.mxu0
      %4926 = vmatprep.mubr.bf16.mxu0 %v2177
      %4927 = vmatmul.mubr.bf16.gmra.mxu0 %v2176
      %v4928 = vpop.f32.mrf.mxu0
      %v4929 = vadd.f32 %v4793, %v4928
      %v4930 = vpop.f32.mrf.mxu0
      %v4931 = vpop.f32.mrf.mxu0
      %v4932 = vpop.f32.mrf.mxu0
      %4933 = vdwg.mxu0
      %4934 = vmatprep.subr.bf16.mxu0 0
      %4935 = vmatpush1.bf16.msra.mxu0 %v3461
      %4936 = vmatprep.subr.bf16.mxu0 0
      %4937 = vmatpush1.bf16.msra.mxu0 %v3460
      %4938 = vmatprep.subr.bf16.mxu0 0
      %4939 = vmatpush1.bf16.msra.mxu0 %v3459
      %4940 = vmatprep.subr.bf16.mxu0 0
      %4941 = vmatpush1.bf16.msra.mxu0 %v3458
      %4942 = vmatprep.subr.bf16.mxu0 0
      %4943 = vmatpush1.bf16.msra.mxu0 %v3457
      %4944 = vmatprep.subr.bf16.mxu0 0
      %4945 = vmatpush1.bf16.msra.mxu0 %v3456
      %4946 = vmatprep.subr.bf16.mxu0 0
      %4947 = vmatpush1.bf16.msra.mxu0 %v3455
      %4948 = vmatprep.subr.bf16.mxu0 0
      %4949 = vmatpush1.bf16.msra.mxu0 %v3454
      %4950 = vmatprep.subr.bf16.mxu0 0
      %4951 = vmatpush2.bf16.msra.mxu0 %v3469
      %4952 = vmatprep.subr.bf16.mxu0 0
      %4953 = vmatpush2.bf16.msra.mxu0 %v3468
      %4954 = vmatprep.subr.bf16.mxu0 0
      %4955 = vmatpush2.bf16.msra.mxu0 %v3467
      %4956 = vmatprep.subr.bf16.mxu0 0
      %4957 = vmatpush2.bf16.msra.mxu0 %v3466
      %4958 = vmatprep.subr.bf16.mxu0 0
      %4959 = vmatpush2.bf16.msra.mxu0 %v3465
      %4960 = vmatprep.subr.bf16.mxu0 0
      %4961 = vmatpush2.bf16.msra.mxu0 %v3464
      %4962 = vmatprep.subr.bf16.mxu0 0
      %4963 = vmatpush2.bf16.msra.mxu0 %v3463
      %4964 = vmatprep.subr.bf16.mxu0 0
      %4965 = vmatpush2.bf16.msra.mxu0 %v3462
      %4966 = vmatprep.mubr.bf16.mxu0 %v1879
      %4967 = vmatmul.mubr.bf16.gmra.mxu0 %v1878
      %v4968 = vpop.f32.mrf.mxu0
      %v4969 = vadd.f32 %v4833, %v4968
      %v4970 = vpop.f32.mrf.mxu0
      %v4971 = vpop.f32.mrf.mxu0
      %v4972 = vadd.f32 %v4836, %v4971
      %v4973 = vpop.f32.mrf.mxu0
      %4974 = vmatprep.mubr.bf16.mxu0 %v1904
      %4975 = vmatmul.mubr.bf16.gmra.mxu0 %v1903
      %v4976 = vpop.f32.mrf.mxu0
      %v4977 = vadd.f32 %v4841, %v4976
      %v4978 = vpop.f32.mrf.mxu0
      %v4979 = vpop.f32.mrf.mxu0
      %v4980 = vadd.f32 %v4844, %v4979
      %v4981 = vpop.f32.mrf.mxu0
      %4982 = vmatprep.mubr.bf16.mxu0 %v1929
      %4983 = vmatmul.mubr.bf16.gmra.mxu0 %v1928
      %v4984 = vpop.f32.mrf.mxu0
      %v4985 = vadd.f32 %v4849, %v4984
      %v4986 = vpop.f32.mrf.mxu0
      %v4987 = vpop.f32.mrf.mxu0
      %v4988 = vadd.f32 %v4852, %v4987
      %v4989 = vpop.f32.mrf.mxu0
      %4990 = vmatprep.mubr.bf16.mxu0 %v1954
      %4991 = vmatmul.mubr.bf16.gmra.mxu0 %v1953
      %v4992 = vpop.f32.mrf.mxu0
      %v4993 = vadd.f32 %v4857, %v4992
      %v4994 = vpop.f32.mrf.mxu0
      %v4995 = vpop.f32.mrf.mxu0
      %v4996 = vadd.f32 %v4860, %v4995
      %v4997 = vpop.f32.mrf.mxu0
      %4998 = vmatprep.mubr.bf16.mxu0 %v1979
      %4999 = vmatmul.mubr.bf16.gmra.mxu0 %v1978
      %v5000 = vpop.f32.mrf.mxu0
      %v5001 = vadd.f32 %v4865, %v5000
      %v5002 = vpop.f32.mrf.mxu0
      %v5003 = vpop.f32.mrf.mxu0
      %v5004 = vadd.f32 %v4868, %v5003
      %v5005 = vpop.f32.mrf.mxu0
      %5006 = vmatprep.mubr.bf16.mxu0 %v2004
      %5007 = vmatmul.mubr.bf16.gmra.mxu0 %v2003
      %v5008 = vpop.f32.mrf.mxu0
      %v5009 = vadd.f32 %v4873, %v5008
      %v5010 = vpop.f32.mrf.mxu0
      %v5011 = vpop.f32.mrf.mxu0
      %v5012 = vadd.f32 %v4876, %v5011
      %v5013 = vpop.f32.mrf.mxu0
      %5014 = vmatprep.mubr.bf16.mxu0 %v2029
      %5015 = vmatmul.mubr.bf16.gmra.mxu0 %v2028
      %v5016 = vpop.f32.mrf.mxu0
      %v5017 = vadd.f32 %v4881, %v5016
      %v5018 = vpop.f32.mrf.mxu0
      %v5019 = vpop.f32.mrf.mxu0
      %v5020 = vadd.f32 %v4884, %v5019
      %v5021 = vpop.f32.mrf.mxu0
      %5022 = vmatprep.mubr.bf16.mxu0 %v2054
      %5023 = vmatmul.mubr.bf16.gmra.mxu0 %v2053
      %v5024 = vpop.f32.mrf.mxu0
      %v5025 = vadd.f32 %v4889, %v5024
      %v5026 = vpop.f32.mrf.mxu0
      %v5027 = vpop.f32.mrf.mxu0
      %v5028 = vadd.f32 %v4892, %v5027
      %v5029 = vpop.f32.mrf.mxu0
      %5030 = vmatprep.mubr.bf16.mxu0 %v2079
      %5031 = vmatmul.mubr.bf16.gmra.mxu0 %v2078
      %v5032 = vpop.f32.mrf.mxu0
      %v5033 = vadd.f32 %v4897, %v5032
      %v5034 = vpop.f32.mrf.mxu0
      %v5035 = vpop.f32.mrf.mxu0
      %v5036 = vadd.f32 %v4900, %v5035
      %v5037 = vpop.f32.mrf.mxu0
      %5038 = vmatprep.mubr.bf16.mxu0 %v2104
      %5039 = vmatmul.mubr.bf16.gmra.mxu0 %v2103
      %v5040 = vpop.f32.mrf.mxu0
      %v5041 = vadd.f32 %v4905, %v5040
      %v5042 = vpop.f32.mrf.mxu0
      %v5043 = vpop.f32.mrf.mxu0
      %v5044 = vadd.f32 %v4908, %v5043
      %v5045 = vpop.f32.mrf.mxu0
      %5046 = vmatprep.mubr.bf16.mxu0 %v2129
      %5047 = vmatmul.mubr.bf16.gmra.mxu0 %v2128
      %v5048 = vpop.f32.mrf.mxu0
      %v5049 = vadd.f32 %v4913, %v5048
      %v5050 = vpop.f32.mrf.mxu0
      %v5051 = vpop.f32.mrf.mxu0
      %v5052 = vadd.f32 %v4916, %v5051
      %v5053 = vpop.f32.mrf.mxu0
      %5054 = vmatprep.mubr.bf16.mxu0 %v2154
      %5055 = vmatmul.mubr.bf16.gmra.mxu0 %v2153
      %v5056 = vpop.f32.mrf.mxu0
      %v5057 = vadd.f32 %v4921, %v5056
      %v5058 = vpop.f32.mrf.mxu0
      %v5059 = vpop.f32.mrf.mxu0
      %v5060 = vadd.f32 %v4924, %v5059
      %v5061 = vpop.f32.mrf.mxu0
      %5062 = vmatprep.mubr.bf16.mxu0 %v2179
      %5063 = vmatmul.mubr.bf16.gmra.mxu0 %v2178
      %v5064 = vpop.f32.mrf.mxu0
      %v5065 = vadd.f32 %v4929, %v5064
      %v5066 = vpop.f32.mrf.mxu0
      %v5067 = vpop.f32.mrf.mxu0
      %v5068 = vpop.f32.mrf.mxu0
      %5069 = vdwg.mxu0
      %5070 = vmatprep.subr.bf16.mxu0 0
      %5071 = vmatpush1.bf16.msra.mxu0 %v3477
      %5072 = vmatprep.subr.bf16.mxu0 0
      %5073 = vmatpush1.bf16.msra.mxu0 %v3476
      %5074 = vmatprep.subr.bf16.mxu0 0
      %5075 = vmatpush1.bf16.msra.mxu0 %v3475
      %5076 = vmatprep.subr.bf16.mxu0 0
      %5077 = vmatpush1.bf16.msra.mxu0 %v3474
      %5078 = vmatprep.subr.bf16.mxu0 0
      %5079 = vmatpush1.bf16.msra.mxu0 %v3473
      %5080 = vmatprep.subr.bf16.mxu0 0
      %5081 = vmatpush1.bf16.msra.mxu0 %v3472
      %5082 = vmatprep.subr.bf16.mxu0 0
      %5083 = vmatpush1.bf16.msra.mxu0 %v3471
      %5084 = vmatprep.subr.bf16.mxu0 0
      %5085 = vmatpush1.bf16.msra.mxu0 %v3470
      %5086 = vmatprep.subr.bf16.mxu0 0
      %5087 = vmatpush2.bf16.msra.mxu0 %v3485
      %5088 = vmatprep.subr.bf16.mxu0 0
      %5089 = vmatpush2.bf16.msra.mxu0 %v3484
      %5090 = vmatprep.subr.bf16.mxu0 0
      %5091 = vmatpush2.bf16.msra.mxu0 %v3483
      %5092 = vmatprep.subr.bf16.mxu0 0
      %5093 = vmatpush2.bf16.msra.mxu0 %v3482
      %5094 = vmatprep.subr.bf16.mxu0 0
      %5095 = vmatpush2.bf16.msra.mxu0 %v3481
      %5096 = vmatprep.subr.bf16.mxu0 0
      %5097 = vmatpush2.bf16.msra.mxu0 %v3480
      %5098 = vmatprep.subr.bf16.mxu0 0
      %5099 = vmatpush2.bf16.msra.mxu0 %v3479
      %5100 = vmatprep.subr.bf16.mxu0 0
      %5101 = vmatpush2.bf16.msra.mxu0 %v3478
      %5102 = vmatprep.mubr.bf16.mxu0 %v1881
      %5103 = vmatmul.mubr.bf16.gmra.mxu0 %v1880
      %v5104 = vpop.f32.mrf.mxu0
      %v5105 = vadd.f32 %v4969, %v5104
      %v5106 = vpop.f32.mrf.mxu0
      %v5107 = vpop.f32.mrf.mxu0
      %v5108 = vadd.f32 %v4972, %v5107
      %v5109 = vpop.f32.mrf.mxu0
      %5110 = vmatprep.mubr.bf16.mxu0 %v1906
      %5111 = vmatmul.mubr.bf16.gmra.mxu0 %v1905
      %v5112 = vpop.f32.mrf.mxu0
      %v5113 = vadd.f32 %v4977, %v5112
      %v5114 = vpop.f32.mrf.mxu0
      %v5115 = vpop.f32.mrf.mxu0
      %v5116 = vadd.f32 %v4980, %v5115
      %v5117 = vpop.f32.mrf.mxu0
      %5118 = vmatprep.mubr.bf16.mxu0 %v1931
      %5119 = vmatmul.mubr.bf16.gmra.mxu0 %v1930
      %v5120 = vpop.f32.mrf.mxu0
      %v5121 = vadd.f32 %v4985, %v5120
      %v5122 = vpop.f32.mrf.mxu0
      %v5123 = vpop.f32.mrf.mxu0
      %v5124 = vadd.f32 %v4988, %v5123
      %v5125 = vpop.f32.mrf.mxu0
      %5126 = vmatprep.mubr.bf16.mxu0 %v1956
      %5127 = vmatmul.mubr.bf16.gmra.mxu0 %v1955
      %v5128 = vpop.f32.mrf.mxu0
      %v5129 = vadd.f32 %v4993, %v5128
      %v5130 = vpop.f32.mrf.mxu0
      %v5131 = vpop.f32.mrf.mxu0
      %v5132 = vadd.f32 %v4996, %v5131
      %v5133 = vpop.f32.mrf.mxu0
      %5134 = vmatprep.mubr.bf16.mxu0 %v1981
      %5135 = vmatmul.mubr.bf16.gmra.mxu0 %v1980
      %v5136 = vpop.f32.mrf.mxu0
      %v5137 = vadd.f32 %v5001, %v5136
      %v5138 = vpop.f32.mrf.mxu0
      %v5139 = vpop.f32.mrf.mxu0
      %v5140 = vadd.f32 %v5004, %v5139
      %v5141 = vpop.f32.mrf.mxu0
      %5142 = vmatprep.mubr.bf16.mxu0 %v2006
      %5143 = vmatmul.mubr.bf16.gmra.mxu0 %v2005
      %v5144 = vpop.f32.mrf.mxu0
      %v5145 = vadd.f32 %v5009, %v5144
      %v5146 = vpop.f32.mrf.mxu0
      %v5147 = vpop.f32.mrf.mxu0
      %v5148 = vadd.f32 %v5012, %v5147
      %v5149 = vpop.f32.mrf.mxu0
      %5150 = vmatprep.mubr.bf16.mxu0 %v2031
      %5151 = vmatmul.mubr.bf16.gmra.mxu0 %v2030
      %v5152 = vpop.f32.mrf.mxu0
      %v5153 = vadd.f32 %v5017, %v5152
      %v5154 = vpop.f32.mrf.mxu0
      %v5155 = vpop.f32.mrf.mxu0
      %v5156 = vadd.f32 %v5020, %v5155
      %v5157 = vpop.f32.mrf.mxu0
      %5158 = vmatprep.mubr.bf16.mxu0 %v2056
      %5159 = vmatmul.mubr.bf16.gmra.mxu0 %v2055
      %v5160 = vpop.f32.mrf.mxu0
      %v5161 = vadd.f32 %v5025, %v5160
      %v5162 = vpop.f32.mrf.mxu0
      %v5163 = vpop.f32.mrf.mxu0
      %v5164 = vadd.f32 %v5028, %v5163
      %v5165 = vpop.f32.mrf.mxu0
      %5166 = vmatprep.mubr.bf16.mxu0 %v2081
      %5167 = vmatmul.mubr.bf16.gmra.mxu0 %v2080
      %v5168 = vpop.f32.mrf.mxu0
      %v5169 = vadd.f32 %v5033, %v5168
      %v5170 = vpop.f32.mrf.mxu0
      %v5171 = vpop.f32.mrf.mxu0
      %v5172 = vadd.f32 %v5036, %v5171
      %v5173 = vpop.f32.mrf.mxu0
      %5174 = vmatprep.mubr.bf16.mxu0 %v2106
      %5175 = vmatmul.mubr.bf16.gmra.mxu0 %v2105
      %v5176 = vpop.f32.mrf.mxu0
      %v5177 = vadd.f32 %v5041, %v5176
      %v5178 = vpop.f32.mrf.mxu0
      %v5179 = vpop.f32.mrf.mxu0
      %v5180 = vadd.f32 %v5044, %v5179
      %v5181 = vpop.f32.mrf.mxu0
      %5182 = vmatprep.mubr.bf16.mxu0 %v2131
      %5183 = vmatmul.mubr.bf16.gmra.mxu0 %v2130
      %v5184 = vpop.f32.mrf.mxu0
      %v5185 = vadd.f32 %v5049, %v5184
      %v5186 = vpop.f32.mrf.mxu0
      %v5187 = vpop.f32.mrf.mxu0
      %v5188 = vadd.f32 %v5052, %v5187
      %v5189 = vpop.f32.mrf.mxu0
      %5190 = vmatprep.mubr.bf16.mxu0 %v2156
      %5191 = vmatmul.mubr.bf16.gmra.mxu0 %v2155
      %v5192 = vpop.f32.mrf.mxu0
      %v5193 = vadd.f32 %v5057, %v5192
      %v5194 = vpop.f32.mrf.mxu0
      %v5195 = vpop.f32.mrf.mxu0
      %v5196 = vadd.f32 %v5060, %v5195
      %v5197 = vpop.f32.mrf.mxu0
      %5198 = vmatprep.mubr.bf16.mxu0 %v2181
      %5199 = vmatmul.mubr.bf16.gmra.mxu0 %v2180
      %v5200 = vpop.f32.mrf.mxu0
      %v5201 = vadd.f32 %v5065, %v5200
      %v5202 = vpop.f32.mrf.mxu0
      %v5203 = vpop.f32.mrf.mxu0
      %v5204 = vpop.f32.mrf.mxu0
      %5205 = vdwg.mxu0
      %5206 = vmatprep.subr.bf16.mxu0 0
      %5207 = vmatpush1.bf16.msra.mxu0 %v3493
      %5208 = vmatprep.subr.bf16.mxu0 0
      %5209 = vmatpush1.bf16.msra.mxu0 %v3492
      %5210 = vmatprep.subr.bf16.mxu0 0
      %5211 = vmatpush1.bf16.msra.mxu0 %v3491
      %5212 = vmatprep.subr.bf16.mxu0 0
      %5213 = vmatpush1.bf16.msra.mxu0 %v3490
      %5214 = vmatprep.subr.bf16.mxu0 0
      %5215 = vmatpush1.bf16.msra.mxu0 %v3489
      %5216 = vmatprep.subr.bf16.mxu0 0
      %5217 = vmatpush1.bf16.msra.mxu0 %v3488
      %5218 = vmatprep.subr.bf16.mxu0 0
      %5219 = vmatpush1.bf16.msra.mxu0 %v3487
      %5220 = vmatprep.subr.bf16.mxu0 0
      %5221 = vmatpush1.bf16.msra.mxu0 %v3486
      %5222 = vmatprep.subr.bf16.mxu0 0
      %5223 = vmatpush2.bf16.msra.mxu0 %v3501
      %5224 = vmatprep.subr.bf16.mxu0 0
      %5225 = vmatpush2.bf16.msra.mxu0 %v3500
      %5226 = vmatprep.subr.bf16.mxu0 0
      %5227 = vmatpush2.bf16.msra.mxu0 %v3499
      %5228 = vmatprep.subr.bf16.mxu0 0
      %5229 = vmatpush2.bf16.msra.mxu0 %v3498
      %5230 = vmatprep.subr.bf16.mxu0 0
      %5231 = vmatpush2.bf16.msra.mxu0 %v3497
      %5232 = vmatprep.subr.bf16.mxu0 0
      %5233 = vmatpush2.bf16.msra.mxu0 %v3496
      %5234 = vmatprep.subr.bf16.mxu0 0
      %5235 = vmatpush2.bf16.msra.mxu0 %v3495
      %5236 = vmatprep.subr.bf16.mxu0 0
      %5237 = vmatpush2.bf16.msra.mxu0 %v3494
      %5238 = vmatprep.mubr.bf16.mxu0 %v1883
      %5239 = vmatmul.mubr.bf16.gmra.mxu0 %v1882
      %v5240 = vpop.f32.mrf.mxu0
      %v5241 = vadd.f32 %v5105, %v5240
      %v5242 = vpop.f32.mrf.mxu0
      %v5243 = vpop.f32.mrf.mxu0
      %v5244 = vadd.f32 %v5108, %v5243
      %v5245 = vpop.f32.mrf.mxu0
      %5246 = vmatprep.mubr.bf16.mxu0 %v1908
      %5247 = vmatmul.mubr.bf16.gmra.mxu0 %v1907
      %v5248 = vpop.f32.mrf.mxu0
      %v5249 = vadd.f32 %v5113, %v5248
      %v5250 = vpop.f32.mrf.mxu0
      %v5251 = vpop.f32.mrf.mxu0
      %v5252 = vadd.f32 %v5116, %v5251
      %v5253 = vpop.f32.mrf.mxu0
      %5254 = vmatprep.mubr.bf16.mxu0 %v1933
      %5255 = vmatmul.mubr.bf16.gmra.mxu0 %v1932
      %v5256 = vpop.f32.mrf.mxu0
      %v5257 = vadd.f32 %v5121, %v5256
      %v5258 = vpop.f32.mrf.mxu0
      %v5259 = vpop.f32.mrf.mxu0
      %v5260 = vadd.f32 %v5124, %v5259
      %v5261 = vpop.f32.mrf.mxu0
      %5262 = vmatprep.mubr.bf16.mxu0 %v1958
      %5263 = vmatmul.mubr.bf16.gmra.mxu0 %v1957
      %v5264 = vpop.f32.mrf.mxu0
      %v5265 = vadd.f32 %v5129, %v5264
      %v5266 = vpop.f32.mrf.mxu0
      %v5267 = vpop.f32.mrf.mxu0
      %v5268 = vadd.f32 %v5132, %v5267
      %v5269 = vpop.f32.mrf.mxu0
      %5270 = vmatprep.mubr.bf16.mxu0 %v1983
      %5271 = vmatmul.mubr.bf16.gmra.mxu0 %v1982
      %v5272 = vpop.f32.mrf.mxu0
      %v5273 = vadd.f32 %v5137, %v5272
      %v5274 = vpop.f32.mrf.mxu0
      %v5275 = vpop.f32.mrf.mxu0
      %v5276 = vadd.f32 %v5140, %v5275
      %v5277 = vpop.f32.mrf.mxu0
      %5278 = vmatprep.mubr.bf16.mxu0 %v2008
      %5279 = vmatmul.mubr.bf16.gmra.mxu0 %v2007
      %v5280 = vpop.f32.mrf.mxu0
      %v5281 = vadd.f32 %v5145, %v5280
      %v5282 = vpop.f32.mrf.mxu0
      %v5283 = vpop.f32.mrf.mxu0
      %v5284 = vadd.f32 %v5148, %v5283
      %v5285 = vpop.f32.mrf.mxu0
      %5286 = vmatprep.mubr.bf16.mxu0 %v2033
      %5287 = vmatmul.mubr.bf16.gmra.mxu0 %v2032
      %v5288 = vpop.f32.mrf.mxu0
      %v5289 = vadd.f32 %v5153, %v5288
      %v5290 = vpop.f32.mrf.mxu0
      %v5291 = vpop.f32.mrf.mxu0
      %v5292 = vadd.f32 %v5156, %v5291
      %v5293 = vpop.f32.mrf.mxu0
      %5294 = vmatprep.mubr.bf16.mxu0 %v2058
      %5295 = vmatmul.mubr.bf16.gmra.mxu0 %v2057
      %v5296 = vpop.f32.mrf.mxu0
      %v5297 = vadd.f32 %v5161, %v5296
      %v5298 = vpop.f32.mrf.mxu0
      %v5299 = vpop.f32.mrf.mxu0
      %v5300 = vadd.f32 %v5164, %v5299
      %v5301 = vpop.f32.mrf.mxu0
      %5302 = vmatprep.mubr.bf16.mxu0 %v2083
      %5303 = vmatmul.mubr.bf16.gmra.mxu0 %v2082
      %v5304 = vpop.f32.mrf.mxu0
      %v5305 = vadd.f32 %v5169, %v5304
      %v5306 = vpop.f32.mrf.mxu0
      %v5307 = vpop.f32.mrf.mxu0
      %v5308 = vadd.f32 %v5172, %v5307
      %v5309 = vpop.f32.mrf.mxu0
      %5310 = vmatprep.mubr.bf16.mxu0 %v2108
      %5311 = vmatmul.mubr.bf16.gmra.mxu0 %v2107
      %v5312 = vpop.f32.mrf.mxu0
      %v5313 = vadd.f32 %v5177, %v5312
      %v5314 = vpop.f32.mrf.mxu0
      %v5315 = vpop.f32.mrf.mxu0
      %v5316 = vadd.f32 %v5180, %v5315
      %v5317 = vpop.f32.mrf.mxu0
      %5318 = vmatprep.mubr.bf16.mxu0 %v2133
      %5319 = vmatmul.mubr.bf16.gmra.mxu0 %v2132
      %v5320 = vpop.f32.mrf.mxu0
      %v5321 = vadd.f32 %v5185, %v5320
      %v5322 = vpop.f32.mrf.mxu0
      %v5323 = vpop.f32.mrf.mxu0
      %v5324 = vadd.f32 %v5188, %v5323
      %v5325 = vpop.f32.mrf.mxu0
      %5326 = vmatprep.mubr.bf16.mxu0 %v2158
      %5327 = vmatmul.mubr.bf16.gmra.mxu0 %v2157
      %v5328 = vpop.f32.mrf.mxu0
      %v5329 = vadd.f32 %v5193, %v5328
      %v5330 = vpop.f32.mrf.mxu0
      %v5331 = vpop.f32.mrf.mxu0
      %v5332 = vadd.f32 %v5196, %v5331
      %v5333 = vpop.f32.mrf.mxu0
      %5334 = vmatprep.mubr.bf16.mxu0 %v2183
      %5335 = vmatmul.mubr.bf16.gmra.mxu0 %v2182
      %v5336 = vpop.f32.mrf.mxu0
      %v5337 = vadd.f32 %v5201, %v5336
      %v5338 = vpop.f32.mrf.mxu0
      %v5339 = vpop.f32.mrf.mxu0
      %v5340 = vpop.f32.mrf.mxu0
      %5341 = vdwg.mxu0
      %5342 = vmatprep.subr.bf16.mxu0 0
      %5343 = vmatpush1.bf16.msra.mxu0 %v3509
      %5344 = vmatprep.subr.bf16.mxu0 0
      %5345 = vmatpush1.bf16.msra.mxu0 %v3508
      %5346 = vmatprep.subr.bf16.mxu0 0
      %5347 = vmatpush1.bf16.msra.mxu0 %v3507
      %5348 = vmatprep.subr.bf16.mxu0 0
      %5349 = vmatpush1.bf16.msra.mxu0 %v3506
      %5350 = vmatprep.subr.bf16.mxu0 0
      %5351 = vmatpush1.bf16.msra.mxu0 %v3505
      %5352 = vmatprep.subr.bf16.mxu0 0
      %5353 = vmatpush1.bf16.msra.mxu0 %v3504
      %5354 = vmatprep.subr.bf16.mxu0 0
      %5355 = vmatpush1.bf16.msra.mxu0 %v3503
      %5356 = vmatprep.subr.bf16.mxu0 0
      %5357 = vmatpush1.bf16.msra.mxu0 %v3502
      %5358 = vmatprep.subr.bf16.mxu0 0
      %5359 = vmatpush2.bf16.msra.mxu0 0
      %5360 = vmatprep.subr.bf16.mxu0 0
      %5361 = vmatpush2.bf16.msra.mxu0 0
      %5362 = vmatprep.subr.bf16.mxu0 0
      %5363 = vmatpush2.bf16.msra.mxu0 0
      %5364 = vmatprep.subr.bf16.mxu0 0
      %5365 = vmatpush2.bf16.msra.mxu0 0
      %5366 = vmatprep.subr.bf16.mxu0 0
      %5367 = vmatpush2.bf16.msra.mxu0 0
      %5368 = vmatprep.subr.bf16.mxu0 0
      %5369 = vmatpush2.bf16.msra.mxu0 0
      %5370 = vmatprep.subr.bf16.mxu0 0
      %5371 = vmatpush2.bf16.msra.mxu0 0
      %5372 = vmatprep.subr.bf16.mxu0 0
      %5373 = vmatpush2.bf16.msra.mxu0 0
      %5374 = vmatprep.mubr.bf16.mxu0 0
      %5375 = vmatmul.mubr.bf16.gmra.mxu0 %v1884
      %v5376 = vpop.f32.mrf.mxu0
      %v5377 = vadd.f32 %v5241, %v5376
      %v5378 = vpop.f32.mrf.mxu0
      %v5379 = vpop.f32.mrf.mxu0
      %v5380 = vadd.f32 %v5244, %v5379
      %v5381 = vpop.f32.mrf.mxu0
      %5382 = vmatprep.mubr.bf16.mxu0 0
      %5383 = vmatmul.mubr.bf16.gmra.mxu0 %v1909
      %v5384 = vpop.f32.mrf.mxu0
      %v5385 = vadd.f32 %v5249, %v5384
      %v5386 = vpop.f32.mrf.mxu0
      %v5387 = vpop.f32.mrf.mxu0
      %v5388 = vadd.f32 %v5252, %v5387
      %v5389 = vpop.f32.mrf.mxu0
      %5390 = vmatprep.mubr.bf16.mxu0 0
      %5391 = vmatmul.mubr.bf16.gmra.mxu0 %v1934
      %v5392 = vpop.f32.mrf.mxu0
      %v5393 = vadd.f32 %v5257, %v5392
      %v5394 = vpop.f32.mrf.mxu0
      %v5395 = vpop.f32.mrf.mxu0
      %v5396 = vadd.f32 %v5260, %v5395
      %v5397 = vpop.f32.mrf.mxu0
      %5398 = vmatprep.mubr.bf16.mxu0 0
      %5399 = vmatmul.mubr.bf16.gmra.mxu0 %v1959
      %v5400 = vpop.f32.mrf.mxu0
      %v5401 = vadd.f32 %v5265, %v5400
      %v5402 = vpop.f32.mrf.mxu0
      %v5403 = vpop.f32.mrf.mxu0
      %v5404 = vadd.f32 %v5268, %v5403
      %v5405 = vpop.f32.mrf.mxu0
      %5406 = vmatprep.mubr.bf16.mxu0 0
      %5407 = vmatmul.mubr.bf16.gmra.mxu0 %v1984
      %v5408 = vpop.f32.mrf.mxu0
      %v5409 = vadd.f32 %v5273, %v5408
      %v5410 = vpop.f32.mrf.mxu0
      %v5411 = vpop.f32.mrf.mxu0
      %v5412 = vadd.f32 %v5276, %v5411
      %v5413 = vpop.f32.mrf.mxu0
      %5414 = vmatprep.mubr.bf16.mxu0 0
      %5415 = vmatmul.mubr.bf16.gmra.mxu0 %v2009
      %v5416 = vpop.f32.mrf.mxu0
      %v5417 = vadd.f32 %v5281, %v5416
      %v5418 = vpop.f32.mrf.mxu0
      %v5419 = vpop.f32.mrf.mxu0
      %v5420 = vadd.f32 %v5284, %v5419
      %v5421 = vpop.f32.mrf.mxu0
      %5422 = vmatprep.mubr.bf16.mxu0 0
      %5423 = vmatmul.mubr.bf16.gmra.mxu0 %v2034
      %v5424 = vpop.f32.mrf.mxu0
      %v5425 = vadd.f32 %v5289, %v5424
      %v5426 = vpop.f32.mrf.mxu0
      %v5427 = vpop.f32.mrf.mxu0
      %v5428 = vadd.f32 %v5292, %v5427
      %v5429 = vpop.f32.mrf.mxu0
      %5430 = vmatprep.mubr.bf16.mxu0 0
      %5431 = vmatmul.mubr.bf16.gmra.mxu0 %v2059
      %v5432 = vpop.f32.mrf.mxu0
      %v5433 = vadd.f32 %v5297, %v5432
      %v5434 = vpop.f32.mrf.mxu0
      %v5435 = vpop.f32.mrf.mxu0
      %v5436 = vadd.f32 %v5300, %v5435
      %v5437 = vpop.f32.mrf.mxu0
      %5438 = vmatprep.mubr.bf16.mxu0 0
      %5439 = vmatmul.mubr.bf16.gmra.mxu0 %v2084
      %v5440 = vpop.f32.mrf.mxu0
      %v5441 = vadd.f32 %v5305, %v5440
      %v5442 = vpop.f32.mrf.mxu0
      %v5443 = vpop.f32.mrf.mxu0
      %v5444 = vadd.f32 %v5308, %v5443
      %v5445 = vpop.f32.mrf.mxu0
      %5446 = vmatprep.mubr.bf16.mxu0 0
      %5447 = vmatmul.mubr.bf16.gmra.mxu0 %v2109
      %v5448 = vpop.f32.mrf.mxu0
      %v5449 = vadd.f32 %v5313, %v5448
      %v5450 = vpop.f32.mrf.mxu0
      %v5451 = vpop.f32.mrf.mxu0
      %v5452 = vadd.f32 %v5316, %v5451
      %v5453 = vpop.f32.mrf.mxu0
      %5454 = vmatprep.mubr.bf16.mxu0 0
      %5455 = vmatmul.mubr.bf16.gmra.mxu0 %v2134
      %v5456 = vpop.f32.mrf.mxu0
      %v5457 = vadd.f32 %v5321, %v5456
      %v5458 = vpop.f32.mrf.mxu0
      %v5459 = vpop.f32.mrf.mxu0
      %v5460 = vadd.f32 %v5324, %v5459
      %v5461 = vpop.f32.mrf.mxu0
      %5462 = vmatprep.mubr.bf16.mxu0 0
      %5463 = vmatmul.mubr.bf16.gmra.mxu0 %v2159
      %v5464 = vpop.f32.mrf.mxu0
      %v5465 = vadd.f32 %v5329, %v5464
      %v5466 = vpop.f32.mrf.mxu0
      %v5467 = vpop.f32.mrf.mxu0
      %v5468 = vadd.f32 %v5332, %v5467
      %v5469 = vpop.f32.mrf.mxu0
      %5470 = vmatprep.mubr.bf16.mxu0 0
      %5471 = vmatmul.mubr.bf16.gmra.mxu0 %v2184
      %v5472 = vpop.f32.mrf.mxu0
      %v5473 = vadd.f32 %v5337, %v5472
      %v5474 = vpop.f32.mrf.mxu0
      %v5475 = vpop.f32.mrf.mxu0
      %v5476 = vpop.f32.mrf.mxu0
      %5477 = vdwg.mxu0
      %v5478 = vmax.f32 %v5377, 0.0
      %v5479 = vmax.f32 %v5380, 0.0
      %v5480 = vmax.f32 %v5385, 0.0
      %v5481 = vmax.f32 %v5388, 0.0
      %v5482 = vmax.f32 %v5393, 0.0
      %v5483 = vmax.f32 %v5396, 0.0
      %v5484 = vmax.f32 %v5401, 0.0
      %v5485 = vmax.f32 %v5404, 0.0
      %v5486 = vmax.f32 %v5409, 0.0
      %v5487 = vmax.f32 %v5412, 0.0
      %v5488 = vmax.f32 %v5417, 0.0
      %v5489 = vmax.f32 %v5420, 0.0
      %v5490 = vmax.f32 %v5425, 0.0
      %v5491 = vmax.f32 %v5428, 0.0
      %v5492 = vmax.f32 %v5433, 0.0
      %v5493 = vmax.f32 %v5436, 0.0
      %v5494 = vmax.f32 %v5441, 0.0
      %v5495 = vmax.f32 %v5444, 0.0
      %v5496 = vmax.f32 %v5449, 0.0
      %v5497 = vmax.f32 %v5452, 0.0
      %v5498 = vmax.f32 %v5457, 0.0
      %v5499 = vmax.f32 %v5460, 0.0
      %v5500 = vmax.f32 %v5465, 0.0
      %v5501 = vmax.f32 %v5468, 0.0
      %v5502 = vmax.f32 %v5473, 0.0
      %v5503 = vpack.c.bf16 %v5479, %v5478
      %v5504 = vpack.c.bf16 %v5481, %v5480
      %v5505 = vpack.c.bf16 %v5483, %v5482
      %v5506 = vpack.c.bf16 %v5485, %v5484
      %v5507 = vpack.c.bf16 %v5487, %v5486
      %v5508 = vpack.c.bf16 %v5489, %v5488
      %v5509 = vpack.c.bf16 %v5491, %v5490
      %v5510 = vpack.c.bf16 %v5493, %v5492
      %v5511 = vpack.c.bf16 %v5495, %v5494
      %v5512 = vpack.c.bf16 %v5497, %v5496
      %v5513 = vpack.c.bf16 %v5499, %v5498
      %v5514 = vpack.c.bf16 %v5501, %v5500
      %v5515 = vpack.c.bf16 %v5502, %v5502
      %v5529 = vunpack.c.l.b16 %v5503
      %v5530 = vunpack.c.h.b16 %v5503
      %v5531 = vunpack.c.l.b16 %v5504
      %v5532 = vunpack.c.h.b16 %v5504
      %v5533 = vunpack.c.l.b16 %v5505
      %v5534 = vunpack.c.h.b16 %v5505
      %v5535 = vunpack.c.l.b16 %v5506
      %v5536 = vunpack.c.h.b16 %v5506
      %v5537 = vunpack.c.l.b16 %v5507
      %v5538 = vunpack.c.h.b16 %v5507
      %v5539 = vunpack.c.l.b16 %v5508
      %v5540 = vunpack.c.h.b16 %v5508
      %v5541 = vunpack.c.l.b16 %v5509
      %v5542 = vunpack.c.h.b16 %v5509
      %v5543 = vunpack.c.l.b16 %v5510
      %v5544 = vunpack.c.h.b16 %v5510
      %v5545 = vunpack.c.l.b16 %v5511
      %v5546 = vunpack.c.h.b16 %v5511
      %v5547 = vunpack.c.l.b16 %v5512
      %v5548 = vunpack.c.h.b16 %v5512
      %v5549 = vunpack.c.l.b16 %v5513
      %v5550 = vunpack.c.h.b16 %v5513
      %v5551 = vunpack.c.l.b16 %v5514
      %v5552 = vunpack.c.h.b16 %v5514
      %v5553 = vunpack.c.l.b16 %v5515
      %v5554 = vpack.c.b16 %v5529, %v5529
      %v5555 = vpack.c.b16 %v5530, %v5530
      %v5556 = vpack.c.b16 %v5531, %v5531
      %v5557 = vpack.c.b16 %v5532, %v5532
      %v5558 = vpack.c.b16 %v5533, %v5533
      %v5559 = vpack.c.b16 %v5534, %v5534
      %v5560 = vpack.c.b16 %v5535, %v5535
      %v5561 = vpack.c.b16 %v5536, %v5536
      %v5562 = vpack.c.b16 %v5537, %v5537
      %v5563 = vpack.c.b16 %v5538, %v5538
      %v5564 = vpack.c.b16 %v5539, %v5539
      %v5565 = vpack.c.b16 %v5540, %v5540
      %v5566 = vpack.c.b16 %v5541, %v5541
      %v5567 = vpack.c.b16 %v5542, %v5542
      %v5568 = vpack.c.b16 %v5543, %v5543
      %v5569 = vpack.c.b16 %v5544, %v5544
      %v5570 = vpack.c.b16 %v5545, %v5545
      %v5571 = vpack.c.b16 %v5546, %v5546
      %v5572 = vpack.c.b16 %v5547, %v5547
      %v5573 = vpack.c.b16 %v5548, %v5548
      %v5574 = vpack.c.b16 %v5549, %v5549
      %v5575 = vpack.c.b16 %v5550, %v5550
      %v5576 = vpack.c.b16 %v5551, %v5551
      %v5577 = vpack.c.b16 %v5552, %v5552
      %v5578 = vpack.c.b16 %v5553, %v5553
      %5604 = vst [vmem:[%s175] sm:$0xf] %v5554
      %5605 = vst [vmem:[%s175 + $0x4] sm:$0xf] %v5555
      %5606 = vst [vmem:[%s175 + $0x8] sm:$0xf] %v5556
      %5607 = vst [vmem:[%s175 + $0xc] sm:$0xf] %v5557
      %5608 = vst [vmem:[%s175 + $0x10] sm:$0xf] %v5558
      %5609 = vst [vmem:[%s175 + $0x14] sm:$0xf] %v5559
      %5610 = vst [vmem:[%s175 + $0x18] sm:$0xf] %v5560
      %5611 = vst [vmem:[%s175 + $0x1c] sm:$0xf] %v5561
      %5612 = vst [vmem:[%s175 + $0x20] sm:$0xf] %v5562
      %5613 = vst [vmem:[%s175 + $0x24] sm:$0xf] %v5563
      %5614 = vst [vmem:[%s175 + $0x28] sm:$0xf] %v5564
      %5615 = vst [vmem:[%s175 + $0x2c] sm:$0xf] %v5565
      %5616 = vst [vmem:[%s175 + $0x30] sm:$0xf] %v5566
      %5617 = vst [vmem:[%s175 + $0x34] sm:$0xf] %v5567
      %5618 = vst [vmem:[%s175 + $0x38] sm:$0xf] %v5568
      %5619 = vst [vmem:[%s175 + $0x3c] sm:$0xf] %v5569
      %5620 = vst [vmem:[%s175 + $0x40] sm:$0xf] %v5570
      %5621 = vst [vmem:[%s175 + $0x44] sm:$0xf] %v5571
      %5622 = vst [vmem:[%s175 + $0x48] sm:$0xf] %v5572
      %5623 = vst [vmem:[%s175 + $0x4c] sm:$0xf] %v5573
      %5624 = vst [vmem:[%s175 + $0x50] sm:$0xf] %v5574
      %5625 = vst [vmem:[%s175 + $0x54] sm:$0xf] %v5575
      %5626 = vst [vmem:[%s175 + $0x58] sm:$0xf] %v5576
      %5627 = vst [vmem:[%s175 + $0x5c] sm:$0xf] %v5577
      %5628 = vst [vmem:[%s175 + $0x60] sm:$0xf] %v5578
      %s5629 = smul.u32 25, %s14
      %p5630 = scmp.lt.s32.totalorder %s5629, 49
      %s5631 = scalar_select %p5630, %s5629, 49
      %s5632 = smul.addr %s5631, 4
      %s5633 = scalar_lea.vmem %s3, %s5632
      // Predicated region
      $region33: #{hypernet_forward_numeric.4} parent=31 // pred_check
        %p5634 = pneg %p100
      $region34: #{hypernet_forward_numeric.4} parent=31 // pred_check_branch
        %5636 = sbr.rel (%p5634) target = $region36
      $region35: #{hypernet_forward_numeric.4} parent=31 // pred_region
        %s5637 = smul.u32 25, %s14
      $region36: #{hypernet_forward_numeric.4} parent=31 // pred_fallthru
        _
    $region32: #{hypernet_forward_numeric.4} parent=5 // pred_fallthru
      _
    %p5638 = scmp.le.s32.totalorder 2, %s9
    // Predicated region
    $region37: #{hypernet_forward_numeric.4} parent=5 // pred_check
      %p5639 = pneg %p5638
    $region38: #{hypernet_forward_numeric.4} parent=5 // pred_check_branch
      %5641 = sbr.rel (%p5639) target = $region40
    $region39: #{hypernet_forward_numeric.4} parent=5 // pred_region
      %s5642 = ssub.s32 %s9, 2
      // Predicated region
      $region41: #{hypernet_forward_numeric.4} parent=39 // pred_check
        %p5643 = pneg %p106
      $region42: #{hypernet_forward_numeric.4} parent=39 // pred_check_branch
        %5645 = sbr.rel (%p5643) target = $region44
      $region43: #{hypernet_forward_numeric.4} parent=39 // pred_region
        %s5646 = smul.u32 25, %s15
        %p5647 = scmp.lt.s32.totalorder %s5646, 49
        %s5648 = scalar_select %p5647, %s5646, 49
        %s5649 = smul.addr %s5648, 4
        %s5650 = scalar_lea.vmem %s3, %s5649
      $region44: #{hypernet_forward_numeric.4} parent=39 // pred_fallthru
        _
    $region40: #{hypernet_forward_numeric.4} parent=5 // pred_fallthru
      _
  $region6: #{hypernet_forward_numeric.4} parent=0 // loop_footer
    %s13 = sadd.s32 1, %s9
  $region7: #{hypernet_forward_numeric.4} parent=0 // loop_footer_branch
    %8 = sbr.rel target = $region3
  $region8: #{hypernet_forward_numeric.4} parent=0 // loop_exit
    _

// kernel: hypernet_forward_numeric.5
$region0: #{hypernet_forward_numeric.5}
  #allocation0 [shape = 'u32[]', space=smem, size = 0x4, offset = 0x4, fixed_abs, tag = 'smem constant byte address 0x4 - core index']
  #allocation1 [shape = 'u32[144,128]{1,0:T(1,128)}', space=vmem, size = 0x12000, scoped, tag = 'internal scratch']
  %s0 = inlined_call_operand.vmem [shape: bf16[8,3200], index: 0, kind: input, shape index: {}]
  %s1 = inlined_call_operand.vmem [shape: bf16[3200,128], index: 1, kind: input, shape index: {}]
  %s2 = inlined_call_operand.vmem [shape: f32[1,128], index: 2, kind: input, shape index: {}]
  %s3 = inlined_call_operand.vmem [shape: bf16[128,128], index: 3, kind: input, shape index: {}]
  %s4 = inlined_call_operand.vmem [shape: f32[1,128], index: 4, kind: input, shape index: {}]
  %s5 = inlined_call_operand.vmem [shape: bf16[128,32], index: 5, kind: input, shape index: {}]
  %s6 = inlined_call_operand.vmem [shape: f32[1,32], index: 6, kind: input, shape index: {}]
  %s7 = inlined_call_operand.vmem [shape: f32[32,32], index: 7, kind: input, shape index: {}]
  %s8 = inlined_call_operand.vmem [shape: f32[1,32], index: 8, kind: input, shape index: {}]
  %s9 = inlined_call_operand.vmem [shape: f32[32,32], index: 9, kind: input, shape index: {}]
  %s10 = inlined_call_operand.vmem [shape: f32[1,32], index: 10, kind: input, shape index: {}]
  %s11 = inlined_call_operand.vmem [shape: f32[32,32], index: 11, kind: input, shape index: {}]
  %s12 = inlined_call_operand.vmem [shape: f32[1,32], index: 12, kind: input, shape index: {}]
  %s13 = inlined_call_operand.vmem [shape: f32[32,40], index: 13, kind: input, shape index: {}]
  %s14 = inlined_call_operand.vmem [shape: f32[1,40], index: 14, kind: input, shape index: {}]
  %s15 = inlined_call_operand.vmem [shape: f32[1,40], index: 15, kind: output, shape index: {}]
  %s16 = sld [smem:[#allocation0]]
  $region70: #{hypernet_forward_numeric.5} parent=0
    _
  %s18 = ssub.s32 1, %s16
  %s19 = scalar_select 0, %s18, %s16
  // Predicated region
  $region2: #{hypernet_forward_numeric.5} parent=0 // pred_check
    _
  $region3: #{hypernet_forward_numeric.5} parent=0 // pred_check_branch
    %21 = sbr.rel (0) target = $region5
  $region4: #{hypernet_forward_numeric.5} parent=0 // pred_region
    _
  $region5: #{hypernet_forward_numeric.5} parent=0 // pred_fallthru
    _
  // Predicated region
  $region6: #{hypernet_forward_numeric.5} parent=0 // pred_check
    _
  $region7: #{hypernet_forward_numeric.5} parent=0 // pred_check_branch
    %23 = sbr.rel (0) target = $region9
  $region8: #{hypernet_forward_numeric.5} parent=0 // pred_region
    _
  $region9: #{hypernet_forward_numeric.5} parent=0 // pred_fallthru
    _
  // Predicated region
  $region10: #{hypernet_forward_numeric.5} parent=0 // pred_check
    _
  $region11: #{hypernet_forward_numeric.5} parent=0 // pred_check_branch
    %25 = sbr.rel (0) target = $region13
  $region12: #{hypernet_forward_numeric.5} parent=0 // pred_region
    _
  $region13: #{hypernet_forward_numeric.5} parent=0 // pred_fallthru
    _
  // Predicated region
  $region14: #{hypernet_forward_numeric.5} parent=0 // pred_check
    _
  $region15: #{hypernet_forward_numeric.5} parent=0 // pred_check_branch
    %27 = sbr.rel (0) target = $region17
  $region16: #{hypernet_forward_numeric.5} parent=0 // pred_region
    _
  $region17: #{hypernet_forward_numeric.5} parent=0 // pred_fallthru
    _
  // Predicated region
  $region18: #{hypernet_forward_numeric.5} parent=0 // pred_check
    _
  $region19: #{hypernet_forward_numeric.5} parent=0 // pred_check_branch
    %29 = sbr.rel (0) target = $region21
  $region20: #{hypernet_forward_numeric.5} parent=0 // pred_region
    _
  $region21: #{hypernet_forward_numeric.5} parent=0 // pred_fallthru
    _
  // Predicated region
  $region22: #{hypernet_forward_numeric.5} parent=0 // pred_check
    _
  $region23: #{hypernet_forward_numeric.5} parent=0 // pred_check_branch
    %31 = sbr.rel (0) target = $region25
  $region24: #{hypernet_forward_numeric.5} parent=0 // pred_region
    _
  $region25: #{hypernet_forward_numeric.5} parent=0 // pred_fallthru
    _
  // Predicated region
  $region26: #{hypernet_forward_numeric.5} parent=0 // pred_check
    _
  $region27: #{hypernet_forward_numeric.5} parent=0 // pred_check_branch
    %33 = sbr.rel (0) target = $region29
  $region28: #{hypernet_forward_numeric.5} parent=0 // pred_region
    _
  $region29: #{hypernet_forward_numeric.5} parent=0 // pred_fallthru
    _
  // Predicated region
  $region30: #{hypernet_forward_numeric.5} parent=0 // pred_check
    _
  $region31: #{hypernet_forward_numeric.5} parent=0 // pred_check_branch
    %35 = sbr.rel (0) target = $region33
  $region32: #{hypernet_forward_numeric.5} parent=0 // pred_region
    _
  $region33: #{hypernet_forward_numeric.5} parent=0 // pred_fallthru
    _
  // Predicated region
  $region34: #{hypernet_forward_numeric.5} parent=0 // pred_check
    _
  $region35: #{hypernet_forward_numeric.5} parent=0 // pred_check_branch
    %37 = sbr.rel (0) target = $region37
  $region36: #{hypernet_forward_numeric.5} parent=0 // pred_region
    _
  $region37: #{hypernet_forward_numeric.5} parent=0 // pred_fallthru
    _
  // Predicated region
  $region38: #{hypernet_forward_numeric.5} parent=0 // pred_check
    _
  $region39: #{hypernet_forward_numeric.5} parent=0 // pred_check_branch
    %39 = sbr.rel (0) target = $region41
  $region40: #{hypernet_forward_numeric.5} parent=0 // pred_region
    _
  $region41: #{hypernet_forward_numeric.5} parent=0 // pred_fallthru
    _
  // Predicated region
  $region42: #{hypernet_forward_numeric.5} parent=0 // pred_check
    _
  $region43: #{hypernet_forward_numeric.5} parent=0 // pred_check_branch
    %41 = sbr.rel (0) target = $region45
  $region44: #{hypernet_forward_numeric.5} parent=0 // pred_region
    _
  $region45: #{hypernet_forward_numeric.5} parent=0 // pred_fallthru
    _
  // Predicated region
  $region46: #{hypernet_forward_numeric.5} parent=0 // pred_check
    _
  $region47: #{hypernet_forward_numeric.5} parent=0 // pred_check_branch
    %43 = sbr.rel (0) target = $region49
  $region48: #{hypernet_forward_numeric.5} parent=0 // pred_region
    _
  $region49: #{hypernet_forward_numeric.5} parent=0 // pred_fallthru
    _
  // Predicated region
  $region50: #{hypernet_forward_numeric.5} parent=0 // pred_check
    _
  $region51: #{hypernet_forward_numeric.5} parent=0 // pred_check_branch
    %45 = sbr.rel (0) target = $region53
  $region52: #{hypernet_forward_numeric.5} parent=0 // pred_region
    _
  $region53: #{hypernet_forward_numeric.5} parent=0 // pred_fallthru
    _
  // Predicated region
  $region54: #{hypernet_forward_numeric.5} parent=0 // pred_check
    _
  $region55: #{hypernet_forward_numeric.5} parent=0 // pred_check_branch
    %47 = sbr.rel (0) target = $region57
  $region56: #{hypernet_forward_numeric.5} parent=0 // pred_region
    _
  $region57: #{hypernet_forward_numeric.5} parent=0 // pred_fallthru
    _
  // Predicated region
  $region58: #{hypernet_forward_numeric.5} parent=0 // pred_check
    _
  $region59: #{hypernet_forward_numeric.5} parent=0 // pred_check_branch
    %49 = sbr.rel (0) target = $region61
  $region60: #{hypernet_forward_numeric.5} parent=0 // pred_region
    _
  $region61: #{hypernet_forward_numeric.5} parent=0 // pred_fallthru
    _
  %v51 = vld [vmem:[%s0] sm:$0xff]
  %v52 = vld [vmem:[%s0 + $0x8] sm:$0xff]
  %v53 = vld [vmem:[%s0 + $0x10] sm:$0xff]
  %v54 = vld [vmem:[%s0 + $0x18] sm:$0xff]
  %v55 = vld [vmem:[%s0 + $0x20] sm:$0xff]
  %v56 = vld [vmem:[%s0 + $0x28] sm:$0xff]
  %v57 = vld [vmem:[%s0 + $0x30] sm:$0xff]
  %v58 = vld [vmem:[%s0 + $0x38] sm:$0xff]
  %v59 = vld [vmem:[%s0 + $0x40] sm:$0xff]
  %v60 = vld [vmem:[%s0 + $0x48] sm:$0xff]
  %v61 = vld [vmem:[%s0 + $0x50] sm:$0xff]
  %v62 = vld [vmem:[%s0 + $0x58] sm:$0xff]
  %v63 = vld [vmem:[%s0 + $0x60] sm:$0xf]
  %v64 = vld [vmem:[%s1] sm:$0xf]
  %v65 = vld [vmem:[%s1 + $0x4] sm:$0xf]
  %v66 = vld [vmem:[%s1 + $0x8] sm:$0xf]
  %v67 = vld [vmem:[%s1 + $0xc] sm:$0xf]
  %v68 = vld [vmem:[%s1 + $0x10] sm:$0xf]
  %v69 = vld [vmem:[%s1 + $0x14] sm:$0xf]
  %v70 = vld [vmem:[%s1 + $0x18] sm:$0xf]
  %v71 = vld [vmem:[%s1 + $0x1c] sm:$0xf]
  %v72 = vld [vmem:[%s1 + $0x20] sm:$0xf]
  %v73 = vld [vmem:[%s1 + $0x24] sm:$0xf]
  %v74 = vld [vmem:[%s1 + $0x28] sm:$0xf]
  %v75 = vld [vmem:[%s1 + $0x2c] sm:$0xf]
  %v76 = vld [vmem:[%s1 + $0x30] sm:$0xf]
  %v77 = vld [vmem:[%s1 + $0x34] sm:$0xf]
  %v78 = vld [vmem:[%s1 + $0x38] sm:$0xf]
  %v79 = vld [vmem:[%s1 + $0x3c] sm:$0xf]
  %v80 = vld [vmem:[%s1 + $0x40] sm:$0xf]
  %v81 = vld [vmem:[%s1 + $0x44] sm:$0xf]
  %v82 = vld [vmem:[%s1 + $0x48] sm:$0xf]
  %v83 = vld [vmem:[%s1 + $0x4c] sm:$0xf]
  %v84 = vld [vmem:[%s1 + $0x50] sm:$0xf]
  %v85 = vld [vmem:[%s1 + $0x54] sm:$0xf]
  %v86 = vld [vmem:[%s1 + $0x58] sm:$0xf]
  %v87 = vld [vmem:[%s1 + $0x5c] sm:$0xf]
  %v88 = vld [vmem:[%s1 + $0x60] sm:$0xf]
  %v89 = vld [vmem:[%s1 + $0x64] sm:$0xf]
  %v90 = vld [vmem:[%s1 + $0x68] sm:$0xf]
  %v91 = vld [vmem:[%s1 + $0x6c] sm:$0xf]
  %v92 = vld [vmem:[%s1 + $0x70] sm:$0xf]
  %v93 = vld [vmem:[%s1 + $0x74] sm:$0xf]
  %v94 = vld [vmem:[%s1 + $0x78] sm:$0xf]
  %v95 = vld [vmem:[%s1 + $0x7c] sm:$0xf]
  %v96 = vld [vmem:[%s1 + $0x80] sm:$0xf]
  %v97 = vld [vmem:[%s1 + $0x84] sm:$0xf]
  %v98 = vld [vmem:[%s1 + $0x88] sm:$0xf]
  %v99 = vld [vmem:[%s1 + $0x8c] sm:$0xf]
  %v100 = vld [vmem:[%s1 + $0x90] sm:$0xf]
  %v101 = vld [vmem:[%s1 + $0x94] sm:$0xf]
  %v102 = vld [vmem:[%s1 + $0x98] sm:$0xf]
  %v103 = vld [vmem:[%s1 + $0x9c] sm:$0xf]
  %v104 = vld [vmem:[%s1 + $0xa0] sm:$0xf]
  %v105 = vld [vmem:[%s1 + $0xa4] sm:$0xf]
  %v106 = vld [vmem:[%s1 + $0xa8] sm:$0xf]
  %v107 = vld [vmem:[%s1 + $0xac] sm:$0xf]
  %v108 = vld [vmem:[%s1 + $0xb0] sm:$0xf]
  %v109 = vld [vmem:[%s1 + $0xb4] sm:$0xf]
  %v110 = vld [vmem:[%s1 + $0xb8] sm:$0xf]
  %v111 = vld [vmem:[%s1 + $0xbc] sm:$0xf]
  %v112 = vld [vmem:[%s1 + $0xc0] sm:$0xf]
  %v113 = vld [vmem:[%s1 + $0xc4] sm:$0xf]
  %v114 = vld [vmem:[%s1 + $0xc8] sm:$0xf]
  %v115 = vld [vmem:[%s1 + $0xcc] sm:$0xf]
  %v116 = vld [vmem:[%s1 + $0xd0] sm:$0xf]
  %v117 = vld [vmem:[%s1 + $0xd4] sm:$0xf]
  %v118 = vld [vmem:[%s1 + $0xd8] sm:$0xf]
  %v119 = vld [vmem:[%s1 + $0xdc] sm:$0xf]
  %v120 = vld [vmem:[%s1 + $0xe0] sm:$0xf]
  %v121 = vld [vmem:[%s1 + $0xe4] sm:$0xf]
  %v122 = vld [vmem:[%s1 + $0xe8] sm:$0xf]
  %v123 = vld [vmem:[%s1 + $0xec] sm:$0xf]
  %v124 = vld [vmem:[%s1 + $0xf0] sm:$0xf]
  %v125 = vld [vmem:[%s1 + $0xf4] sm:$0xf]
  %v126 = vld [vmem:[%s1 + $0xf8] sm:$0xf]
  %v127 = vld [vmem:[%s1 + $0xfc] sm:$0xf]
  %v128 = vld [vmem:[%s1 + $0x100] sm:$0xf]
  %v129 = vld [vmem:[%s1 + $0x104] sm:$0xf]
  %v130 = vld [vmem:[%s1 + $0x108] sm:$0xf]
  %v131 = vld [vmem:[%s1 + $0x10c] sm:$0xf]
  %v132 = vld [vmem:[%s1 + $0x110] sm:$0xf]
  %v133 = vld [vmem:[%s1 + $0x114] sm:$0xf]
  %v134 = vld [vmem:[%s1 + $0x118] sm:$0xf]
  %v135 = vld [vmem:[%s1 + $0x11c] sm:$0xf]
  %v136 = vld [vmem:[%s1 + $0x120] sm:$0xf]
  %v137 = vld [vmem:[%s1 + $0x124] sm:$0xf]
  %v138 = vld [vmem:[%s1 + $0x128] sm:$0xf]
  %v139 = vld [vmem:[%s1 + $0x12c] sm:$0xf]
  %v140 = vld [vmem:[%s1 + $0x130] sm:$0xf]
  %v141 = vld [vmem:[%s1 + $0x134] sm:$0xf]
  %v142 = vld [vmem:[%s1 + $0x138] sm:$0xf]
  %v143 = vld [vmem:[%s1 + $0x13c] sm:$0xf]
  %v144 = vld [vmem:[%s1 + $0x140] sm:$0xf]
  %v145 = vld [vmem:[%s1 + $0x144] sm:$0xf]
  %v146 = vld [vmem:[%s1 + $0x148] sm:$0xf]
  %v147 = vld [vmem:[%s1 + $0x14c] sm:$0xf]
  %v148 = vld [vmem:[%s1 + $0x150] sm:$0xf]
  %v149 = vld [vmem:[%s1 + $0x154] sm:$0xf]
  %v150 = vld [vmem:[%s1 + $0x158] sm:$0xf]
  %v151 = vld [vmem:[%s1 + $0x15c] sm:$0xf]
  %v152 = vld [vmem:[%s1 + $0x160] sm:$0xf]
  %v153 = vld [vmem:[%s1 + $0x164] sm:$0xf]
  %v154 = vld [vmem:[%s1 + $0x168] sm:$0xf]
  %v155 = vld [vmem:[%s1 + $0x16c] sm:$0xf]
  %v156 = vld [vmem:[%s1 + $0x170] sm:$0xf]
  %v157 = vld [vmem:[%s1 + $0x174] sm:$0xf]
  %v158 = vld [vmem:[%s1 + $0x178] sm:$0xf]
  %v159 = vld [vmem:[%s1 + $0x17c] sm:$0xf]
  %v160 = vld [vmem:[%s1 + $0x180] sm:$0xf]
  %v161 = vld [vmem:[%s1 + $0x184] sm:$0xf]
  %v162 = vld [vmem:[%s1 + $0x188] sm:$0xf]
  %v163 = vld [vmem:[%s1 + $0x18c] sm:$0xf]
  %v164 = vld [vmem:[%s1 + $0x190] sm:$0xf]
  %v165 = vld [vmem:[%s1 + $0x194] sm:$0xf]
  %v166 = vld [vmem:[%s1 + $0x198] sm:$0xf]
  %v167 = vld [vmem:[%s1 + $0x19c] sm:$0xf]
  %v168 = vld [vmem:[%s1 + $0x1a0] sm:$0xf]
  %v169 = vld [vmem:[%s1 + $0x1a4] sm:$0xf]
  %v170 = vld [vmem:[%s1 + $0x1a8] sm:$0xf]
  %v171 = vld [vmem:[%s1 + $0x1ac] sm:$0xf]
  %v172 = vld [vmem:[%s1 + $0x1b0] sm:$0xf]
  %v173 = vld [vmem:[%s1 + $0x1b4] sm:$0xf]
  %v174 = vld [vmem:[%s1 + $0x1b8] sm:$0xf]
  %v175 = vld [vmem:[%s1 + $0x1bc] sm:$0xf]
  %v176 = vld [vmem:[%s1 + $0x1c0] sm:$0xf]
  %v177 = vld [vmem:[%s1 + $0x1c4] sm:$0xf]
  %v178 = vld [vmem:[%s1 + $0x1c8] sm:$0xf]
  %v179 = vld [vmem:[%s1 + $0x1cc] sm:$0xf]
  %v180 = vld [vmem:[%s1 + $0x1d0] sm:$0xf]
  %v181 = vld [vmem:[%s1 + $0x1d4] sm:$0xf]
  %v182 = vld [vmem:[%s1 + $0x1d8] sm:$0xf]
  %v183 = vld [vmem:[%s1 + $0x1dc] sm:$0xf]
  %v184 = vld [vmem:[%s1 + $0x1e0] sm:$0xf]
  %v185 = vld [vmem:[%s1 + $0x1e4] sm:$0xf]
  %v186 = vld [vmem:[%s1 + $0x1e8] sm:$0xf]
  %v187 = vld [vmem:[%s1 + $0x1ec] sm:$0xf]
  %v188 = vld [vmem:[%s1 + $0x1f0] sm:$0xf]
  %v189 = vld [vmem:[%s1 + $0x1f4] sm:$0xf]
  %v190 = vld [vmem:[%s1 + $0x1f8] sm:$0xf]
  %v191 = vld [vmem:[%s1 + $0x1fc] sm:$0xf]
  %v192 = vld [vmem:[%s1 + $0x200] sm:$0xf]
  %v193 = vld [vmem:[%s1 + $0x204] sm:$0xf]
  %v194 = vld [vmem:[%s1 + $0x208] sm:$0xf]
  %v195 = vld [vmem:[%s1 + $0x20c] sm:$0xf]
  %v196 = vld [vmem:[%s1 + $0x210] sm:$0xf]
  %v197 = vld [vmem:[%s1 + $0x214] sm:$0xf]
  %v198 = vld [vmem:[%s1 + $0x218] sm:$0xf]
  %v199 = vld [vmem:[%s1 + $0x21c] sm:$0xf]
  %v200 = vld [vmem:[%s1 + $0x220] sm:$0xf]
  %v201 = vld [vmem:[%s1 + $0x224] sm:$0xf]
  %v202 = vld [vmem:[%s1 + $0x228] sm:$0xf]
  %v203 = vld [vmem:[%s1 + $0x22c] sm:$0xf]
  %v204 = vld [vmem:[%s1 + $0x230] sm:$0xf]
  %v205 = vld [vmem:[%s1 + $0x234] sm:$0xf]
  %v206 = vld [vmem:[%s1 + $0x238] sm:$0xf]
  %v207 = vld [vmem:[%s1 + $0x23c] sm:$0xf]
  %v208 = vld [vmem:[%s1 + $0x240] sm:$0xf]
  %v209 = vld [vmem:[%s1 + $0x244] sm:$0xf]
  %v210 = vld [vmem:[%s1 + $0x248] sm:$0xf]
  %v211 = vld [vmem:[%s1 + $0x24c] sm:$0xf]
  %v212 = vld [vmem:[%s1 + $0x250] sm:$0xf]
  %v213 = vld [vmem:[%s1 + $0x254] sm:$0xf]
  %v214 = vld [vmem:[%s1 + $0x258] sm:$0xf]
  %v215 = vld [vmem:[%s1 + $0x25c] sm:$0xf]
  %v216 = vld [vmem:[%s1 + $0x260] sm:$0xf]
  %v217 = vld [vmem:[%s1 + $0x264] sm:$0xf]
  %v218 = vld [vmem:[%s1 + $0x268] sm:$0xf]
  %v219 = vld [vmem:[%s1 + $0x26c] sm:$0xf]
  %v220 = vld [vmem:[%s1 + $0x270] sm:$0xf]
  %v221 = vld [vmem:[%s1 + $0x274] sm:$0xf]
  %v222 = vld [vmem:[%s1 + $0x278] sm:$0xf]
  %v223 = vld [vmem:[%s1 + $0x27c] sm:$0xf]
  %v224 = vld [vmem:[%s1 + $0x280] sm:$0xf]
  %v225 = vld [vmem:[%s1 + $0x284] sm:$0xf]
  %v226 = vld [vmem:[%s1 + $0x288] sm:$0xf]
  %v227 = vld [vmem:[%s1 + $0x28c] sm:$0xf]
  %v228 = vld [vmem:[%s1 + $0x290] sm:$0xf]
  %v229 = vld [vmem:[%s1 + $0x294] sm:$0xf]
  %v230 = vld [vmem:[%s1 + $0x298] sm:$0xf]
  %v231 = vld [vmem:[%s1 + $0x29c] sm:$0xf]
  %v232 = vld [vmem:[%s1 + $0x2a0] sm:$0xf]
  %v233 = vld [vmem:[%s1 + $0x2a4] sm:$0xf]
  %v234 = vld [vmem:[%s1 + $0x2a8] sm:$0xf]
  %v235 = vld [vmem:[%s1 + $0x2ac] sm:$0xf]
  %v236 = vld [vmem:[%s1 + $0x2b0] sm:$0xf]
  %v237 = vld [vmem:[%s1 + $0x2b4] sm:$0xf]
  %v238 = vld [vmem:[%s1 + $0x2b8] sm:$0xf]
  %v239 = vld [vmem:[%s1 + $0x2bc] sm:$0xf]
  %v240 = vld [vmem:[%s1 + $0x2c0] sm:$0xf]
  %v241 = vld [vmem:[%s1 + $0x2c4] sm:$0xf]
  %v242 = vld [vmem:[%s1 + $0x2c8] sm:$0xf]
  %v243 = vld [vmem:[%s1 + $0x2cc] sm:$0xf]
  %v244 = vld [vmem:[%s1 + $0x2d0] sm:$0xf]
  %v245 = vld [vmem:[%s1 + $0x2d4] sm:$0xf]
  %v246 = vld [vmem:[%s1 + $0x2d8] sm:$0xf]
  %v247 = vld [vmem:[%s1 + $0x2dc] sm:$0xf]
  %v248 = vld [vmem:[%s1 + $0x2e0] sm:$0xf]
  %v249 = vld [vmem:[%s1 + $0x2e4] sm:$0xf]
  %v250 = vld [vmem:[%s1 + $0x2e8] sm:$0xf]
  %v251 = vld [vmem:[%s1 + $0x2ec] sm:$0xf]
  %v252 = vld [vmem:[%s1 + $0x2f0] sm:$0xf]
  %v253 = vld [vmem:[%s1 + $0x2f4] sm:$0xf]
  %v254 = vld [vmem:[%s1 + $0x2f8] sm:$0xf]
  %v255 = vld [vmem:[%s1 + $0x2fc] sm:$0xf]
  %v256 = vld [vmem:[%s1 + $0x300] sm:$0xf]
  %v257 = vld [vmem:[%s1 + $0x304] sm:$0xf]
  %v258 = vld [vmem:[%s1 + $0x308] sm:$0xf]
  %v259 = vld [vmem:[%s1 + $0x30c] sm:$0xf]
  %v260 = vld [vmem:[%s1 + $0x310] sm:$0xf]
  %v261 = vld [vmem:[%s1 + $0x314] sm:$0xf]
  %v262 = vld [vmem:[%s1 + $0x318] sm:$0xf]
  %v263 = vld [vmem:[%s1 + $0x31c] sm:$0xf]
  %v264 = vld [vmem:[%s1 + $0x320] sm:$0xf]
  %v265 = vld [vmem:[%s1 + $0x324] sm:$0xf]
  %v266 = vld [vmem:[%s1 + $0x328] sm:$0xf]
  %v267 = vld [vmem:[%s1 + $0x32c] sm:$0xf]
  %v268 = vld [vmem:[%s1 + $0x330] sm:$0xf]
  %v269 = vld [vmem:[%s1 + $0x334] sm:$0xf]
  %v270 = vld [vmem:[%s1 + $0x338] sm:$0xf]
  %v271 = vld [vmem:[%s1 + $0x33c] sm:$0xf]
  %v272 = vld [vmem:[%s1 + $0x340] sm:$0xf]
  %v273 = vld [vmem:[%s1 + $0x344] sm:$0xf]
  %v274 = vld [vmem:[%s1 + $0x348] sm:$0xf]
  %v275 = vld [vmem:[%s1 + $0x34c] sm:$0xf]
  %v276 = vld [vmem:[%s1 + $0x350] sm:$0xf]
  %v277 = vld [vmem:[%s1 + $0x354] sm:$0xf]
  %v278 = vld [vmem:[%s1 + $0x358] sm:$0xf]
  %v279 = vld [vmem:[%s1 + $0x35c] sm:$0xf]
  %v280 = vld [vmem:[%s1 + $0x360] sm:$0xf]
  %v281 = vld [vmem:[%s1 + $0x364] sm:$0xf]
  %v282 = vld [vmem:[%s1 + $0x368] sm:$0xf]
  %v283 = vld [vmem:[%s1 + $0x36c] sm:$0xf]
  %v284 = vld [vmem:[%s1 + $0x370] sm:$0xf]
  %v285 = vld [vmem:[%s1 + $0x374] sm:$0xf]
  %v286 = vld [vmem:[%s1 + $0x378] sm:$0xf]
  %v287 = vld [vmem:[%s1 + $0x37c] sm:$0xf]
  %v288 = vld [vmem:[%s1 + $0x380] sm:$0xf]
  %v289 = vld [vmem:[%s1 + $0x384] sm:$0xf]
  %v290 = vld [vmem:[%s1 + $0x388] sm:$0xf]
  %v291 = vld [vmem:[%s1 + $0x38c] sm:$0xf]
  %v292 = vld [vmem:[%s1 + $0x390] sm:$0xf]
  %v293 = vld [vmem:[%s1 + $0x394] sm:$0xf]
  %v294 = vld [vmem:[%s1 + $0x398] sm:$0xf]
  %v295 = vld [vmem:[%s1 + $0x39c] sm:$0xf]
  %v296 = vld [vmem:[%s1 + $0x3a0] sm:$0xf]
  %v297 = vld [vmem:[%s1 + $0x3a4] sm:$0xf]
  %v298 = vld [vmem:[%s1 + $0x3a8] sm:$0xf]
  %v299 = vld [vmem:[%s1 + $0x3ac] sm:$0xf]
  %v300 = vld [vmem:[%s1 + $0x3b0] sm:$0xf]
  %v301 = vld [vmem:[%s1 + $0x3b4] sm:$0xf]
  %v302 = vld [vmem:[%s1 + $0x3b8] sm:$0xf]
  %v303 = vld [vmem:[%s1 + $0x3bc] sm:$0xf]
  %v304 = vld [vmem:[%s1 + $0x3c0] sm:$0xf]
  %v305 = vld [vmem:[%s1 + $0x3c4] sm:$0xf]
  %v306 = vld [vmem:[%s1 + $0x3c8] sm:$0xf]
  %v307 = vld [vmem:[%s1 + $0x3cc] sm:$0xf]
  %v308 = vld [vmem:[%s1 + $0x3d0] sm:$0xf]
  %v309 = vld [vmem:[%s1 + $0x3d4] sm:$0xf]
  %v310 = vld [vmem:[%s1 + $0x3d8] sm:$0xf]
  %v311 = vld [vmem:[%s1 + $0x3dc] sm:$0xf]
  %v312 = vld [vmem:[%s1 + $0x3e0] sm:$0xf]
  %v313 = vld [vmem:[%s1 + $0x3e4] sm:$0xf]
  %v314 = vld [vmem:[%s1 + $0x3e8] sm:$0xf]
  %v315 = vld [vmem:[%s1 + $0x3ec] sm:$0xf]
  %v316 = vld [vmem:[%s1 + $0x3f0] sm:$0xf]
  %v317 = vld [vmem:[%s1 + $0x3f4] sm:$0xf]
  %v318 = vld [vmem:[%s1 + $0x3f8] sm:$0xf]
  %v319 = vld [vmem:[%s1 + $0x3fc] sm:$0xf]
  %v320 = vld [vmem:[%s1 + $0x400] sm:$0xf]
  %v321 = vld [vmem:[%s1 + $0x404] sm:$0xf]
  %v322 = vld [vmem:[%s1 + $0x408] sm:$0xf]
  %v323 = vld [vmem:[%s1 + $0x40c] sm:$0xf]
  %v324 = vld [vmem:[%s1 + $0x410] sm:$0xf]
  %v325 = vld [vmem:[%s1 + $0x414] sm:$0xf]
  %v326 = vld [vmem:[%s1 + $0x418] sm:$0xf]
  %v327 = vld [vmem:[%s1 + $0x41c] sm:$0xf]
  %v328 = vld [vmem:[%s1 + $0x420] sm:$0xf]
  %v329 = vld [vmem:[%s1 + $0x424] sm:$0xf]
  %v330 = vld [vmem:[%s1 + $0x428] sm:$0xf]
  %v331 = vld [vmem:[%s1 + $0x42c] sm:$0xf]
  %v332 = vld [vmem:[%s1 + $0x430] sm:$0xf]
  %v333 = vld [vmem:[%s1 + $0x434] sm:$0xf]
  %v334 = vld [vmem:[%s1 + $0x438] sm:$0xf]
  %v335 = vld [vmem:[%s1 + $0x43c] sm:$0xf]
  %v336 = vld [vmem:[%s1 + $0x440] sm:$0xf]
  %v337 = vld [vmem:[%s1 + $0x444] sm:$0xf]
  %v338 = vld [vmem:[%s1 + $0x448] sm:$0xf]
  %v339 = vld [vmem:[%s1 + $0x44c] sm:$0xf]
  %v340 = vld [vmem:[%s1 + $0x450] sm:$0xf]
  %v341 = vld [vmem:[%s1 + $0x454] sm:$0xf]
  %v342 = vld [vmem:[%s1 + $0x458] sm:$0xf]
  %v343 = vld [vmem:[%s1 + $0x45c] sm:$0xf]
  %v344 = vld [vmem:[%s1 + $0x460] sm:$0xf]
  %v345 = vld [vmem:[%s1 + $0x464] sm:$0xf]
  %v346 = vld [vmem:[%s1 + $0x468] sm:$0xf]
  %v347 = vld [vmem:[%s1 + $0x46c] sm:$0xf]
  %v348 = vld [vmem:[%s1 + $0x470] sm:$0xf]
  %v349 = vld [vmem:[%s1 + $0x474] sm:$0xf]
  %v350 = vld [vmem:[%s1 + $0x478] sm:$0xf]
  %v351 = vld [vmem:[%s1 + $0x47c] sm:$0xf]
  %v352 = vld [vmem:[%s1 + $0x480] sm:$0xf]
  %v353 = vld [vmem:[%s1 + $0x484] sm:$0xf]
  %v354 = vld [vmem:[%s1 + $0x488] sm:$0xf]
  %v355 = vld [vmem:[%s1 + $0x48c] sm:$0xf]
  %v356 = vld [vmem:[%s1 + $0x490] sm:$0xf]
  %v357 = vld [vmem:[%s1 + $0x494] sm:$0xf]
  %v358 = vld [vmem:[%s1 + $0x498] sm:$0xf]
  %v359 = vld [vmem:[%s1 + $0x49c] sm:$0xf]
  %v360 = vld [vmem:[%s1 + $0x4a0] sm:$0xf]
  %v361 = vld [vmem:[%s1 + $0x4a4] sm:$0xf]
  %v362 = vld [vmem:[%s1 + $0x4a8] sm:$0xf]
  %v363 = vld [vmem:[%s1 + $0x4ac] sm:$0xf]
  %v364 = vld [vmem:[%s1 + $0x4b0] sm:$0xf]
  %v365 = vld [vmem:[%s1 + $0x4b4] sm:$0xf]
  %v366 = vld [vmem:[%s1 + $0x4b8] sm:$0xf]
  %v367 = vld [vmem:[%s1 + $0x4bc] sm:$0xf]
  %v368 = vld [vmem:[%s1 + $0x4c0] sm:$0xf]
  %v369 = vld [vmem:[%s1 + $0x4c4] sm:$0xf]
  %v370 = vld [vmem:[%s1 + $0x4c8] sm:$0xf]
  %v371 = vld [vmem:[%s1 + $0x4cc] sm:$0xf]
  %v372 = vld [vmem:[%s1 + $0x4d0] sm:$0xf]
  %v373 = vld [vmem:[%s1 + $0x4d4] sm:$0xf]
  %v374 = vld [vmem:[%s1 + $0x4d8] sm:$0xf]
  %v375 = vld [vmem:[%s1 + $0x4dc] sm:$0xf]
  %v376 = vld [vmem:[%s1 + $0x4e0] sm:$0xf]
  %v377 = vld [vmem:[%s1 + $0x4e4] sm:$0xf]
  %v378 = vld [vmem:[%s1 + $0x4e8] sm:$0xf]
  %v379 = vld [vmem:[%s1 + $0x4ec] sm:$0xf]
  %v380 = vld [vmem:[%s1 + $0x4f0] sm:$0xf]
  %v381 = vld [vmem:[%s1 + $0x4f4] sm:$0xf]
  %v382 = vld [vmem:[%s1 + $0x4f8] sm:$0xf]
  %v383 = vld [vmem:[%s1 + $0x4fc] sm:$0xf]
  %v384 = vld [vmem:[%s1 + $0x500] sm:$0xf]
  %v385 = vld [vmem:[%s1 + $0x504] sm:$0xf]
  %v386 = vld [vmem:[%s1 + $0x508] sm:$0xf]
  %v387 = vld [vmem:[%s1 + $0x50c] sm:$0xf]
  %v388 = vld [vmem:[%s1 + $0x510] sm:$0xf]
  %v389 = vld [vmem:[%s1 + $0x514] sm:$0xf]
  %v390 = vld [vmem:[%s1 + $0x518] sm:$0xf]
  %v391 = vld [vmem:[%s1 + $0x51c] sm:$0xf]
  %v392 = vld [vmem:[%s1 + $0x520] sm:$0xf]
  %v393 = vld [vmem:[%s1 + $0x524] sm:$0xf]
  %v394 = vld [vmem:[%s1 + $0x528] sm:$0xf]
  %v395 = vld [vmem:[%s1 + $0x52c] sm:$0xf]
  %v396 = vld [vmem:[%s1 + $0x530] sm:$0xf]
  %v397 = vld [vmem:[%s1 + $0x534] sm:$0xf]
  %v398 = vld [vmem:[%s1 + $0x538] sm:$0xf]
  %v399 = vld [vmem:[%s1 + $0x53c] sm:$0xf]
  %v400 = vld [vmem:[%s1 + $0x540] sm:$0xf]
  %v401 = vld [vmem:[%s1 + $0x544] sm:$0xf]
  %v402 = vld [vmem:[%s1 + $0x548] sm:$0xf]
  %v403 = vld [vmem:[%s1 + $0x54c] sm:$0xf]
  %v404 = vld [vmem:[%s1 + $0x550] sm:$0xf]
  %v405 = vld [vmem:[%s1 + $0x554] sm:$0xf]
  %v406 = vld [vmem:[%s1 + $0x558] sm:$0xf]
  %v407 = vld [vmem:[%s1 + $0x55c] sm:$0xf]
  %v408 = vld [vmem:[%s1 + $0x560] sm:$0xf]
  %v409 = vld [vmem:[%s1 + $0x564] sm:$0xf]
  %v410 = vld [vmem:[%s1 + $0x568] sm:$0xf]
  %v411 = vld [vmem:[%s1 + $0x56c] sm:$0xf]
  %v412 = vld [vmem:[%s1 + $0x570] sm:$0xf]
  %v413 = vld [vmem:[%s1 + $0x574] sm:$0xf]
  %v414 = vld [vmem:[%s1 + $0x578] sm:$0xf]
  %v415 = vld [vmem:[%s1 + $0x57c] sm:$0xf]
  %v416 = vld [vmem:[%s1 + $0x580] sm:$0xf]
  %v417 = vld [vmem:[%s1 + $0x584] sm:$0xf]
  %v418 = vld [vmem:[%s1 + $0x588] sm:$0xf]
  %v419 = vld [vmem:[%s1 + $0x58c] sm:$0xf]
  %v420 = vld [vmem:[%s1 + $0x590] sm:$0xf]
  %v421 = vld [vmem:[%s1 + $0x594] sm:$0xf]
  %v422 = vld [vmem:[%s1 + $0x598] sm:$0xf]
  %v423 = vld [vmem:[%s1 + $0x59c] sm:$0xf]
  %v424 = vld [vmem:[%s1 + $0x5a0] sm:$0xf]
  %v425 = vld [vmem:[%s1 + $0x5a4] sm:$0xf]
  %v426 = vld [vmem:[%s1 + $0x5a8] sm:$0xf]
  %v427 = vld [vmem:[%s1 + $0x5ac] sm:$0xf]
  %v428 = vld [vmem:[%s1 + $0x5b0] sm:$0xf]
  %v429 = vld [vmem:[%s1 + $0x5b4] sm:$0xf]
  %v430 = vld [vmem:[%s1 + $0x5b8] sm:$0xf]
  %v431 = vld [vmem:[%s1 + $0x5bc] sm:$0xf]
  %v432 = vld [vmem:[%s1 + $0x5c0] sm:$0xf]
  %v433 = vld [vmem:[%s1 + $0x5c4] sm:$0xf]
  %v434 = vld [vmem:[%s1 + $0x5c8] sm:$0xf]
  %v435 = vld [vmem:[%s1 + $0x5cc] sm:$0xf]
  %v436 = vld [vmem:[%s1 + $0x5d0] sm:$0xf]
  %v437 = vld [vmem:[%s1 + $0x5d4] sm:$0xf]
  %v438 = vld [vmem:[%s1 + $0x5d8] sm:$0xf]
  %v439 = vld [vmem:[%s1 + $0x5dc] sm:$0xf]
  %v440 = vld [vmem:[%s1 + $0x5e0] sm:$0xf]
  %v441 = vld [vmem:[%s1 + $0x5e4] sm:$0xf]
  %v442 = vld [vmem:[%s1 + $0x5e8] sm:$0xf]
  %v443 = vld [vmem:[%s1 + $0x5ec] sm:$0xf]
  %v444 = vld [vmem:[%s1 + $0x5f0] sm:$0xf]
  %v445 = vld [vmem:[%s1 + $0x5f4] sm:$0xf]
  %v446 = vld [vmem:[%s1 + $0x5f8] sm:$0xf]
  %v447 = vld [vmem:[%s1 + $0x5fc] sm:$0xf]
  %v448 = vld [vmem:[%s1 + $0x600] sm:$0xf]
  %v449 = vld [vmem:[%s1 + $0x604] sm:$0xf]
  %v450 = vld [vmem:[%s1 + $0x608] sm:$0xf]
  %v451 = vld [vmem:[%s1 + $0x60c] sm:$0xf]
  %v452 = vld [vmem:[%s1 + $0x610] sm:$0xf]
  %v453 = vld [vmem:[%s1 + $0x614] sm:$0xf]
  %v454 = vld [vmem:[%s1 + $0x618] sm:$0xf]
  %v455 = vld [vmem:[%s1 + $0x61c] sm:$0xf]
  %v456 = vld [vmem:[%s1 + $0x620] sm:$0xf]
  %v457 = vld [vmem:[%s1 + $0x624] sm:$0xf]
  %v458 = vld [vmem:[%s1 + $0x628] sm:$0xf]
  %v459 = vld [vmem:[%s1 + $0x62c] sm:$0xf]
  %v460 = vld [vmem:[%s1 + $0x630] sm:$0xf]
  %v461 = vld [vmem:[%s1 + $0x634] sm:$0xf]
  %v462 = vld [vmem:[%s1 + $0x638] sm:$0xf]
  %v463 = vld [vmem:[%s1 + $0x63c] sm:$0xf]
  %v464 = vld [vmem:[%s2] sm:$0x1]
  %v466 = vlaneseq
  %v467 = vshrl.u32 %v466, 7
  %v468 = vsub.s32 0, %v467
  %v469 = vrot.slane %v464, %v468
  %v484 = vunpack.c.l.b16 %v51
  %v485 = vunpack.c.h.b16 %v51
  %v486 = vunpack.c.l.b16 %v52
  %v487 = vunpack.c.h.b16 %v52
  %v488 = vunpack.c.l.b16 %v53
  %v489 = vunpack.c.h.b16 %v53
  %v490 = vunpack.c.l.b16 %v54
  %v491 = vunpack.c.h.b16 %v54
  %v492 = vunpack.c.l.b16 %v55
  %v493 = vunpack.c.h.b16 %v55
  %v494 = vunpack.c.l.b16 %v56
  %v495 = vunpack.c.h.b16 %v56
  %v496 = vunpack.c.l.b16 %v57
  %v497 = vunpack.c.h.b16 %v57
  %v498 = vunpack.c.l.b16 %v58
  %v499 = vunpack.c.h.b16 %v58
  %v500 = vunpack.c.l.b16 %v59
  %v501 = vunpack.c.h.b16 %v59
  %v502 = vunpack.c.l.b16 %v60
  %v503 = vunpack.c.h.b16 %v60
  %v504 = vunpack.c.l.b16 %v61
  %v505 = vunpack.c.h.b16 %v61
  %v506 = vunpack.c.l.b16 %v62
  %v507 = vunpack.c.h.b16 %v62
  %v508 = vunpack.c.l.b16 %v63
  %v509 = vpack.c.b16 %v484, %v484
  %v510 = vpack.c.b16 %v485, %v485
  %v511 = vpack.c.b16 %v486, %v486
  %v512 = vpack.c.b16 %v487, %v487
  %v513 = vpack.c.b16 %v488, %v488
  %v514 = vpack.c.b16 %v489, %v489
  %v515 = vpack.c.b16 %v490, %v490
  %v516 = vpack.c.b16 %v491, %v491
  %v517 = vpack.c.b16 %v492, %v492
  %v518 = vpack.c.b16 %v493, %v493
  %v519 = vpack.c.b16 %v494, %v494
  %v520 = vpack.c.b16 %v495, %v495
  %v521 = vpack.c.b16 %v496, %v496
  %v522 = vpack.c.b16 %v497, %v497
  %v523 = vpack.c.b16 %v498, %v498
  %v524 = vpack.c.b16 %v499, %v499
  %v525 = vpack.c.b16 %v500, %v500
  %v526 = vpack.c.b16 %v501, %v501
  %v527 = vpack.c.b16 %v502, %v502
  %v528 = vpack.c.b16 %v503, %v503
  %v529 = vpack.c.b16 %v504, %v504
  %v530 = vpack.c.b16 %v505, %v505
  %v531 = vpack.c.b16 %v506, %v506
  %v532 = vpack.c.b16 %v507, %v507
  %v533 = vpack.c.b16 %v508, %v508
  %v959 = vunpack.c.l.b16 %v64
  %v960 = vunpack.c.l.b16 %v65
  %v961 = vunpack.c.l.b16 %v66
  %v962 = vunpack.c.l.b16 %v67
  %v963 = vunpack.c.l.b16 %v68
  %v964 = vunpack.c.l.b16 %v69
  %v965 = vunpack.c.l.b16 %v70
  %v966 = vunpack.c.l.b16 %v71
  %v967 = vunpack.c.l.b16 %v72
  %v968 = vunpack.c.l.b16 %v73
  %v969 = vunpack.c.l.b16 %v74
  %v970 = vunpack.c.l.b16 %v75
  %v971 = vunpack.c.l.b16 %v76
  %v972 = vunpack.c.l.b16 %v77
  %v973 = vunpack.c.l.b16 %v78
  %v974 = vunpack.c.l.b16 %v79
  %v975 = vunpack.c.l.b16 %v80
  %v976 = vunpack.c.l.b16 %v81
  %v977 = vunpack.c.l.b16 %v82
  %v978 = vunpack.c.l.b16 %v83
  %v979 = vunpack.c.l.b16 %v84
  %v980 = vunpack.c.l.b16 %v85
  %v981 = vunpack.c.l.b16 %v86
  %v982 = vunpack.c.l.b16 %v87
  %v983 = vunpack.c.l.b16 %v88
  %v984 = vunpack.c.l.b16 %v89
  %v985 = vunpack.c.l.b16 %v90
  %v986 = vunpack.c.l.b16 %v91
  %v987 = vunpack.c.l.b16 %v92
  %v988 = vunpack.c.l.b16 %v93
  %v989 = vunpack.c.l.b16 %v94
  %v990 = vunpack.c.l.b16 %v95
  %v991 = vunpack.c.l.b16 %v96
  %v992 = vunpack.c.l.b16 %v97
  %v993 = vunpack.c.l.b16 %v98
  %v994 = vunpack.c.l.b16 %v99
  %v995 = vunpack.c.l.b16 %v100
  %v996 = vunpack.c.l.b16 %v101
  %v997 = vunpack.c.l.b16 %v102
  %v998 = vunpack.c.l.b16 %v103
  %v999 = vunpack.c.l.b16 %v104
  %v1000 = vunpack.c.l.b16 %v105
  %v1001 = vunpack.c.l.b16 %v106
  %v1002 = vunpack.c.l.b16 %v107
  %v1003 = vunpack.c.l.b16 %v108
  %v1004 = vunpack.c.l.b16 %v109
  %v1005 = vunpack.c.l.b16 %v110
  %v1006 = vunpack.c.l.b16 %v111
  %v1007 = vunpack.c.l.b16 %v112
  %v1008 = vunpack.c.l.b16 %v113
  %v1009 = vunpack.c.l.b16 %v114
  %v1010 = vunpack.c.l.b16 %v115
  %v1011 = vunpack.c.l.b16 %v116
  %v1012 = vunpack.c.l.b16 %v117
  %v1013 = vunpack.c.l.b16 %v118
  %v1014 = vunpack.c.l.b16 %v119
  %v1015 = vunpack.c.l.b16 %v120
  %v1016 = vunpack.c.l.b16 %v121
  %v1017 = vunpack.c.l.b16 %v122
  %v1018 = vunpack.c.l.b16 %v123
  %v1019 = vunpack.c.l.b16 %v124
  %v1020 = vunpack.c.l.b16 %v125
  %v1021 = vunpack.c.l.b16 %v126
  %v1022 = vunpack.c.l.b16 %v127
  %v1023 = vunpack.c.l.b16 %v128
  %v1024 = vunpack.c.l.b16 %v129
  %v1025 = vunpack.c.l.b16 %v130
  %v1026 = vunpack.c.l.b16 %v131
  %v1027 = vunpack.c.l.b16 %v132
  %v1028 = vunpack.c.l.b16 %v133
  %v1029 = vunpack.c.l.b16 %v134
  %v1030 = vunpack.c.l.b16 %v135
  %v1031 = vunpack.c.l.b16 %v136
  %v1032 = vunpack.c.l.b16 %v137
  %v1033 = vunpack.c.l.b16 %v138
  %v1034 = vunpack.c.l.b16 %v139
  %v1035 = vunpack.c.l.b16 %v140
  %v1036 = vunpack.c.l.b16 %v141
  %v1037 = vunpack.c.l.b16 %v142
  %v1038 = vunpack.c.l.b16 %v143
  %v1039 = vunpack.c.l.b16 %v144
  %v1040 = vunpack.c.l.b16 %v145
  %v1041 = vunpack.c.l.b16 %v146
  %v1042 = vunpack.c.l.b16 %v147
  %v1043 = vunpack.c.l.b16 %v148
  %v1044 = vunpack.c.l.b16 %v149
  %v1045 = vunpack.c.l.b16 %v150
  %v1046 = vunpack.c.l.b16 %v151
  %v1047 = vunpack.c.l.b16 %v152
  %v1048 = vunpack.c.l.b16 %v153
  %v1049 = vunpack.c.l.b16 %v154
  %v1050 = vunpack.c.l.b16 %v155
  %v1051 = vunpack.c.l.b16 %v156
  %v1052 = vunpack.c.l.b16 %v157
  %v1053 = vunpack.c.l.b16 %v158
  %v1054 = vunpack.c.l.b16 %v159
  %v1055 = vunpack.c.l.b16 %v160
  %v1056 = vunpack.c.l.b16 %v161
  %v1057 = vunpack.c.l.b16 %v162
  %v1058 = vunpack.c.l.b16 %v163
  %v1059 = vunpack.c.l.b16 %v164
  %v1060 = vunpack.c.l.b16 %v165
  %v1061 = vunpack.c.l.b16 %v166
  %v1062 = vunpack.c.l.b16 %v167
  %v1063 = vunpack.c.l.b16 %v168
  %v1064 = vunpack.c.l.b16 %v169
  %v1065 = vunpack.c.l.b16 %v170
  %v1066 = vunpack.c.l.b16 %v171
  %v1067 = vunpack.c.l.b16 %v172
  %v1068 = vunpack.c.l.b16 %v173
  %v1069 = vunpack.c.l.b16 %v174
  %v1070 = vunpack.c.l.b16 %v175
  %v1071 = vunpack.c.l.b16 %v176
  %v1072 = vunpack.c.l.b16 %v177
  %v1073 = vunpack.c.l.b16 %v178
  %v1074 = vunpack.c.l.b16 %v179
  %v1075 = vunpack.c.l.b16 %v180
  %v1076 = vunpack.c.l.b16 %v181
  %v1077 = vunpack.c.l.b16 %v182
  %v1078 = vunpack.c.l.b16 %v183
  %v1079 = vunpack.c.l.b16 %v184
  %v1080 = vunpack.c.l.b16 %v185
  %v1081 = vunpack.c.l.b16 %v186
  %v1082 = vunpack.c.l.b16 %v187
  %v1083 = vunpack.c.l.b16 %v188
  %v1084 = vunpack.c.l.b16 %v189
  %v1085 = vunpack.c.l.b16 %v190
  %v1086 = vunpack.c.l.b16 %v191
  %v1087 = vunpack.c.l.b16 %v192
  %v1088 = vunpack.c.l.b16 %v193
  %v1089 = vunpack.c.l.b16 %v194
  %v1090 = vunpack.c.l.b16 %v195
  %v1091 = vunpack.c.l.b16 %v196
  %v1092 = vunpack.c.l.b16 %v197
  %v1093 = vunpack.c.l.b16 %v198
  %v1094 = vunpack.c.l.b16 %v199
  %v1095 = vunpack.c.l.b16 %v200
  %v1096 = vunpack.c.l.b16 %v201
  %v1097 = vunpack.c.l.b16 %v202
  %v1098 = vunpack.c.l.b16 %v203
  %v1099 = vunpack.c.l.b16 %v204
  %v1100 = vunpack.c.l.b16 %v205
  %v1101 = vunpack.c.l.b16 %v206
  %v1102 = vunpack.c.l.b16 %v207
  %v1103 = vunpack.c.l.b16 %v208
  %v1104 = vunpack.c.l.b16 %v209
  %v1105 = vunpack.c.l.b16 %v210
  %v1106 = vunpack.c.l.b16 %v211
  %v1107 = vunpack.c.l.b16 %v212
  %v1108 = vunpack.c.l.b16 %v213
  %v1109 = vunpack.c.l.b16 %v214
  %v1110 = vunpack.c.l.b16 %v215
  %v1111 = vunpack.c.l.b16 %v216
  %v1112 = vunpack.c.l.b16 %v217
  %v1113 = vunpack.c.l.b16 %v218
  %v1114 = vunpack.c.l.b16 %v219
  %v1115 = vunpack.c.l.b16 %v220
  %v1116 = vunpack.c.l.b16 %v221
  %v1117 = vunpack.c.l.b16 %v222
  %v1118 = vunpack.c.l.b16 %v223
  %v1119 = vunpack.c.l.b16 %v224
  %v1120 = vunpack.c.l.b16 %v225
  %v1121 = vunpack.c.l.b16 %v226
  %v1122 = vunpack.c.l.b16 %v227
  %v1123 = vunpack.c.l.b16 %v228
  %v1124 = vunpack.c.l.b16 %v229
  %v1125 = vunpack.c.l.b16 %v230
  %v1126 = vunpack.c.l.b16 %v231
  %v1127 = vunpack.c.l.b16 %v232
  %v1128 = vunpack.c.l.b16 %v233
  %v1129 = vunpack.c.l.b16 %v234
  %v1130 = vunpack.c.l.b16 %v235
  %v1131 = vunpack.c.l.b16 %v236
  %v1132 = vunpack.c.l.b16 %v237
  %v1133 = vunpack.c.l.b16 %v238
  %v1134 = vunpack.c.l.b16 %v239
  %v1135 = vunpack.c.l.b16 %v240
  %v1136 = vunpack.c.l.b16 %v241
  %v1137 = vunpack.c.l.b16 %v242
  %v1138 = vunpack.c.l.b16 %v243
  %v1139 = vunpack.c.l.b16 %v244
  %v1140 = vunpack.c.l.b16 %v245
  %v1141 = vunpack.c.l.b16 %v246
  %v1142 = vunpack.c.l.b16 %v247
  %v1143 = vunpack.c.l.b16 %v248
  %v1144 = vunpack.c.l.b16 %v249
  %v1145 = vunpack.c.l.b16 %v250
  %v1146 = vunpack.c.l.b16 %v251
  %v1147 = vunpack.c.l.b16 %v252
  %v1148 = vunpack.c.l.b16 %v253
  %v1149 = vunpack.c.l.b16 %v254
  %v1150 = vunpack.c.l.b16 %v255
  %v1151 = vunpack.c.l.b16 %v256
  %v1152 = vunpack.c.l.b16 %v257
  %v1153 = vunpack.c.l.b16 %v258
  %v1154 = vunpack.c.l.b16 %v259
  %v1155 = vunpack.c.l.b16 %v260
  %v1156 = vunpack.c.l.b16 %v261
  %v1157 = vunpack.c.l.b16 %v262
  %v1158 = vunpack.c.l.b16 %v263
  %v1159 = vunpack.c.l.b16 %v264
  %v1160 = vunpack.c.l.b16 %v265
  %v1161 = vunpack.c.l.b16 %v266
  %v1162 = vunpack.c.l.b16 %v267
  %v1163 = vunpack.c.l.b16 %v268
  %v1164 = vunpack.c.l.b16 %v269
  %v1165 = vunpack.c.l.b16 %v270
  %v1166 = vunpack.c.l.b16 %v271
  %v1167 = vunpack.c.l.b16 %v272
  %v1168 = vunpack.c.l.b16 %v273
  %v1169 = vunpack.c.l.b16 %v274
  %v1170 = vunpack.c.l.b16 %v275
  %v1171 = vunpack.c.l.b16 %v276
  %v1172 = vunpack.c.l.b16 %v277
  %v1173 = vunpack.c.l.b16 %v278
  %v1174 = vunpack.c.l.b16 %v279
  %v1175 = vunpack.c.l.b16 %v280
  %v1176 = vunpack.c.l.b16 %v281
  %v1177 = vunpack.c.l.b16 %v282
  %v1178 = vunpack.c.l.b16 %v283
  %v1179 = vunpack.c.l.b16 %v284
  %v1180 = vunpack.c.l.b16 %v285
  %v1181 = vunpack.c.l.b16 %v286
  %v1182 = vunpack.c.l.b16 %v287
  %v1183 = vunpack.c.l.b16 %v288
  %v1184 = vunpack.c.l.b16 %v289
  %v1185 = vunpack.c.l.b16 %v290
  %v1186 = vunpack.c.l.b16 %v291
  %v1187 = vunpack.c.l.b16 %v292
  %v1188 = vunpack.c.l.b16 %v293
  %v1189 = vunpack.c.l.b16 %v294
  %v1190 = vunpack.c.l.b16 %v295
  %v1191 = vunpack.c.l.b16 %v296
  %v1192 = vunpack.c.l.b16 %v297
  %v1193 = vunpack.c.l.b16 %v298
  %v1194 = vunpack.c.l.b16 %v299
  %v1195 = vunpack.c.l.b16 %v300
  %v1196 = vunpack.c.l.b16 %v301
  %v1197 = vunpack.c.l.b16 %v302
  %v1198 = vunpack.c.l.b16 %v303
  %v1199 = vunpack.c.l.b16 %v304
  %v1200 = vunpack.c.l.b16 %v305
  %v1201 = vunpack.c.l.b16 %v306
  %v1202 = vunpack.c.l.b16 %v307
  %v1203 = vunpack.c.l.b16 %v308
  %v1204 = vunpack.c.l.b16 %v309
  %v1205 = vunpack.c.l.b16 %v310
  %v1206 = vunpack.c.l.b16 %v311
  %v1207 = vunpack.c.l.b16 %v312
  %v1208 = vunpack.c.l.b16 %v313
  %v1209 = vunpack.c.l.b16 %v314
  %v1210 = vunpack.c.l.b16 %v315
  %v1211 = vunpack.c.l.b16 %v316
  %v1212 = vunpack.c.l.b16 %v317
  %v1213 = vunpack.c.l.b16 %v318
  %v1214 = vunpack.c.l.b16 %v319
  %v1215 = vunpack.c.l.b16 %v320
  %v1216 = vunpack.c.l.b16 %v321
  %v1217 = vunpack.c.l.b16 %v322
  %v1218 = vunpack.c.l.b16 %v323
  %v1219 = vunpack.c.l.b16 %v324
  %v1220 = vunpack.c.l.b16 %v325
  %v1221 = vunpack.c.l.b16 %v326
  %v1222 = vunpack.c.l.b16 %v327
  %v1223 = vunpack.c.l.b16 %v328
  %v1224 = vunpack.c.l.b16 %v329
  %v1225 = vunpack.c.l.b16 %v330
  %v1226 = vunpack.c.l.b16 %v331
  %v1227 = vunpack.c.l.b16 %v332
  %v1228 = vunpack.c.l.b16 %v333
  %v1229 = vunpack.c.l.b16 %v334
  %v1230 = vunpack.c.l.b16 %v335
  %v1231 = vunpack.c.l.b16 %v336
  %v1232 = vunpack.c.l.b16 %v337
  %v1233 = vunpack.c.l.b16 %v338
  %v1234 = vunpack.c.l.b16 %v339
  %v1235 = vunpack.c.l.b16 %v340
  %v1236 = vunpack.c.l.b16 %v341
  %v1237 = vunpack.c.l.b16 %v342
  %v1238 = vunpack.c.l.b16 %v343
  %v1239 = vunpack.c.l.b16 %v344
  %v1240 = vunpack.c.l.b16 %v345
  %v1241 = vunpack.c.l.b16 %v346
  %v1242 = vunpack.c.l.b16 %v347
  %v1243 = vunpack.c.l.b16 %v348
  %v1244 = vunpack.c.l.b16 %v349
  %v1245 = vunpack.c.l.b16 %v350
  %v1246 = vunpack.c.l.b16 %v351
  %v1247 = vunpack.c.l.b16 %v352
  %v1248 = vunpack.c.l.b16 %v353
  %v1249 = vunpack.c.l.b16 %v354
  %v1250 = vunpack.c.l.b16 %v355
  %v1251 = vunpack.c.l.b16 %v356
  %v1252 = vunpack.c.l.b16 %v357
  %v1253 = vunpack.c.l.b16 %v358
  %v1254 = vunpack.c.l.b16 %v359
  %v1255 = vunpack.c.l.b16 %v360
  %v1256 = vunpack.c.l.b16 %v361
  %v1257 = vunpack.c.l.b16 %v362
  %v1258 = vunpack.c.l.b16 %v363
  %v1259 = vunpack.c.l.b16 %v364
  %v1260 = vunpack.c.l.b16 %v365
  %v1261 = vunpack.c.l.b16 %v366
  %v1262 = vunpack.c.l.b16 %v367
  %v1263 = vunpack.c.l.b16 %v368
  %v1264 = vunpack.c.l.b16 %v369
  %v1265 = vunpack.c.l.b16 %v370
  %v1266 = vunpack.c.l.b16 %v371
  %v1267 = vunpack.c.l.b16 %v372
  %v1268 = vunpack.c.l.b16 %v373
  %v1269 = vunpack.c.l.b16 %v374
  %v1270 = vunpack.c.l.b16 %v375
  %v1271 = vunpack.c.l.b16 %v376
  %v1272 = vunpack.c.l.b16 %v377
  %v1273 = vunpack.c.l.b16 %v378
  %v1274 = vunpack.c.l.b16 %v379
  %v1275 = vunpack.c.l.b16 %v380
  %v1276 = vunpack.c.l.b16 %v381
  %v1277 = vunpack.c.l.b16 %v382
  %v1278 = vunpack.c.l.b16 %v383
  %v1279 = vunpack.c.l.b16 %v384
  %v1280 = vunpack.c.l.b16 %v385
  %v1281 = vunpack.c.l.b16 %v386
  %v1282 = vunpack.c.l.b16 %v387
  %v1283 = vunpack.c.l.b16 %v388
  %v1284 = vunpack.c.l.b16 %v389
  %v1285 = vunpack.c.l.b16 %v390
  %v1286 = vunpack.c.l.b16 %v391
  %v1287 = vunpack.c.l.b16 %v392
  %v1288 = vunpack.c.l.b16 %v393
  %v1289 = vunpack.c.l.b16 %v394
  %v1290 = vunpack.c.l.b16 %v395
  %v1291 = vunpack.c.l.b16 %v396
  %v1292 = vunpack.c.l.b16 %v397
  %v1293 = vunpack.c.l.b16 %v398
  %v1294 = vunpack.c.l.b16 %v399
  %v1295 = vunpack.c.l.b16 %v400
  %v1296 = vunpack.c.l.b16 %v401
  %v1297 = vunpack.c.l.b16 %v402
  %v1298 = vunpack.c.l.b16 %v403
  %v1299 = vunpack.c.l.b16 %v404
  %v1300 = vunpack.c.l.b16 %v405
  %v1301 = vunpack.c.l.b16 %v406
  %v1302 = vunpack.c.l.b16 %v407
  %v1303 = vunpack.c.l.b16 %v408
  %v1304 = vunpack.c.l.b16 %v409
  %v1305 = vunpack.c.l.b16 %v410
  %v1306 = vunpack.c.l.b16 %v411
  %v1307 = vunpack.c.l.b16 %v412
  %v1308 = vunpack.c.l.b16 %v413
  %v1309 = vunpack.c.l.b16 %v414
  %v1310 = vunpack.c.l.b16 %v415
  %v1311 = vunpack.c.l.b16 %v416
  %v1312 = vunpack.c.l.b16 %v417
  %v1313 = vunpack.c.l.b16 %v418
  %v1314 = vunpack.c.l.b16 %v419
  %v1315 = vunpack.c.l.b16 %v420
  %v1316 = vunpack.c.l.b16 %v421
  %v1317 = vunpack.c.l.b16 %v422
  %v1318 = vunpack.c.l.b16 %v423
  %v1319 = vunpack.c.l.b16 %v424
  %v1320 = vunpack.c.l.b16 %v425
  %v1321 = vunpack.c.l.b16 %v426
  %v1322 = vunpack.c.l.b16 %v427
  %v1323 = vunpack.c.l.b16 %v428
  %v1324 = vunpack.c.l.b16 %v429
  %v1325 = vunpack.c.l.b16 %v430
  %v1326 = vunpack.c.l.b16 %v431
  %v1327 = vunpack.c.l.b16 %v432
  %v1328 = vunpack.c.l.b16 %v433
  %v1329 = vunpack.c.l.b16 %v434
  %v1330 = vunpack.c.l.b16 %v435
  %v1331 = vunpack.c.l.b16 %v436
  %v1332 = vunpack.c.l.b16 %v437
  %v1333 = vunpack.c.l.b16 %v438
  %v1334 = vunpack.c.l.b16 %v439
  %v1335 = vunpack.c.l.b16 %v440
  %v1336 = vunpack.c.l.b16 %v441
  %v1337 = vunpack.c.l.b16 %v442
  %v1338 = vunpack.c.l.b16 %v443
  %v1339 = vunpack.c.l.b16 %v444
  %v1340 = vunpack.c.l.b16 %v445
  %v1341 = vunpack.c.l.b16 %v446
  %v1342 = vunpack.c.l.b16 %v447
  %v1343 = vunpack.c.l.b16 %v448
  %v1344 = vunpack.c.l.b16 %v449
  %v1345 = vunpack.c.l.b16 %v450
  %v1346 = vunpack.c.l.b16 %v451
  %v1347 = vunpack.c.l.b16 %v452
  %v1348 = vunpack.c.l.b16 %v453
  %v1349 = vunpack.c.l.b16 %v454
  %v1350 = vunpack.c.l.b16 %v455
  %v1351 = vunpack.c.l.b16 %v456
  %v1352 = vunpack.c.l.b16 %v457
  %v1353 = vunpack.c.l.b16 %v458
  %v1354 = vunpack.c.l.b16 %v459
  %v1355 = vunpack.c.l.b16 %v460
  %v1356 = vunpack.c.l.b16 %v461
  %v1357 = vunpack.c.l.b16 %v462
  %v1358 = vunpack.c.l.b16 %v463
  %v1359 = vpack.c.b16 %v960, %v959
  %v1360 = vpack.c.b16 %v962, %v961
  %v1361 = vpack.c.b16 %v964, %v963
  %v1362 = vpack.c.b16 %v966, %v965
  %v1363 = vpack.c.b16 %v968, %v967
  %v1364 = vpack.c.b16 %v970, %v969
  %v1365 = vpack.c.b16 %v972, %v971
  %v1366 = vpack.c.b16 %v974, %v973
  %v1367 = vpack.c.b16 %v976, %v975
  %v1368 = vpack.c.b16 %v978, %v977
  %v1369 = vpack.c.b16 %v980, %v979
  %v1370 = vpack.c.b16 %v982, %v981
  %v1371 = vpack.c.b16 %v984, %v983
  %v1372 = vpack.c.b16 %v986, %v985
  %v1373 = vpack.c.b16 %v988, %v987
  %v1374 = vpack.c.b16 %v990, %v989
  %v1375 = vpack.c.b16 %v992, %v991
  %v1376 = vpack.c.b16 %v994, %v993
  %v1377 = vpack.c.b16 %v996, %v995
  %v1378 = vpack.c.b16 %v998, %v997
  %v1379 = vpack.c.b16 %v1000, %v999
  %v1380 = vpack.c.b16 %v1002, %v1001
  %v1381 = vpack.c.b16 %v1004, %v1003
  %v1382 = vpack.c.b16 %v1006, %v1005
  %v1383 = vpack.c.b16 %v1008, %v1007
  %v1384 = vpack.c.b16 %v1010, %v1009
  %v1385 = vpack.c.b16 %v1012, %v1011
  %v1386 = vpack.c.b16 %v1014, %v1013
  %v1387 = vpack.c.b16 %v1016, %v1015
  %v1388 = vpack.c.b16 %v1018, %v1017
  %v1389 = vpack.c.b16 %v1020, %v1019
  %v1390 = vpack.c.b16 %v1022, %v1021
  %v1391 = vpack.c.b16 %v1024, %v1023
  %v1392 = vpack.c.b16 %v1026, %v1025
  %v1393 = vpack.c.b16 %v1028, %v1027
  %v1394 = vpack.c.b16 %v1030, %v1029
  %v1395 = vpack.c.b16 %v1032, %v1031
  %v1396 = vpack.c.b16 %v1034, %v1033
  %v1397 = vpack.c.b16 %v1036, %v1035
  %v1398 = vpack.c.b16 %v1038, %v1037
  %v1399 = vpack.c.b16 %v1040, %v1039
  %v1400 = vpack.c.b16 %v1042, %v1041
  %v1401 = vpack.c.b16 %v1044, %v1043
  %v1402 = vpack.c.b16 %v1046, %v1045
  %v1403 = vpack.c.b16 %v1048, %v1047
  %v1404 = vpack.c.b16 %v1050, %v1049
  %v1405 = vpack.c.b16 %v1052, %v1051
  %v1406 = vpack.c.b16 %v1054, %v1053
  %v1407 = vpack.c.b16 %v1056, %v1055
  %v1408 = vpack.c.b16 %v1058, %v1057
  %v1409 = vpack.c.b16 %v1060, %v1059
  %v1410 = vpack.c.b16 %v1062, %v1061
  %v1411 = vpack.c.b16 %v1064, %v1063
  %v1412 = vpack.c.b16 %v1066, %v1065
  %v1413 = vpack.c.b16 %v1068, %v1067
  %v1414 = vpack.c.b16 %v1070, %v1069
  %v1415 = vpack.c.b16 %v1072, %v1071
  %v1416 = vpack.c.b16 %v1074, %v1073
  %v1417 = vpack.c.b16 %v1076, %v1075
  %v1418 = vpack.c.b16 %v1078, %v1077
  %v1419 = vpack.c.b16 %v1080, %v1079
  %v1420 = vpack.c.b16 %v1082, %v1081
  %v1421 = vpack.c.b16 %v1084, %v1083
  %v1422 = vpack.c.b16 %v1086, %v1085
  %v1423 = vpack.c.b16 %v1088, %v1087
  %v1424 = vpack.c.b16 %v1090, %v1089
  %v1425 = vpack.c.b16 %v1092, %v1091
  %v1426 = vpack.c.b16 %v1094, %v1093
  %v1427 = vpack.c.b16 %v1096, %v1095
  %v1428 = vpack.c.b16 %v1098, %v1097
  %v1429 = vpack.c.b16 %v1100, %v1099
  %v1430 = vpack.c.b16 %v1102, %v1101
  %v1431 = vpack.c.b16 %v1104, %v1103
  %v1432 = vpack.c.b16 %v1106, %v1105
  %v1433 = vpack.c.b16 %v1108, %v1107
  %v1434 = vpack.c.b16 %v1110, %v1109
  %v1435 = vpack.c.b16 %v1112, %v1111
  %v1436 = vpack.c.b16 %v1114, %v1113
  %v1437 = vpack.c.b16 %v1116, %v1115
  %v1438 = vpack.c.b16 %v1118, %v1117
  %v1439 = vpack.c.b16 %v1120, %v1119
  %v1440 = vpack.c.b16 %v1122, %v1121
  %v1441 = vpack.c.b16 %v1124, %v1123
  %v1442 = vpack.c.b16 %v1126, %v1125
  %v1443 = vpack.c.b16 %v1128, %v1127
  %v1444 = vpack.c.b16 %v1130, %v1129
  %v1445 = vpack.c.b16 %v1132, %v1131
  %v1446 = vpack.c.b16 %v1134, %v1133
  %v1447 = vpack.c.b16 %v1136, %v1135
  %v1448 = vpack.c.b16 %v1138, %v1137
  %v1449 = vpack.c.b16 %v1140, %v1139
  %v1450 = vpack.c.b16 %v1142, %v1141
  %v1451 = vpack.c.b16 %v1144, %v1143
  %v1452 = vpack.c.b16 %v1146, %v1145
  %v1453 = vpack.c.b16 %v1148, %v1147
  %v1454 = vpack.c.b16 %v1150, %v1149
  %v1455 = vpack.c.b16 %v1152, %v1151
  %v1456 = vpack.c.b16 %v1154, %v1153
  %v1457 = vpack.c.b16 %v1156, %v1155
  %v1458 = vpack.c.b16 %v1158, %v1157
  %v1459 = vpack.c.b16 %v1160, %v1159
  %v1460 = vpack.c.b16 %v1162, %v1161
  %v1461 = vpack.c.b16 %v1164, %v1163
  %v1462 = vpack.c.b16 %v1166, %v1165
  %v1463 = vpack.c.b16 %v1168, %v1167
  %v1464 = vpack.c.b16 %v1170, %v1169
  %v1465 = vpack.c.b16 %v1172, %v1171
  %v1466 = vpack.c.b16 %v1174, %v1173
  %v1467 = vpack.c.b16 %v1176, %v1175
  %v1468 = vpack.c.b16 %v1178, %v1177
  %v1469 = vpack.c.b16 %v1180, %v1179
  %v1470 = vpack.c.b16 %v1182, %v1181
  %v1471 = vpack.c.b16 %v1184, %v1183
  %v1472 = vpack.c.b16 %v1186, %v1185
  %v1473 = vpack.c.b16 %v1188, %v1187
  %v1474 = vpack.c.b16 %v1190, %v1189
  %v1475 = vpack.c.b16 %v1192, %v1191
  %v1476 = vpack.c.b16 %v1194, %v1193
  %v1477 = vpack.c.b16 %v1196, %v1195
  %v1478 = vpack.c.b16 %v1198, %v1197
  %v1479 = vpack.c.b16 %v1200, %v1199
  %v1480 = vpack.c.b16 %v1202, %v1201
  %v1481 = vpack.c.b16 %v1204, %v1203
  %v1482 = vpack.c.b16 %v1206, %v1205
  %v1483 = vpack.c.b16 %v1208, %v1207
  %v1484 = vpack.c.b16 %v1210, %v1209
  %v1485 = vpack.c.b16 %v1212, %v1211
  %v1486 = vpack.c.b16 %v1214, %v1213
  %v1487 = vpack.c.b16 %v1216, %v1215
  %v1488 = vpack.c.b16 %v1218, %v1217
  %v1489 = vpack.c.b16 %v1220, %v1219
  %v1490 = vpack.c.b16 %v1222, %v1221
  %v1491 = vpack.c.b16 %v1224, %v1223
  %v1492 = vpack.c.b16 %v1226, %v1225
  %v1493 = vpack.c.b16 %v1228, %v1227
  %v1494 = vpack.c.b16 %v1230, %v1229
  %v1495 = vpack.c.b16 %v1232, %v1231
  %v1496 = vpack.c.b16 %v1234, %v1233
  %v1497 = vpack.c.b16 %v1236, %v1235
  %v1498 = vpack.c.b16 %v1238, %v1237
  %v1499 = vpack.c.b16 %v1240, %v1239
  %v1500 = vpack.c.b16 %v1242, %v1241
  %v1501 = vpack.c.b16 %v1244, %v1243
  %v1502 = vpack.c.b16 %v1246, %v1245
  %v1503 = vpack.c.b16 %v1248, %v1247
  %v1504 = vpack.c.b16 %v1250, %v1249
  %v1505 = vpack.c.b16 %v1252, %v1251
  %v1506 = vpack.c.b16 %v1254, %v1253
  %v1507 = vpack.c.b16 %v1256, %v1255
  %v1508 = vpack.c.b16 %v1258, %v1257
  %v1509 = vpack.c.b16 %v1260, %v1259
  %v1510 = vpack.c.b16 %v1262, %v1261
  %v1511 = vpack.c.b16 %v1264, %v1263
  %v1512 = vpack.c.b16 %v1266, %v1265
  %v1513 = vpack.c.b16 %v1268, %v1267
  %v1514 = vpack.c.b16 %v1270, %v1269
  %v1515 = vpack.c.b16 %v1272, %v1271
  %v1516 = vpack.c.b16 %v1274, %v1273
  %v1517 = vpack.c.b16 %v1276, %v1275
  %v1518 = vpack.c.b16 %v1278, %v1277
  %v1519 = vpack.c.b16 %v1280, %v1279
  %v1520 = vpack.c.b16 %v1282, %v1281
  %v1521 = vpack.c.b16 %v1284, %v1283
  %v1522 = vpack.c.b16 %v1286, %v1285
  %v1523 = vpack.c.b16 %v1288, %v1287
  %v1524 = vpack.c.b16 %v1290, %v1289
  %v1525 = vpack.c.b16 %v1292, %v1291
  %v1526 = vpack.c.b16 %v1294, %v1293
  %v1527 = vpack.c.b16 %v1296, %v1295
  %v1528 = vpack.c.b16 %v1298, %v1297
  %v1529 = vpack.c.b16 %v1300, %v1299
  %v1530 = vpack.c.b16 %v1302, %v1301
  %v1531 = vpack.c.b16 %v1304, %v1303
  %v1532 = vpack.c.b16 %v1306, %v1305
  %v1533 = vpack.c.b16 %v1308, %v1307
  %v1534 = vpack.c.b16 %v1310, %v1309
  %v1535 = vpack.c.b16 %v1312, %v1311
  %v1536 = vpack.c.b16 %v1314, %v1313
  %v1537 = vpack.c.b16 %v1316, %v1315
  %v1538 = vpack.c.b16 %v1318, %v1317
  %v1539 = vpack.c.b16 %v1320, %v1319
  %v1540 = vpack.c.b16 %v1322, %v1321
  %v1541 = vpack.c.b16 %v1324, %v1323
  %v1542 = vpack.c.b16 %v1326, %v1325
  %v1543 = vpack.c.b16 %v1328, %v1327
  %v1544 = vpack.c.b16 %v1330, %v1329
  %v1545 = vpack.c.b16 %v1332, %v1331
  %v1546 = vpack.c.b16 %v1334, %v1333
  %v1547 = vpack.c.b16 %v1336, %v1335
  %v1548 = vpack.c.b16 %v1338, %v1337
  %v1549 = vpack.c.b16 %v1340, %v1339
  %v1550 = vpack.c.b16 %v1342, %v1341
  %v1551 = vpack.c.b16 %v1344, %v1343
  %v1552 = vpack.c.b16 %v1346, %v1345
  %v1553 = vpack.c.b16 %v1348, %v1347
  %v1554 = vpack.c.b16 %v1350, %v1349
  %v1555 = vpack.c.b16 %v1352, %v1351
  %v1556 = vpack.c.b16 %v1354, %v1353
  %v1557 = vpack.c.b16 %v1356, %v1355
  %v1558 = vpack.c.b16 %v1358, %v1357
  %1759 = vmatprep.subr.bf16.mxu0 0
  %1760 = vmatpush1.bf16.msra.mxu0 %v1366
  %1761 = vmatprep.subr.bf16.mxu0 0
  %1762 = vmatpush1.bf16.msra.mxu0 %v1365
  %1763 = vmatprep.subr.bf16.mxu0 0
  %1764 = vmatpush1.bf16.msra.mxu0 %v1364
  %1765 = vmatprep.subr.bf16.mxu0 0
  %1766 = vmatpush1.bf16.msra.mxu0 %v1363
  %1767 = vmatprep.subr.bf16.mxu0 0
  %1768 = vmatpush1.bf16.msra.mxu0 %v1362
  %1769 = vmatprep.subr.bf16.mxu0 0
  %1770 = vmatpush1.bf16.msra.mxu0 %v1361
  %1771 = vmatprep.subr.bf16.mxu0 0
  %1772 = vmatpush1.bf16.msra.mxu0 %v1360
  %1773 = vmatprep.subr.bf16.mxu0 0
  %1774 = vmatpush1.bf16.msra.mxu0 %v1359
  %1775 = vmatprep.subr.bf16.mxu0 0
  %1776 = vmatpush2.bf16.msra.mxu0 %v1374
  %1777 = vmatprep.subr.bf16.mxu0 0
  %1778 = vmatpush2.bf16.msra.mxu0 %v1373
  %1779 = vmatprep.subr.bf16.mxu0 0
  %1780 = vmatpush2.bf16.msra.mxu0 %v1372
  %1781 = vmatprep.subr.bf16.mxu0 0
  %1782 = vmatpush2.bf16.msra.mxu0 %v1371
  %1783 = vmatprep.subr.bf16.mxu0 0
  %1784 = vmatpush2.bf16.msra.mxu0 %v1370
  %1785 = vmatprep.subr.bf16.mxu0 0
  %1786 = vmatpush2.bf16.msra.mxu0 %v1369
  %1787 = vmatprep.subr.bf16.mxu0 0
  %1788 = vmatpush2.bf16.msra.mxu0 %v1368
  %1789 = vmatprep.subr.bf16.mxu0 0
  %1790 = vmatpush2.bf16.msra.mxu0 %v1367
  %1791 = vmatprep.mubr.bf16.mxu0 %v510
  %1792 = vmatmul.mubr.bf16.gmra.mxu0 %v509
  %v1793 = vpop.f32.mrf.mxu0
  %v1794 = vadd.f32 %v469, %v1793
  %v1795 = vpop.f32.mrf.mxu0
  %v1796 = vpop.f32.mrf.mxu0
  %v1797 = vpop.f32.mrf.mxu0
  %1798 = vdwg.mxu0
  %1799 = vmatprep.subr.bf16.mxu0 0
  %1800 = vmatpush1.bf16.msra.mxu0 %v1382
  %1801 = vmatprep.subr.bf16.mxu0 0
  %1802 = vmatpush1.bf16.msra.mxu0 %v1381
  %1803 = vmatprep.subr.bf16.mxu0 0
  %1804 = vmatpush1.bf16.msra.mxu0 %v1380
  %1805 = vmatprep.subr.bf16.mxu0 0
  %1806 = vmatpush1.bf16.msra.mxu0 %v1379
  %1807 = vmatprep.subr.bf16.mxu0 0
  %1808 = vmatpush1.bf16.msra.mxu0 %v1378
  %1809 = vmatprep.subr.bf16.mxu0 0
  %1810 = vmatpush1.bf16.msra.mxu0 %v1377
  %1811 = vmatprep.subr.bf16.mxu0 0
  %1812 = vmatpush1.bf16.msra.mxu0 %v1376
  %1813 = vmatprep.subr.bf16.mxu0 0
  %1814 = vmatpush1.bf16.msra.mxu0 %v1375
  %1815 = vmatprep.subr.bf16.mxu0 0
  %1816 = vmatpush2.bf16.msra.mxu0 %v1390
  %1817 = vmatprep.subr.bf16.mxu0 0
  %1818 = vmatpush2.bf16.msra.mxu0 %v1389
  %1819 = vmatprep.subr.bf16.mxu0 0
  %1820 = vmatpush2.bf16.msra.mxu0 %v1388
  %1821 = vmatprep.subr.bf16.mxu0 0
  %1822 = vmatpush2.bf16.msra.mxu0 %v1387
  %1823 = vmatprep.subr.bf16.mxu0 0
  %1824 = vmatpush2.bf16.msra.mxu0 %v1386
  %1825 = vmatprep.subr.bf16.mxu0 0
  %1826 = vmatpush2.bf16.msra.mxu0 %v1385
  %1827 = vmatprep.subr.bf16.mxu0 0
  %1828 = vmatpush2.bf16.msra.mxu0 %v1384
  %1829 = vmatprep.subr.bf16.mxu0 0
  %1830 = vmatpush2.bf16.msra.mxu0 %v1383
  %1831 = vmatprep.mubr.bf16.mxu0 %v512
  %1832 = vmatmul.mubr.bf16.gmra.mxu0 %v511
  %v1833 = vpop.f32.mrf.mxu0
  %v1834 = vadd.f32 %v1794, %v1833
  %v1835 = vpop.f32.mrf.mxu0
  %v1836 = vpop.f32.mrf.mxu0
  %v1837 = vpop.f32.mrf.mxu0
  %1838 = vdwg.mxu0
  %1839 = vmatprep.subr.bf16.mxu0 0
  %1840 = vmatpush1.bf16.msra.mxu0 %v1398
  %1841 = vmatprep.subr.bf16.mxu0 0
  %1842 = vmatpush1.bf16.msra.mxu0 %v1397
  %1843 = vmatprep.subr.bf16.mxu0 0
  %1844 = vmatpush1.bf16.msra.mxu0 %v1396
  %1845 = vmatprep.subr.bf16.mxu0 0
  %1846 = vmatpush1.bf16.msra.mxu0 %v1395
  %1847 = vmatprep.subr.bf16.mxu0 0
  %1848 = vmatpush1.bf16.msra.mxu0 %v1394
  %1849 = vmatprep.subr.bf16.mxu0 0
  %1850 = vmatpush1.bf16.msra.mxu0 %v1393
  %1851 = vmatprep.subr.bf16.mxu0 0
  %1852 = vmatpush1.bf16.msra.mxu0 %v1392
  %1853 = vmatprep.subr.bf16.mxu0 0
  %1854 = vmatpush1.bf16.msra.mxu0 %v1391
  %1855 = vmatprep.subr.bf16.mxu0 0
  %1856 = vmatpush2.bf16.msra.mxu0 %v1406
  %1857 = vmatprep.subr.bf16.mxu0 0
  %1858 = vmatpush2.bf16.msra.mxu0 %v1405
  %1859 = vmatprep.subr.bf16.mxu0 0
  %1860 = vmatpush2.bf16.msra.mxu0 %v1404
  %1861 = vmatprep.subr.bf16.mxu0 0
  %1862 = vmatpush2.bf16.msra.mxu0 %v1403
  %1863 = vmatprep.subr.bf16.mxu0 0
  %1864 = vmatpush2.bf16.msra.mxu0 %v1402
  %1865 = vmatprep.subr.bf16.mxu0 0
  %1866 = vmatpush2.bf16.msra.mxu0 %v1401
  %1867 = vmatprep.subr.bf16.mxu0 0
  %1868 = vmatpush2.bf16.msra.mxu0 %v1400
  %1869 = vmatprep.subr.bf16.mxu0 0
  %1870 = vmatpush2.bf16.msra.mxu0 %v1399
  %1871 = vmatprep.mubr.bf16.mxu0 %v514
  %1872 = vmatmul.mubr.bf16.gmra.mxu0 %v513
  %v1873 = vpop.f32.mrf.mxu0
  %v1874 = vadd.f32 %v1834, %v1873
  %v1875 = vpop.f32.mrf.mxu0
  %v1876 = vpop.f32.mrf.mxu0
  %v1877 = vpop.f32.mrf.mxu0
  %1878 = vdwg.mxu0
  %1879 = vmatprep.subr.bf16.mxu0 0
  %1880 = vmatpush1.bf16.msra.mxu0 %v1414
  %1881 = vmatprep.subr.bf16.mxu0 0
  %1882 = vmatpush1.bf16.msra.mxu0 %v1413
  %1883 = vmatprep.subr.bf16.mxu0 0
  %1884 = vmatpush1.bf16.msra.mxu0 %v1412
  %1885 = vmatprep.subr.bf16.mxu0 0
  %1886 = vmatpush1.bf16.msra.mxu0 %v1411
  %1887 = vmatprep.subr.bf16.mxu0 0
  %1888 = vmatpush1.bf16.msra.mxu0 %v1410
  %1889 = vmatprep.subr.bf16.mxu0 0
  %1890 = vmatpush1.bf16.msra.mxu0 %v1409
  %1891 = vmatprep.subr.bf16.mxu0 0
  %1892 = vmatpush1.bf16.msra.mxu0 %v1408
  %1893 = vmatprep.subr.bf16.mxu0 0
  %1894 = vmatpush1.bf16.msra.mxu0 %v1407
  %1895 = vmatprep.subr.bf16.mxu0 0
  %1896 = vmatpush2.bf16.msra.mxu0 %v1422
  %1897 = vmatprep.subr.bf16.mxu0 0
  %1898 = vmatpush2.bf16.msra.mxu0 %v1421
  %1899 = vmatprep.subr.bf16.mxu0 0
  %1900 = vmatpush2.bf16.msra.mxu0 %v1420
  %1901 = vmatprep.subr.bf16.mxu0 0
  %1902 = vmatpush2.bf16.msra.mxu0 %v1419
  %1903 = vmatprep.subr.bf16.mxu0 0
  %1904 = vmatpush2.bf16.msra.mxu0 %v1418
  %1905 = vmatprep.subr.bf16.mxu0 0
  %1906 = vmatpush2.bf16.msra.mxu0 %v1417
  %1907 = vmatprep.subr.bf16.mxu0 0
  %1908 = vmatpush2.bf16.msra.mxu0 %v1416
  %1909 = vmatprep.subr.bf16.mxu0 0
  %1910 = vmatpush2.bf16.msra.mxu0 %v1415
  %1911 = vmatprep.mubr.bf16.mxu0 %v516
  %1912 = vmatmul.mubr.bf16.gmra.mxu0 %v515
  %v1913 = vpop.f32.mrf.mxu0
  %v1914 = vadd.f32 %v1874, %v1913
  %v1915 = vpop.f32.mrf.mxu0
  %v1916 = vpop.f32.mrf.mxu0
  %v1917 = vpop.f32.mrf.mxu0
  %1918 = vdwg.mxu0
  %1919 = vmatprep.subr.bf16.mxu0 0
  %1920 = vmatpush1.bf16.msra.mxu0 %v1430
  %1921 = vmatprep.subr.bf16.mxu0 0
  %1922 = vmatpush1.bf16.msra.mxu0 %v1429
  %1923 = vmatprep.subr.bf16.mxu0 0
  %1924 = vmatpush1.bf16.msra.mxu0 %v1428
  %1925 = vmatprep.subr.bf16.mxu0 0
  %1926 = vmatpush1.bf16.msra.mxu0 %v1427
  %1927 = vmatprep.subr.bf16.mxu0 0
  %1928 = vmatpush1.bf16.msra.mxu0 %v1426
  %1929 = vmatprep.subr.bf16.mxu0 0
  %1930 = vmatpush1.bf16.msra.mxu0 %v1425
  %1931 = vmatprep.subr.bf16.mxu0 0
  %1932 = vmatpush1.bf16.msra.mxu0 %v1424
  %1933 = vmatprep.subr.bf16.mxu0 0
  %1934 = vmatpush1.bf16.msra.mxu0 %v1423
  %1935 = vmatprep.subr.bf16.mxu0 0
  %1936 = vmatpush2.bf16.msra.mxu0 %v1438
  %1937 = vmatprep.subr.bf16.mxu0 0
  %1938 = vmatpush2.bf16.msra.mxu0 %v1437
  %1939 = vmatprep.subr.bf16.mxu0 0
  %1940 = vmatpush2.bf16.msra.mxu0 %v1436
  %1941 = vmatprep.subr.bf16.mxu0 0
  %1942 = vmatpush2.bf16.msra.mxu0 %v1435
  %1943 = vmatprep.subr.bf16.mxu0 0
  %1944 = vmatpush2.bf16.msra.mxu0 %v1434
  %1945 = vmatprep.subr.bf16.mxu0 0
  %1946 = vmatpush2.bf16.msra.mxu0 %v1433
  %1947 = vmatprep.subr.bf16.mxu0 0
  %1948 = vmatpush2.bf16.msra.mxu0 %v1432
  %1949 = vmatprep.subr.bf16.mxu0 0
  %1950 = vmatpush2.bf16.msra.mxu0 %v1431
  %1951 = vmatprep.mubr.bf16.mxu0 %v518
  %1952 = vmatmul.mubr.bf16.gmra.mxu0 %v517
  %v1953 = vpop.f32.mrf.mxu0
  %v1954 = vadd.f32 %v1914, %v1953
  %v1955 = vpop.f32.mrf.mxu0
  %v1956 = vpop.f32.mrf.mxu0
  %v1957 = vpop.f32.mrf.mxu0
  %1958 = vdwg.mxu0
  %1959 = vmatprep.subr.bf16.mxu0 0
  %1960 = vmatpush1.bf16.msra.mxu0 %v1446
  %1961 = vmatprep.subr.bf16.mxu0 0
  %1962 = vmatpush1.bf16.msra.mxu0 %v1445
  %1963 = vmatprep.subr.bf16.mxu0 0
  %1964 = vmatpush1.bf16.msra.mxu0 %v1444
  %1965 = vmatprep.subr.bf16.mxu0 0
  %1966 = vmatpush1.bf16.msra.mxu0 %v1443
  %1967 = vmatprep.subr.bf16.mxu0 0
  %1968 = vmatpush1.bf16.msra.mxu0 %v1442
  %1969 = vmatprep.subr.bf16.mxu0 0
  %1970 = vmatpush1.bf16.msra.mxu0 %v1441
  %1971 = vmatprep.subr.bf16.mxu0 0
  %1972 = vmatpush1.bf16.msra.mxu0 %v1440
  %1973 = vmatprep.subr.bf16.mxu0 0
  %1974 = vmatpush1.bf16.msra.mxu0 %v1439
  %1975 = vmatprep.subr.bf16.mxu0 0
  %1976 = vmatpush2.bf16.msra.mxu0 %v1454
  %1977 = vmatprep.subr.bf16.mxu0 0
  %1978 = vmatpush2.bf16.msra.mxu0 %v1453
  %1979 = vmatprep.subr.bf16.mxu0 0
  %1980 = vmatpush2.bf16.msra.mxu0 %v1452
  %1981 = vmatprep.subr.bf16.mxu0 0
  %1982 = vmatpush2.bf16.msra.mxu0 %v1451
  %1983 = vmatprep.subr.bf16.mxu0 0
  %1984 = vmatpush2.bf16.msra.mxu0 %v1450
  %1985 = vmatprep.subr.bf16.mxu0 0
  %1986 = vmatpush2.bf16.msra.mxu0 %v1449
  %1987 = vmatprep.subr.bf16.mxu0 0
  %1988 = vmatpush2.bf16.msra.mxu0 %v1448
  %1989 = vmatprep.subr.bf16.mxu0 0
  %1990 = vmatpush2.bf16.msra.mxu0 %v1447
  %1991 = vmatprep.mubr.bf16.mxu0 %v520
  %1992 = vmatmul.mubr.bf16.gmra.mxu0 %v519
  %v1993 = vpop.f32.mrf.mxu0
  %v1994 = vadd.f32 %v1954, %v1993
  %v1995 = vpop.f32.mrf.mxu0
  %v1996 = vpop.f32.mrf.mxu0
  %v1997 = vpop.f32.mrf.mxu0
  %1998 = vdwg.mxu0
  %1999 = vmatprep.subr.bf16.mxu0 0
  %2000 = vmatpush1.bf16.msra.mxu0 %v1462
  %2001 = vmatprep.subr.bf16.mxu0 0
  %2002 = vmatpush1.bf16.msra.mxu0 %v1461
  %2003 = vmatprep.subr.bf16.mxu0 0
  %2004 = vmatpush1.bf16.msra.mxu0 %v1460
  %2005 = vmatprep.subr.bf16.mxu0 0
  %2006 = vmatpush1.bf16.msra.mxu0 %v1459
  %2007 = vmatprep.subr.bf16.mxu0 0
  %2008 = vmatpush1.bf16.msra.mxu0 %v1458
  %2009 = vmatprep.subr.bf16.mxu0 0
  %2010 = vmatpush1.bf16.msra.mxu0 %v1457
  %2011 = vmatprep.subr.bf16.mxu0 0
  %2012 = vmatpush1.bf16.msra.mxu0 %v1456
  %2013 = vmatprep.subr.bf16.mxu0 0
  %2014 = vmatpush1.bf16.msra.mxu0 %v1455
  %2015 = vmatprep.subr.bf16.mxu0 0
  %2016 = vmatpush2.bf16.msra.mxu0 %v1470
  %2017 = vmatprep.subr.bf16.mxu0 0
  %2018 = vmatpush2.bf16.msra.mxu0 %v1469
  %2019 = vmatprep.subr.bf16.mxu0 0
  %2020 = vmatpush2.bf16.msra.mxu0 %v1468
  %2021 = vmatprep.subr.bf16.mxu0 0
  %2022 = vmatpush2.bf16.msra.mxu0 %v1467
  %2023 = vmatprep.subr.bf16.mxu0 0
  %2024 = vmatpush2.bf16.msra.mxu0 %v1466
  %2025 = vmatprep.subr.bf16.mxu0 0
  %2026 = vmatpush2.bf16.msra.mxu0 %v1465
  %2027 = vmatprep.subr.bf16.mxu0 0
  %2028 = vmatpush2.bf16.msra.mxu0 %v1464
  %2029 = vmatprep.subr.bf16.mxu0 0
  %2030 = vmatpush2.bf16.msra.mxu0 %v1463
  %2031 = vmatprep.mubr.bf16.mxu0 %v522
  %2032 = vmatmul.mubr.bf16.gmra.mxu0 %v521
  %v2033 = vpop.f32.mrf.mxu0
  %v2034 = vadd.f32 %v1994, %v2033
  %v2035 = vpop.f32.mrf.mxu0
  %v2036 = vpop.f32.mrf.mxu0
  %v2037 = vpop.f32.mrf.mxu0
  %2038 = vdwg.mxu0
  %2039 = vmatprep.subr.bf16.mxu0 0
  %2040 = vmatpush1.bf16.msra.mxu0 %v1478
  %2041 = vmatprep.subr.bf16.mxu0 0
  %2042 = vmatpush1.bf16.msra.mxu0 %v1477
  %2043 = vmatprep.subr.bf16.mxu0 0
  %2044 = vmatpush1.bf16.msra.mxu0 %v1476
  %2045 = vmatprep.subr.bf16.mxu0 0
  %2046 = vmatpush1.bf16.msra.mxu0 %v1475
  %2047 = vmatprep.subr.bf16.mxu0 0
  %2048 = vmatpush1.bf16.msra.mxu0 %v1474
  %2049 = vmatprep.subr.bf16.mxu0 0
  %2050 = vmatpush1.bf16.msra.mxu0 %v1473
  %2051 = vmatprep.subr.bf16.mxu0 0
  %2052 = vmatpush1.bf16.msra.mxu0 %v1472
  %2053 = vmatprep.subr.bf16.mxu0 0
  %2054 = vmatpush1.bf16.msra.mxu0 %v1471
  %2055 = vmatprep.subr.bf16.mxu0 0
  %2056 = vmatpush2.bf16.msra.mxu0 %v1486
  %2057 = vmatprep.subr.bf16.mxu0 0
  %2058 = vmatpush2.bf16.msra.mxu0 %v1485
  %2059 = vmatprep.subr.bf16.mxu0 0
  %2060 = vmatpush2.bf16.msra.mxu0 %v1484
  %2061 = vmatprep.subr.bf16.mxu0 0
  %2062 = vmatpush2.bf16.msra.mxu0 %v1483
  %2063 = vmatprep.subr.bf16.mxu0 0
  %2064 = vmatpush2.bf16.msra.mxu0 %v1482
  %2065 = vmatprep.subr.bf16.mxu0 0
  %2066 = vmatpush2.bf16.msra.mxu0 %v1481
  %2067 = vmatprep.subr.bf16.mxu0 0
  %2068 = vmatpush2.bf16.msra.mxu0 %v1480
  %2069 = vmatprep.subr.bf16.mxu0 0
  %2070 = vmatpush2.bf16.msra.mxu0 %v1479
  %2071 = vmatprep.mubr.bf16.mxu0 %v524
  %2072 = vmatmul.mubr.bf16.gmra.mxu0 %v523
  %v2073 = vpop.f32.mrf.mxu0
  %v2074 = vadd.f32 %v2034, %v2073
  %v2075 = vpop.f32.mrf.mxu0
  %v2076 = vpop.f32.mrf.mxu0
  %v2077 = vpop.f32.mrf.mxu0
  %2078 = vdwg.mxu0
  %2079 = vmatprep.subr.bf16.mxu0 0
  %2080 = vmatpush1.bf16.msra.mxu0 %v1494
  %2081 = vmatprep.subr.bf16.mxu0 0
  %2082 = vmatpush1.bf16.msra.mxu0 %v1493
  %2083 = vmatprep.subr.bf16.mxu0 0
  %2084 = vmatpush1.bf16.msra.mxu0 %v1492
  %2085 = vmatprep.subr.bf16.mxu0 0
  %2086 = vmatpush1.bf16.msra.mxu0 %v1491
  %2087 = vmatprep.subr.bf16.mxu0 0
  %2088 = vmatpush1.bf16.msra.mxu0 %v1490
  %2089 = vmatprep.subr.bf16.mxu0 0
  %2090 = vmatpush1.bf16.msra.mxu0 %v1489
  %2091 = vmatprep.subr.bf16.mxu0 0
  %2092 = vmatpush1.bf16.msra.mxu0 %v1488
  %2093 = vmatprep.subr.bf16.mxu0 0
  %2094 = vmatpush1.bf16.msra.mxu0 %v1487
  %2095 = vmatprep.subr.bf16.mxu0 0
  %2096 = vmatpush2.bf16.msra.mxu0 %v1502
  %2097 = vmatprep.subr.bf16.mxu0 0
  %2098 = vmatpush2.bf16.msra.mxu0 %v1501
  %2099 = vmatprep.subr.bf16.mxu0 0
  %2100 = vmatpush2.bf16.msra.mxu0 %v1500
  %2101 = vmatprep.subr.bf16.mxu0 0
  %2102 = vmatpush2.bf16.msra.mxu0 %v1499
  %2103 = vmatprep.subr.bf16.mxu0 0
  %2104 = vmatpush2.bf16.msra.mxu0 %v1498
  %2105 = vmatprep.subr.bf16.mxu0 0
  %2106 = vmatpush2.bf16.msra.mxu0 %v1497
  %2107 = vmatprep.subr.bf16.mxu0 0
  %2108 = vmatpush2.bf16.msra.mxu0 %v1496
  %2109 = vmatprep.subr.bf16.mxu0 0
  %2110 = vmatpush2.bf16.msra.mxu0 %v1495
  %2111 = vmatprep.mubr.bf16.mxu0 %v526
  %2112 = vmatmul.mubr.bf16.gmra.mxu0 %v525
  %v2113 = vpop.f32.mrf.mxu0
  %v2114 = vadd.f32 %v2074, %v2113
  %v2115 = vpop.f32.mrf.mxu0
  %v2116 = vpop.f32.mrf.mxu0
  %v2117 = vpop.f32.mrf.mxu0
  %2118 = vdwg.mxu0
  %2119 = vmatprep.subr.bf16.mxu0 0
  %2120 = vmatpush1.bf16.msra.mxu0 %v1510
  %2121 = vmatprep.subr.bf16.mxu0 0
  %2122 = vmatpush1.bf16.msra.mxu0 %v1509
  %2123 = vmatprep.subr.bf16.mxu0 0
  %2124 = vmatpush1.bf16.msra.mxu0 %v1508
  %2125 = vmatprep.subr.bf16.mxu0 0
  %2126 = vmatpush1.bf16.msra.mxu0 %v1507
  %2127 = vmatprep.subr.bf16.mxu0 0
  %2128 = vmatpush1.bf16.msra.mxu0 %v1506
  %2129 = vmatprep.subr.bf16.mxu0 0
  %2130 = vmatpush1.bf16.msra.mxu0 %v1505
  %2131 = vmatprep.subr.bf16.mxu0 0
  %2132 = vmatpush1.bf16.msra.mxu0 %v1504
  %2133 = vmatprep.subr.bf16.mxu0 0
  %2134 = vmatpush1.bf16.msra.mxu0 %v1503
  %2135 = vmatprep.subr.bf16.mxu0 0
  %2136 = vmatpush2.bf16.msra.mxu0 %v1518
  %2137 = vmatprep.subr.bf16.mxu0 0
  %2138 = vmatpush2.bf16.msra.mxu0 %v1517
  %2139 = vmatprep.subr.bf16.mxu0 0
  %2140 = vmatpush2.bf16.msra.mxu0 %v1516
  %2141 = vmatprep.subr.bf16.mxu0 0
  %2142 = vmatpush2.bf16.msra.mxu0 %v1515
  %2143 = vmatprep.subr.bf16.mxu0 0
  %2144 = vmatpush2.bf16.msra.mxu0 %v1514
  %2145 = vmatprep.subr.bf16.mxu0 0
  %2146 = vmatpush2.bf16.msra.mxu0 %v1513
  %2147 = vmatprep.subr.bf16.mxu0 0
  %2148 = vmatpush2.bf16.msra.mxu0 %v1512
  %2149 = vmatprep.subr.bf16.mxu0 0
  %2150 = vmatpush2.bf16.msra.mxu0 %v1511
  %2151 = vmatprep.mubr.bf16.mxu0 %v528
  %2152 = vmatmul.mubr.bf16.gmra.mxu0 %v527
  %v2153 = vpop.f32.mrf.mxu0
  %v2154 = vadd.f32 %v2114, %v2153
  %v2155 = vpop.f32.mrf.mxu0
  %v2156 = vpop.f32.mrf.mxu0
  %v2157 = vpop.f32.mrf.mxu0
  %2158 = vdwg.mxu0
  %2159 = vmatprep.subr.bf16.mxu0 0
  %2160 = vmatpush1.bf16.msra.mxu0 %v1526
  %2161 = vmatprep.subr.bf16.mxu0 0
  %2162 = vmatpush1.bf16.msra.mxu0 %v1525
  %2163 = vmatprep.subr.bf16.mxu0 0
  %2164 = vmatpush1.bf16.msra.mxu0 %v1524
  %2165 = vmatprep.subr.bf16.mxu0 0
  %2166 = vmatpush1.bf16.msra.mxu0 %v1523
  %2167 = vmatprep.subr.bf16.mxu0 0
  %2168 = vmatpush1.bf16.msra.mxu0 %v1522
  %2169 = vmatprep.subr.bf16.mxu0 0
  %2170 = vmatpush1.bf16.msra.mxu0 %v1521
  %2171 = vmatprep.subr.bf16.mxu0 0
  %2172 = vmatpush1.bf16.msra.mxu0 %v1520
  %2173 = vmatprep.subr.bf16.mxu0 0
  %2174 = vmatpush1.bf16.msra.mxu0 %v1519
  %2175 = vmatprep.subr.bf16.mxu0 0
  %2176 = vmatpush2.bf16.msra.mxu0 %v1534
  %2177 = vmatprep.subr.bf16.mxu0 0
  %2178 = vmatpush2.bf16.msra.mxu0 %v1533
  %2179 = vmatprep.subr.bf16.mxu0 0
  %2180 = vmatpush2.bf16.msra.mxu0 %v1532
  %2181 = vmatprep.subr.bf16.mxu0 0
  %2182 = vmatpush2.bf16.msra.mxu0 %v1531
  %2183 = vmatprep.subr.bf16.mxu0 0
  %2184 = vmatpush2.bf16.msra.mxu0 %v1530
  %2185 = vmatprep.subr.bf16.mxu0 0
  %2186 = vmatpush2.bf16.msra.mxu0 %v1529
  %2187 = vmatprep.subr.bf16.mxu0 0
  %2188 = vmatpush2.bf16.msra.mxu0 %v1528
  %2189 = vmatprep.subr.bf16.mxu0 0
  %2190 = vmatpush2.bf16.msra.mxu0 %v1527
  %2191 = vmatprep.mubr.bf16.mxu0 %v530
  %2192 = vmatmul.mubr.bf16.gmra.mxu0 %v529
  %v2193 = vpop.f32.mrf.mxu0
  %v2194 = vadd.f32 %v2154, %v2193
  %v2195 = vpop.f32.mrf.mxu0
  %v2196 = vpop.f32.mrf.mxu0
  %v2197 = vpop.f32.mrf.mxu0
  %2198 = vdwg.mxu0
  %2199 = vmatprep.subr.bf16.mxu0 0
  %2200 = vmatpush1.bf16.msra.mxu0 %v1542
  %2201 = vmatprep.subr.bf16.mxu0 0
  %2202 = vmatpush1.bf16.msra.mxu0 %v1541
  %2203 = vmatprep.subr.bf16.mxu0 0
  %2204 = vmatpush1.bf16.msra.mxu0 %v1540
  %2205 = vmatprep.subr.bf16.mxu0 0
  %2206 = vmatpush1.bf16.msra.mxu0 %v1539
  %2207 = vmatprep.subr.bf16.mxu0 0
  %2208 = vmatpush1.bf16.msra.mxu0 %v1538
  %2209 = vmatprep.subr.bf16.mxu0 0
  %2210 = vmatpush1.bf16.msra.mxu0 %v1537
  %2211 = vmatprep.subr.bf16.mxu0 0
  %2212 = vmatpush1.bf16.msra.mxu0 %v1536
  %2213 = vmatprep.subr.bf16.mxu0 0
  %2214 = vmatpush1.bf16.msra.mxu0 %v1535
  %2215 = vmatprep.subr.bf16.mxu0 0
  %2216 = vmatpush2.bf16.msra.mxu0 %v1550
  %2217 = vmatprep.subr.bf16.mxu0 0
  %2218 = vmatpush2.bf16.msra.mxu0 %v1549
  %2219 = vmatprep.subr.bf16.mxu0 0
  %2220 = vmatpush2.bf16.msra.mxu0 %v1548
  %2221 = vmatprep.subr.bf16.mxu0 0
  %2222 = vmatpush2.bf16.msra.mxu0 %v1547
  %2223 = vmatprep.subr.bf16.mxu0 0
  %2224 = vmatpush2.bf16.msra.mxu0 %v1546
  %2225 = vmatprep.subr.bf16.mxu0 0
  %2226 = vmatpush2.bf16.msra.mxu0 %v1545
  %2227 = vmatprep.subr.bf16.mxu0 0
  %2228 = vmatpush2.bf16.msra.mxu0 %v1544
  %2229 = vmatprep.subr.bf16.mxu0 0
  %2230 = vmatpush2.bf16.msra.mxu0 %v1543
  %2231 = vmatprep.mubr.bf16.mxu0 %v532
  %2232 = vmatmul.mubr.bf16.gmra.mxu0 %v531
  %v2233 = vpop.f32.mrf.mxu0
  %v2234 = vadd.f32 %v2194, %v2233
  %v2235 = vpop.f32.mrf.mxu0
  %v2236 = vpop.f32.mrf.mxu0
  %v2237 = vpop.f32.mrf.mxu0
  %2238 = vdwg.mxu0
  %2239 = vmatprep.subr.bf16.mxu0 0
  %2240 = vmatpush1.bf16.msra.mxu0 %v1558
  %2241 = vmatprep.subr.bf16.mxu0 0
  %2242 = vmatpush1.bf16.msra.mxu0 %v1557
  %2243 = vmatprep.subr.bf16.mxu0 0
  %2244 = vmatpush1.bf16.msra.mxu0 %v1556
  %2245 = vmatprep.subr.bf16.mxu0 0
  %2246 = vmatpush1.bf16.msra.mxu0 %v1555
  %2247 = vmatprep.subr.bf16.mxu0 0
  %2248 = vmatpush1.bf16.msra.mxu0 %v1554
  %2249 = vmatprep.subr.bf16.mxu0 0
  %2250 = vmatpush1.bf16.msra.mxu0 %v1553
  %2251 = vmatprep.subr.bf16.mxu0 0
  %2252 = vmatpush1.bf16.msra.mxu0 %v1552
  %2253 = vmatprep.subr.bf16.mxu0 0
  %2254 = vmatpush1.bf16.msra.mxu0 %v1551
  %2255 = vmatprep.subr.bf16.mxu0 0
  %2256 = vmatpush2.bf16.msra.mxu0 0
  %2257 = vmatprep.subr.bf16.mxu0 0
  %2258 = vmatpush2.bf16.msra.mxu0 0
  %2259 = vmatprep.subr.bf16.mxu0 0
  %2260 = vmatpush2.bf16.msra.mxu0 0
  %2261 = vmatprep.subr.bf16.mxu0 0
  %2262 = vmatpush2.bf16.msra.mxu0 0
  %2263 = vmatprep.subr.bf16.mxu0 0
  %2264 = vmatpush2.bf16.msra.mxu0 0
  %2265 = vmatprep.subr.bf16.mxu0 0
  %2266 = vmatpush2.bf16.msra.mxu0 0
  %2267 = vmatprep.subr.bf16.mxu0 0
  %2268 = vmatpush2.bf16.msra.mxu0 0
  %2269 = vmatprep.subr.bf16.mxu0 0
  %2270 = vmatpush2.bf16.msra.mxu0 0
  %2271 = vmatprep.mubr.bf16.mxu0 0
  %2272 = vmatmul.mubr.bf16.gmra.mxu0 %v533
  %v2273 = vpop.f32.mrf.mxu0
  %v2274 = vadd.f32 %v2234, %v2273
  %v2275 = vpop.f32.mrf.mxu0
  %v2276 = vpop.f32.mrf.mxu0
  %v2277 = vpop.f32.mrf.mxu0
  %2278 = vdwg.mxu0
  %v2279 = vmax.f32 %v2274, 0.0
  %v2280 = vpack.c.bf16 %v2279, %v2279
  %v2281 = vld [vmem:[%s3] sm:$0xf]
  %v2282 = vld [vmem:[%s3 + $0x4] sm:$0xf]
  %v2283 = vld [vmem:[%s3 + $0x8] sm:$0xf]
  %v2284 = vld [vmem:[%s3 + $0xc] sm:$0xf]
  %v2285 = vld [vmem:[%s3 + $0x10] sm:$0xf]
  %v2286 = vld [vmem:[%s3 + $0x14] sm:$0xf]
  %v2287 = vld [vmem:[%s3 + $0x18] sm:$0xf]
  %v2288 = vld [vmem:[%s3 + $0x1c] sm:$0xf]
  %v2289 = vld [vmem:[%s3 + $0x20] sm:$0xf]
  %v2290 = vld [vmem:[%s3 + $0x24] sm:$0xf]
  %v2291 = vld [vmem:[%s3 + $0x28] sm:$0xf]
  %v2292 = vld [vmem:[%s3 + $0x2c] sm:$0xf]
  %v2293 = vld [vmem:[%s3 + $0x30] sm:$0xf]
  %v2294 = vld [vmem:[%s3 + $0x34] sm:$0xf]
  %v2295 = vld [vmem:[%s3 + $0x38] sm:$0xf]
  %v2296 = vld [vmem:[%s3 + $0x3c] sm:$0xf]
  %v2297 = vld [vmem:[%s4] sm:$0x1]
  %v2299 = vlaneseq
  %v2300 = vshrl.u32 %v2299, 7
  %v2301 = vsub.s32 0, %v2300
  %v2302 = vrot.slane %v2297, %v2301
  %v2320 = vunpack.c.l.b16 %v2281
  %v2321 = vunpack.c.l.b16 %v2282
  %v2322 = vunpack.c.l.b16 %v2283
  %v2323 = vunpack.c.l.b16 %v2284
  %v2324 = vunpack.c.l.b16 %v2285
  %v2325 = vunpack.c.l.b16 %v2286
  %v2326 = vunpack.c.l.b16 %v2287
  %v2327 = vunpack.c.l.b16 %v2288
  %v2328 = vunpack.c.l.b16 %v2289
  %v2329 = vunpack.c.l.b16 %v2290
  %v2330 = vunpack.c.l.b16 %v2291
  %v2331 = vunpack.c.l.b16 %v2292
  %v2332 = vunpack.c.l.b16 %v2293
  %v2333 = vunpack.c.l.b16 %v2294
  %v2334 = vunpack.c.l.b16 %v2295
  %v2335 = vunpack.c.l.b16 %v2296
  %v2336 = vpack.c.b16 %v2321, %v2320
  %v2337 = vpack.c.b16 %v2323, %v2322
  %v2338 = vpack.c.b16 %v2325, %v2324
  %v2339 = vpack.c.b16 %v2327, %v2326
  %v2340 = vpack.c.b16 %v2329, %v2328
  %v2341 = vpack.c.b16 %v2331, %v2330
  %v2342 = vpack.c.b16 %v2333, %v2332
  %v2343 = vpack.c.b16 %v2335, %v2334
  %2352 = vmatprep.subr.bf16.mxu0 0
  %2353 = vmatpush1.bf16.msra.mxu0 %v2343
  %2354 = vmatprep.subr.bf16.mxu0 0
  %2355 = vmatpush1.bf16.msra.mxu0 %v2342
  %2356 = vmatprep.subr.bf16.mxu0 0
  %2357 = vmatpush1.bf16.msra.mxu0 %v2341
  %2358 = vmatprep.subr.bf16.mxu0 0
  %2359 = vmatpush1.bf16.msra.mxu0 %v2340
  %2360 = vmatprep.subr.bf16.mxu0 0
  %2361 = vmatpush1.bf16.msra.mxu0 %v2339
  %2362 = vmatprep.subr.bf16.mxu0 0
  %2363 = vmatpush1.bf16.msra.mxu0 %v2338
  %2364 = vmatprep.subr.bf16.mxu0 0
  %2365 = vmatpush1.bf16.msra.mxu0 %v2337
  %2366 = vmatprep.subr.bf16.mxu0 0
  %2367 = vmatpush1.bf16.msra.mxu0 %v2336
  %2368 = vmatprep.subr.bf16.mxu0 0
  %2369 = vmatpush2.bf16.msra.mxu0 0
  %2370 = vmatprep.subr.bf16.mxu0 0
  %2371 = vmatpush2.bf16.msra.mxu0 0
  %2372 = vmatprep.subr.bf16.mxu0 0
  %2373 = vmatpush2.bf16.msra.mxu0 0
  %2374 = vmatprep.subr.bf16.mxu0 0
  %2375 = vmatpush2.bf16.msra.mxu0 0
  %2376 = vmatprep.subr.bf16.mxu0 0
  %2377 = vmatpush2.bf16.msra.mxu0 0
  %2378 = vmatprep.subr.bf16.mxu0 0
  %2379 = vmatpush2.bf16.msra.mxu0 0
  %2380 = vmatprep.subr.bf16.mxu0 0
  %2381 = vmatpush2.bf16.msra.mxu0 0
  %2382 = vmatprep.subr.bf16.mxu0 0
  %2383 = vmatpush2.bf16.msra.mxu0 0
  %2384 = vmatprep.mubr.bf16.mxu0 0
  %2385 = vmatmul.mubr.bf16.gmra.mxu0 %v2280
  %v2386 = vpop.f32.mrf.mxu0
  %v2387 = vadd.f32 %v2302, %v2386
  %v2388 = vpop.f32.mrf.mxu0
  %v2389 = vpop.f32.mrf.mxu0
  %v2390 = vpop.f32.mrf.mxu0
  %2391 = vdwg.mxu0
  %v2392 = vmax.f32 %v2387, 0.0
  %v2393 = vpack.c.bf16 %v2392, %v2392
  %v2394 = vld [vmem:[%s5] sm:$0xf]
  %v2395 = vld [vmem:[%s5 + $0x4] sm:$0xf]
  %v2396 = vld [vmem:[%s5 + $0x8] sm:$0xf]
  %v2397 = vld [vmem:[%s5 + $0xc] sm:$0xf]
  %v2398 = vld [vmem:[%s5 + $0x10] sm:$0xf]
  %v2399 = vld [vmem:[%s5 + $0x14] sm:$0xf]
  %v2400 = vld [vmem:[%s5 + $0x18] sm:$0xf]
  %v2401 = vld [vmem:[%s5 + $0x1c] sm:$0xf]
  %v2402 = vld [vmem:[%s5 + $0x20] sm:$0xf]
  %v2403 = vld [vmem:[%s5 + $0x24] sm:$0xf]
  %v2404 = vld [vmem:[%s5 + $0x28] sm:$0xf]
  %v2405 = vld [vmem:[%s5 + $0x2c] sm:$0xf]
  %v2406 = vld [vmem:[%s5 + $0x30] sm:$0xf]
  %v2407 = vld [vmem:[%s5 + $0x34] sm:$0xf]
  %v2408 = vld [vmem:[%s5 + $0x38] sm:$0xf]
  %v2409 = vld [vmem:[%s5 + $0x3c] sm:$0xf]
  %v2410 = vld [vmem:[%s6] sm:$0x1]
  %v2412 = vlaneseq
  %v2413 = vshrl.u32 %v2412, 7
  %v2414 = vsub.s32 0, %v2413
  %v2415 = vrot.slane %v2410, %v2414
  %v2433 = vunpack.c.l.b16 %v2394
  %v2434 = vunpack.c.l.b16 %v2395
  %v2435 = vunpack.c.l.b16 %v2396
  %v2436 = vunpack.c.l.b16 %v2397
  %v2437 = vunpack.c.l.b16 %v2398
  %v2438 = vunpack.c.l.b16 %v2399
  %v2439 = vunpack.c.l.b16 %v2400
  %v2440 = vunpack.c.l.b16 %v2401
  %v2441 = vunpack.c.l.b16 %v2402
  %v2442 = vunpack.c.l.b16 %v2403
  %v2443 = vunpack.c.l.b16 %v2404
  %v2444 = vunpack.c.l.b16 %v2405
  %v2445 = vunpack.c.l.b16 %v2406
  %v2446 = vunpack.c.l.b16 %v2407
  %v2447 = vunpack.c.l.b16 %v2408
  %v2448 = vunpack.c.l.b16 %v2409
  %v2449 = vpack.c.b16 %v2434, %v2433
  %v2450 = vpack.c.b16 %v2436, %v2435
  %v2451 = vpack.c.b16 %v2438, %v2437
  %v2452 = vpack.c.b16 %v2440, %v2439
  %v2453 = vpack.c.b16 %v2442, %v2441
  %v2454 = vpack.c.b16 %v2444, %v2443
  %v2455 = vpack.c.b16 %v2446, %v2445
  %v2456 = vpack.c.b16 %v2448, %v2447
  %2465 = vmatprep.subr.bf16.mxu0 0
  %2466 = vmatpush1.bf16.msra.mxu0 %v2456
  %2467 = vmatprep.subr.bf16.mxu0 0
  %2468 = vmatpush1.bf16.msra.mxu0 %v2455
  %2469 = vmatprep.subr.bf16.mxu0 0
  %2470 = vmatpush1.bf16.msra.mxu0 %v2454
  %2471 = vmatprep.subr.bf16.mxu0 0
  %2472 = vmatpush1.bf16.msra.mxu0 %v2453
  %2473 = vmatprep.subr.bf16.mxu0 0
  %2474 = vmatpush1.bf16.msra.mxu0 %v2452
  %2475 = vmatprep.subr.bf16.mxu0 0
  %2476 = vmatpush1.bf16.msra.mxu0 %v2451
  %2477 = vmatprep.subr.bf16.mxu0 0
  %2478 = vmatpush1.bf16.msra.mxu0 %v2450
  %2479 = vmatprep.subr.bf16.mxu0 0
  %2480 = vmatpush1.bf16.msra.mxu0 %v2449
  %2481 = vmatprep.subr.bf16.mxu0 0
  %2482 = vmatpush2.bf16.msra.mxu0 0
  %2483 = vmatprep.subr.bf16.mxu0 0
  %2484 = vmatpush2.bf16.msra.mxu0 0
  %2485 = vmatprep.subr.bf16.mxu0 0
  %2486 = vmatpush2.bf16.msra.mxu0 0
  %2487 = vmatprep.subr.bf16.mxu0 0
  %2488 = vmatpush2.bf16.msra.mxu0 0
  %2489 = vmatprep.subr.bf16.mxu0 0
  %2490 = vmatpush2.bf16.msra.mxu0 0
  %2491 = vmatprep.subr.bf16.mxu0 0
  %2492 = vmatpush2.bf16.msra.mxu0 0
  %2493 = vmatprep.subr.bf16.mxu0 0
  %2494 = vmatpush2.bf16.msra.mxu0 0
  %2495 = vmatprep.subr.bf16.mxu0 0
  %2496 = vmatpush2.bf16.msra.mxu0 0
  %2497 = vmatprep.mubr.bf16.mxu0 0
  %2498 = vmatmul.mubr.bf16.gmra.mxu0 %v2393
  %v2499 = vpop.f32.mrf.mxu0
  %v2500 = vadd.f32 %v2415, %v2499
  %v2501 = vpop.f32.mrf.mxu0
  %v2502 = vpop.f32.mrf.mxu0
  %v2503 = vpop.f32.mrf.mxu0
  %2504 = vdwg.mxu0
  %vm2505 = vcmask 257024
  %v2506 = vsel %vm2505, %v2500, 0.0
  %v2507 = vrot.slane %v2506, 4
  %v2508 = vadd.f32 %v2506, %v2507
  %v2509 = vrot.slane %v2508, 2
  %v2510 = vadd.f32 %v2508, %v2509
  %v2511 = vrot.slane %v2510, 1
  %v2512 = vadd.f32 %v2510, %v2511
  %v2513 = vmul.f32 %v2512, 0.5
  %vm2514 = vcmask 253952
  %v2515 = vsel %vm2514, %v2513, 0.0
  %2516 = vadd.xlane.f32.xlu0 %v2515
  %v2517 = vpop.xlane.xlu0 %2516
  %v2518 = vrot.slane %v2517, 4
  %v2519 = vadd.f32 %v2517, %v2518
  %v2520 = vrot.slane %v2519, 2
  %v2521 = vadd.f32 %v2519, %v2520
  %v2522 = vrot.slane %v2521, 1
  %v2523 = vadd.f32 %v2521, %v2522
  %s2524 = vtos %v2523
  %v2525 = vrcp.pop 32.0
  %s2526 = vtos %v2525
  %s2527 = smul.f32 %s2524, %s2526
  %v2528 = vstv %s2527
  %v2529 = vsub.f32 %v2513, %v2528
  %v2530 = vmul.f32 %v2529, %v2529
  %v2531 = vsel %vm2514, %v2530, 0.0
  %2532 = vadd.xlane.f32.xlu0 %v2531
  %v2533 = vpop.xlane.xlu0 %2532
  %v2534 = vrot.slane %v2533, 4
  %v2535 = vadd.f32 %v2533, %v2534
  %v2536 = vrot.slane %v2535, 2
  %v2537 = vadd.f32 %v2535, %v2536
  %v2538 = vrot.slane %v2537, 1
  %v2539 = vadd.f32 %v2537, %v2538
  %s2540 = vtos %v2539
  %v2541 = vrcp.pop 31.0
  %s2542 = vtos %v2541
  %s2543 = smul.f32 %s2540, %s2542
  %v2544 = vstv %s2543
  %v2545 = vrsqrt.pop %v2544
  %s2546 = vtos %v2545
  %v2547 = vstv %s2546
  %v2548 = vmul.f32 %v2529, %v2547
  %v2549 = vld [vmem:[%s7] sm:$0xff]
  %v2550 = vld [vmem:[%s7 + $0x8] sm:$0xff]
  %v2551 = vld [vmem:[%s7 + $0x10] sm:$0xff]
  %v2552 = vld [vmem:[%s7 + $0x18] sm:$0xff]
  %v2553 = vld [vmem:[%s8] sm:$0x1]
  %v2555 = vlaneseq
  %v2556 = vshrl.u32 %v2555, 7
  %v2557 = vsub.s32 0, %v2556
  %v2558 = vrot.slane %v2553, %v2557
  %vm2560 = vcmask 261120
  %v2562 = vsel %vm2560, %v2548, 0
  %2564 = vmatprep.subr.mxu0 0.0
  %2565 = vmatpush1.msra.mxu0 0.0
  %2566 = vmatprep.subr.mxu0 0.0
  %2567 = vmatpush1.msra.mxu0 0.0
  %2568 = vmatprep.subr.mxu0 0.0
  %2569 = vmatpush1.msra.mxu0 0.0
  %2570 = vmatprep.subr.mxu0 0.0
  %2571 = vmatpush1.msra.mxu0 0.0
  %2572 = vmatprep.subr.mxu0 0.0
  %2573 = vmatpush1.msra.mxu0 0.0
  %2574 = vmatprep.subr.mxu0 0.0
  %2575 = vmatpush1.msra.mxu0 0.0
  %2576 = vmatprep.subr.mxu0 0.0
  %2577 = vmatpush1.msra.mxu0 0.0
  %2578 = vmatprep.subr.mxu0 0.0
  %2579 = vmatpush1.msra.mxu0 0.0
  %2580 = vmatprep.subr.mxu0 0.0
  %2581 = vmatpush1.msra.mxu0 0.0
  %2582 = vmatprep.subr.mxu0 0.0
  %2583 = vmatpush1.msra.mxu0 0.0
  %2584 = vmatprep.subr.mxu0 0.0
  %2585 = vmatpush1.msra.mxu0 0.0
  %2586 = vmatprep.subr.mxu0 0.0
  %2587 = vmatpush1.msra.mxu0 0.0
  %2588 = vmatprep.subr.mxu0 0.0
  %2589 = vmatpush1.msra.mxu0 %v2552
  %2590 = vmatprep.subr.mxu0 0.0
  %2591 = vmatpush1.msra.mxu0 %v2551
  %2592 = vmatprep.subr.mxu0 0.0
  %2593 = vmatpush1.msra.mxu0 %v2550
  %2594 = vmatprep.subr.mxu0 0.0
  %2595 = vmatpush1.msra.mxu0 %v2549
  %2596 = vmatprep.subr.mxu0 0.0
  %2597 = vmatpush2.msra.mxu0 0.0
  %2598 = vmatprep.subr.mxu0 0.0
  %2599 = vmatpush2.msra.mxu0 0.0
  %2600 = vmatprep.subr.mxu0 0.0
  %2601 = vmatpush2.msra.mxu0 0.0
  %2602 = vmatprep.subr.mxu0 0.0
  %2603 = vmatpush2.msra.mxu0 0.0
  %2604 = vmatprep.subr.mxu0 0.0
  %2605 = vmatpush2.msra.mxu0 0.0
  %2606 = vmatprep.subr.mxu0 0.0
  %2607 = vmatpush2.msra.mxu0 0.0
  %2608 = vmatprep.subr.mxu0 0.0
  %2609 = vmatpush2.msra.mxu0 0.0
  %2610 = vmatprep.subr.mxu0 0.0
  %2611 = vmatpush2.msra.mxu0 0.0
  %2612 = vmatprep.subr.mxu0 0.0
  %2613 = vmatpush2.msra.mxu0 0.0
  %2614 = vmatprep.subr.mxu0 0.0
  %2615 = vmatpush2.msra.mxu0 0.0
  %2616 = vmatprep.subr.mxu0 0.0
  %2617 = vmatpush2.msra.mxu0 0.0
  %2618 = vmatprep.subr.mxu0 0.0
  %2619 = vmatpush2.msra.mxu0 0.0
  %2620 = vmatprep.subr.mxu0 0.0
  %2621 = vmatpush2.msra.mxu0 0.0
  %2622 = vmatprep.subr.mxu0 0.0
  %2623 = vmatpush2.msra.mxu0 0.0
  %2624 = vmatprep.subr.mxu0 0.0
  %2625 = vmatpush2.msra.mxu0 0.0
  %2626 = vmatprep.subr.mxu0 0.0
  %2627 = vmatpush2.msra.mxu0 0.0
  %2628 = vmatprep.mubr.f32.mxu0 0.0
  %2629 = vmatmul.mubr.f32.gmra.mxu0 %v2562
  %v2630 = vpop.f32.mrf.mxu0
  %v2631 = vadd.f32 %v2558, %v2630
  %v2632 = vpop.f32.mrf.mxu0
  %2633 = vdwg.mxu0
  %v2634 = vmax.f32 %v2631, 0.0
  %v2635 = vld [vmem:[%s9] sm:$0xff]
  %v2636 = vld [vmem:[%s9 + $0x8] sm:$0xff]
  %v2637 = vld [vmem:[%s9 + $0x10] sm:$0xff]
  %v2638 = vld [vmem:[%s9 + $0x18] sm:$0xff]
  %v2639 = vld [vmem:[%s10] sm:$0x1]
  %v2641 = vlaneseq
  %v2642 = vshrl.u32 %v2641, 7
  %v2643 = vsub.s32 0, %v2642
  %v2644 = vrot.slane %v2639, %v2643
  %v2647 = vsel %vm2560, %v2634, 0
  %2649 = vmatprep.subr.mxu0 0.0
  %2650 = vmatpush1.msra.mxu0 0.0
  %2651 = vmatprep.subr.mxu0 0.0
  %2652 = vmatpush1.msra.mxu0 0.0
  %2653 = vmatprep.subr.mxu0 0.0
  %2654 = vmatpush1.msra.mxu0 0.0
  %2655 = vmatprep.subr.mxu0 0.0
  %2656 = vmatpush1.msra.mxu0 0.0
  %2657 = vmatprep.subr.mxu0 0.0
  %2658 = vmatpush1.msra.mxu0 0.0
  %2659 = vmatprep.subr.mxu0 0.0
  %2660 = vmatpush1.msra.mxu0 0.0
  %2661 = vmatprep.subr.mxu0 0.0
  %2662 = vmatpush1.msra.mxu0 0.0
  %2663 = vmatprep.subr.mxu0 0.0
  %2664 = vmatpush1.msra.mxu0 0.0
  %2665 = vmatprep.subr.mxu0 0.0
  %2666 = vmatpush1.msra.mxu0 0.0
  %2667 = vmatprep.subr.mxu0 0.0
  %2668 = vmatpush1.msra.mxu0 0.0
  %2669 = vmatprep.subr.mxu0 0.0
  %2670 = vmatpush1.msra.mxu0 0.0
  %2671 = vmatprep.subr.mxu0 0.0
  %2672 = vmatpush1.msra.mxu0 0.0
  %2673 = vmatprep.subr.mxu0 0.0
  %2674 = vmatpush1.msra.mxu0 %v2638
  %2675 = vmatprep.subr.mxu0 0.0
  %2676 = vmatpush1.msra.mxu0 %v2637
  %2677 = vmatprep.subr.mxu0 0.0
  %2678 = vmatpush1.msra.mxu0 %v2636
  %2679 = vmatprep.subr.mxu0 0.0
  %2680 = vmatpush1.msra.mxu0 %v2635
  %2681 = vmatprep.subr.mxu0 0.0
  %2682 = vmatpush2.msra.mxu0 0.0
  %2683 = vmatprep.subr.mxu0 0.0
  %2684 = vmatpush2.msra.mxu0 0.0
  %2685 = vmatprep.subr.mxu0 0.0
  %2686 = vmatpush2.msra.mxu0 0.0
  %2687 = vmatprep.subr.mxu0 0.0
  %2688 = vmatpush2.msra.mxu0 0.0
  %2689 = vmatprep.subr.mxu0 0.0
  %2690 = vmatpush2.msra.mxu0 0.0
  %2691 = vmatprep.subr.mxu0 0.0
  %2692 = vmatpush2.msra.mxu0 0.0
  %2693 = vmatprep.subr.mxu0 0.0
  %2694 = vmatpush2.msra.mxu0 0.0
  %2695 = vmatprep.subr.mxu0 0.0
  %2696 = vmatpush2.msra.mxu0 0.0
  %2697 = vmatprep.subr.mxu0 0.0
  %2698 = vmatpush2.msra.mxu0 0.0
  %2699 = vmatprep.subr.mxu0 0.0
  %2700 = vmatpush2.msra.mxu0 0.0
  %2701 = vmatprep.subr.mxu0 0.0
  %2702 = vmatpush2.msra.mxu0 0.0
  %2703 = vmatprep.subr.mxu0 0.0
  %2704 = vmatpush2.msra.mxu0 0.0
  %2705 = vmatprep.subr.mxu0 0.0
  %2706 = vmatpush2.msra.mxu0 0.0
  %2707 = vmatprep.subr.mxu0 0.0
  %2708 = vmatpush2.msra.mxu0 0.0
  %2709 = vmatprep.subr.mxu0 0.0
  %2710 = vmatpush2.msra.mxu0 0.0
  %2711 = vmatprep.subr.mxu0 0.0
  %2712 = vmatpush2.msra.mxu0 0.0
  %2713 = vmatprep.mubr.f32.mxu0 0.0
  %2714 = vmatmul.mubr.f32.gmra.mxu0 %v2647
  %v2715 = vpop.f32.mrf.mxu0
  %v2716 = vadd.f32 %v2644, %v2715
  %v2717 = vpop.f32.mrf.mxu0
  %2718 = vdwg.mxu0
  %v2719 = vmax.f32 %v2716, 0.0
  %v2720 = vld [vmem:[%s11] sm:$0xff]
  %v2721 = vld [vmem:[%s11 + $0x8] sm:$0xff]
  %v2722 = vld [vmem:[%s11 + $0x10] sm:$0xff]
  %v2723 = vld [vmem:[%s11 + $0x18] sm:$0xff]
  %v2724 = vld [vmem:[%s12] sm:$0x1]
  %v2726 = vlaneseq
  %v2727 = vshrl.u32 %v2726, 7
  %v2728 = vsub.s32 0, %v2727
  %v2729 = vrot.slane %v2724, %v2728
  %v2732 = vsel %vm2560, %v2719, 0
  %2734 = vmatprep.subr.mxu0 0.0
  %2735 = vmatpush1.msra.mxu0 0.0
  %2736 = vmatprep.subr.mxu0 0.0
  %2737 = vmatpush1.msra.mxu0 0.0
  %2738 = vmatprep.subr.mxu0 0.0
  %2739 = vmatpush1.msra.mxu0 0.0
  %2740 = vmatprep.subr.mxu0 0.0
  %2741 = vmatpush1.msra.mxu0 0.0
  %2742 = vmatprep.subr.mxu0 0.0
  %2743 = vmatpush1.msra.mxu0 0.0
  %2744 = vmatprep.subr.mxu0 0.0
  %2745 = vmatpush1.msra.mxu0 0.0
  %2746 = vmatprep.subr.mxu0 0.0
  %2747 = vmatpush1.msra.mxu0 0.0
  %2748 = vmatprep.subr.mxu0 0.0
  %2749 = vmatpush1.msra.mxu0 0.0
  %2750 = vmatprep.subr.mxu0 0.0
  %2751 = vmatpush1.msra.mxu0 0.0
  %2752 = vmatprep.subr.mxu0 0.0
  %2753 = vmatpush1.msra.mxu0 0.0
  %2754 = vmatprep.subr.mxu0 0.0
  %2755 = vmatpush1.msra.mxu0 0.0
  %2756 = vmatprep.subr.mxu0 0.0
  %2757 = vmatpush1.msra.mxu0 0.0
  %2758 = vmatprep.subr.mxu0 0.0
  %2759 = vmatpush1.msra.mxu0 %v2723
  %2760 = vmatprep.subr.mxu0 0.0
  %2761 = vmatpush1.msra.mxu0 %v2722
  %2762 = vmatprep.subr.mxu0 0.0
  %2763 = vmatpush1.msra.mxu0 %v2721
  %2764 = vmatprep.subr.mxu0 0.0
  %2765 = vmatpush1.msra.mxu0 %v2720
  %2766 = vmatprep.subr.mxu0 0.0
  %2767 = vmatpush2.msra.mxu0 0.0
  %2768 = vmatprep.subr.mxu0 0.0
  %2769 = vmatpush2.msra.mxu0 0.0
  %2770 = vmatprep.subr.mxu0 0.0
  %2771 = vmatpush2.msra.mxu0 0.0
  %2772 = vmatprep.subr.mxu0 0.0
  %2773 = vmatpush2.msra.mxu0 0.0
  %2774 = vmatprep.subr.mxu0 0.0
  %2775 = vmatpush2.msra.mxu0 0.0
  %2776 = vmatprep.subr.mxu0 0.0
  %2777 = vmatpush2.msra.mxu0 0.0
  %2778 = vmatprep.subr.mxu0 0.0
  %2779 = vmatpush2.msra.mxu0 0.0
  %2780 = vmatprep.subr.mxu0 0.0
  %2781 = vmatpush2.msra.mxu0 0.0
  %2782 = vmatprep.subr.mxu0 0.0
  %2783 = vmatpush2.msra.mxu0 0.0
  %2784 = vmatprep.subr.mxu0 0.0
  %2785 = vmatpush2.msra.mxu0 0.0
  %2786 = vmatprep.subr.mxu0 0.0
  %2787 = vmatpush2.msra.mxu0 0.0
  %2788 = vmatprep.subr.mxu0 0.0
  %2789 = vmatpush2.msra.mxu0 0.0
  %2790 = vmatprep.subr.mxu0 0.0
  %2791 = vmatpush2.msra.mxu0 0.0
  %2792 = vmatprep.subr.mxu0 0.0
  %2793 = vmatpush2.msra.mxu0 0.0
  %2794 = vmatprep.subr.mxu0 0.0
  %2795 = vmatpush2.msra.mxu0 0.0
  %2796 = vmatprep.subr.mxu0 0.0
  %2797 = vmatpush2.msra.mxu0 0.0
  %2798 = vmatprep.mubr.f32.mxu0 0.0
  %2799 = vmatmul.mubr.f32.gmra.mxu0 %v2732
  %v2800 = vpop.f32.mrf.mxu0
  %v2801 = vadd.f32 %v2729, %v2800
  %v2802 = vpop.f32.mrf.mxu0
  %2803 = vdwg.mxu0
  %v2804 = vmax.f32 %v2801, 0.0
  %v2805 = vld [vmem:[%s13] sm:$0xff]
  %v2806 = vld [vmem:[%s13 + $0x8] sm:$0xff]
  %v2807 = vld [vmem:[%s13 + $0x10] sm:$0xff]
  %v2808 = vld [vmem:[%s13 + $0x18] sm:$0xff]
  %v2809 = vld [vmem:[%s14] sm:$0x1]
  %v2811 = vlaneseq
  %v2812 = vshrl.u32 %v2811, 7
  %v2813 = vsub.s32 0, %v2812
  %v2814 = vrot.slane %v2809, %v2813
  %v2817 = vsel %vm2560, %v2804, 0
  %2819 = vmatprep.subr.mxu0 0.0
  %2820 = vmatpush1.msra.mxu0 0.0
  %2821 = vmatprep.subr.mxu0 0.0
  %2822 = vmatpush1.msra.mxu0 0.0
  %2823 = vmatprep.subr.mxu0 0.0
  %2824 = vmatpush1.msra.mxu0 0.0
  %2825 = vmatprep.subr.mxu0 0.0
  %2826 = vmatpush1.msra.mxu0 0.0
  %2827 = vmatprep.subr.mxu0 0.0
  %2828 = vmatpush1.msra.mxu0 0.0
  %2829 = vmatprep.subr.mxu0 0.0
  %2830 = vmatpush1.msra.mxu0 0.0
  %2831 = vmatprep.subr.mxu0 0.0
  %2832 = vmatpush1.msra.mxu0 0.0
  %2833 = vmatprep.subr.mxu0 0.0
  %2834 = vmatpush1.msra.mxu0 0.0
  %2835 = vmatprep.subr.mxu0 0.0
  %2836 = vmatpush1.msra.mxu0 0.0
  %2837 = vmatprep.subr.mxu0 0.0
  %2838 = vmatpush1.msra.mxu0 0.0
  %2839 = vmatprep.subr.mxu0 0.0
  %2840 = vmatpush1.msra.mxu0 0.0
  %2841 = vmatprep.subr.mxu0 0.0
  %2842 = vmatpush1.msra.mxu0 0.0
  %2843 = vmatprep.subr.mxu0 0.0
  %2844 = vmatpush1.msra.mxu0 %v2808
  %2845 = vmatprep.subr.mxu0 0.0
  %2846 = vmatpush1.msra.mxu0 %v2807
  %2847 = vmatprep.subr.mxu0 0.0
  %2848 = vmatpush1.msra.mxu0 %v2806
  %2849 = vmatprep.subr.mxu0 0.0
  %2850 = vmatpush1.msra.mxu0 %v2805
  %2851 = vmatprep.subr.mxu0 0.0
  %2852 = vmatpush2.msra.mxu0 0.0
  %2853 = vmatprep.subr.mxu0 0.0
  %2854 = vmatpush2.msra.mxu0 0.0
  %2855 = vmatprep.subr.mxu0 0.0
  %2856 = vmatpush2.msra.mxu0 0.0
  %2857 = vmatprep.subr.mxu0 0.0
  %2858 = vmatpush2.msra.mxu0 0.0
  %2859 = vmatprep.subr.mxu0 0.0
  %2860 = vmatpush2.msra.mxu0 0.0
  %2861 = vmatprep.subr.mxu0 0.0
  %2862 = vmatpush2.msra.mxu0 0.0
  %2863 = vmatprep.subr.mxu0 0.0
  %2864 = vmatpush2.msra.mxu0 0.0
  %2865 = vmatprep.subr.mxu0 0.0
  %2866 = vmatpush2.msra.mxu0 0.0
  %2867 = vmatprep.subr.mxu0 0.0
  %2868 = vmatpush2.msra.mxu0 0.0
  %2869 = vmatprep.subr.mxu0 0.0
  %2870 = vmatpush2.msra.mxu0 0.0
  %2871 = vmatprep.subr.mxu0 0.0
  %2872 = vmatpush2.msra.mxu0 0.0
  %2873 = vmatprep.subr.mxu0 0.0
  %2874 = vmatpush2.msra.mxu0 0.0
  %2875 = vmatprep.subr.mxu0 0.0
  %2876 = vmatpush2.msra.mxu0 0.0
  %2877 = vmatprep.subr.mxu0 0.0
  %2878 = vmatpush2.msra.mxu0 0.0
  %2879 = vmatprep.subr.mxu0 0.0
  %2880 = vmatpush2.msra.mxu0 0.0
  %2881 = vmatprep.subr.mxu0 0.0
  %2882 = vmatpush2.msra.mxu0 0.0
  %2883 = vmatprep.mubr.f32.mxu0 0.0
  %2884 = vmatmul.mubr.f32.gmra.mxu0 %v2817
  %v2885 = vpop.f32.mrf.mxu0
  %v2886 = vadd.f32 %v2814, %v2885
  %v2887 = vpop.f32.mrf.mxu0
  %2888 = vdwg.mxu0
  %v2889 = vmax.f32 %v2886, 0.0
  %vm2890 = vcmask 319488
  %2891 = vst.msk [vmem:[%s15] sm:$0x1] %vm2890, %v2889
  // Predicated region
  $region62: #{hypernet_forward_numeric.5} parent=0 // pred_check
    _
  $region63: #{hypernet_forward_numeric.5} parent=0 // pred_check_branch
    %2893 = sbr.rel (0) target = $region65
  $region64: #{hypernet_forward_numeric.5} parent=0 // pred_region
    _
  $region65: #{hypernet_forward_numeric.5} parent=0 // pred_fallthru
    _
  // Predicated region
  $region66: #{hypernet_forward_numeric.5} parent=0 // pred_check
    _
  $region67: #{hypernet_forward_numeric.5} parent=0 // pred_check_branch
    %2895 = sbr.rel (0) target = $region69
  $region68: #{hypernet_forward_numeric.5} parent=0 // pred_region
    _
  $region69: #{hypernet_forward_numeric.5} parent=0 // pred_fallthru
    _

</llo_original>
